<compile_context>
chip_gen: v6e
topology: v6e:2x2x1
jax: 0.10.0
libtpu: 0.0.40
codegen_flags: <defaults>
</compile_context>

<pallas_src>
import functools

import jax
import jax.numpy as jnp
import numpy as np
from jax.experimental import pallas as pl
from jax.experimental.pallas import tpu as pltpu


def _erf(x):
    # Abramowitz & Stegun 7.1.26 (max abs err ~1.5e-7). Uses only exp / mul / select,
    # which are guaranteed to lower on all TPU generations.
    a1, a2, a3, a4, a5 = 0.254829592, -0.284496736, 1.421413741, -1.453152027, 1.061405429
    p = 0.3275911
    s = jnp.where(x < 0.0, -1.0, 1.0)
    ax = jnp.abs(x)
    t = 1.0 / (1.0 + p * ax)
    poly = ((((a5 * t + a4) * t + a3) * t + a2) * t + a1) * t
    return s * (1.0 - poly * jnp.exp(-ax * ax))


def _gelu_exact(x):
    # torch.nn.GELU() default (approximate='none'): 0.5 * x * (1 + erf(x / sqrt(2)))
    return 0.5 * x * (1.0 + _erf(x * np.float32(1.0 / np.sqrt(2.0))))


def _layernorm(x, gamma, beta, eps):
    mu = jnp.mean(x, axis=-1, keepdims=True)
    xc = x - mu
    var = jnp.mean(xc * xc, axis=-1, keepdims=True)
    return xc * jax.lax.rsqrt(var + eps) * gamma + beta


def _encoder_block_kernel(z_ref, g1_ref, be1_ref, wq_ref, wk_ref, wv_ref,
                          wo_ref, bo_ref, g2_ref, be2_ref,
                          w1_ref, b1_ref, w2_ref, b2_ref,
                          rep_ref, hmask_ref, out_ref, *, head_dim, eps):
    # One grid step == one batch element. Everything below is 2-D (sublane, lane) math.
    z = z_ref[0]                                                       # (N, D) f32

    # --- LayerNorm 1 + multi-head self-attention -------------------------------------
    ln1 = _layernorm(z, g1_ref[...], be1_ref[...], eps)

    q = jnp.dot(ln1, wq_ref[...], preferred_element_type=jnp.float32)  # (N, D)
    k = jnp.dot(ln1, wk_ref[...], preferred_element_type=jnp.float32)  # (N, D)
    v = jnp.dot(ln1, wv_ref[...], preferred_element_type=jnp.float32)  # (N, D)

    rep = rep_ref[...]     # (H*N, N)  rep[h*N+i, i] = 1  (replicate / fold matrix)
    hm = hmask_ref[...]    # (H*N, D)  1.0 on head-h's column block for rows h*N .. h*N+N-1

    # All heads' scores in ONE 2-D matmul: rows of q_h are q replicated per head and
    # masked to that head's D/H columns, so q_h @ k^T contracts only head-h dims.
    q_h = jnp.dot(rep, q, preferred_element_type=jnp.float32) * hm     # (H*N, D)
    dots = jax.lax.dot_general(q_h, k, (((1,), (1,)), ((), ())),
                               preferred_element_type=jnp.float32)      # (H*N, N)
    dots = dots * np.float32(1.0 / np.sqrt(head_dim))

    m = jnp.max(dots, axis=-1, keepdims=True)                           # row softmax
    e = jnp.exp(dots - m)
    attn = e / jnp.sum(e, axis=-1, keepdims=True)

    ctx = jnp.dot(attn, v, preferred_element_type=jnp.float32) * hm     # (H*N, D)
    # Fold the H row-blocks back to (N, D): ctx_out[i, :] = sum_h ctx[h*N + i, :]
    ctx = jax.lax.dot_general(rep, ctx, (((0,), (0,)), ((), ())),
                              preferred_element_type=jnp.float32)       # (N, D)

    msa = jnp.dot(ctx, wo_ref[...], preferred_element_type=jnp.float32) + bo_ref[...]
    res1 = msa + z                                                      # residual 1

    # --- LayerNorm 2 + MLP -------------------------------------------------------------
    ln2 = _layernorm(res1, g2_ref[...], be2_ref[...], eps)
    h = jnp.dot(ln2, w1_ref[...], preferred_element_type=jnp.float32) + b1_ref[...]
    h = _gelu_exact(h)
    mlp = jnp.dot(h, w2_ref[...], preferred_element_type=jnp.float32) + b2_ref[...]

    out_ref[0] = (mlp + res1).astype(out_ref.dtype)                     # residual 2


def prepare_params(g1, be1, wq, wk, wv, wo, bo, g2, be2, w1, b1, w2, b2):
    """One-time prep: transpose torch-layout (out, in) Linear weights to (in, out) and
    reshape 1-D vectors to lane-dense (1, D) rows."""
    row = lambda v: jnp.asarray(v, jnp.float32).reshape(1, -1)
    mat = lambda w: jnp.asarray(w, jnp.float32).T
    return (row(g1), row(be1), mat(wq), mat(wk), mat(wv), mat(wo), row(bo),
            row(g2), row(be2), mat(w1), row(b1), mat(w2), row(b2))


@functools.partial(jax.jit, static_argnames=("num_heads",))
def vit_encoder_block(z, params, *, num_heads):
    """z: (B, N, D) f32 -> (B, N, D) f32, forward pass of VitEncoderBlock."""
    (g1, be1, wq_t, wk_t, wv_t, wo_t, bo, g2, be2, w1_t, b1, w2_t, b2) = params
    B, N, D = z.shape
    HID = w1_t.shape[1]
    Dh = D // num_heads
    HN = num_heads * N

    # Tiny constants for the all-heads-in-one-matmul trick (constant-folded under jit).
    rep = jnp.tile(jnp.eye(N, dtype=jnp.float32), (num_heads, 1))              # (HN, N)
    hmask = ((jnp.arange(HN) // N)[:, None] ==
             (jnp.arange(D) // Dh)[None, :]).astype(jnp.float32)               # (HN, D)

    kernel = functools.partial(_encoder_block_kernel, head_dim=Dh, eps=1e-5)
    const = lambda shape: pl.BlockSpec(shape, lambda b: (0, 0))

    flops = int(B * (2 * N * D * (4 * D + 2 * HID) + 8 * HN * N * D))
    transcend = int(B * (HN * N + N * HID + 2 * N))
    bytes_acc = int(4 * (4 * D * D + 2 * D * HID + HN * (N + D)) + 2 * B * N * D * 4)

    return pl.pallas_call(
        kernel,
        out_shape=jax.ShapeDtypeStruct((B, N, D), z.dtype),
        grid_spec=pltpu.PrefetchScalarGridSpec(
            num_scalar_prefetch=0,
            grid=(B,),
            in_specs=[
                pl.BlockSpec((1, N, D), lambda b: (b, 0, 0)),   # z (per-batch block)
                const((1, D)), const((1, D)),                   # ln1 gamma / beta
                const((D, D)), const((D, D)), const((D, D)),    # Wq^T, Wk^T, Wv^T
                const((D, D)), const((1, D)),                   # Wo^T, bo
                const((1, D)), const((1, D)),                   # ln2 gamma / beta
                const((D, HID)), const((1, HID)),               # W1^T, b1
                const((HID, D)), const((1, D)),                 # W2^T, b2
                const((HN, N)), const((HN, D)),                 # replicate matrix, head mask
            ],
            out_specs=pl.BlockSpec((1, N, D), lambda b: (b, 0, 0)),
        ),
        compiler_params=pltpu.CompilerParams(
            dimension_semantics=("parallel",),
            vmem_limit_bytes=32 * 1024 * 1024),
        cost_estimate=pl.CostEstimate(flops=flops, transcendentals=transcend,
                                      bytes_accessed=bytes_acc),
    )(z, g1, be1, wq_t, wk_t, wv_t, wo_t, bo, g2, be2, w1_t, b1, w2_t, b2, rep, hmask)


def reference_encoder_block(z, raw, num_heads):
    """Pure-JAX f32 reference with PyTorch semantics (biased-var LN, exact-erf GELU)."""
    (g1, be1, wq, wk, wv, wo, bo, g2, be2, w1, b1, w2, b2) = raw
    eps = 1e-5

    def ln(x, g, b):
        mu = x.mean(-1, keepdims=True)
        var = ((x - mu) ** 2).mean(-1, keepdims=True)
        return (x - mu) / jnp.sqrt(var + eps) * g + b

    B, N, D = z.shape
    Dh = D // num_heads
    x = ln(z, g1, be1)
    q = (x @ wq.T).reshape(B, N, num_heads, Dh).transpose(0, 2, 1, 3)
    k = (x @ wk.T).reshape(B, N, num_heads, Dh).transpose(0, 2, 1, 3)
    v = (x @ wv.T).reshape(B, N, num_heads, Dh).transpose(0, 2, 1, 3)
    dots = (q @ k.transpose(0, 1, 3, 2)) / np.sqrt(Dh)
    attn = jax.nn.softmax(dots, axis=-1)
    ctx = (attn @ v).transpose(0, 2, 1, 3).reshape(B, N, D)
    res1 = ctx @ wo.T + bo + z
    y = ln(res1, g2, be2)
    h = jax.nn.gelu(y @ w1.T + b1, approximate=False)
    return h @ w2.T + b2 + res1


if __name__ == "__main__":
    # VitEncoderBlock defaults: emb_dim=384, head=8, hidden_dim=4*384.
    # Token count from the upstream VitInputLayer(num_patch_row=2): N = 2*2 + 1 = 5.
    emb_dim, num_heads, hidden_dim = 384, 8, 4 * 384
    num_tokens, batch = 5, 2

    key = jax.random.PRNGKey(0)
    ks = jax.random.split(key, 14)

    z = jax.random.normal(ks[0], (batch, num_tokens, emb_dim), dtype=jnp.float32)

    g1 = 1.0 + 0.05 * jax.random.normal(ks[1], (emb_dim,), dtype=jnp.float32)
    be1 = 0.05 * jax.random.normal(ks[2], (emb_dim,), dtype=jnp.float32)
    wq = 0.02 * jax.random.normal(ks[3], (emb_dim, emb_dim), dtype=jnp.float32)
    wk = 0.02 * jax.random.normal(ks[4], (emb_dim, emb_dim), dtype=jnp.float32)
    wv = 0.02 * jax.random.normal(ks[5], (emb_dim, emb_dim), dtype=jnp.float32)
    wo = 0.02 * jax.random.normal(ks[6], (emb_dim, emb_dim), dtype=jnp.float32)
    bo = 0.02 * jax.random.normal(ks[7], (emb_dim,), dtype=jnp.float32)
    g2 = 1.0 + 0.05 * jax.random.normal(ks[8], (emb_dim,), dtype=jnp.float32)
    be2 = 0.05 * jax.random.normal(ks[9], (emb_dim,), dtype=jnp.float32)
    w1 = 0.02 * jax.random.normal(ks[10], (hidden_dim, emb_dim), dtype=jnp.float32)
    b1 = 0.02 * jax.random.normal(ks[11], (hidden_dim,), dtype=jnp.float32)
    w2 = 0.02 * jax.random.normal(ks[12], (emb_dim, hidden_dim), dtype=jnp.float32)
    b2 = 0.02 * jax.random.normal(ks[13], (emb_dim,), dtype=jnp.float32)

    raw = (g1, be1, wq, wk, wv, wo, bo, g2, be2, w1, b1, w2, b2)
    params = prepare_params(*raw)          # one-time host-side prep (transposes / reshapes)

    out = vit_encoder_block(z, params, num_heads=num_heads)
    out = jax.block_until_ready(out)

    with jax.default_matmul_precision("highest"):
        ref = reference_encoder_block(z, raw, num_heads)
        ref = jax.block_until_ready(ref)

    assert out.shape == (batch, num_tokens, emb_dim)
    np.testing.assert_allclose(np.asarray(out), np.asarray(ref), rtol=2e-2, atol=2e-2)
    print("KERNEL_OK")
</pallas_src>

<mosaic_0001>
module attributes {stable_mosaic.version = 11 : i64} {
  func.func @_encoder_block_kernel(%arg0: i32, %arg1: memref<1x5x384xf32, #tpu.memory_space<vmem>>, %arg2: memref<1x384xf32, #tpu.memory_space<vmem>>, %arg3: memref<1x384xf32, #tpu.memory_space<vmem>>, %arg4: memref<384x384xf32, #tpu.memory_space<vmem>>, %arg5: memref<384x384xf32, #tpu.memory_space<vmem>>, %arg6: memref<384x384xf32, #tpu.memory_space<vmem>>, %arg7: memref<384x384xf32, #tpu.memory_space<vmem>>, %arg8: memref<1x384xf32, #tpu.memory_space<vmem>>, %arg9: memref<1x384xf32, #tpu.memory_space<vmem>>, %arg10: memref<1x384xf32, #tpu.memory_space<vmem>>, %arg11: memref<384x1536xf32, #tpu.memory_space<vmem>>, %arg12: memref<1x1536xf32, #tpu.memory_space<vmem>>, %arg13: memref<1536x384xf32, #tpu.memory_space<vmem>>, %arg14: memref<1x384xf32, #tpu.memory_space<vmem>>, %arg15: memref<40x5xf32, #tpu.memory_space<vmem>>, %arg16: memref<40x384xf32, #tpu.memory_space<vmem>>, %arg17: memref<1x5x384xf32, #tpu.memory_space<vmem>>) attributes {dimension_semantics = [#tpu.dimension_semantics<parallel>], iteration_bounds = array<i64: 2>, scalar_prefetch = 0 : i64, scratch_operands = 0 : i64, tpu.core_type = #tpu.core_type<tc>, window_params = [{transform_indices = @transform_0, window_bounds = array<i64: 1, 5, 384>}, {pipeline_mode = #tpu.pipeline_mode<synchronous>, transform_indices = @transform_1, window_bounds = array<i64: 1, 384>}, {pipeline_mode = #tpu.pipeline_mode<synchronous>, transform_indices = @transform_2, window_bounds = array<i64: 1, 384>}, {pipeline_mode = #tpu.pipeline_mode<synchronous>, transform_indices = @transform_3, window_bounds = array<i64: 384, 384>}, {pipeline_mode = #tpu.pipeline_mode<synchronous>, transform_indices = @transform_4, window_bounds = array<i64: 384, 384>}, {pipeline_mode = #tpu.pipeline_mode<synchronous>, transform_indices = @transform_5, window_bounds = array<i64: 384, 384>}, {pipeline_mode = #tpu.pipeline_mode<synchronous>, transform_indices = @transform_6, window_bounds = array<i64: 384, 384>}, {pipeline_mode = #tpu.pipeline_mode<synchronous>, transform_indices = @transform_7, window_bounds = array<i64: 1, 384>}, {pipeline_mode = #tpu.pipeline_mode<synchronous>, transform_indices = @transform_8, window_bounds = array<i64: 1, 384>}, {pipeline_mode = #tpu.pipeline_mode<synchronous>, transform_indices = @transform_9, window_bounds = array<i64: 1, 384>}, {pipeline_mode = #tpu.pipeline_mode<synchronous>, transform_indices = @transform_10, window_bounds = array<i64: 384, 1536>}, {pipeline_mode = #tpu.pipeline_mode<synchronous>, transform_indices = @transform_11, window_bounds = array<i64: 1, 1536>}, {pipeline_mode = #tpu.pipeline_mode<synchronous>, transform_indices = @transform_12, window_bounds = array<i64: 1536, 384>}, {pipeline_mode = #tpu.pipeline_mode<synchronous>, transform_indices = @transform_13, window_bounds = array<i64: 1, 384>}, {pipeline_mode = #tpu.pipeline_mode<synchronous>, transform_indices = @transform_14, window_bounds = array<i64: 40, 5>}, {pipeline_mode = #tpu.pipeline_mode<synchronous>, transform_indices = @transform_15, window_bounds = array<i64: 40, 384>}, {transform_indices = @transform_16, window_bounds = array<i64: 1, 5, 384>}]} {
    %c0 = arith.constant 0 : index
    %c0_0 = arith.constant 0 : index
    %c0_1 = arith.constant 0 : index
    %0 = vector.load %arg1[%c0, %c0_0, %c0_1] : memref<1x5x384xf32, #tpu.memory_space<vmem>>, vector<1x5x384xf32>
    %1 = vector.shape_cast %0 : vector<1x5x384xf32> to vector<5x384xf32>
    %c0_2 = arith.constant 0 : index
    %c0_3 = arith.constant 0 : index
    %2 = vector.load %arg2[%c0_2, %c0_3] : memref<1x384xf32, #tpu.memory_space<vmem>>, vector<1x384xf32>
    %c0_4 = arith.constant 0 : index
    %c0_5 = arith.constant 0 : index
    %3 = vector.load %arg3[%c0_4, %c0_5] : memref<1x384xf32, #tpu.memory_space<vmem>>, vector<1x384xf32>
    %cst = arith.constant dense<0.000000e+00> : vector<5xf32>
    %4 = vector.multi_reduction <add>, %1, %cst [1] : vector<5x384xf32> to vector<5xf32>
    %5 = vector.shape_cast %4 : vector<5xf32> to vector<5x1xf32>
    %cst_6 = arith.constant 3.840000e+02 : f32
    %6 = vector.broadcast %cst_6 : f32 to vector<5x1xf32>
    %7 = arith.divf %5, %6 : vector<5x1xf32>
    %8 = vector.broadcast %7 : vector<5x1xf32> to vector<5x384xf32>
    %9 = arith.subf %1, %8 : vector<5x384xf32>
    %10 = arith.mulf %9, %9 : vector<5x384xf32>
    %cst_7 = arith.constant dense<0.000000e+00> : vector<5xf32>
    %11 = vector.multi_reduction <add>, %10, %cst_7 [1] : vector<5x384xf32> to vector<5xf32>
    %12 = vector.shape_cast %11 : vector<5xf32> to vector<5x1xf32>
    %cst_8 = arith.constant 3.840000e+02 : f32
    %13 = vector.broadcast %cst_8 : f32 to vector<5x1xf32>
    %14 = arith.divf %12, %13 : vector<5x1xf32>
    %cst_9 = arith.constant 9.99999974E-6 : f32
    %15 = vector.broadcast %cst_9 : f32 to vector<5x1xf32>
    %16 = arith.addf %14, %15 : vector<5x1xf32>
    %17 = math.rsqrt %16 : vector<5x1xf32>
    %18 = vector.broadcast %17 : vector<5x1xf32> to vector<5x384xf32>
    %19 = arith.mulf %9, %18 : vector<5x384xf32>
    %20 = vector.broadcast %2 : vector<1x384xf32> to vector<5x384xf32>
    %21 = arith.mulf %19, %20 : vector<5x384xf32>
    %22 = vector.broadcast %3 : vector<1x384xf32> to vector<5x384xf32>
    %23 = arith.addf %21, %22 : vector<5x384xf32>
    %c0_10 = arith.constant 0 : index
    %c0_11 = arith.constant 0 : index
    %24 = vector.load %arg4[%c0_10, %c0_11] : memref<384x384xf32, #tpu.memory_space<vmem>>, vector<384x384xf32>
    %cst_12 = arith.constant dense<0.000000e+00> : vector<5x384xf32>
    %25 = tpu.matmul %23, %24, %cst_12 {dimension_numbers = #tpu.dot_dimension_numbers<[1], [0], [0], [1], [0, 0, 1, 1], [], []>} : vector<5x384xf32>, vector<384x384xf32>, vector<5x384xf32> -> vector<5x384xf32>
    %c0_13 = arith.constant 0 : index
    %c0_14 = arith.constant 0 : index
    %26 = vector.load %arg5[%c0_13, %c0_14] : memref<384x384xf32, #tpu.memory_space<vmem>>, vector<384x384xf32>
    %cst_15 = arith.constant dense<0.000000e+00> : vector<5x384xf32>
    %27 = tpu.matmul %23, %26, %cst_15 {dimension_numbers = #tpu.dot_dimension_numbers<[1], [0], [0], [1], [0, 0, 1, 1], [], []>} : vector<5x384xf32>, vector<384x384xf32>, vector<5x384xf32> -> vector<5x384xf32>
    %c0_16 = arith.constant 0 : index
    %c0_17 = arith.constant 0 : index
    %28 = vector.load %arg6[%c0_16, %c0_17] : memref<384x384xf32, #tpu.memory_space<vmem>>, vector<384x384xf32>
    %cst_18 = arith.constant dense<0.000000e+00> : vector<5x384xf32>
    %29 = tpu.matmul %23, %28, %cst_18 {dimension_numbers = #tpu.dot_dimension_numbers<[1], [0], [0], [1], [0, 0, 1, 1], [], []>} : vector<5x384xf32>, vector<384x384xf32>, vector<5x384xf32> -> vector<5x384xf32>
    %c0_19 = arith.constant 0 : index
    %c0_20 = arith.constant 0 : index
    %30 = vector.load %arg15[%c0_19, %c0_20] : memref<40x5xf32, #tpu.memory_space<vmem>>, vector<40x5xf32>
    %c0_21 = arith.constant 0 : index
    %c0_22 = arith.constant 0 : index
    %31 = vector.load %arg16[%c0_21, %c0_22] : memref<40x384xf32, #tpu.memory_space<vmem>>, vector<40x384xf32>
    %cst_23 = arith.constant dense<0.000000e+00> : vector<40x384xf32>
    %32 = tpu.matmul %30, %25, %cst_23 {dimension_numbers = #tpu.dot_dimension_numbers<[1], [0], [0], [1], [0, 0, 1, 1], [], []>} : vector<40x5xf32>, vector<5x384xf32>, vector<40x384xf32> -> vector<40x384xf32>
    %33 = arith.mulf %32, %31 : vector<40x384xf32>
    %cst_24 = arith.constant dense<0.000000e+00> : vector<40x5xf32>
    %34 = tpu.matmul %33, %27, %cst_24 {dimension_numbers = #tpu.dot_dimension_numbers<[1], [1], [0], [0], [0, 0, 1, 0], [], []>} : vector<40x384xf32>, vector<5x384xf32>, vector<40x5xf32> -> vector<40x5xf32>
    %cst_25 = arith.constant 0.144337565 : f32
    %35 = vector.broadcast %cst_25 : f32 to vector<40x5xf32>
    %36 = arith.mulf %34, %35 : vector<40x5xf32>
    %cst_26 = arith.constant dense<0xFF800000> : vector<40xf32>
    %37 = vector.multi_reduction <maximumf>, %36, %cst_26 [1] : vector<40x5xf32> to vector<40xf32>
    %38 = vector.shape_cast %37 : vector<40xf32> to vector<40x1xf32>
    %39 = vector.broadcast %38 : vector<40x1xf32> to vector<40x5xf32>
    %40 = arith.subf %36, %39 : vector<40x5xf32>
    %41 = math.exp %40 : vector<40x5xf32>
    %cst_27 = arith.constant dense<0.000000e+00> : vector<40xf32>
    %42 = vector.multi_reduction <add>, %41, %cst_27 [1] : vector<40x5xf32> to vector<40xf32>
    %43 = vector.shape_cast %42 : vector<40xf32> to vector<40x1xf32>
    %44 = vector.broadcast %43 : vector<40x1xf32> to vector<40x5xf32>
    %45 = arith.divf %41, %44 : vector<40x5xf32>
    %cst_28 = arith.constant dense<0.000000e+00> : vector<40x384xf32>
    %46 = tpu.matmul %45, %29, %cst_28 {dimension_numbers = #tpu.dot_dimension_numbers<[1], [0], [0], [1], [0, 0, 1, 1], [], []>} : vector<40x5xf32>, vector<5x384xf32>, vector<40x384xf32> -> vector<40x384xf32>
    %47 = arith.mulf %46, %31 : vector<40x384xf32>
    %cst_29 = arith.constant dense<0.000000e+00> : vector<5x384xf32>
    %48 = tpu.matmul %30, %47, %cst_29 {dimension_numbers = #tpu.dot_dimension_numbers<[0], [0], [1], [1], [0, 1, 1, 1], [], []>} : vector<40x5xf32>, vector<40x384xf32>, vector<5x384xf32> -> vector<5x384xf32>
    %c0_30 = arith.constant 0 : index
    %c0_31 = arith.constant 0 : index
    %49 = vector.load %arg7[%c0_30, %c0_31] : memref<384x384xf32, #tpu.memory_space<vmem>>, vector<384x384xf32>
    %cst_32 = arith.constant dense<0.000000e+00> : vector<5x384xf32>
    %50 = tpu.matmul %48, %49, %cst_32 {dimension_numbers = #tpu.dot_dimension_numbers<[1], [0], [0], [1], [0, 0, 1, 1], [], []>} : vector<5x384xf32>, vector<384x384xf32>, vector<5x384xf32> -> vector<5x384xf32>
    %c0_33 = arith.constant 0 : index
    %c0_34 = arith.constant 0 : index
    %51 = vector.load %arg8[%c0_33, %c0_34] : memref<1x384xf32, #tpu.memory_space<vmem>>, vector<1x384xf32>
    %52 = vector.broadcast %51 : vector<1x384xf32> to vector<5x384xf32>
    %53 = arith.addf %50, %52 : vector<5x384xf32>
    %54 = arith.addf %53, %1 : vector<5x384xf32>
    %c0_35 = arith.constant 0 : index
    %c0_36 = arith.constant 0 : index
    %55 = vector.load %arg9[%c0_35, %c0_36] : memref<1x384xf32, #tpu.memory_space<vmem>>, vector<1x384xf32>
    %c0_37 = arith.constant 0 : index
    %c0_38 = arith.constant 0 : index
    %56 = vector.load %arg10[%c0_37, %c0_38] : memref<1x384xf32, #tpu.memory_space<vmem>>, vector<1x384xf32>
    %cst_39 = arith.constant dense<0.000000e+00> : vector<5xf32>
    %57 = vector.multi_reduction <add>, %54, %cst_39 [1] : vector<5x384xf32> to vector<5xf32>
    %58 = vector.shape_cast %57 : vector<5xf32> to vector<5x1xf32>
    %cst_40 = arith.constant 3.840000e+02 : f32
    %59 = vector.broadcast %cst_40 : f32 to vector<5x1xf32>
    %60 = arith.divf %58, %59 : vector<5x1xf32>
    %61 = vector.broadcast %60 : vector<5x1xf32> to vector<5x384xf32>
    %62 = arith.subf %54, %61 : vector<5x384xf32>
    %63 = arith.mulf %62, %62 : vector<5x384xf32>
    %cst_41 = arith.constant dense<0.000000e+00> : vector<5xf32>
    %64 = vector.multi_reduction <add>, %63, %cst_41 [1] : vector<5x384xf32> to vector<5xf32>
    %65 = vector.shape_cast %64 : vector<5xf32> to vector<5x1xf32>
    %cst_42 = arith.constant 3.840000e+02 : f32
    %66 = vector.broadcast %cst_42 : f32 to vector<5x1xf32>
    %67 = arith.divf %65, %66 : vector<5x1xf32>
    %cst_43 = arith.constant 9.99999974E-6 : f32
    %68 = vector.broadcast %cst_43 : f32 to vector<5x1xf32>
    %69 = arith.addf %67, %68 : vector<5x1xf32>
    %70 = math.rsqrt %69 : vector<5x1xf32>
    %71 = vector.broadcast %70 : vector<5x1xf32> to vector<5x384xf32>
    %72 = arith.mulf %62, %71 : vector<5x384xf32>
    %73 = vector.broadcast %55 : vector<1x384xf32> to vector<5x384xf32>
    %74 = arith.mulf %72, %73 : vector<5x384xf32>
    %75 = vector.broadcast %56 : vector<1x384xf32> to vector<5x384xf32>
    %76 = arith.addf %74, %75 : vector<5x384xf32>
    %c0_44 = arith.constant 0 : index
    %c0_45 = arith.constant 0 : index
    %77 = vector.load %arg11[%c0_44, %c0_45] : memref<384x1536xf32, #tpu.memory_space<vmem>>, vector<384x1536xf32>
    %cst_46 = arith.constant dense<0.000000e+00> : vector<5x1536xf32>
    %78 = tpu.matmul %76, %77, %cst_46 {dimension_numbers = #tpu.dot_dimension_numbers<[1], [0], [0], [1], [0, 0, 1, 1], [], []>} : vector<5x384xf32>, vector<384x1536xf32>, vector<5x1536xf32> -> vector<5x1536xf32>
    %c0_47 = arith.constant 0 : index
    %c0_48 = arith.constant 0 : index
    %79 = vector.load %arg12[%c0_47, %c0_48] : memref<1x1536xf32, #tpu.memory_space<vmem>>, vector<1x1536xf32>
    %80 = vector.broadcast %79 : vector<1x1536xf32> to vector<5x1536xf32>
    %81 = arith.addf %78, %80 : vector<5x1536xf32>
    %cst_49 = arith.constant 5.000000e-01 : f32
    %82 = vector.broadcast %cst_49 : f32 to vector<5x1536xf32>
    %83 = arith.mulf %82, %81 : vector<5x1536xf32>
    %cst_50 = arith.constant 0.707106769 : f32
    %84 = vector.broadcast %cst_50 : f32 to vector<5x1536xf32>
    %85 = arith.mulf %81, %84 : vector<5x1536xf32>
    %cst_51 = arith.constant 0.000000e+00 : f32
    %86 = vector.broadcast %cst_51 : f32 to vector<5x1536xf32>
    %87 = arith.cmpf olt, %85, %86 : vector<5x1536xf32>
    %cst_52 = arith.constant -1.000000e+00 : f32
    %cst_53 = arith.constant 1.000000e+00 : f32
    %88 = vector.broadcast %cst_52 : f32 to vector<5x1536xf32>
    %89 = vector.broadcast %cst_53 : f32 to vector<5x1536xf32>
    %90 = arith.select %87, %88, %89 : vector<5x1536xi1>, vector<5x1536xf32>
    %91 = math.absf %85 : vector<5x1536xf32>
    %cst_54 = arith.constant 0.327591091 : f32
    %92 = vector.broadcast %cst_54 : f32 to vector<5x1536xf32>
    %93 = arith.mulf %92, %91 : vector<5x1536xf32>
    %cst_55 = arith.constant 1.000000e+00 : f32
    %94 = vector.broadcast %cst_55 : f32 to vector<5x1536xf32>
    %95 = arith.addf %94, %93 : vector<5x1536xf32>
    %cst_56 = arith.constant 1.000000e+00 : f32
    %96 = vector.broadcast %cst_56 : f32 to vector<5x1536xf32>
    %97 = arith.divf %96, %95 : vector<5x1536xf32>
    %cst_57 = arith.constant 1.06140542 : f32
    %98 = vector.broadcast %cst_57 : f32 to vector<5x1536xf32>
    %99 = arith.mulf %98, %97 : vector<5x1536xf32>
    %cst_58 = arith.constant -1.45315206 : f32
    %100 = vector.broadcast %cst_58 : f32 to vector<5x1536xf32>
    %101 = arith.addf %99, %100 : vector<5x1536xf32>
    %102 = arith.mulf %101, %97 : vector<5x1536xf32>
    %cst_59 = arith.constant 1.42141378 : f32
    %103 = vector.broadcast %cst_59 : f32 to vector<5x1536xf32>
    %104 = arith.addf %102, %103 : vector<5x1536xf32>
    %105 = arith.mulf %104, %97 : vector<5x1536xf32>
    %cst_60 = arith.constant -0.284496725 : f32
    %106 = vector.broadcast %cst_60 : f32 to vector<5x1536xf32>
    %107 = arith.addf %105, %106 : vector<5x1536xf32>
    %108 = arith.mulf %107, %97 : vector<5x1536xf32>
    %cst_61 = arith.constant 0.254829586 : f32
    %109 = vector.broadcast %cst_61 : f32 to vector<5x1536xf32>
    %110 = arith.addf %108, %109 : vector<5x1536xf32>
    %111 = arith.mulf %110, %97 : vector<5x1536xf32>
    %cst_62 = arith.constant 0.000000e+00 : f32
    %112 = vector.broadcast %cst_62 : f32 to vector<5x1536xf32>
    %113 = arith.subf %112, %91 : vector<5x1536xf32>
    %114 = arith.mulf %113, %91 : vector<5x1536xf32>
    %115 = math.exp %114 : vector<5x1536xf32>
    %116 = arith.mulf %111, %115 : vector<5x1536xf32>
    %cst_63 = arith.constant 1.000000e+00 : f32
    %117 = vector.broadcast %cst_63 : f32 to vector<5x1536xf32>
    %118 = arith.subf %117, %116 : vector<5x1536xf32>
    %119 = arith.mulf %90, %118 : vector<5x1536xf32>
    %cst_64 = arith.constant 1.000000e+00 : f32
    %120 = vector.broadcast %cst_64 : f32 to vector<5x1536xf32>
    %121 = arith.addf %120, %119 : vector<5x1536xf32>
    %122 = arith.mulf %83, %121 : vector<5x1536xf32>
    %c0_65 = arith.constant 0 : index
    %c0_66 = arith.constant 0 : index
    %123 = vector.load %arg13[%c0_65, %c0_66] : memref<1536x384xf32, #tpu.memory_space<vmem>>, vector<1536x384xf32>
    %cst_67 = arith.constant dense<0.000000e+00> : vector<5x384xf32>
    %124 = tpu.matmul %122, %123, %cst_67 {dimension_numbers = #tpu.dot_dimension_numbers<[1], [0], [0], [1], [0, 0, 1, 1], [], []>} : vector<5x1536xf32>, vector<1536x384xf32>, vector<5x384xf32> -> vector<5x384xf32>
    %c0_68 = arith.constant 0 : index
    %c0_69 = arith.constant 0 : index
    %125 = vector.load %arg14[%c0_68, %c0_69] : memref<1x384xf32, #tpu.memory_space<vmem>>, vector<1x384xf32>
    %126 = vector.broadcast %125 : vector<1x384xf32> to vector<5x384xf32>
    %127 = arith.addf %124, %126 : vector<5x384xf32>
    %128 = arith.addf %127, %54 : vector<5x384xf32>
    %c0_70 = arith.constant 0 : index
    %c0_71 = arith.constant 0 : index
    %c0_72 = arith.constant 0 : index
    %129 = vector.load %arg17[%c0_70, %c0_71, %c0_72] : memref<1x5x384xf32, #tpu.memory_space<vmem>>, vector<1x5x384xf32>
    %130 = vector.shape_cast %129 : vector<1x5x384xf32> to vector<5x384xf32>
    %131 = vector.shape_cast %128 : vector<5x384xf32> to vector<1x5x384xf32>
    tpu.vector_store %arg17[%c0_70, %c0_71, %c0_72], %131 {strides = array<i32>} : memref<1x5x384xf32, #tpu.memory_space<vmem>>, vector<1x5x384xf32>,
    return
  }
  func.func @transform_0(%arg0: i32) -> (i32, i32, i32) {
    %c0_i32 = arith.constant 0 : i32
    %c0_i32_0 = arith.constant 0 : i32
    %c0_i32_1 = arith.constant 0 : i32
    return %arg0, %c0_i32, %c0_i32_0 : i32, i32, i32
  }
  func.func @transform_1(%arg0: i32) -> (i32, i32) {
    %c0_i32 = arith.constant 0 : i32
    %c0_i32_0 = arith.constant 0 : i32
    %c0_i32_1 = arith.constant 0 : i32
    return %c0_i32, %c0_i32_0 : i32, i32
  }
  func.func @transform_2(%arg0: i32) -> (i32, i32) {
    %c0_i32 = arith.constant 0 : i32
    %c0_i32_0 = arith.constant 0 : i32
    %c0_i32_1 = arith.constant 0 : i32
    return %c0_i32, %c0_i32_0 : i32, i32
  }
  func.func @transform_3(%arg0: i32) -> (i32, i32) {
    %c0_i32 = arith.constant 0 : i32
    %c0_i32_0 = arith.constant 0 : i32
    %c0_i32_1 = arith.constant 0 : i32
    return %c0_i32, %c0_i32_0 : i32, i32
  }
  func.func @transform_4(%arg0: i32) -> (i32, i32) {
    %c0_i32 = arith.constant 0 : i32
    %c0_i32_0 = arith.constant 0 : i32
    %c0_i32_1 = arith.constant 0 : i32
    return %c0_i32, %c0_i32_0 : i32, i32
  }
  func.func @transform_5(%arg0: i32) -> (i32, i32) {
    %c0_i32 = arith.constant 0 : i32
    %c0_i32_0 = arith.constant 0 : i32
    %c0_i32_1 = arith.constant 0 : i32
    return %c0_i32, %c0_i32_0 : i32, i32
  }
  func.func @transform_6(%arg0: i32) -> (i32, i32) {
    %c0_i32 = arith.constant 0 : i32
    %c0_i32_0 = arith.constant 0 : i32
    %c0_i32_1 = arith.constant 0 : i32
    return %c0_i32, %c0_i32_0 : i32, i32
  }
  func.func @transform_7(%arg0: i32) -> (i32, i32) {
    %c0_i32 = arith.constant 0 : i32
    %c0_i32_0 = arith.constant 0 : i32
    %c0_i32_1 = arith.constant 0 : i32
    return %c0_i32, %c0_i32_0 : i32, i32
  }
  func.func @transform_8(%arg0: i32) -> (i32, i32) {
    %c0_i32 = arith.constant 0 : i32
    %c0_i32_0 = arith.constant 0 : i32
    %c0_i32_1 = arith.constant 0 : i32
    return %c0_i32, %c0_i32_0 : i32, i32
  }
  func.func @transform_9(%arg0: i32) -> (i32, i32) {
    %c0_i32 = arith.constant 0 : i32
    %c0_i32_0 = arith.constant 0 : i32
    %c0_i32_1 = arith.constant 0 : i32
    return %c0_i32, %c0_i32_0 : i32, i32
  }
  func.func @transform_10(%arg0: i32) -> (i32, i32) {
    %c0_i32 = arith.constant 0 : i32
    %c0_i32_0 = arith.constant 0 : i32
    %c0_i32_1 = arith.constant 0 : i32
    return %c0_i32, %c0_i32_0 : i32, i32
  }
  func.func @transform_11(%arg0: i32) -> (i32, i32) {
    %c0_i32 = arith.constant 0 : i32
    %c0_i32_0 = arith.constant 0 : i32
    %c0_i32_1 = arith.constant 0 : i32
    return %c0_i32, %c0_i32_0 : i32, i32
  }
  func.func @transform_12(%arg0: i32) -> (i32, i32) {
    %c0_i32 = arith.constant 0 : i32
    %c0_i32_0 = arith.constant 0 : i32
    %c0_i32_1 = arith.constant 0 : i32
    return %c0_i32, %c0_i32_0 : i32, i32
  }
  func.func @transform_13(%arg0: i32) -> (i32, i32) {
    %c0_i32 = arith.constant 0 : i32
    %c0_i32_0 = arith.constant 0 : i32
    %c0_i32_1 = arith.constant 0 : i32
    return %c0_i32, %c0_i32_0 : i32, i32
  }
  func.func @transform_14(%arg0: i32) -> (i32, i32) {
    %c0_i32 = arith.constant 0 : i32
    %c0_i32_0 = arith.constant 0 : i32
    %c0_i32_1 = arith.constant 0 : i32
    return %c0_i32, %c0_i32_0 : i32, i32
  }
  func.func @transform_15(%arg0: i32) -> (i32, i32) {
    %c0_i32 = arith.constant 0 : i32
    %c0_i32_0 = arith.constant 0 : i32
    %c0_i32_1 = arith.constant 0 : i32
    return %c0_i32, %c0_i32_0 : i32, i32
  }
  func.func @transform_16(%arg0: i32) -> (i32, i32, i32) {
    %c0_i32 = arith.constant 0 : i32
    %c0_i32_0 = arith.constant 0 : i32
    %c0_i32_1 = arith.constant 0 : i32
    return %arg0, %c0_i32, %c0_i32_0 : i32, i32, i32
  }
}

</mosaic_0001>

<llo_original>
// kernel: tile.9
$region0: #{tile.9}
  %s0 = inlined_call_operand.vmem [shape: f32[8,5,5], index: 0, kind: input, shape index: {}]
  %s1 = inlined_call_operand.vmem [shape: f32[40,5], index: 1, kind: output, shape index: {}]
  %v2 = vld [vmem:[%s0] ss:$8 sm:$0xf]
  %s3 = scalar_lea.vmem %s0, 28
  %v4 = vld [vmem:[%s3] sm:$0x10]
  %vm5 = vcmask 1044484
  %v6 = vsel %vm5, %v4, %v2
  %vm7 = vcmask 39936
  %8 = vst.msk [vmem:[%s1] sm:$0x1f] %vm7, %v6
  %s9 = scalar_lea.vmem %s0, 7
  %v10 = vld [vmem:[%s9] ss:$8 sm:$0xf]
  %s11 = scalar_lea.vmem %s0, 35
  %v12 = vld [vmem:[%s11] sm:$0x10]
  %vm13 = vcmask 1044484
  %v14 = vsel %vm13, %v12, %v10
  %15 = vrot.lane.b32.xlu0 %v14, 35
  %v16 = vpop.permute.xlu0 %15
  %vm17 = vcmask 326936
  %18 = vst.msk [vmem:[%s1] sm:$0x1f] %vm17, %v16
  %s19 = scalar_lea.vmem %s0, 6
  %v20 = vld [vmem:[%s19] ss:$8 sm:$0xf]
  %s21 = scalar_lea.vmem %s0, 34
  %v22 = vld [vmem:[%s21] sm:$0x10]
  %vm23 = vcmask 1044484
  %v24 = vsel %vm23, %v22, %v20
  %25 = vrot.lane.b32.xlu0 %v24, 30
  %v26 = vpop.permute.xlu0 %25
  %vm27 = vcmask 285936
  %28 = vst.msk [vmem:[%s1] sm:$0x1f] %vm27, %v26
  %s29 = scalar_lea.vmem %s0, 5
  %v30 = vld [vmem:[%s29] ss:$8 sm:$0xf]
  %s31 = scalar_lea.vmem %s0, 33
  %v32 = vld [vmem:[%s31] sm:$0x10]
  %vm33 = vcmask 1044484
  %v34 = vsel %vm33, %v32, %v30
  %35 = vrot.lane.b32.xlu0 %v34, 25
  %v36 = vpop.permute.xlu0 %35
  %vm37 = vcmask 244936
  %38 = vst.msk [vmem:[%s1] sm:$0x1f] %vm37, %v36
  %s39 = scalar_lea.vmem %s0, 4
  %v40 = vld [vmem:[%s39] ss:$8 sm:$0xf]
  %s41 = scalar_lea.vmem %s0, 32
  %v42 = vld [vmem:[%s41] sm:$0x10]
  %vm43 = vcmask 1044484
  %v44 = vsel %vm43, %v42, %v40
  %45 = vrot.lane.b32.xlu0 %v44, 20
  %v46 = vpop.permute.xlu0 %45
  %vm47 = vcmask 203936
  %48 = vst.msk [vmem:[%s1] sm:$0x1f] %vm47, %v46
  %s49 = scalar_lea.vmem %s0, 3
  %v50 = vld [vmem:[%s49] ss:$8 sm:$0xf]
  %s51 = scalar_lea.vmem %s0, 31
  %v52 = vld [vmem:[%s51] sm:$0x10]
  %vm53 = vcmask 1044484
  %v54 = vsel %vm53, %v52, %v50
  %55 = vrot.lane.b32.xlu0 %v54, 15
  %v56 = vpop.permute.xlu0 %55
  %vm57 = vcmask 162936
  %58 = vst.msk [vmem:[%s1] sm:$0x1f] %vm57, %v56
  %s59 = scalar_lea.vmem %s0, 2
  %v60 = vld [vmem:[%s59] ss:$8 sm:$0xf]
  %s61 = scalar_lea.vmem %s0, 30
  %v62 = vld [vmem:[%s61] sm:$0x10]
  %vm63 = vcmask 1044484
  %v64 = vsel %vm63, %v62, %v60
  %65 = vrot.lane.b32.xlu0 %v64, 10
  %v66 = vpop.permute.xlu0 %65
  %vm67 = vcmask 121936
  %68 = vst.msk [vmem:[%s1] sm:$0x1f] %vm67, %v66
  %s69 = scalar_lea.vmem %s0, 1
  %v70 = vld [vmem:[%s69] ss:$8 sm:$0xf]
  %s71 = scalar_lea.vmem %s0, 29
  %v72 = vld [vmem:[%s71] sm:$0x10]
  %vm73 = vcmask 1044484
  %v74 = vsel %vm73, %v72, %v70
  %75 = vrot.lane.b32.xlu0 %v74, 5
  %v76 = vpop.permute.xlu0 %75
  %vm77 = vcmask 80936
  %78 = vst.msk [vmem:[%s1] sm:$0x1f] %vm77, %v76

// kernel: vit_encoder_block.1
$region0: #{vit_encoder_block.1}
  #allocation0 [shape = 'u32[]', space=smem, size = 0x4, offset = 0x4, fixed_abs, tag = 'smem constant byte address 0x4 - core index']
  #allocation1 [shape = 'u32[144,128]{1,0:T(1,128)}', space=vmem, size = 0x12000, scoped, tag = 'internal scratch']
  %s0 = inlined_call_operand.vmem [shape: f32[2,5,384], index: 0, kind: input, shape index: {}]
  %s1 = inlined_call_operand.hbm [shape: f32[1,384], index: 1, kind: input, shape index: {}]
  %s2 = inlined_call_operand.hbm [shape: f32[1,384], index: 2, kind: input, shape index: {}]
  %s3 = inlined_call_operand.hbm [shape: f32[384,384], index: 3, kind: input, shape index: {}]
  %s4 = inlined_call_operand.hbm [shape: f32[384,384], index: 4, kind: input, shape index: {}]
  %s5 = inlined_call_operand.hbm [shape: f32[384,384], index: 5, kind: input, shape index: {}]
  %s6 = inlined_call_operand.hbm [shape: f32[384,384], index: 6, kind: input, shape index: {}]
  %s7 = inlined_call_operand.hbm [shape: f32[1,384], index: 7, kind: input, shape index: {}]
  %s8 = inlined_call_operand.hbm [shape: f32[1,384], index: 8, kind: input, shape index: {}]
  %s9 = inlined_call_operand.hbm [shape: f32[1,384], index: 9, kind: input, shape index: {}]
  %s10 = inlined_call_operand.hbm [shape: f32[384,1536], index: 10, kind: input, shape index: {}]
  %s11 = inlined_call_operand.hbm [shape: f32[1,1536], index: 11, kind: input, shape index: {}]
  %s12 = inlined_call_operand.hbm [shape: f32[1536,384], index: 12, kind: input, shape index: {}]
  %s13 = inlined_call_operand.hbm [shape: f32[1,384], index: 13, kind: input, shape index: {}]
  %s14 = inlined_call_operand.vmem [shape: f32[40,5], index: 14, kind: input, shape index: {}]
  %s15 = inlined_call_operand.vmem [shape: f32[40,384], index: 15, kind: input, shape index: {}]
  %s16 = inlined_call_operand.vmem [shape: f32[2,5,384], index: 16, kind: output, shape index: {}]
  %s17 = sld [smem:[#allocation0]]
  $region149: #{vit_encoder_block.1} parent=0
    _
  %s19 = ssub.s32 1, %s17
  %s20 = scalar_select 0, %s19, %s17
  $region1: #{vit_encoder_block.1} parent=0
    #allocation2 [shape = 'u8[1536]{0}', space=vmem, size = 0x800, scoped, tag = 'input window, operand 1, single buffered']
    #allocation3 [shape = 's32[2]{0}', space=sflag, size = 0x8, scoped, tag = 'scoped memory for vit_encoder_block.1']
    #allocation4 [shape = 'u8[1536]{0}', space=vmem, size = 0x800, scoped, tag = 'input window, operand 2, single buffered']
    #allocation5 [shape = 's32[1]{0}', space=sflag, size = 0x4, scoped, tag = 'scoped memory for vit_encoder_block.1']
    #allocation6 [shape = 'u8[589824]{0}', space=vmem, size = 0x90000, scoped, tag = 'input window, operand 3, single buffered']
    #allocation7 [shape = 'u8[589824]{0}', space=vmem, size = 0x90000, scoped, tag = 'input window, operand 4, single buffered']
    #allocation8 [shape = 's32[1]{0}', space=sflag, size = 0x4, scoped, tag = 'scoped memory for vit_encoder_block.1']
    #allocation9 [shape = 'u8[589824]{0}', space=vmem, size = 0x90000, scoped, tag = 'input window, operand 5, single buffered']
    #allocation10 [shape = 'u8[589824]{0}', space=vmem, size = 0x90000, scoped, tag = 'input window, operand 6, single buffered']
    #allocation11 [shape = 's32[1]{0}', space=sflag, size = 0x4, scoped, tag = 'scoped memory for vit_encoder_block.1']
    #allocation12 [shape = 'u8[1536]{0}', space=vmem, size = 0x800, scoped, tag = 'input window, operand 7, single buffered']
    #allocation13 [shape = 'u8[1536]{0}', space=vmem, size = 0x800, scoped, tag = 'input window, operand 8, single buffered']
    #allocation14 [shape = 's32[1]{0}', space=sflag, size = 0x4, scoped, tag = 'scoped memory for vit_encoder_block.1']
    #allocation15 [shape = 'u8[1536]{0}', space=vmem, size = 0x800, scoped, tag = 'input window, operand 9, single buffered']
    #allocation16 [shape = 'u8[2359296]{0}', space=vmem, size = 0x240000, scoped, tag = 'input window, operand 10, single buffered']
    #allocation17 [shape = 's32[1]{0}', space=sflag, size = 0x4, scoped, tag = 'scoped memory for vit_encoder_block.1']
    #allocation18 [shape = 'u8[6144]{0}', space=vmem, size = 0x1800, scoped, tag = 'input window, operand 11, single buffered']
    #allocation19 [shape = 'u8[2359296]{0}', space=vmem, size = 0x240000, scoped, tag = 'input window, operand 12, single buffered']
    #allocation20 [shape = 's32[1]{0}', space=sflag, size = 0x4, scoped, tag = 'scoped memory for vit_encoder_block.1']
    #allocation21 [shape = 'u8[1536]{0}', space=vmem, size = 0x800, scoped, tag = 'input window, operand 13, single buffered']
    %21 = vsyncpa [#allocation3], 0
    %22 = vsyncpa [#allocation5], 0
    %23 = vsyncpa [#allocation8], 0
    %24 = vsyncpa [#allocation11], 0
    %25 = vsyncpa [#allocation14], 0
    %26 = vsyncpa [#allocation17], 0
    %27 = vsyncpa [#allocation20], 0
    loop: start=0, step=1, limit=4
    $region2: #{vit_encoder_block.1} parent=1 // loop_pre_header
      _
    $region3: #{vit_encoder_block.1} parent=1 // loop_header
      %s29 = sphi 0, %s33
      %p30 = scmp.ge.s32.totalorder %s29, 4
      %s39 = sphi 0, %s41
      %s42 = sphi 0, %s39
      %s43 = sphi 0, %s42
      %s59 = sphi 0, %s43
      %s63 = sphi 0, %s63
      %s65 = sphi 0, %s63
      %s66 = sphi 0, %s65
      %s80 = sphi 0, %s66
      %s84 = sphi 0, %s84
      %s86 = sphi 0, %s84
      %s87 = sphi 0, %s86
      %s101 = sphi 0, %s87
      %s105 = sphi 0, %s105
      %s107 = sphi 0, %s105
      %s108 = sphi 0, %s107
      %s122 = sphi 0, %s108
      %s126 = sphi 0, %s126
      %s128 = sphi 0, %s126
      %s129 = sphi 0, %s128
      %s143 = sphi 0, %s129
      %s147 = sphi 0, %s147
      %s149 = sphi 0, %s147
      %s150 = sphi 0, %s149
      %s164 = sphi 0, %s150
      %s168 = sphi 0, %s168
      %s170 = sphi 0, %s168
      %s171 = sphi 0, %s170
      %s185 = sphi 0, %s171
      %s189 = sphi 0, %s189
      %s191 = sphi 0, %s189
      %s192 = sphi 0, %s191
      %s206 = sphi 0, %s192
      %s210 = sphi 0, %s210
      %s212 = sphi 0, %s210
      %s213 = sphi 0, %s212
      %s227 = sphi 0, %s213
      %s231 = sphi 0, %s231
      %s233 = sphi 0, %s231
      %s234 = sphi 0, %s233
      %s248 = sphi 0, %s234
      %s252 = sphi 0, %s252
      %s254 = sphi 0, %s252
      %s255 = sphi 0, %s254
      %s269 = sphi 0, %s255
      %s273 = sphi 0, %s273
      %s275 = sphi 0, %s273
      %s276 = sphi 0, %s275
      %s290 = sphi 0, %s276
      %s294 = sphi 0, %s294
      %s296 = sphi 0, %s294
      %s297 = sphi 0, %s296
      %s311 = sphi 0, %s297
      %s315 = sphi 0, %s315
      %s317 = sphi 0, %s315
      %s318 = sphi 0, %s317
      %s332 = sphi 0, %s318
      %s336 = sphi 0, %s336
      %s338 = sphi 0, %s336
      %s339 = sphi 0, %s338
      %s353 = sphi 0, %s339
      %s357 = sphi 0, %s357
      %s359 = sphi 0, %s357
      %s360 = sphi 0, %s359
      %s374 = sphi 0, %s360
      %s380 = sphi 0, %s382
      %s383 = sphi 0, %s380
      %s384 = sphi 0, %s383
      %s400 = sphi 0, %s384
    $region4: #{vit_encoder_block.1} parent=1 // loop_header_branch
      %32 = sbr.rel (%p30) target = $region8
    $region5: #{vit_encoder_block.1} parent=1 // loop_body
      %s34 = ssub.s32 %s29, 1
      %s35 = ssub.s32 %s29, 2
      %s36 = sadd.s32 %s29, 1
      %s37 = ssub.s32 %s29, %s36
      %p38 = scmp.eq.s32.totalorder %s37, 0
      %s40 = sadd.s32 %s39, 1
      %s41 = scalar_select %p38, %s39, %s40
      %p44 = pneg %p38
      %p45 = scmp.eq.s32.totalorder %s29, 1
      %p46 = por %p44, %p45
      %p47 = scmp.ne.s32.totalorder %s39, %s42
      %p48 = scmp.eq.s32.totalorder %s29, 0
      %p49 = por %p47, %p48
      %p50 = scmp.ne.s32.totalorder %s39, %s42
      %p51 = scmp.eq.s32.totalorder %s34, 1
      %p52 = por %p50, %p51
      %p53 = scmp.ne.s32.totalorder %s42, %s43
      %p54 = scmp.eq.s32.totalorder %s34, 0
      %p55 = por %p53, %p54
      %p56 = scmp.ne.s32.totalorder %s42, %s43
      %p57 = scmp.eq.s32.totalorder %s35, 1
      %p58 = por %p56, %p57
      %p60 = scmp.ne.s32.totalorder %s43, %s59
      %p61 = scmp.eq.s32.totalorder %s35, 0
      %p62 = por %p60, %p61
      %s64 = sadd.s32 %s63, 1
      %p67 = scmp.eq.s32.totalorder %s29, 1
      %p68 = scmp.ne.s32.totalorder %s63, %s65
      %p69 = scmp.eq.s32.totalorder %s29, 0
      %p70 = por %p68, %p69
      %p71 = scmp.ne.s32.totalorder %s63, %s65
      %p72 = scmp.eq.s32.totalorder %s34, 1
      %p73 = por %p71, %p72
      %p74 = scmp.ne.s32.totalorder %s65, %s66
      %p75 = scmp.eq.s32.totalorder %s34, 0
      %p76 = por %p74, %p75
      %p77 = scmp.ne.s32.totalorder %s65, %s66
      %p78 = scmp.eq.s32.totalorder %s35, 1
      %p79 = por %p77, %p78
      %p81 = scmp.ne.s32.totalorder %s66, %s80
      %p82 = scmp.eq.s32.totalorder %s35, 0
      %p83 = por %p81, %p82
      %s85 = sadd.s32 %s84, 1
      %p88 = scmp.eq.s32.totalorder %s29, 1
      %p89 = scmp.ne.s32.totalorder %s84, %s86
      %p90 = scmp.eq.s32.totalorder %s29, 0
      %p91 = por %p89, %p90
      %p92 = scmp.ne.s32.totalorder %s84, %s86
      %p93 = scmp.eq.s32.totalorder %s34, 1
      %p94 = por %p92, %p93
      %p95 = scmp.ne.s32.totalorder %s86, %s87
      %p96 = scmp.eq.s32.totalorder %s34, 0
      %p97 = por %p95, %p96
      %p98 = scmp.ne.s32.totalorder %s86, %s87
      %p99 = scmp.eq.s32.totalorder %s35, 1
      %p100 = por %p98, %p99
      %p102 = scmp.ne.s32.totalorder %s87, %s101
      %p103 = scmp.eq.s32.totalorder %s35, 0
      %p104 = por %p102, %p103
      %s106 = sadd.s32 %s105, 1
      %p109 = scmp.eq.s32.totalorder %s29, 1
      %p110 = scmp.ne.s32.totalorder %s105, %s107
      %p111 = scmp.eq.s32.totalorder %s29, 0
      %p112 = por %p110, %p111
      %p113 = scmp.ne.s32.totalorder %s105, %s107
      %p114 = scmp.eq.s32.totalorder %s34, 1
      %p115 = por %p113, %p114
      %p116 = scmp.ne.s32.totalorder %s107, %s108
      %p117 = scmp.eq.s32.totalorder %s34, 0
      %p118 = por %p116, %p117
      %p119 = scmp.ne.s32.totalorder %s107, %s108
      %p120 = scmp.eq.s32.totalorder %s35, 1
      %p121 = por %p119, %p120
      %p123 = scmp.ne.s32.totalorder %s108, %s122
      %p124 = scmp.eq.s32.totalorder %s35, 0
      %p125 = por %p123, %p124
      %s127 = sadd.s32 %s126, 1
      %p130 = scmp.eq.s32.totalorder %s29, 1
      %p131 = scmp.ne.s32.totalorder %s126, %s128
      %p132 = scmp.eq.s32.totalorder %s29, 0
      %p133 = por %p131, %p132
      %p134 = scmp.ne.s32.totalorder %s126, %s128
      %p135 = scmp.eq.s32.totalorder %s34, 1
      %p136 = por %p134, %p135
      %p137 = scmp.ne.s32.totalorder %s128, %s129
      %p138 = scmp.eq.s32.totalorder %s34, 0
      %p139 = por %p137, %p138
      %p140 = scmp.ne.s32.totalorder %s128, %s129
      %p141 = scmp.eq.s32.totalorder %s35, 1
      %p142 = por %p140, %p141
      %p144 = scmp.ne.s32.totalorder %s129, %s143
      %p145 = scmp.eq.s32.totalorder %s35, 0
      %p146 = por %p144, %p145
      %s148 = sadd.s32 %s147, 1
      %p151 = scmp.eq.s32.totalorder %s29, 1
      %p152 = scmp.ne.s32.totalorder %s147, %s149
      %p153 = scmp.eq.s32.totalorder %s29, 0
      %p154 = por %p152, %p153
      %p155 = scmp.ne.s32.totalorder %s147, %s149
      %p156 = scmp.eq.s32.totalorder %s34, 1
      %p157 = por %p155, %p156
      %p158 = scmp.ne.s32.totalorder %s149, %s150
      %p159 = scmp.eq.s32.totalorder %s34, 0
      %p160 = por %p158, %p159
      %p161 = scmp.ne.s32.totalorder %s149, %s150
      %p162 = scmp.eq.s32.totalorder %s35, 1
      %p163 = por %p161, %p162
      %p165 = scmp.ne.s32.totalorder %s150, %s164
      %p166 = scmp.eq.s32.totalorder %s35, 0
      %p167 = por %p165, %p166
      %s169 = sadd.s32 %s168, 1
      %p172 = scmp.eq.s32.totalorder %s29, 1
      %p173 = scmp.ne.s32.totalorder %s168, %s170
      %p174 = scmp.eq.s32.totalorder %s29, 0
      %p175 = por %p173, %p174
      %p176 = scmp.ne.s32.totalorder %s168, %s170
      %p177 = scmp.eq.s32.totalorder %s34, 1
      %p178 = por %p176, %p177
      %p179 = scmp.ne.s32.totalorder %s170, %s171
      %p180 = scmp.eq.s32.totalorder %s34, 0
      %p181 = por %p179, %p180
      %p182 = scmp.ne.s32.totalorder %s170, %s171
      %p183 = scmp.eq.s32.totalorder %s35, 1
      %p184 = por %p182, %p183
      %p186 = scmp.ne.s32.totalorder %s171, %s185
      %p187 = scmp.eq.s32.totalorder %s35, 0
      %p188 = por %p186, %p187
      %s190 = sadd.s32 %s189, 1
      %p193 = scmp.eq.s32.totalorder %s29, 1
      %p194 = scmp.ne.s32.totalorder %s189, %s191
      %p195 = scmp.eq.s32.totalorder %s29, 0
      %p196 = por %p194, %p195
      %p197 = scmp.ne.s32.totalorder %s189, %s191
      %p198 = scmp.eq.s32.totalorder %s34, 1
      %p199 = por %p197, %p198
      %p200 = scmp.ne.s32.totalorder %s191, %s192
      %p201 = scmp.eq.s32.totalorder %s34, 0
      %p202 = por %p200, %p201
      %p203 = scmp.ne.s32.totalorder %s191, %s192
      %p204 = scmp.eq.s32.totalorder %s35, 1
      %p205 = por %p203, %p204
      %p207 = scmp.ne.s32.totalorder %s192, %s206
      %p208 = scmp.eq.s32.totalorder %s35, 0
      %p209 = por %p207, %p208
      %s211 = sadd.s32 %s210, 1
      %p214 = scmp.eq.s32.totalorder %s29, 1
      %p215 = scmp.ne.s32.totalorder %s210, %s212
      %p216 = scmp.eq.s32.totalorder %s29, 0
      %p217 = por %p215, %p216
      %p218 = scmp.ne.s32.totalorder %s210, %s212
      %p219 = scmp.eq.s32.totalorder %s34, 1
      %p220 = por %p218, %p219
      %p221 = scmp.ne.s32.totalorder %s212, %s213
      %p222 = scmp.eq.s32.totalorder %s34, 0
      %p223 = por %p221, %p222
      %p224 = scmp.ne.s32.totalorder %s212, %s213
      %p225 = scmp.eq.s32.totalorder %s35, 1
      %p226 = por %p224, %p225
      %p228 = scmp.ne.s32.totalorder %s213, %s227
      %p229 = scmp.eq.s32.totalorder %s35, 0
      %p230 = por %p228, %p229
      %s232 = sadd.s32 %s231, 1
      %p235 = scmp.eq.s32.totalorder %s29, 1
      %p236 = scmp.ne.s32.totalorder %s231, %s233
      %p237 = scmp.eq.s32.totalorder %s29, 0
      %p238 = por %p236, %p237
      %p239 = scmp.ne.s32.totalorder %s231, %s233
      %p240 = scmp.eq.s32.totalorder %s34, 1
      %p241 = por %p239, %p240
      %p242 = scmp.ne.s32.totalorder %s233, %s234
      %p243 = scmp.eq.s32.totalorder %s34, 0
      %p244 = por %p242, %p243
      %p245 = scmp.ne.s32.totalorder %s233, %s234
      %p246 = scmp.eq.s32.totalorder %s35, 1
      %p247 = por %p245, %p246
      %p249 = scmp.ne.s32.totalorder %s234, %s248
      %p250 = scmp.eq.s32.totalorder %s35, 0
      %p251 = por %p249, %p250
      %s253 = sadd.s32 %s252, 1
      %p256 = scmp.eq.s32.totalorder %s29, 1
      %p257 = scmp.ne.s32.totalorder %s252, %s254
      %p258 = scmp.eq.s32.totalorder %s29, 0
      %p259 = por %p257, %p258
      %p260 = scmp.ne.s32.totalorder %s252, %s254
      %p261 = scmp.eq.s32.totalorder %s34, 1
      %p262 = por %p260, %p261
      %p263 = scmp.ne.s32.totalorder %s254, %s255
      %p264 = scmp.eq.s32.totalorder %s34, 0
      %p265 = por %p263, %p264
      %p266 = scmp.ne.s32.totalorder %s254, %s255
      %p267 = scmp.eq.s32.totalorder %s35, 1
      %p268 = por %p266, %p267
      %p270 = scmp.ne.s32.totalorder %s255, %s269
      %p271 = scmp.eq.s32.totalorder %s35, 0
      %p272 = por %p270, %p271
      %s274 = sadd.s32 %s273, 1
      %p277 = scmp.eq.s32.totalorder %s29, 1
      %p278 = scmp.ne.s32.totalorder %s273, %s275
      %p279 = scmp.eq.s32.totalorder %s29, 0
      %p280 = por %p278, %p279
      %p281 = scmp.ne.s32.totalorder %s273, %s275
      %p282 = scmp.eq.s32.totalorder %s34, 1
      %p283 = por %p281, %p282
      %p284 = scmp.ne.s32.totalorder %s275, %s276
      %p285 = scmp.eq.s32.totalorder %s34, 0
      %p286 = por %p284, %p285
      %p287 = scmp.ne.s32.totalorder %s275, %s276
      %p288 = scmp.eq.s32.totalorder %s35, 1
      %p289 = por %p287, %p288
      %p291 = scmp.ne.s32.totalorder %s276, %s290
      %p292 = scmp.eq.s32.totalorder %s35, 0
      %p293 = por %p291, %p292
      %s295 = sadd.s32 %s294, 1
      %p298 = scmp.eq.s32.totalorder %s29, 1
      %p299 = scmp.ne.s32.totalorder %s294, %s296
      %p300 = scmp.eq.s32.totalorder %s29, 0
      %p301 = por %p299, %p300
      %p302 = scmp.ne.s32.totalorder %s294, %s296
      %p303 = scmp.eq.s32.totalorder %s34, 1
      %p304 = por %p302, %p303
      %p305 = scmp.ne.s32.totalorder %s296, %s297
      %p306 = scmp.eq.s32.totalorder %s34, 0
      %p307 = por %p305, %p306
      %p308 = scmp.ne.s32.totalorder %s296, %s297
      %p309 = scmp.eq.s32.totalorder %s35, 1
      %p310 = por %p308, %p309
      %p312 = scmp.ne.s32.totalorder %s297, %s311
      %p313 = scmp.eq.s32.totalorder %s35, 0
      %p314 = por %p312, %p313
      %s316 = sadd.s32 %s315, 1
      %p319 = scmp.eq.s32.totalorder %s29, 1
      %p320 = scmp.ne.s32.totalorder %s315, %s317
      %p321 = scmp.eq.s32.totalorder %s29, 0
      %p322 = por %p320, %p321
      %p323 = scmp.ne.s32.totalorder %s315, %s317
      %p324 = scmp.eq.s32.totalorder %s34, 1
      %p325 = por %p323, %p324
      %p326 = scmp.ne.s32.totalorder %s317, %s318
      %p327 = scmp.eq.s32.totalorder %s34, 0
      %p328 = por %p326, %p327
      %p329 = scmp.ne.s32.totalorder %s317, %s318
      %p330 = scmp.eq.s32.totalorder %s35, 1
      %p331 = por %p329, %p330
      %p333 = scmp.ne.s32.totalorder %s318, %s332
      %p334 = scmp.eq.s32.totalorder %s35, 0
      %p335 = por %p333, %p334
      %s337 = sadd.s32 %s336, 1
      %p340 = scmp.eq.s32.totalorder %s29, 1
      %p341 = scmp.ne.s32.totalorder %s336, %s338
      %p342 = scmp.eq.s32.totalorder %s29, 0
      %p343 = por %p341, %p342
      %p344 = scmp.ne.s32.totalorder %s336, %s338
      %p345 = scmp.eq.s32.totalorder %s34, 1
      %p346 = por %p344, %p345
      %p347 = scmp.ne.s32.totalorder %s338, %s339
      %p348 = scmp.eq.s32.totalorder %s34, 0
      %p349 = por %p347, %p348
      %p350 = scmp.ne.s32.totalorder %s338, %s339
      %p351 = scmp.eq.s32.totalorder %s35, 1
      %p352 = por %p350, %p351
      %p354 = scmp.ne.s32.totalorder %s339, %s353
      %p355 = scmp.eq.s32.totalorder %s35, 0
      %p356 = por %p354, %p355
      %s358 = sadd.s32 %s357, 1
      %p361 = scmp.eq.s32.totalorder %s29, 1
      %p362 = scmp.ne.s32.totalorder %s357, %s359
      %p363 = scmp.eq.s32.totalorder %s29, 0
      %p364 = por %p362, %p363
      %p365 = scmp.ne.s32.totalorder %s357, %s359
      %p366 = scmp.eq.s32.totalorder %s34, 1
      %p367 = por %p365, %p366
      %p368 = scmp.ne.s32.totalorder %s359, %s360
      %p369 = scmp.eq.s32.totalorder %s34, 0
      %p370 = por %p368, %p369
      %p371 = scmp.ne.s32.totalorder %s359, %s360
      %p372 = scmp.eq.s32.totalorder %s35, 1
      %p373 = por %p371, %p372
      %p375 = scmp.ne.s32.totalorder %s360, %s374
      %p376 = scmp.eq.s32.totalorder %s35, 0
      %p377 = por %p375, %p376
      %s378 = ssub.s32 %s29, %s36
      %p379 = scmp.eq.s32.totalorder %s378, 0
      %s381 = sadd.s32 %s380, 1
      %s382 = scalar_select %p379, %s380, %s381
      %p385 = pneg %p379
      %p386 = scmp.eq.s32.totalorder %s29, 1
      %p387 = por %p385, %p386
      %p388 = scmp.ne.s32.totalorder %s380, %s383
      %p389 = scmp.eq.s32.totalorder %s29, 0
      %p390 = por %p388, %p389
      %p391 = scmp.ne.s32.totalorder %s380, %s383
      %p392 = scmp.eq.s32.totalorder %s34, 1
      %p393 = por %p391, %p392
      %p394 = scmp.ne.s32.totalorder %s383, %s384
      %p395 = scmp.eq.s32.totalorder %s34, 0
      %p396 = por %p394, %p395
      %p397 = scmp.ne.s32.totalorder %s383, %s384
      %p398 = scmp.eq.s32.totalorder %s35, 1
      %p399 = por %p397, %p398
      %p401 = scmp.ne.s32.totalorder %s384, %s400
      %p402 = scmp.eq.s32.totalorder %s35, 0
      %p403 = por %p401, %p402
      %p404 = scmp.le.s32.totalorder 1, %s29
      %p405 = scmp.lt.s32.totalorder %s29, 3
      %p406 = pnand %p404, %p405
      %p407 = pneg %p406
      // Predicated region
      $region9: #{vit_encoder_block.1} parent=5 // pred_check
        _
      $region10: #{vit_encoder_block.1} parent=5 // pred_check_branch
        %409 = sbr.rel (%p406) target = $region12
      $region11: #{vit_encoder_block.1} parent=5 // pred_region
        %s410 = ssub.s32 %s29, 1
        // Predicated region
        $region13: #{vit_encoder_block.1} parent=11 // pred_check
          %p411 = pneg %p76
        $region14: #{vit_encoder_block.1} parent=11 // pred_check_branch
          %413 = sbr.rel (%p411) target = $region16
        $region15: #{vit_encoder_block.1} parent=11 // pred_region
          %s415 = ssub.s32 48, 48
          %416 = vsyncadd [#allocation3], %s415
          %s418 = sshll.u32 [#allocation2], 4
          %s419 = int_to_ptr.vmem [resolvable:$true] %s418
          %421 = dma.hbm_to_vmem [thread:$0]  %s1, 48, %s419, [#allocation3]
        $region16: #{vit_encoder_block.1} parent=11 // pred_fallthru
          _
        // Predicated region
        $region17: #{vit_encoder_block.1} parent=11 // pred_check
          %p422 = pneg %p97
        $region18: #{vit_encoder_block.1} parent=11 // pred_check_branch
          %424 = sbr.rel (%p422) target = $region20
        $region19: #{vit_encoder_block.1} parent=11 // pred_region
          %s426 = ssub.s32 48, 48
          %427 = vsyncadd [#allocation5], %s426
          %s429 = sshll.u32 [#allocation4], 4
          %s430 = int_to_ptr.vmem [resolvable:$true] %s429
          %432 = dma.hbm_to_vmem [thread:$0]  %s2, 48, %s430, [#allocation5]
        $region20: #{vit_encoder_block.1} parent=11 // pred_fallthru
          _
        // Predicated region
        $region21: #{vit_encoder_block.1} parent=11 // pred_check
          %p433 = pneg %p118
        $region22: #{vit_encoder_block.1} parent=11 // pred_check_branch
          %435 = sbr.rel (%p433) target = $region24
        $region23: #{vit_encoder_block.1} parent=11 // pred_region
          %s437 = ssub.s32 18432, 18432
          %438 = vsyncadd [#allocation5], %s437
          %s439 = sshll.u32 [#allocation6], 4
          %s440 = int_to_ptr.vmem [resolvable:$true] %s439
          %445 = dma.hbm_to_vmem [thread:$0]  %s3, 18432, %s440, [#allocation5], 384, 384, 24
        $region24: #{vit_encoder_block.1} parent=11 // pred_fallthru
          _
        // Predicated region
        $region25: #{vit_encoder_block.1} parent=11 // pred_check
          %p446 = pneg %p139
        $region26: #{vit_encoder_block.1} parent=11 // pred_check_branch
          %448 = sbr.rel (%p446) target = $region28
        $region27: #{vit_encoder_block.1} parent=11 // pred_region
          %s450 = ssub.s32 18432, 18432
          %451 = vsyncadd [#allocation8], %s450
          %s452 = sshll.u32 [#allocation7], 4
          %s453 = int_to_ptr.vmem [resolvable:$true] %s452
          %458 = dma.hbm_to_vmem [thread:$0]  %s4, 18432, %s453, [#allocation8], 384, 384, 24
        $region28: #{vit_encoder_block.1} parent=11 // pred_fallthru
          _
        // Predicated region
        $region29: #{vit_encoder_block.1} parent=11 // pred_check
          %p459 = pneg %p160
        $region30: #{vit_encoder_block.1} parent=11 // pred_check_branch
          %461 = sbr.rel (%p459) target = $region32
        $region31: #{vit_encoder_block.1} parent=11 // pred_region
          %s463 = ssub.s32 18432, 18432
          %464 = vsyncadd [#allocation8], %s463
          %s465 = sshll.u32 [#allocation9], 4
          %s466 = int_to_ptr.vmem [resolvable:$true] %s465
          %471 = dma.hbm_to_vmem [thread:$0]  %s5, 18432, %s466, [#allocation8], 384, 384, 24
        $region32: #{vit_encoder_block.1} parent=11 // pred_fallthru
          _
        // Predicated region
        $region33: #{vit_encoder_block.1} parent=11 // pred_check
          %p472 = pneg %p181
        $region34: #{vit_encoder_block.1} parent=11 // pred_check_branch
          %474 = sbr.rel (%p472) target = $region36
        $region35: #{vit_encoder_block.1} parent=11 // pred_region
          %s476 = ssub.s32 18432, 18432
          %477 = vsyncadd [#allocation11], %s476
          %s478 = sshll.u32 [#allocation10], 4
          %s479 = int_to_ptr.vmem [resolvable:$true] %s478
          %484 = dma.hbm_to_vmem [thread:$0]  %s6, 18432, %s479, [#allocation11], 384, 384, 24
        $region36: #{vit_encoder_block.1} parent=11 // pred_fallthru
          _
        // Predicated region
        $region37: #{vit_encoder_block.1} parent=11 // pred_check
          %p485 = pneg %p202
        $region38: #{vit_encoder_block.1} parent=11 // pred_check_branch
          %487 = sbr.rel (%p485) target = $region40
        $region39: #{vit_encoder_block.1} parent=11 // pred_region
          %s489 = ssub.s32 48, 48
          %490 = vsyncadd [#allocation11], %s489
          %s492 = sshll.u32 [#allocation12], 4
          %s493 = int_to_ptr.vmem [resolvable:$true] %s492
          %495 = dma.hbm_to_vmem [thread:$0]  %s7, 48, %s493, [#allocation11]
        $region40: #{vit_encoder_block.1} parent=11 // pred_fallthru
          _
        // Predicated region
        $region41: #{vit_encoder_block.1} parent=11 // pred_check
          %p496 = pneg %p223
        $region42: #{vit_encoder_block.1} parent=11 // pred_check_branch
          %498 = sbr.rel (%p496) target = $region44
        $region43: #{vit_encoder_block.1} parent=11 // pred_region
          %s500 = ssub.s32 48, 48
          %501 = vsyncadd [#allocation14], %s500
          %s503 = sshll.u32 [#allocation13], 4
          %s504 = int_to_ptr.vmem [resolvable:$true] %s503
          %506 = dma.hbm_to_vmem [thread:$0]  %s8, 48, %s504, [#allocation14]
        $region44: #{vit_encoder_block.1} parent=11 // pred_fallthru
          _
        // Predicated region
        $region45: #{vit_encoder_block.1} parent=11 // pred_check
          %p507 = pneg %p244
        $region46: #{vit_encoder_block.1} parent=11 // pred_check_branch
          %509 = sbr.rel (%p507) target = $region48
        $region47: #{vit_encoder_block.1} parent=11 // pred_region
          %s511 = ssub.s32 48, 48
          %512 = vsyncadd [#allocation14], %s511
          %s514 = sshll.u32 [#allocation15], 4
          %s515 = int_to_ptr.vmem [resolvable:$true] %s514
          %517 = dma.hbm_to_vmem [thread:$0]  %s9, 48, %s515, [#allocation14]
        $region48: #{vit_encoder_block.1} parent=11 // pred_fallthru
          _
        // Predicated region
        $region49: #{vit_encoder_block.1} parent=11 // pred_check
          %p518 = pneg %p265
        $region50: #{vit_encoder_block.1} parent=11 // pred_check_branch
          %520 = sbr.rel (%p518) target = $region52
        $region51: #{vit_encoder_block.1} parent=11 // pred_region
          %s522 = ssub.s32 73728, 73728
          %523 = vsyncadd [#allocation17], %s522
          %s524 = sshll.u32 [#allocation16], 4
          %s525 = int_to_ptr.vmem [resolvable:$true] %s524
          %530 = dma.hbm_to_vmem [thread:$0]  %s10, 73728, %s525, [#allocation17], 1536, 1536, 96
        $region52: #{vit_encoder_block.1} parent=11 // pred_fallthru
          _
        // Predicated region
        $region53: #{vit_encoder_block.1} parent=11 // pred_check
          %p531 = pneg %p286
        $region54: #{vit_encoder_block.1} parent=11 // pred_check_branch
          %533 = sbr.rel (%p531) target = $region56
        $region55: #{vit_encoder_block.1} parent=11 // pred_region
          %s535 = ssub.s32 192, 192
          %536 = vsyncadd [#allocation17], %s535
          %s538 = sshll.u32 [#allocation18], 4
          %s539 = int_to_ptr.vmem [resolvable:$true] %s538
          %541 = dma.hbm_to_vmem [thread:$0]  %s11, 192, %s539, [#allocation17]
        $region56: #{vit_encoder_block.1} parent=11 // pred_fallthru
          _
        // Predicated region
        $region57: #{vit_encoder_block.1} parent=11 // pred_check
          %p542 = pneg %p307
        $region58: #{vit_encoder_block.1} parent=11 // pred_check_branch
          %544 = sbr.rel (%p542) target = $region60
        $region59: #{vit_encoder_block.1} parent=11 // pred_region
          %s546 = ssub.s32 73728, 73728
          %547 = vsyncadd [#allocation20], %s546
          %s548 = sshll.u32 [#allocation19], 4
          %s549 = int_to_ptr.vmem [resolvable:$true] %s548
          %554 = dma.hbm_to_vmem [thread:$0]  %s12, 73728, %s549, [#allocation20], 384, 384, 24
        $region60: #{vit_encoder_block.1} parent=11 // pred_fallthru
          _
        // Predicated region
        $region61: #{vit_encoder_block.1} parent=11 // pred_check
          %p555 = pneg %p328
        $region62: #{vit_encoder_block.1} parent=11 // pred_check_branch
          %557 = sbr.rel (%p555) target = $region64
        $region63: #{vit_encoder_block.1} parent=11 // pred_region
          %s559 = ssub.s32 48, 48
          %560 = vsyncadd [#allocation20], %s559
          %s562 = sshll.u32 [#allocation21], 4
          %s563 = int_to_ptr.vmem [resolvable:$true] %s562
          %565 = dma.hbm_to_vmem [thread:$0]  %s13, 48, %s563, [#allocation20]
        $region64: #{vit_encoder_block.1} parent=11 // pred_fallthru
          _
        // Predicated region
        $region65: #{vit_encoder_block.1} parent=11 // pred_check
          %p566 = pneg %p349
        $region66: #{vit_encoder_block.1} parent=11 // pred_check_branch
          %568 = sbr.rel (%p566) target = $region68
        $region67: #{vit_encoder_block.1} parent=11 // pred_region
          _
        $region68: #{vit_encoder_block.1} parent=11 // pred_fallthru
          _
        // Predicated region
        $region69: #{vit_encoder_block.1} parent=11 // pred_check
          %p569 = pneg %p370
        $region70: #{vit_encoder_block.1} parent=11 // pred_check_branch
          %571 = sbr.rel (%p569) target = $region72
        $region71: #{vit_encoder_block.1} parent=11 // pred_region
          _
        $region72: #{vit_encoder_block.1} parent=11 // pred_fallthru
          _
      $region12: #{vit_encoder_block.1} parent=5 // pred_fallthru
        _
      %p572 = scmp.lt.s32.totalorder %s29, 2
      // Predicated region
      $region73: #{vit_encoder_block.1} parent=5 // pred_check
        %p573 = pneg %p572
      $region74: #{vit_encoder_block.1} parent=5 // pred_check_branch
        %575 = sbr.rel (%p573) target = $region76
      $region75: #{vit_encoder_block.1} parent=5 // pred_region
        // Predicated region
        $region77: #{vit_encoder_block.1} parent=75 // pred_check
          %p576 = pneg %p49
        $region78: #{vit_encoder_block.1} parent=75 // pred_check_branch
          %578 = sbr.rel (%p576) target = $region80
        $region79: #{vit_encoder_block.1} parent=75 // pred_region
          %p579 = scmp.lt.s32.totalorder %s29, 1
          %s580 = scalar_select %p579, %s29, 1
          %s581 = smul.addr %s580, 3
          %s582 = smul.addr %s581, 8
          %s583 = scalar_lea.vmem %s0, %s582
        $region80: #{vit_encoder_block.1} parent=75 // pred_fallthru
          _
      $region76: #{vit_encoder_block.1} parent=5 // pred_fallthru
        _
      %p584 = scmp.le.s32.totalorder 1, %s29
      %p585 = scmp.lt.s32.totalorder %s29, 3
      %p586 = pnand %p584, %p585
      %p587 = pneg %p586
      // Predicated region
      $region81: #{vit_encoder_block.1} parent=5 // pred_check
        _
      $region82: #{vit_encoder_block.1} parent=5 // pred_check_branch
        %589 = sbr.rel (%p586) target = $region84
      $region83: #{vit_encoder_block.1} parent=5 // pred_region
        %s590 = ssub.s32 %s29, 1
        // Predicated region
        $region85: #{vit_encoder_block.1} parent=83 // pred_check
          %p591 = pneg %p76
        $region86: #{vit_encoder_block.1} parent=83 // pred_check_branch
          %593 = sbr.rel (%p591) target = $region88
        $region87: #{vit_encoder_block.1} parent=83 // pred_region
          %594 = dma.done [#allocation3], 48
        $region88: #{vit_encoder_block.1} parent=83 // pred_fallthru
          _
        // Predicated region
        $region89: #{vit_encoder_block.1} parent=83 // pred_check
          %p595 = pneg %p97
        $region90: #{vit_encoder_block.1} parent=83 // pred_check_branch
          %597 = sbr.rel (%p595) target = $region92
        $region91: #{vit_encoder_block.1} parent=83 // pred_region
          %598 = dma.done [#allocation5], 48
        $region92: #{vit_encoder_block.1} parent=83 // pred_fallthru
          _
        // Predicated region
        $region93: #{vit_encoder_block.1} parent=83 // pred_check
          %p599 = pneg %p118
        $region94: #{vit_encoder_block.1} parent=83 // pred_check_branch
          %601 = sbr.rel (%p599) target = $region96
        $region95: #{vit_encoder_block.1} parent=83 // pred_region
          %602 = dma.done [#allocation5], 18432
        $region96: #{vit_encoder_block.1} parent=83 // pred_fallthru
          _
        // Predicated region
        $region97: #{vit_encoder_block.1} parent=83 // pred_check
          %p603 = pneg %p139
        $region98: #{vit_encoder_block.1} parent=83 // pred_check_branch
          %605 = sbr.rel (%p603) target = $region100
        $region99: #{vit_encoder_block.1} parent=83 // pred_region
          %606 = dma.done [#allocation8], 18432
        $region100: #{vit_encoder_block.1} parent=83 // pred_fallthru
          _
        // Predicated region
        $region101: #{vit_encoder_block.1} parent=83 // pred_check
          %p607 = pneg %p160
        $region102: #{vit_encoder_block.1} parent=83 // pred_check_branch
          %609 = sbr.rel (%p607) target = $region104
        $region103: #{vit_encoder_block.1} parent=83 // pred_region
          %610 = dma.done [#allocation8], 18432
        $region104: #{vit_encoder_block.1} parent=83 // pred_fallthru
          _
        // Predicated region
        $region105: #{vit_encoder_block.1} parent=83 // pred_check
          %p611 = pneg %p181
        $region106: #{vit_encoder_block.1} parent=83 // pred_check_branch
          %613 = sbr.rel (%p611) target = $region108
        $region107: #{vit_encoder_block.1} parent=83 // pred_region
          %614 = dma.done [#allocation11], 18432
        $region108: #{vit_encoder_block.1} parent=83 // pred_fallthru
          _
        // Predicated region
        $region109: #{vit_encoder_block.1} parent=83 // pred_check
          %p615 = pneg %p202
        $region110: #{vit_encoder_block.1} parent=83 // pred_check_branch
          %617 = sbr.rel (%p615) target = $region112
        $region111: #{vit_encoder_block.1} parent=83 // pred_region
          %618 = dma.done [#allocation11], 48
        $region112: #{vit_encoder_block.1} parent=83 // pred_fallthru
          _
        // Predicated region
        $region113: #{vit_encoder_block.1} parent=83 // pred_check
          %p619 = pneg %p223
        $region114: #{vit_encoder_block.1} parent=83 // pred_check_branch
          %621 = sbr.rel (%p619) target = $region116
        $region115: #{vit_encoder_block.1} parent=83 // pred_region
          %622 = dma.done [#allocation14], 48
        $region116: #{vit_encoder_block.1} parent=83 // pred_fallthru
          _
        // Predicated region
        $region117: #{vit_encoder_block.1} parent=83 // pred_check
          %p623 = pneg %p244
        $region118: #{vit_encoder_block.1} parent=83 // pred_check_branch
          %625 = sbr.rel (%p623) target = $region120
        $region119: #{vit_encoder_block.1} parent=83 // pred_region
          %626 = dma.done [#allocation14], 48
        $region120: #{vit_encoder_block.1} parent=83 // pred_fallthru
          _
        // Predicated region
        $region121: #{vit_encoder_block.1} parent=83 // pred_check
          %p627 = pneg %p265
        $region122: #{vit_encoder_block.1} parent=83 // pred_check_branch
          %629 = sbr.rel (%p627) target = $region124
        $region123: #{vit_encoder_block.1} parent=83 // pred_region
          %630 = dma.done [#allocation17], 73728
        $region124: #{vit_encoder_block.1} parent=83 // pred_fallthru
          _
        // Predicated region
        $region125: #{vit_encoder_block.1} parent=83 // pred_check
          %p631 = pneg %p286
        $region126: #{vit_encoder_block.1} parent=83 // pred_check_branch
          %633 = sbr.rel (%p631) target = $region128
        $region127: #{vit_encoder_block.1} parent=83 // pred_region
          %634 = dma.done [#allocation17], 192
        $region128: #{vit_encoder_block.1} parent=83 // pred_fallthru
          _
        // Predicated region
        $region129: #{vit_encoder_block.1} parent=83 // pred_check
          %p635 = pneg %p307
        $region130: #{vit_encoder_block.1} parent=83 // pred_check_branch
          %637 = sbr.rel (%p635) target = $region132
        $region131: #{vit_encoder_block.1} parent=83 // pred_region
          %638 = dma.done [#allocation20], 73728
        $region132: #{vit_encoder_block.1} parent=83 // pred_fallthru
          _
        // Predicated region
        $region133: #{vit_encoder_block.1} parent=83 // pred_check
          %p639 = pneg %p328
        $region134: #{vit_encoder_block.1} parent=83 // pred_check_branch
          %641 = sbr.rel (%p639) target = $region136
        $region135: #{vit_encoder_block.1} parent=83 // pred_region
          %642 = dma.done [#allocation20], 48
        $region136: #{vit_encoder_block.1} parent=83 // pred_fallthru
          _
        %p643 = scmp.lt.s32.totalorder %s34, 1
        %s644 = scalar_select %p643, %s34, 1
        %s645 = smul.addr %s644, 3
        %s646 = smul.addr %s645, 8
        %s647 = scalar_lea.vmem %s0, %s646
        %p648 = pneg %p55
        %p649 = pneg %p52
        %p650 = pneg %p76
        %p651 = pneg %p73
        %p652 = pneg %p97
        %p653 = pneg %p94
        %p654 = pneg %p118
        %p655 = pneg %p115
        %p656 = pneg %p139
        %p657 = pneg %p136
        %p658 = pneg %p160
        %p659 = pneg %p157
        %p660 = pneg %p181
        %p661 = pneg %p178
        %p662 = pneg %p202
        %p663 = pneg %p199
        %p664 = pneg %p223
        %p665 = pneg %p220
        %p666 = pneg %p244
        %p667 = pneg %p241
        %p668 = pneg %p265
        %p669 = pneg %p262
        %p670 = pneg %p286
        %p671 = pneg %p283
        %p672 = pneg %p307
        %p673 = pneg %p304
        %p674 = pneg %p328
        %p675 = pneg %p325
        %p676 = pneg %p349
        %p677 = pneg %p346
        %p678 = pneg %p370
        %p679 = pneg %p367
        %p680 = pneg %p396
        %p681 = pneg %p393
        %p682 = scmp.lt.s32.totalorder %s34, 1
        %s683 = scalar_select %p682, %s34, 1
        %s684 = smul.addr %s683, 3
        %s685 = smul.addr %s684, 8
        %s686 = scalar_lea.vmem %s16, %s685
        %p687 = scmp.lt.s32.totalorder %s34, 1
        %s688 = scalar_select %p687, %s34, 1
        %s689 = smul.addr %s688, 3
        %s690 = smul.addr %s689, 8
        %s691 = scalar_lea.vmem %s0, %s690
        %p692 = scmp.lt.s32.totalorder %s34, 1
        %s693 = scalar_select %p692, %s34, 1
        %s694 = smul.addr %s693, 3
        %s695 = smul.addr %s694, 8
        %s696 = scalar_lea.vmem %s16, %s695
        %v697 = vld [vmem:[%s691] sm:$0x1f]
        %v698 = vld [vmem:[%s691 + $0x8] sm:$0x1f]
        %v699 = vld [vmem:[%s691 + $0x10] sm:$0x1f]
        %v700 = vld [vmem:[#allocation2] sm:$0x7]
        %v701 = vld [vmem:[#allocation4] sm:$0x7]
        %vm702 = vcmask 1044480
        %v703 = vsel %vm702, %v697, 0.0
        %v704 = vsel %vm702, %v698, 0.0
        %v705 = vadd.f32 %v703, %v704
        %v706 = vsel %vm702, %v699, 0.0
        %v707 = vadd.f32 %v705, %v706
        %708 = vadd.xlane.f32.xlu0 %v707
        %v709 = vpop.xlane.xlu0 %708
        %v710 = vrcp.pop 384.0
        %v711 = vmul.f32 %v709, %v710
        %v712 = vsub.f32 %v697, %v711
        %v713 = vsub.f32 %v698, %v711
        %v714 = vsub.f32 %v699, %v711
        %v715 = vmul.f32 %v712, %v712
        %v716 = vmul.f32 %v713, %v713
        %v717 = vmul.f32 %v714, %v714
        %v718 = vsel %vm702, %v715, 0.0
        %v719 = vsel %vm702, %v716, 0.0
        %v720 = vadd.f32 %v718, %v719
        %v721 = vsel %vm702, %v717, 0.0
        %v722 = vadd.f32 %v720, %v721
        %723 = vadd.xlane.f32.xlu0 %v722
        %v724 = vpop.xlane.xlu0 %723
        %v725 = vmul.f32 %v724, %v710
        %v726 = vadd.f32 %v725, 1e-05
        %v727 = vrsqrt.pop %v726
        %v728 = vmul.f32 %v712, %v727
        %v729 = vmul.f32 %v713, %v727
        %v730 = vmul.f32 %v714, %v727
        %v732 = vlaneseq
        %v733 = vshrl.u32 %v732, 7
        %v734 = vsub.s32 0, %v733
        %v735 = vrot.slane %v700, %v734
        %v736 = vlaneseq
        %v737 = vshrl.u32 %v736, 7
        %v738 = vsub.s32 1, %v737
        %v739 = vrot.slane %v700, %v738
        %v740 = vlaneseq
        %v741 = vshrl.u32 %v740, 7
        %v742 = vsub.s32 2, %v741
        %v743 = vrot.slane %v700, %v742
        %v747 = vmul.f32 %v728, %v735
        %v748 = vmul.f32 %v729, %v739
        %v749 = vmul.f32 %v730, %v743
        %v751 = vlaneseq
        %v752 = vshrl.u32 %v751, 7
        %v753 = vsub.s32 0, %v752
        %v754 = vrot.slane %v701, %v753
        %v755 = vlaneseq
        %v756 = vshrl.u32 %v755, 7
        %v757 = vsub.s32 1, %v756
        %v758 = vrot.slane %v701, %v757
        %v759 = vlaneseq
        %v760 = vshrl.u32 %v759, 7
        %v761 = vsub.s32 2, %v760
        %v762 = vrot.slane %v701, %v761
        %v766 = vadd.f32 %v747, %v754
        %v767 = vadd.f32 %v748, %v758
        %v768 = vadd.f32 %v749, %v762
        %v769 = vld [vmem:[#allocation6] sm:$0xff]
        %v770 = vld [vmem:[#allocation6 + $0x8] sm:$0xff]
        %v771 = vld [vmem:[#allocation6 + $0x10] sm:$0xff]
        %v772 = vld [vmem:[#allocation6 + $0x18] sm:$0xff]
        %v773 = vld [vmem:[#allocation6 + $0x20] sm:$0xff]
        %v774 = vld [vmem:[#allocation6 + $0x28] sm:$0xff]
        %v775 = vld [vmem:[#allocation6 + $0x30] sm:$0xff]
        %v776 = vld [vmem:[#allocation6 + $0x38] sm:$0xff]
        %v777 = vld [vmem:[#allocation6 + $0x40] sm:$0xff]
        %v778 = vld [vmem:[#allocation6 + $0x48] sm:$0xff]
        %v779 = vld [vmem:[#allocation6 + $0x50] sm:$0xff]
        %v780 = vld [vmem:[#allocation6 + $0x58] sm:$0xff]
        %v781 = vld [vmem:[#allocation6 + $0x60] sm:$0xff]
        %v782 = vld [vmem:[#allocation6 + $0x68] sm:$0xff]
        %v783 = vld [vmem:[#allocation6 + $0x70] sm:$0xff]
        %v784 = vld [vmem:[#allocation6 + $0x78] sm:$0xff]
        %v785 = vld [vmem:[#allocation6 + $0x80] sm:$0xff]
        %v786 = vld [vmem:[#allocation6 + $0x88] sm:$0xff]
        %v787 = vld [vmem:[#allocation6 + $0x90] sm:$0xff]
        %v788 = vld [vmem:[#allocation6 + $0x98] sm:$0xff]
        %v789 = vld [vmem:[#allocation6 + $0xa0] sm:$0xff]
        %v790 = vld [vmem:[#allocation6 + $0xa8] sm:$0xff]
        %v791 = vld [vmem:[#allocation6 + $0xb0] sm:$0xff]
        %v792 = vld [vmem:[#allocation6 + $0xb8] sm:$0xff]
        %v793 = vld [vmem:[#allocation6 + $0xc0] sm:$0xff]
        %v794 = vld [vmem:[#allocation6 + $0xc8] sm:$0xff]
        %v795 = vld [vmem:[#allocation6 + $0xd0] sm:$0xff]
        %v796 = vld [vmem:[#allocation6 + $0xd8] sm:$0xff]
        %v797 = vld [vmem:[#allocation6 + $0xe0] sm:$0xff]
        %v798 = vld [vmem:[#allocation6 + $0xe8] sm:$0xff]
        %v799 = vld [vmem:[#allocation6 + $0xf0] sm:$0xff]
        %v800 = vld [vmem:[#allocation6 + $0xf8] sm:$0xff]
        %v801 = vld [vmem:[#allocation6 + $0x100] sm:$0xff]
        %v802 = vld [vmem:[#allocation6 + $0x108] sm:$0xff]
        %v803 = vld [vmem:[#allocation6 + $0x110] sm:$0xff]
        %v804 = vld [vmem:[#allocation6 + $0x118] sm:$0xff]
        %v805 = vld [vmem:[#allocation6 + $0x120] sm:$0xff]
        %v806 = vld [vmem:[#allocation6 + $0x128] sm:$0xff]
        %v807 = vld [vmem:[#allocation6 + $0x130] sm:$0xff]
        %v808 = vld [vmem:[#allocation6 + $0x138] sm:$0xff]
        %v809 = vld [vmem:[#allocation6 + $0x140] sm:$0xff]
        %v810 = vld [vmem:[#allocation6 + $0x148] sm:$0xff]
        %v811 = vld [vmem:[#allocation6 + $0x150] sm:$0xff]
        %v812 = vld [vmem:[#allocation6 + $0x158] sm:$0xff]
        %v813 = vld [vmem:[#allocation6 + $0x160] sm:$0xff]
        %v814 = vld [vmem:[#allocation6 + $0x168] sm:$0xff]
        %v815 = vld [vmem:[#allocation6 + $0x170] sm:$0xff]
        %v816 = vld [vmem:[#allocation6 + $0x178] sm:$0xff]
        %v817 = vld [vmem:[#allocation6 + $0x180] sm:$0xff]
        %v818 = vld [vmem:[#allocation6 + $0x188] sm:$0xff]
        %v819 = vld [vmem:[#allocation6 + $0x190] sm:$0xff]
        %v820 = vld [vmem:[#allocation6 + $0x198] sm:$0xff]
        %v821 = vld [vmem:[#allocation6 + $0x1a0] sm:$0xff]
        %v822 = vld [vmem:[#allocation6 + $0x1a8] sm:$0xff]
        %v823 = vld [vmem:[#allocation6 + $0x1b0] sm:$0xff]
        %v824 = vld [vmem:[#allocation6 + $0x1b8] sm:$0xff]
        %v825 = vld [vmem:[#allocation6 + $0x1c0] sm:$0xff]
        %v826 = vld [vmem:[#allocation6 + $0x1c8] sm:$0xff]
        %v827 = vld [vmem:[#allocation6 + $0x1d0] sm:$0xff]
        %v828 = vld [vmem:[#allocation6 + $0x1d8] sm:$0xff]
        %v829 = vld [vmem:[#allocation6 + $0x1e0] sm:$0xff]
        %v830 = vld [vmem:[#allocation6 + $0x1e8] sm:$0xff]
        %v831 = vld [vmem:[#allocation6 + $0x1f0] sm:$0xff]
        %v832 = vld [vmem:[#allocation6 + $0x1f8] sm:$0xff]
        %v833 = vld [vmem:[#allocation6 + $0x200] sm:$0xff]
        %v834 = vld [vmem:[#allocation6 + $0x208] sm:$0xff]
        %v835 = vld [vmem:[#allocation6 + $0x210] sm:$0xff]
        %v836 = vld [vmem:[#allocation6 + $0x218] sm:$0xff]
        %v837 = vld [vmem:[#allocation6 + $0x220] sm:$0xff]
        %v838 = vld [vmem:[#allocation6 + $0x228] sm:$0xff]
        %v839 = vld [vmem:[#allocation6 + $0x230] sm:$0xff]
        %v840 = vld [vmem:[#allocation6 + $0x238] sm:$0xff]
        %v841 = vld [vmem:[#allocation6 + $0x240] sm:$0xff]
        %v842 = vld [vmem:[#allocation6 + $0x248] sm:$0xff]
        %v843 = vld [vmem:[#allocation6 + $0x250] sm:$0xff]
        %v844 = vld [vmem:[#allocation6 + $0x258] sm:$0xff]
        %v845 = vld [vmem:[#allocation6 + $0x260] sm:$0xff]
        %v846 = vld [vmem:[#allocation6 + $0x268] sm:$0xff]
        %v847 = vld [vmem:[#allocation6 + $0x270] sm:$0xff]
        %v848 = vld [vmem:[#allocation6 + $0x278] sm:$0xff]
        %v849 = vld [vmem:[#allocation6 + $0x280] sm:$0xff]
        %v850 = vld [vmem:[#allocation6 + $0x288] sm:$0xff]
        %v851 = vld [vmem:[#allocation6 + $0x290] sm:$0xff]
        %v852 = vld [vmem:[#allocation6 + $0x298] sm:$0xff]
        %v853 = vld [vmem:[#allocation6 + $0x2a0] sm:$0xff]
        %v854 = vld [vmem:[#allocation6 + $0x2a8] sm:$0xff]
        %v855 = vld [vmem:[#allocation6 + $0x2b0] sm:$0xff]
        %v856 = vld [vmem:[#allocation6 + $0x2b8] sm:$0xff]
        %v857 = vld [vmem:[#allocation6 + $0x2c0] sm:$0xff]
        %v858 = vld [vmem:[#allocation6 + $0x2c8] sm:$0xff]
        %v859 = vld [vmem:[#allocation6 + $0x2d0] sm:$0xff]
        %v860 = vld [vmem:[#allocation6 + $0x2d8] sm:$0xff]
        %v861 = vld [vmem:[#allocation6 + $0x2e0] sm:$0xff]
        %v862 = vld [vmem:[#allocation6 + $0x2e8] sm:$0xff]
        %v863 = vld [vmem:[#allocation6 + $0x2f0] sm:$0xff]
        %v864 = vld [vmem:[#allocation6 + $0x2f8] sm:$0xff]
        %v865 = vld [vmem:[#allocation6 + $0x300] sm:$0xff]
        %v866 = vld [vmem:[#allocation6 + $0x308] sm:$0xff]
        %v867 = vld [vmem:[#allocation6 + $0x310] sm:$0xff]
        %v868 = vld [vmem:[#allocation6 + $0x318] sm:$0xff]
        %v869 = vld [vmem:[#allocation6 + $0x320] sm:$0xff]
        %v870 = vld [vmem:[#allocation6 + $0x328] sm:$0xff]
        %v871 = vld [vmem:[#allocation6 + $0x330] sm:$0xff]
        %v872 = vld [vmem:[#allocation6 + $0x338] sm:$0xff]
        %v873 = vld [vmem:[#allocation6 + $0x340] sm:$0xff]
        %v874 = vld [vmem:[#allocation6 + $0x348] sm:$0xff]
        %v875 = vld [vmem:[#allocation6 + $0x350] sm:$0xff]
        %v876 = vld [vmem:[#allocation6 + $0x358] sm:$0xff]
        %v877 = vld [vmem:[#allocation6 + $0x360] sm:$0xff]
        %v878 = vld [vmem:[#allocation6 + $0x368] sm:$0xff]
        %v879 = vld [vmem:[#allocation6 + $0x370] sm:$0xff]
        %v880 = vld [vmem:[#allocation6 + $0x378] sm:$0xff]
        %v881 = vld [vmem:[#allocation6 + $0x380] sm:$0xff]
        %v882 = vld [vmem:[#allocation6 + $0x388] sm:$0xff]
        %v883 = vld [vmem:[#allocation6 + $0x390] sm:$0xff]
        %v884 = vld [vmem:[#allocation6 + $0x398] sm:$0xff]
        %v885 = vld [vmem:[#allocation6 + $0x3a0] sm:$0xff]
        %v886 = vld [vmem:[#allocation6 + $0x3a8] sm:$0xff]
        %v887 = vld [vmem:[#allocation6 + $0x3b0] sm:$0xff]
        %v888 = vld [vmem:[#allocation6 + $0x3b8] sm:$0xff]
        %v889 = vld [vmem:[#allocation6 + $0x3c0] sm:$0xff]
        %v890 = vld [vmem:[#allocation6 + $0x3c8] sm:$0xff]
        %v891 = vld [vmem:[#allocation6 + $0x3d0] sm:$0xff]
        %v892 = vld [vmem:[#allocation6 + $0x3d8] sm:$0xff]
        %v893 = vld [vmem:[#allocation6 + $0x3e0] sm:$0xff]
        %v894 = vld [vmem:[#allocation6 + $0x3e8] sm:$0xff]
        %v895 = vld [vmem:[#allocation6 + $0x3f0] sm:$0xff]
        %v896 = vld [vmem:[#allocation6 + $0x3f8] sm:$0xff]
        %v897 = vld [vmem:[#allocation6 + $0x400] sm:$0xff]
        %v898 = vld [vmem:[#allocation6 + $0x408] sm:$0xff]
        %v899 = vld [vmem:[#allocation6 + $0x410] sm:$0xff]
        %v900 = vld [vmem:[#allocation6 + $0x418] sm:$0xff]
        %v901 = vld [vmem:[#allocation6 + $0x420] sm:$0xff]
        %v902 = vld [vmem:[#allocation6 + $0x428] sm:$0xff]
        %v903 = vld [vmem:[#allocation6 + $0x430] sm:$0xff]
        %v904 = vld [vmem:[#allocation6 + $0x438] sm:$0xff]
        %v905 = vld [vmem:[#allocation6 + $0x440] sm:$0xff]
        %v906 = vld [vmem:[#allocation6 + $0x448] sm:$0xff]
        %v907 = vld [vmem:[#allocation6 + $0x450] sm:$0xff]
        %v908 = vld [vmem:[#allocation6 + $0x458] sm:$0xff]
        %v909 = vld [vmem:[#allocation6 + $0x460] sm:$0xff]
        %v910 = vld [vmem:[#allocation6 + $0x468] sm:$0xff]
        %v911 = vld [vmem:[#allocation6 + $0x470] sm:$0xff]
        %v912 = vld [vmem:[#allocation6 + $0x478] sm:$0xff]
        %913 = vmatprep.subr.mxu0 %v815
        %914 = vmatpush1.msra.mxu0 %v814
        %915 = vmatprep.subr.mxu0 %v812
        %916 = vmatpush1.msra.mxu0 %v811
        %917 = vmatprep.subr.mxu0 %v809
        %918 = vmatpush1.msra.mxu0 %v808
        %919 = vmatprep.subr.mxu0 %v806
        %920 = vmatpush1.msra.mxu0 %v805
        %921 = vmatprep.subr.mxu0 %v803
        %922 = vmatpush1.msra.mxu0 %v802
        %923 = vmatprep.subr.mxu0 %v800
        %924 = vmatpush1.msra.mxu0 %v799
        %925 = vmatprep.subr.mxu0 %v797
        %926 = vmatpush1.msra.mxu0 %v796
        %927 = vmatprep.subr.mxu0 %v794
        %928 = vmatpush1.msra.mxu0 %v793
        %929 = vmatprep.subr.mxu0 %v791
        %930 = vmatpush1.msra.mxu0 %v790
        %931 = vmatprep.subr.mxu0 %v788
        %932 = vmatpush1.msra.mxu0 %v787
        %933 = vmatprep.subr.mxu0 %v785
        %934 = vmatpush1.msra.mxu0 %v784
        %935 = vmatprep.subr.mxu0 %v782
        %936 = vmatpush1.msra.mxu0 %v781
        %937 = vmatprep.subr.mxu0 %v779
        %938 = vmatpush1.msra.mxu0 %v778
        %939 = vmatprep.subr.mxu0 %v776
        %940 = vmatpush1.msra.mxu0 %v775
        %941 = vmatprep.subr.mxu0 %v773
        %942 = vmatpush1.msra.mxu0 %v772
        %943 = vmatprep.subr.mxu0 %v770
        %944 = vmatpush1.msra.mxu0 %v769
        %945 = vmatprep.subr.mxu0 %v863
        %946 = vmatpush2.msra.mxu0 %v862
        %947 = vmatprep.subr.mxu0 %v860
        %948 = vmatpush2.msra.mxu0 %v859
        %949 = vmatprep.subr.mxu0 %v857
        %950 = vmatpush2.msra.mxu0 %v856
        %951 = vmatprep.subr.mxu0 %v854
        %952 = vmatpush2.msra.mxu0 %v853
        %953 = vmatprep.subr.mxu0 %v851
        %954 = vmatpush2.msra.mxu0 %v850
        %955 = vmatprep.subr.mxu0 %v848
        %956 = vmatpush2.msra.mxu0 %v847
        %957 = vmatprep.subr.mxu0 %v845
        %958 = vmatpush2.msra.mxu0 %v844
        %959 = vmatprep.subr.mxu0 %v842
        %960 = vmatpush2.msra.mxu0 %v841
        %961 = vmatprep.subr.mxu0 %v839
        %962 = vmatpush2.msra.mxu0 %v838
        %963 = vmatprep.subr.mxu0 %v836
        %964 = vmatpush2.msra.mxu0 %v835
        %965 = vmatprep.subr.mxu0 %v833
        %966 = vmatpush2.msra.mxu0 %v832
        %967 = vmatprep.subr.mxu0 %v830
        %968 = vmatpush2.msra.mxu0 %v829
        %969 = vmatprep.subr.mxu0 %v827
        %970 = vmatpush2.msra.mxu0 %v826
        %971 = vmatprep.subr.mxu0 %v824
        %972 = vmatpush2.msra.mxu0 %v823
        %973 = vmatprep.subr.mxu0 %v821
        %974 = vmatpush2.msra.mxu0 %v820
        %975 = vmatprep.subr.mxu0 %v818
        %976 = vmatpush2.msra.mxu0 %v817
        %977 = vmatprep.mubr.f32.mxu0 %v767
        %978 = vmatmul.mubr.f32.gmra.mxu0 %v766
        %v979 = vpop.f32.mrf.mxu0
        %v980 = vadd.f32 0.0, %v979
        %v981 = vpop.f32.mrf.mxu0
        %v982 = vadd.f32 0.0, %v981
        %983 = vdwg.mxu0
        %984 = vmatprep.subr.mxu0 %v911
        %985 = vmatpush1.msra.mxu0 %v910
        %986 = vmatprep.subr.mxu0 %v908
        %987 = vmatpush1.msra.mxu0 %v907
        %988 = vmatprep.subr.mxu0 %v905
        %989 = vmatpush1.msra.mxu0 %v904
        %990 = vmatprep.subr.mxu0 %v902
        %991 = vmatpush1.msra.mxu0 %v901
        %992 = vmatprep.subr.mxu0 %v899
        %993 = vmatpush1.msra.mxu0 %v898
        %994 = vmatprep.subr.mxu0 %v896
        %995 = vmatpush1.msra.mxu0 %v895
        %996 = vmatprep.subr.mxu0 %v893
        %997 = vmatpush1.msra.mxu0 %v892
        %998 = vmatprep.subr.mxu0 %v890
        %999 = vmatpush1.msra.mxu0 %v889
        %1000 = vmatprep.subr.mxu0 %v887
        %1001 = vmatpush1.msra.mxu0 %v886
        %1002 = vmatprep.subr.mxu0 %v884
        %1003 = vmatpush1.msra.mxu0 %v883
        %1004 = vmatprep.subr.mxu0 %v881
        %1005 = vmatpush1.msra.mxu0 %v880
        %1006 = vmatprep.subr.mxu0 %v878
        %1007 = vmatpush1.msra.mxu0 %v877
        %1008 = vmatprep.subr.mxu0 %v875
        %1009 = vmatpush1.msra.mxu0 %v874
        %1010 = vmatprep.subr.mxu0 %v872
        %1011 = vmatpush1.msra.mxu0 %v871
        %1012 = vmatprep.subr.mxu0 %v869
        %1013 = vmatpush1.msra.mxu0 %v868
        %1014 = vmatprep.subr.mxu0 %v866
        %1015 = vmatpush1.msra.mxu0 %v865
        %1016 = vmatprep.subr.mxu0 0.0
        %1017 = vmatpush2.msra.mxu0 0.0
        %1018 = vmatprep.subr.mxu0 0.0
        %1019 = vmatpush2.msra.mxu0 0.0
        %1020 = vmatprep.subr.mxu0 0.0
        %1021 = vmatpush2.msra.mxu0 0.0
        %1022 = vmatprep.subr.mxu0 0.0
        %1023 = vmatpush2.msra.mxu0 0.0
        %1024 = vmatprep.subr.mxu0 0.0
        %1025 = vmatpush2.msra.mxu0 0.0
        %1026 = vmatprep.subr.mxu0 0.0
        %1027 = vmatpush2.msra.mxu0 0.0
        %1028 = vmatprep.subr.mxu0 0.0
        %1029 = vmatpush2.msra.mxu0 0.0
        %1030 = vmatprep.subr.mxu0 0.0
        %1031 = vmatpush2.msra.mxu0 0.0
        %1032 = vmatprep.subr.mxu0 0.0
        %1033 = vmatpush2.msra.mxu0 0.0
        %1034 = vmatprep.subr.mxu0 0.0
        %1035 = vmatpush2.msra.mxu0 0.0
        %1036 = vmatprep.subr.mxu0 0.0
        %1037 = vmatpush2.msra.mxu0 0.0
        %1038 = vmatprep.subr.mxu0 0.0
        %1039 = vmatpush2.msra.mxu0 0.0
        %1040 = vmatprep.subr.mxu0 0.0
        %1041 = vmatpush2.msra.mxu0 0.0
        %1042 = vmatprep.subr.mxu0 0.0
        %1043 = vmatpush2.msra.mxu0 0.0
        %1044 = vmatprep.subr.mxu0 0.0
        %1045 = vmatpush2.msra.mxu0 0.0
        %1046 = vmatprep.subr.mxu0 0.0
        %1047 = vmatpush2.msra.mxu0 0.0
        %1048 = vmatprep.mubr.f32.mxu0 0.0
        %1049 = vmatmul.mubr.f32.gmra.mxu0 %v768
        %v1050 = vpop.f32.mrf.mxu0
        %v1051 = vadd.f32 %v980, %v1050
        %v1052 = vpop.f32.mrf.mxu0
        %v1053 = vadd.f32 %v982, %v1052
        %1054 = vdwg.mxu0
        %1055 = vmatprep.subr.mxu0 0.0
        %1056 = vmatpush1.msra.mxu0 %v816
        %1057 = vmatprep.subr.mxu0 0.0
        %1058 = vmatpush1.msra.mxu0 %v813
        %1059 = vmatprep.subr.mxu0 0.0
        %1060 = vmatpush1.msra.mxu0 %v810
        %1061 = vmatprep.subr.mxu0 0.0
        %1062 = vmatpush1.msra.mxu0 %v807
        %1063 = vmatprep.subr.mxu0 0.0
        %1064 = vmatpush1.msra.mxu0 %v804
        %1065 = vmatprep.subr.mxu0 0.0
        %1066 = vmatpush1.msra.mxu0 %v801
        %1067 = vmatprep.subr.mxu0 0.0
        %1068 = vmatpush1.msra.mxu0 %v798
        %1069 = vmatprep.subr.mxu0 0.0
        %1070 = vmatpush1.msra.mxu0 %v795
        %1071 = vmatprep.subr.mxu0 0.0
        %1072 = vmatpush1.msra.mxu0 %v792
        %1073 = vmatprep.subr.mxu0 0.0
        %1074 = vmatpush1.msra.mxu0 %v789
        %1075 = vmatprep.subr.mxu0 0.0
        %1076 = vmatpush1.msra.mxu0 %v786
        %1077 = vmatprep.subr.mxu0 0.0
        %1078 = vmatpush1.msra.mxu0 %v783
        %1079 = vmatprep.subr.mxu0 0.0
        %1080 = vmatpush1.msra.mxu0 %v780
        %1081 = vmatprep.subr.mxu0 0.0
        %1082 = vmatpush1.msra.mxu0 %v777
        %1083 = vmatprep.subr.mxu0 0.0
        %1084 = vmatpush1.msra.mxu0 %v774
        %1085 = vmatprep.subr.mxu0 0.0
        %1086 = vmatpush1.msra.mxu0 %v771
        %1087 = vmatprep.subr.mxu0 0.0
        %1088 = vmatpush2.msra.mxu0 %v864
        %1089 = vmatprep.subr.mxu0 0.0
        %1090 = vmatpush2.msra.mxu0 %v861
        %1091 = vmatprep.subr.mxu0 0.0
        %1092 = vmatpush2.msra.mxu0 %v858
        %1093 = vmatprep.subr.mxu0 0.0
        %1094 = vmatpush2.msra.mxu0 %v855
        %1095 = vmatprep.subr.mxu0 0.0
        %1096 = vmatpush2.msra.mxu0 %v852
        %1097 = vmatprep.subr.mxu0 0.0
        %1098 = vmatpush2.msra.mxu0 %v849
        %1099 = vmatprep.subr.mxu0 0.0
        %1100 = vmatpush2.msra.mxu0 %v846
        %1101 = vmatprep.subr.mxu0 0.0
        %1102 = vmatpush2.msra.mxu0 %v843
        %1103 = vmatprep.subr.mxu0 0.0
        %1104 = vmatpush2.msra.mxu0 %v840
        %1105 = vmatprep.subr.mxu0 0.0
        %1106 = vmatpush2.msra.mxu0 %v837
        %1107 = vmatprep.subr.mxu0 0.0
        %1108 = vmatpush2.msra.mxu0 %v834
        %1109 = vmatprep.subr.mxu0 0.0
        %1110 = vmatpush2.msra.mxu0 %v831
        %1111 = vmatprep.subr.mxu0 0.0
        %1112 = vmatpush2.msra.mxu0 %v828
        %1113 = vmatprep.subr.mxu0 0.0
        %1114 = vmatpush2.msra.mxu0 %v825
        %1115 = vmatprep.subr.mxu0 0.0
        %1116 = vmatpush2.msra.mxu0 %v822
        %1117 = vmatprep.subr.mxu0 0.0
        %1118 = vmatpush2.msra.mxu0 %v819
        %1119 = vmatprep.mubr.f32.mxu0 %v767
        %1120 = vmatmul.mubr.f32.gmra.mxu0 %v766
        %v1121 = vpop.f32.mrf.mxu0
        %v1122 = vadd.f32 0.0, %v1121
        %v1123 = vpop.f32.mrf.mxu0
        %1124 = vdwg.mxu0
        %1125 = vmatprep.subr.mxu0 0.0
        %1126 = vmatpush1.msra.mxu0 %v912
        %1127 = vmatprep.subr.mxu0 0.0
        %1128 = vmatpush1.msra.mxu0 %v909
        %1129 = vmatprep.subr.mxu0 0.0
        %1130 = vmatpush1.msra.mxu0 %v906
        %1131 = vmatprep.subr.mxu0 0.0
        %1132 = vmatpush1.msra.mxu0 %v903
        %1133 = vmatprep.subr.mxu0 0.0
        %1134 = vmatpush1.msra.mxu0 %v900
        %1135 = vmatprep.subr.mxu0 0.0
        %1136 = vmatpush1.msra.mxu0 %v897
        %1137 = vmatprep.subr.mxu0 0.0
        %1138 = vmatpush1.msra.mxu0 %v894
        %1139 = vmatprep.subr.mxu0 0.0
        %1140 = vmatpush1.msra.mxu0 %v891
        %1141 = vmatprep.subr.mxu0 0.0
        %1142 = vmatpush1.msra.mxu0 %v888
        %1143 = vmatprep.subr.mxu0 0.0
        %1144 = vmatpush1.msra.mxu0 %v885
        %1145 = vmatprep.subr.mxu0 0.0
        %1146 = vmatpush1.msra.mxu0 %v882
        %1147 = vmatprep.subr.mxu0 0.0
        %1148 = vmatpush1.msra.mxu0 %v879
        %1149 = vmatprep.subr.mxu0 0.0
        %1150 = vmatpush1.msra.mxu0 %v876
        %1151 = vmatprep.subr.mxu0 0.0
        %1152 = vmatpush1.msra.mxu0 %v873
        %1153 = vmatprep.subr.mxu0 0.0
        %1154 = vmatpush1.msra.mxu0 %v870
        %1155 = vmatprep.subr.mxu0 0.0
        %1156 = vmatpush1.msra.mxu0 %v867
        %1157 = vmatprep.subr.mxu0 0.0
        %1158 = vmatpush2.msra.mxu0 0.0
        %1159 = vmatprep.subr.mxu0 0.0
        %1160 = vmatpush2.msra.mxu0 0.0
        %1161 = vmatprep.subr.mxu0 0.0
        %1162 = vmatpush2.msra.mxu0 0.0
        %1163 = vmatprep.subr.mxu0 0.0
        %1164 = vmatpush2.msra.mxu0 0.0
        %1165 = vmatprep.subr.mxu0 0.0
        %1166 = vmatpush2.msra.mxu0 0.0
        %1167 = vmatprep.subr.mxu0 0.0
        %1168 = vmatpush2.msra.mxu0 0.0
        %1169 = vmatprep.subr.mxu0 0.0
        %1170 = vmatpush2.msra.mxu0 0.0
        %1171 = vmatprep.subr.mxu0 0.0
        %1172 = vmatpush2.msra.mxu0 0.0
        %1173 = vmatprep.subr.mxu0 0.0
        %1174 = vmatpush2.msra.mxu0 0.0
        %1175 = vmatprep.subr.mxu0 0.0
        %1176 = vmatpush2.msra.mxu0 0.0
        %1177 = vmatprep.subr.mxu0 0.0
        %1178 = vmatpush2.msra.mxu0 0.0
        %1179 = vmatprep.subr.mxu0 0.0
        %1180 = vmatpush2.msra.mxu0 0.0
        %1181 = vmatprep.subr.mxu0 0.0
        %1182 = vmatpush2.msra.mxu0 0.0
        %1183 = vmatprep.subr.mxu0 0.0
        %1184 = vmatpush2.msra.mxu0 0.0
        %1185 = vmatprep.subr.mxu0 0.0
        %1186 = vmatpush2.msra.mxu0 0.0
        %1187 = vmatprep.subr.mxu0 0.0
        %1188 = vmatpush2.msra.mxu0 0.0
        %1189 = vmatprep.mubr.f32.mxu0 0.0
        %1190 = vmatmul.mubr.f32.gmra.mxu0 %v768
        %v1191 = vpop.f32.mrf.mxu0
        %v1192 = vadd.f32 %v1122, %v1191
        %v1193 = vpop.f32.mrf.mxu0
        %1194 = vdwg.mxu0
        %v1195 = vld [vmem:[#allocation7] sm:$0xff]
        %v1196 = vld [vmem:[#allocation7 + $0x8] sm:$0xff]
        %v1197 = vld [vmem:[#allocation7 + $0x10] sm:$0xff]
        %v1198 = vld [vmem:[#allocation7 + $0x18] sm:$0xff]
        %v1199 = vld [vmem:[#allocation7 + $0x20] sm:$0xff]
        %v1200 = vld [vmem:[#allocation7 + $0x28] sm:$0xff]
        %v1201 = vld [vmem:[#allocation7 + $0x30] sm:$0xff]
        %v1202 = vld [vmem:[#allocation7 + $0x38] sm:$0xff]
        %v1203 = vld [vmem:[#allocation7 + $0x40] sm:$0xff]
        %v1204 = vld [vmem:[#allocation7 + $0x48] sm:$0xff]
        %v1205 = vld [vmem:[#allocation7 + $0x50] sm:$0xff]
        %v1206 = vld [vmem:[#allocation7 + $0x58] sm:$0xff]
        %v1207 = vld [vmem:[#allocation7 + $0x60] sm:$0xff]
        %v1208 = vld [vmem:[#allocation7 + $0x68] sm:$0xff]
        %v1209 = vld [vmem:[#allocation7 + $0x70] sm:$0xff]
        %v1210 = vld [vmem:[#allocation7 + $0x78] sm:$0xff]
        %v1211 = vld [vmem:[#allocation7 + $0x80] sm:$0xff]
        %v1212 = vld [vmem:[#allocation7 + $0x88] sm:$0xff]
        %v1213 = vld [vmem:[#allocation7 + $0x90] sm:$0xff]
        %v1214 = vld [vmem:[#allocation7 + $0x98] sm:$0xff]
        %v1215 = vld [vmem:[#allocation7 + $0xa0] sm:$0xff]
        %v1216 = vld [vmem:[#allocation7 + $0xa8] sm:$0xff]
        %v1217 = vld [vmem:[#allocation7 + $0xb0] sm:$0xff]
        %v1218 = vld [vmem:[#allocation7 + $0xb8] sm:$0xff]
        %v1219 = vld [vmem:[#allocation7 + $0xc0] sm:$0xff]
        %v1220 = vld [vmem:[#allocation7 + $0xc8] sm:$0xff]
        %v1221 = vld [vmem:[#allocation7 + $0xd0] sm:$0xff]
        %v1222 = vld [vmem:[#allocation7 + $0xd8] sm:$0xff]
        %v1223 = vld [vmem:[#allocation7 + $0xe0] sm:$0xff]
        %v1224 = vld [vmem:[#allocation7 + $0xe8] sm:$0xff]
        %v1225 = vld [vmem:[#allocation7 + $0xf0] sm:$0xff]
        %v1226 = vld [vmem:[#allocation7 + $0xf8] sm:$0xff]
        %v1227 = vld [vmem:[#allocation7 + $0x100] sm:$0xff]
        %v1228 = vld [vmem:[#allocation7 + $0x108] sm:$0xff]
        %v1229 = vld [vmem:[#allocation7 + $0x110] sm:$0xff]
        %v1230 = vld [vmem:[#allocation7 + $0x118] sm:$0xff]
        %v1231 = vld [vmem:[#allocation7 + $0x120] sm:$0xff]
        %v1232 = vld [vmem:[#allocation7 + $0x128] sm:$0xff]
        %v1233 = vld [vmem:[#allocation7 + $0x130] sm:$0xff]
        %v1234 = vld [vmem:[#allocation7 + $0x138] sm:$0xff]
        %v1235 = vld [vmem:[#allocation7 + $0x140] sm:$0xff]
        %v1236 = vld [vmem:[#allocation7 + $0x148] sm:$0xff]
        %v1237 = vld [vmem:[#allocation7 + $0x150] sm:$0xff]
        %v1238 = vld [vmem:[#allocation7 + $0x158] sm:$0xff]
        %v1239 = vld [vmem:[#allocation7 + $0x160] sm:$0xff]
        %v1240 = vld [vmem:[#allocation7 + $0x168] sm:$0xff]
        %v1241 = vld [vmem:[#allocation7 + $0x170] sm:$0xff]
        %v1242 = vld [vmem:[#allocation7 + $0x178] sm:$0xff]
        %v1243 = vld [vmem:[#allocation7 + $0x180] sm:$0xff]
        %v1244 = vld [vmem:[#allocation7 + $0x188] sm:$0xff]
        %v1245 = vld [vmem:[#allocation7 + $0x190] sm:$0xff]
        %v1246 = vld [vmem:[#allocation7 + $0x198] sm:$0xff]
        %v1247 = vld [vmem:[#allocation7 + $0x1a0] sm:$0xff]
        %v1248 = vld [vmem:[#allocation7 + $0x1a8] sm:$0xff]
        %v1249 = vld [vmem:[#allocation7 + $0x1b0] sm:$0xff]
        %v1250 = vld [vmem:[#allocation7 + $0x1b8] sm:$0xff]
        %v1251 = vld [vmem:[#allocation7 + $0x1c0] sm:$0xff]
        %v1252 = vld [vmem:[#allocation7 + $0x1c8] sm:$0xff]
        %v1253 = vld [vmem:[#allocation7 + $0x1d0] sm:$0xff]
        %v1254 = vld [vmem:[#allocation7 + $0x1d8] sm:$0xff]
        %v1255 = vld [vmem:[#allocation7 + $0x1e0] sm:$0xff]
        %v1256 = vld [vmem:[#allocation7 + $0x1e8] sm:$0xff]
        %v1257 = vld [vmem:[#allocation7 + $0x1f0] sm:$0xff]
        %v1258 = vld [vmem:[#allocation7 + $0x1f8] sm:$0xff]
        %v1259 = vld [vmem:[#allocation7 + $0x200] sm:$0xff]
        %v1260 = vld [vmem:[#allocation7 + $0x208] sm:$0xff]
        %v1261 = vld [vmem:[#allocation7 + $0x210] sm:$0xff]
        %v1262 = vld [vmem:[#allocation7 + $0x218] sm:$0xff]
        %v1263 = vld [vmem:[#allocation7 + $0x220] sm:$0xff]
        %v1264 = vld [vmem:[#allocation7 + $0x228] sm:$0xff]
        %v1265 = vld [vmem:[#allocation7 + $0x230] sm:$0xff]
        %v1266 = vld [vmem:[#allocation7 + $0x238] sm:$0xff]
        %v1267 = vld [vmem:[#allocation7 + $0x240] sm:$0xff]
        %v1268 = vld [vmem:[#allocation7 + $0x248] sm:$0xff]
        %v1269 = vld [vmem:[#allocation7 + $0x250] sm:$0xff]
        %v1270 = vld [vmem:[#allocation7 + $0x258] sm:$0xff]
        %v1271 = vld [vmem:[#allocation7 + $0x260] sm:$0xff]
        %v1272 = vld [vmem:[#allocation7 + $0x268] sm:$0xff]
        %v1273 = vld [vmem:[#allocation7 + $0x270] sm:$0xff]
        %v1274 = vld [vmem:[#allocation7 + $0x278] sm:$0xff]
        %v1275 = vld [vmem:[#allocation7 + $0x280] sm:$0xff]
        %v1276 = vld [vmem:[#allocation7 + $0x288] sm:$0xff]
        %v1277 = vld [vmem:[#allocation7 + $0x290] sm:$0xff]
        %v1278 = vld [vmem:[#allocation7 + $0x298] sm:$0xff]
        %v1279 = vld [vmem:[#allocation7 + $0x2a0] sm:$0xff]
        %v1280 = vld [vmem:[#allocation7 + $0x2a8] sm:$0xff]
        %v1281 = vld [vmem:[#allocation7 + $0x2b0] sm:$0xff]
        %v1282 = vld [vmem:[#allocation7 + $0x2b8] sm:$0xff]
        %v1283 = vld [vmem:[#allocation7 + $0x2c0] sm:$0xff]
        %v1284 = vld [vmem:[#allocation7 + $0x2c8] sm:$0xff]
        %v1285 = vld [vmem:[#allocation7 + $0x2d0] sm:$0xff]
        %v1286 = vld [vmem:[#allocation7 + $0x2d8] sm:$0xff]
        %v1287 = vld [vmem:[#allocation7 + $0x2e0] sm:$0xff]
        %v1288 = vld [vmem:[#allocation7 + $0x2e8] sm:$0xff]
        %v1289 = vld [vmem:[#allocation7 + $0x2f0] sm:$0xff]
        %v1290 = vld [vmem:[#allocation7 + $0x2f8] sm:$0xff]
        %v1291 = vld [vmem:[#allocation7 + $0x300] sm:$0xff]
        %v1292 = vld [vmem:[#allocation7 + $0x308] sm:$0xff]
        %v1293 = vld [vmem:[#allocation7 + $0x310] sm:$0xff]
        %v1294 = vld [vmem:[#allocation7 + $0x318] sm:$0xff]
        %v1295 = vld [vmem:[#allocation7 + $0x320] sm:$0xff]
        %v1296 = vld [vmem:[#allocation7 + $0x328] sm:$0xff]
        %v1297 = vld [vmem:[#allocation7 + $0x330] sm:$0xff]
        %v1298 = vld [vmem:[#allocation7 + $0x338] sm:$0xff]
        %v1299 = vld [vmem:[#allocation7 + $0x340] sm:$0xff]
        %v1300 = vld [vmem:[#allocation7 + $0x348] sm:$0xff]
        %v1301 = vld [vmem:[#allocation7 + $0x350] sm:$0xff]
        %v1302 = vld [vmem:[#allocation7 + $0x358] sm:$0xff]
        %v1303 = vld [vmem:[#allocation7 + $0x360] sm:$0xff]
        %v1304 = vld [vmem:[#allocation7 + $0x368] sm:$0xff]
        %v1305 = vld [vmem:[#allocation7 + $0x370] sm:$0xff]
        %v1306 = vld [vmem:[#allocation7 + $0x378] sm:$0xff]
        %v1307 = vld [vmem:[#allocation7 + $0x380] sm:$0xff]
        %v1308 = vld [vmem:[#allocation7 + $0x388] sm:$0xff]
        %v1309 = vld [vmem:[#allocation7 + $0x390] sm:$0xff]
        %v1310 = vld [vmem:[#allocation7 + $0x398] sm:$0xff]
        %v1311 = vld [vmem:[#allocation7 + $0x3a0] sm:$0xff]
        %v1312 = vld [vmem:[#allocation7 + $0x3a8] sm:$0xff]
        %v1313 = vld [vmem:[#allocation7 + $0x3b0] sm:$0xff]
        %v1314 = vld [vmem:[#allocation7 + $0x3b8] sm:$0xff]
        %v1315 = vld [vmem:[#allocation7 + $0x3c0] sm:$0xff]
        %v1316 = vld [vmem:[#allocation7 + $0x3c8] sm:$0xff]
        %v1317 = vld [vmem:[#allocation7 + $0x3d0] sm:$0xff]
        %v1318 = vld [vmem:[#allocation7 + $0x3d8] sm:$0xff]
        %v1319 = vld [vmem:[#allocation7 + $0x3e0] sm:$0xff]
        %v1320 = vld [vmem:[#allocation7 + $0x3e8] sm:$0xff]
        %v1321 = vld [vmem:[#allocation7 + $0x3f0] sm:$0xff]
        %v1322 = vld [vmem:[#allocation7 + $0x3f8] sm:$0xff]
        %v1323 = vld [vmem:[#allocation7 + $0x400] sm:$0xff]
        %v1324 = vld [vmem:[#allocation7 + $0x408] sm:$0xff]
        %v1325 = vld [vmem:[#allocation7 + $0x410] sm:$0xff]
        %v1326 = vld [vmem:[#allocation7 + $0x418] sm:$0xff]
        %v1327 = vld [vmem:[#allocation7 + $0x420] sm:$0xff]
        %v1328 = vld [vmem:[#allocation7 + $0x428] sm:$0xff]
        %v1329 = vld [vmem:[#allocation7 + $0x430] sm:$0xff]
        %v1330 = vld [vmem:[#allocation7 + $0x438] sm:$0xff]
        %v1331 = vld [vmem:[#allocation7 + $0x440] sm:$0xff]
        %v1332 = vld [vmem:[#allocation7 + $0x448] sm:$0xff]
        %v1333 = vld [vmem:[#allocation7 + $0x450] sm:$0xff]
        %v1334 = vld [vmem:[#allocation7 + $0x458] sm:$0xff]
        %v1335 = vld [vmem:[#allocation7 + $0x460] sm:$0xff]
        %v1336 = vld [vmem:[#allocation7 + $0x468] sm:$0xff]
        %v1337 = vld [vmem:[#allocation7 + $0x470] sm:$0xff]
        %v1338 = vld [vmem:[#allocation7 + $0x478] sm:$0xff]
        %1339 = vmatprep.subr.mxu0 %v1241
        %1340 = vmatpush1.msra.mxu0 %v1240
        %1341 = vmatprep.subr.mxu0 %v1238
        %1342 = vmatpush1.msra.mxu0 %v1237
        %1343 = vmatprep.subr.mxu0 %v1235
        %1344 = vmatpush1.msra.mxu0 %v1234
        %1345 = vmatprep.subr.mxu0 %v1232
        %1346 = vmatpush1.msra.mxu0 %v1231
        %1347 = vmatprep.subr.mxu0 %v1229
        %1348 = vmatpush1.msra.mxu0 %v1228
        %1349 = vmatprep.subr.mxu0 %v1226
        %1350 = vmatpush1.msra.mxu0 %v1225
        %1351 = vmatprep.subr.mxu0 %v1223
        %1352 = vmatpush1.msra.mxu0 %v1222
        %1353 = vmatprep.subr.mxu0 %v1220
        %1354 = vmatpush1.msra.mxu0 %v1219
        %1355 = vmatprep.subr.mxu0 %v1217
        %1356 = vmatpush1.msra.mxu0 %v1216
        %1357 = vmatprep.subr.mxu0 %v1214
        %1358 = vmatpush1.msra.mxu0 %v1213
        %1359 = vmatprep.subr.mxu0 %v1211
        %1360 = vmatpush1.msra.mxu0 %v1210
        %1361 = vmatprep.subr.mxu0 %v1208
        %1362 = vmatpush1.msra.mxu0 %v1207
        %1363 = vmatprep.subr.mxu0 %v1205
        %1364 = vmatpush1.msra.mxu0 %v1204
        %1365 = vmatprep.subr.mxu0 %v1202
        %1366 = vmatpush1.msra.mxu0 %v1201
        %1367 = vmatprep.subr.mxu0 %v1199
        %1368 = vmatpush1.msra.mxu0 %v1198
        %1369 = vmatprep.subr.mxu0 %v1196
        %1370 = vmatpush1.msra.mxu0 %v1195
        %1371 = vmatprep.subr.mxu0 %v1289
        %1372 = vmatpush2.msra.mxu0 %v1288
        %1373 = vmatprep.subr.mxu0 %v1286
        %1374 = vmatpush2.msra.mxu0 %v1285
        %1375 = vmatprep.subr.mxu0 %v1283
        %1376 = vmatpush2.msra.mxu0 %v1282
        %1377 = vmatprep.subr.mxu0 %v1280
        %1378 = vmatpush2.msra.mxu0 %v1279
        %1379 = vmatprep.subr.mxu0 %v1277
        %1380 = vmatpush2.msra.mxu0 %v1276
        %1381 = vmatprep.subr.mxu0 %v1274
        %1382 = vmatpush2.msra.mxu0 %v1273
        %1383 = vmatprep.subr.mxu0 %v1271
        %1384 = vmatpush2.msra.mxu0 %v1270
        %1385 = vmatprep.subr.mxu0 %v1268
        %1386 = vmatpush2.msra.mxu0 %v1267
        %1387 = vmatprep.subr.mxu0 %v1265
        %1388 = vmatpush2.msra.mxu0 %v1264
        %1389 = vmatprep.subr.mxu0 %v1262
        %1390 = vmatpush2.msra.mxu0 %v1261
        %1391 = vmatprep.subr.mxu0 %v1259
        %1392 = vmatpush2.msra.mxu0 %v1258
        %1393 = vmatprep.subr.mxu0 %v1256
        %1394 = vmatpush2.msra.mxu0 %v1255
        %1395 = vmatprep.subr.mxu0 %v1253
        %1396 = vmatpush2.msra.mxu0 %v1252
        %1397 = vmatprep.subr.mxu0 %v1250
        %1398 = vmatpush2.msra.mxu0 %v1249
        %1399 = vmatprep.subr.mxu0 %v1247
        %1400 = vmatpush2.msra.mxu0 %v1246
        %1401 = vmatprep.subr.mxu0 %v1244
        %1402 = vmatpush2.msra.mxu0 %v1243
        %1403 = vmatprep.mubr.f32.mxu0 %v767
        %1404 = vmatmul.mubr.f32.gmra.mxu0 %v766
        %v1405 = vpop.f32.mrf.mxu0
        %v1406 = vadd.f32 0.0, %v1405
        %v1407 = vpop.f32.mrf.mxu0
        %v1408 = vadd.f32 0.0, %v1407
        %1409 = vdwg.mxu0
        %1410 = vmatprep.subr.mxu0 %v1337
        %1411 = vmatpush1.msra.mxu0 %v1336
        %1412 = vmatprep.subr.mxu0 %v1334
        %1413 = vmatpush1.msra.mxu0 %v1333
        %1414 = vmatprep.subr.mxu0 %v1331
        %1415 = vmatpush1.msra.mxu0 %v1330
        %1416 = vmatprep.subr.mxu0 %v1328
        %1417 = vmatpush1.msra.mxu0 %v1327
        %1418 = vmatprep.subr.mxu0 %v1325
        %1419 = vmatpush1.msra.mxu0 %v1324
        %1420 = vmatprep.subr.mxu0 %v1322
        %1421 = vmatpush1.msra.mxu0 %v1321
        %1422 = vmatprep.subr.mxu0 %v1319
        %1423 = vmatpush1.msra.mxu0 %v1318
        %1424 = vmatprep.subr.mxu0 %v1316
        %1425 = vmatpush1.msra.mxu0 %v1315
        %1426 = vmatprep.subr.mxu0 %v1313
        %1427 = vmatpush1.msra.mxu0 %v1312
        %1428 = vmatprep.subr.mxu0 %v1310
        %1429 = vmatpush1.msra.mxu0 %v1309
        %1430 = vmatprep.subr.mxu0 %v1307
        %1431 = vmatpush1.msra.mxu0 %v1306
        %1432 = vmatprep.subr.mxu0 %v1304
        %1433 = vmatpush1.msra.mxu0 %v1303
        %1434 = vmatprep.subr.mxu0 %v1301
        %1435 = vmatpush1.msra.mxu0 %v1300
        %1436 = vmatprep.subr.mxu0 %v1298
        %1437 = vmatpush1.msra.mxu0 %v1297
        %1438 = vmatprep.subr.mxu0 %v1295
        %1439 = vmatpush1.msra.mxu0 %v1294
        %1440 = vmatprep.subr.mxu0 %v1292
        %1441 = vmatpush1.msra.mxu0 %v1291
        %1442 = vmatprep.subr.mxu0 0.0
        %1443 = vmatpush2.msra.mxu0 0.0
        %1444 = vmatprep.subr.mxu0 0.0
        %1445 = vmatpush2.msra.mxu0 0.0
        %1446 = vmatprep.subr.mxu0 0.0
        %1447 = vmatpush2.msra.mxu0 0.0
        %1448 = vmatprep.subr.mxu0 0.0
        %1449 = vmatpush2.msra.mxu0 0.0
        %1450 = vmatprep.subr.mxu0 0.0
        %1451 = vmatpush2.msra.mxu0 0.0
        %1452 = vmatprep.subr.mxu0 0.0
        %1453 = vmatpush2.msra.mxu0 0.0
        %1454 = vmatprep.subr.mxu0 0.0
        %1455 = vmatpush2.msra.mxu0 0.0
        %1456 = vmatprep.subr.mxu0 0.0
        %1457 = vmatpush2.msra.mxu0 0.0
        %1458 = vmatprep.subr.mxu0 0.0
        %1459 = vmatpush2.msra.mxu0 0.0
        %1460 = vmatprep.subr.mxu0 0.0
        %1461 = vmatpush2.msra.mxu0 0.0
        %1462 = vmatprep.subr.mxu0 0.0
        %1463 = vmatpush2.msra.mxu0 0.0
        %1464 = vmatprep.subr.mxu0 0.0
        %1465 = vmatpush2.msra.mxu0 0.0
        %1466 = vmatprep.subr.mxu0 0.0
        %1467 = vmatpush2.msra.mxu0 0.0
        %1468 = vmatprep.subr.mxu0 0.0
        %1469 = vmatpush2.msra.mxu0 0.0
        %1470 = vmatprep.subr.mxu0 0.0
        %1471 = vmatpush2.msra.mxu0 0.0
        %1472 = vmatprep.subr.mxu0 0.0
        %1473 = vmatpush2.msra.mxu0 0.0
        %1474 = vmatprep.mubr.f32.mxu0 0.0
        %1475 = vmatmul.mubr.f32.gmra.mxu0 %v768
        %v1476 = vpop.f32.mrf.mxu0
        %v1477 = vadd.f32 %v1406, %v1476
        %v1478 = vpop.f32.mrf.mxu0
        %v1479 = vadd.f32 %v1408, %v1478
        %1480 = vdwg.mxu0
        %1481 = vmatprep.subr.mxu0 0.0
        %1482 = vmatpush1.msra.mxu0 %v1242
        %1483 = vmatprep.subr.mxu0 0.0
        %1484 = vmatpush1.msra.mxu0 %v1239
        %1485 = vmatprep.subr.mxu0 0.0
        %1486 = vmatpush1.msra.mxu0 %v1236
        %1487 = vmatprep.subr.mxu0 0.0
        %1488 = vmatpush1.msra.mxu0 %v1233
        %1489 = vmatprep.subr.mxu0 0.0
        %1490 = vmatpush1.msra.mxu0 %v1230
        %1491 = vmatprep.subr.mxu0 0.0
        %1492 = vmatpush1.msra.mxu0 %v1227
        %1493 = vmatprep.subr.mxu0 0.0
        %1494 = vmatpush1.msra.mxu0 %v1224
        %1495 = vmatprep.subr.mxu0 0.0
        %1496 = vmatpush1.msra.mxu0 %v1221
        %1497 = vmatprep.subr.mxu0 0.0
        %1498 = vmatpush1.msra.mxu0 %v1218
        %1499 = vmatprep.subr.mxu0 0.0
        %1500 = vmatpush1.msra.mxu0 %v1215
        %1501 = vmatprep.subr.mxu0 0.0
        %1502 = vmatpush1.msra.mxu0 %v1212
        %1503 = vmatprep.subr.mxu0 0.0
        %1504 = vmatpush1.msra.mxu0 %v1209
        %1505 = vmatprep.subr.mxu0 0.0
        %1506 = vmatpush1.msra.mxu0 %v1206
        %1507 = vmatprep.subr.mxu0 0.0
        %1508 = vmatpush1.msra.mxu0 %v1203
        %1509 = vmatprep.subr.mxu0 0.0
        %1510 = vmatpush1.msra.mxu0 %v1200
        %1511 = vmatprep.subr.mxu0 0.0
        %1512 = vmatpush1.msra.mxu0 %v1197
        %1513 = vmatprep.subr.mxu0 0.0
        %1514 = vmatpush2.msra.mxu0 %v1290
        %1515 = vmatprep.subr.mxu0 0.0
        %1516 = vmatpush2.msra.mxu0 %v1287
        %1517 = vmatprep.subr.mxu0 0.0
        %1518 = vmatpush2.msra.mxu0 %v1284
        %1519 = vmatprep.subr.mxu0 0.0
        %1520 = vmatpush2.msra.mxu0 %v1281
        %1521 = vmatprep.subr.mxu0 0.0
        %1522 = vmatpush2.msra.mxu0 %v1278
        %1523 = vmatprep.subr.mxu0 0.0
        %1524 = vmatpush2.msra.mxu0 %v1275
        %1525 = vmatprep.subr.mxu0 0.0
        %1526 = vmatpush2.msra.mxu0 %v1272
        %1527 = vmatprep.subr.mxu0 0.0
        %1528 = vmatpush2.msra.mxu0 %v1269
        %1529 = vmatprep.subr.mxu0 0.0
        %1530 = vmatpush2.msra.mxu0 %v1266
        %1531 = vmatprep.subr.mxu0 0.0
        %1532 = vmatpush2.msra.mxu0 %v1263
        %1533 = vmatprep.subr.mxu0 0.0
        %1534 = vmatpush2.msra.mxu0 %v1260
        %1535 = vmatprep.subr.mxu0 0.0
        %1536 = vmatpush2.msra.mxu0 %v1257
        %1537 = vmatprep.subr.mxu0 0.0
        %1538 = vmatpush2.msra.mxu0 %v1254
        %1539 = vmatprep.subr.mxu0 0.0
        %1540 = vmatpush2.msra.mxu0 %v1251
        %1541 = vmatprep.subr.mxu0 0.0
        %1542 = vmatpush2.msra.mxu0 %v1248
        %1543 = vmatprep.subr.mxu0 0.0
        %1544 = vmatpush2.msra.mxu0 %v1245
        %1545 = vmatprep.mubr.f32.mxu0 %v767
        %1546 = vmatmul.mubr.f32.gmra.mxu0 %v766
        %v1547 = vpop.f32.mrf.mxu0
        %v1548 = vadd.f32 0.0, %v1547
        %v1549 = vpop.f32.mrf.mxu0
        %1550 = vdwg.mxu0
        %1551 = vmatprep.subr.mxu0 0.0
        %1552 = vmatpush1.msra.mxu0 %v1338
        %1553 = vmatprep.subr.mxu0 0.0
        %1554 = vmatpush1.msra.mxu0 %v1335
        %1555 = vmatprep.subr.mxu0 0.0
        %1556 = vmatpush1.msra.mxu0 %v1332
        %1557 = vmatprep.subr.mxu0 0.0
        %1558 = vmatpush1.msra.mxu0 %v1329
        %1559 = vmatprep.subr.mxu0 0.0
        %1560 = vmatpush1.msra.mxu0 %v1326
        %1561 = vmatprep.subr.mxu0 0.0
        %1562 = vmatpush1.msra.mxu0 %v1323
        %1563 = vmatprep.subr.mxu0 0.0
        %1564 = vmatpush1.msra.mxu0 %v1320
        %1565 = vmatprep.subr.mxu0 0.0
        %1566 = vmatpush1.msra.mxu0 %v1317
        %1567 = vmatprep.subr.mxu0 0.0
        %1568 = vmatpush1.msra.mxu0 %v1314
        %1569 = vmatprep.subr.mxu0 0.0
        %1570 = vmatpush1.msra.mxu0 %v1311
        %1571 = vmatprep.subr.mxu0 0.0
        %1572 = vmatpush1.msra.mxu0 %v1308
        %1573 = vmatprep.subr.mxu0 0.0
        %1574 = vmatpush1.msra.mxu0 %v1305
        %1575 = vmatprep.subr.mxu0 0.0
        %1576 = vmatpush1.msra.mxu0 %v1302
        %1577 = vmatprep.subr.mxu0 0.0
        %1578 = vmatpush1.msra.mxu0 %v1299
        %1579 = vmatprep.subr.mxu0 0.0
        %1580 = vmatpush1.msra.mxu0 %v1296
        %1581 = vmatprep.subr.mxu0 0.0
        %1582 = vmatpush1.msra.mxu0 %v1293
        %1583 = vmatprep.subr.mxu0 0.0
        %1584 = vmatpush2.msra.mxu0 0.0
        %1585 = vmatprep.subr.mxu0 0.0
        %1586 = vmatpush2.msra.mxu0 0.0
        %1587 = vmatprep.subr.mxu0 0.0
        %1588 = vmatpush2.msra.mxu0 0.0
        %1589 = vmatprep.subr.mxu0 0.0
        %1590 = vmatpush2.msra.mxu0 0.0
        %1591 = vmatprep.subr.mxu0 0.0
        %1592 = vmatpush2.msra.mxu0 0.0
        %1593 = vmatprep.subr.mxu0 0.0
        %1594 = vmatpush2.msra.mxu0 0.0
        %1595 = vmatprep.subr.mxu0 0.0
        %1596 = vmatpush2.msra.mxu0 0.0
        %1597 = vmatprep.subr.mxu0 0.0
        %1598 = vmatpush2.msra.mxu0 0.0
        %1599 = vmatprep.subr.mxu0 0.0
        %1600 = vmatpush2.msra.mxu0 0.0
        %1601 = vmatprep.subr.mxu0 0.0
        %1602 = vmatpush2.msra.mxu0 0.0
        %1603 = vmatprep.subr.mxu0 0.0
        %1604 = vmatpush2.msra.mxu0 0.0
        %1605 = vmatprep.subr.mxu0 0.0
        %1606 = vmatpush2.msra.mxu0 0.0
        %1607 = vmatprep.subr.mxu0 0.0
        %1608 = vmatpush2.msra.mxu0 0.0
        %1609 = vmatprep.subr.mxu0 0.0
        %1610 = vmatpush2.msra.mxu0 0.0
        %1611 = vmatprep.subr.mxu0 0.0
        %1612 = vmatpush2.msra.mxu0 0.0
        %1613 = vmatprep.subr.mxu0 0.0
        %1614 = vmatpush2.msra.mxu0 0.0
        %1615 = vmatprep.mubr.f32.mxu0 0.0
        %1616 = vmatmul.mubr.f32.gmra.mxu0 %v768
        %v1617 = vpop.f32.mrf.mxu0
        %v1618 = vadd.f32 %v1548, %v1617
        %v1619 = vpop.f32.mrf.mxu0
        %1620 = vdwg.mxu0
        %v1621 = vld [vmem:[#allocation9] sm:$0xff]
        %v1622 = vld [vmem:[#allocation9 + $0x8] sm:$0xff]
        %v1623 = vld [vmem:[#allocation9 + $0x10] sm:$0xff]
        %v1624 = vld [vmem:[#allocation9 + $0x18] sm:$0xff]
        %v1625 = vld [vmem:[#allocation9 + $0x20] sm:$0xff]
        %v1626 = vld [vmem:[#allocation9 + $0x28] sm:$0xff]
        %v1627 = vld [vmem:[#allocation9 + $0x30] sm:$0xff]
        %v1628 = vld [vmem:[#allocation9 + $0x38] sm:$0xff]
        %v1629 = vld [vmem:[#allocation9 + $0x40] sm:$0xff]
        %v1630 = vld [vmem:[#allocation9 + $0x48] sm:$0xff]
        %v1631 = vld [vmem:[#allocation9 + $0x50] sm:$0xff]
        %v1632 = vld [vmem:[#allocation9 + $0x58] sm:$0xff]
        %v1633 = vld [vmem:[#allocation9 + $0x60] sm:$0xff]
        %v1634 = vld [vmem:[#allocation9 + $0x68] sm:$0xff]
        %v1635 = vld [vmem:[#allocation9 + $0x70] sm:$0xff]
        %v1636 = vld [vmem:[#allocation9 + $0x78] sm:$0xff]
        %v1637 = vld [vmem:[#allocation9 + $0x80] sm:$0xff]
        %v1638 = vld [vmem:[#allocation9 + $0x88] sm:$0xff]
        %v1639 = vld [vmem:[#allocation9 + $0x90] sm:$0xff]
        %v1640 = vld [vmem:[#allocation9 + $0x98] sm:$0xff]
        %v1641 = vld [vmem:[#allocation9 + $0xa0] sm:$0xff]
        %v1642 = vld [vmem:[#allocation9 + $0xa8] sm:$0xff]
        %v1643 = vld [vmem:[#allocation9 + $0xb0] sm:$0xff]
        %v1644 = vld [vmem:[#allocation9 + $0xb8] sm:$0xff]
        %v1645 = vld [vmem:[#allocation9 + $0xc0] sm:$0xff]
        %v1646 = vld [vmem:[#allocation9 + $0xc8] sm:$0xff]
        %v1647 = vld [vmem:[#allocation9 + $0xd0] sm:$0xff]
        %v1648 = vld [vmem:[#allocation9 + $0xd8] sm:$0xff]
        %v1649 = vld [vmem:[#allocation9 + $0xe0] sm:$0xff]
        %v1650 = vld [vmem:[#allocation9 + $0xe8] sm:$0xff]
        %v1651 = vld [vmem:[#allocation9 + $0xf0] sm:$0xff]
        %v1652 = vld [vmem:[#allocation9 + $0xf8] sm:$0xff]
        %v1653 = vld [vmem:[#allocation9 + $0x100] sm:$0xff]
        %v1654 = vld [vmem:[#allocation9 + $0x108] sm:$0xff]
        %v1655 = vld [vmem:[#allocation9 + $0x110] sm:$0xff]
        %v1656 = vld [vmem:[#allocation9 + $0x118] sm:$0xff]
        %v1657 = vld [vmem:[#allocation9 + $0x120] sm:$0xff]
        %v1658 = vld [vmem:[#allocation9 + $0x128] sm:$0xff]
        %v1659 = vld [vmem:[#allocation9 + $0x130] sm:$0xff]
        %v1660 = vld [vmem:[#allocation9 + $0x138] sm:$0xff]
        %v1661 = vld [vmem:[#allocation9 + $0x140] sm:$0xff]
        %v1662 = vld [vmem:[#allocation9 + $0x148] sm:$0xff]
        %v1663 = vld [vmem:[#allocation9 + $0x150] sm:$0xff]
        %v1664 = vld [vmem:[#allocation9 + $0x158] sm:$0xff]
        %v1665 = vld [vmem:[#allocation9 + $0x160] sm:$0xff]
        %v1666 = vld [vmem:[#allocation9 + $0x168] sm:$0xff]
        %v1667 = vld [vmem:[#allocation9 + $0x170] sm:$0xff]
        %v1668 = vld [vmem:[#allocation9 + $0x178] sm:$0xff]
        %v1669 = vld [vmem:[#allocation9 + $0x180] sm:$0xff]
        %v1670 = vld [vmem:[#allocation9 + $0x188] sm:$0xff]
        %v1671 = vld [vmem:[#allocation9 + $0x190] sm:$0xff]
        %v1672 = vld [vmem:[#allocation9 + $0x198] sm:$0xff]
        %v1673 = vld [vmem:[#allocation9 + $0x1a0] sm:$0xff]
        %v1674 = vld [vmem:[#allocation9 + $0x1a8] sm:$0xff]
        %v1675 = vld [vmem:[#allocation9 + $0x1b0] sm:$0xff]
        %v1676 = vld [vmem:[#allocation9 + $0x1b8] sm:$0xff]
        %v1677 = vld [vmem:[#allocation9 + $0x1c0] sm:$0xff]
        %v1678 = vld [vmem:[#allocation9 + $0x1c8] sm:$0xff]
        %v1679 = vld [vmem:[#allocation9 + $0x1d0] sm:$0xff]
        %v1680 = vld [vmem:[#allocation9 + $0x1d8] sm:$0xff]
        %v1681 = vld [vmem:[#allocation9 + $0x1e0] sm:$0xff]
        %v1682 = vld [vmem:[#allocation9 + $0x1e8] sm:$0xff]
        %v1683 = vld [vmem:[#allocation9 + $0x1f0] sm:$0xff]
        %v1684 = vld [vmem:[#allocation9 + $0x1f8] sm:$0xff]
        %v1685 = vld [vmem:[#allocation9 + $0x200] sm:$0xff]
        %v1686 = vld [vmem:[#allocation9 + $0x208] sm:$0xff]
        %v1687 = vld [vmem:[#allocation9 + $0x210] sm:$0xff]
        %v1688 = vld [vmem:[#allocation9 + $0x218] sm:$0xff]
        %v1689 = vld [vmem:[#allocation9 + $0x220] sm:$0xff]
        %v1690 = vld [vmem:[#allocation9 + $0x228] sm:$0xff]
        %v1691 = vld [vmem:[#allocation9 + $0x230] sm:$0xff]
        %v1692 = vld [vmem:[#allocation9 + $0x238] sm:$0xff]
        %v1693 = vld [vmem:[#allocation9 + $0x240] sm:$0xff]
        %v1694 = vld [vmem:[#allocation9 + $0x248] sm:$0xff]
        %v1695 = vld [vmem:[#allocation9 + $0x250] sm:$0xff]
        %v1696 = vld [vmem:[#allocation9 + $0x258] sm:$0xff]
        %v1697 = vld [vmem:[#allocation9 + $0x260] sm:$0xff]
        %v1698 = vld [vmem:[#allocation9 + $0x268] sm:$0xff]
        %v1699 = vld [vmem:[#allocation9 + $0x270] sm:$0xff]
        %v1700 = vld [vmem:[#allocation9 + $0x278] sm:$0xff]
        %v1701 = vld [vmem:[#allocation9 + $0x280] sm:$0xff]
        %v1702 = vld [vmem:[#allocation9 + $0x288] sm:$0xff]
        %v1703 = vld [vmem:[#allocation9 + $0x290] sm:$0xff]
        %v1704 = vld [vmem:[#allocation9 + $0x298] sm:$0xff]
        %v1705 = vld [vmem:[#allocation9 + $0x2a0] sm:$0xff]
        %v1706 = vld [vmem:[#allocation9 + $0x2a8] sm:$0xff]
        %v1707 = vld [vmem:[#allocation9 + $0x2b0] sm:$0xff]
        %v1708 = vld [vmem:[#allocation9 + $0x2b8] sm:$0xff]
        %v1709 = vld [vmem:[#allocation9 + $0x2c0] sm:$0xff]
        %v1710 = vld [vmem:[#allocation9 + $0x2c8] sm:$0xff]
        %v1711 = vld [vmem:[#allocation9 + $0x2d0] sm:$0xff]
        %v1712 = vld [vmem:[#allocation9 + $0x2d8] sm:$0xff]
        %v1713 = vld [vmem:[#allocation9 + $0x2e0] sm:$0xff]
        %v1714 = vld [vmem:[#allocation9 + $0x2e8] sm:$0xff]
        %v1715 = vld [vmem:[#allocation9 + $0x2f0] sm:$0xff]
        %v1716 = vld [vmem:[#allocation9 + $0x2f8] sm:$0xff]
        %v1717 = vld [vmem:[#allocation9 + $0x300] sm:$0xff]
        %v1718 = vld [vmem:[#allocation9 + $0x308] sm:$0xff]
        %v1719 = vld [vmem:[#allocation9 + $0x310] sm:$0xff]
        %v1720 = vld [vmem:[#allocation9 + $0x318] sm:$0xff]
        %v1721 = vld [vmem:[#allocation9 + $0x320] sm:$0xff]
        %v1722 = vld [vmem:[#allocation9 + $0x328] sm:$0xff]
        %v1723 = vld [vmem:[#allocation9 + $0x330] sm:$0xff]
        %v1724 = vld [vmem:[#allocation9 + $0x338] sm:$0xff]
        %v1725 = vld [vmem:[#allocation9 + $0x340] sm:$0xff]
        %v1726 = vld [vmem:[#allocation9 + $0x348] sm:$0xff]
        %v1727 = vld [vmem:[#allocation9 + $0x350] sm:$0xff]
        %v1728 = vld [vmem:[#allocation9 + $0x358] sm:$0xff]
        %v1729 = vld [vmem:[#allocation9 + $0x360] sm:$0xff]
        %v1730 = vld [vmem:[#allocation9 + $0x368] sm:$0xff]
        %v1731 = vld [vmem:[#allocation9 + $0x370] sm:$0xff]
        %v1732 = vld [vmem:[#allocation9 + $0x378] sm:$0xff]
        %v1733 = vld [vmem:[#allocation9 + $0x380] sm:$0xff]
        %v1734 = vld [vmem:[#allocation9 + $0x388] sm:$0xff]
        %v1735 = vld [vmem:[#allocation9 + $0x390] sm:$0xff]
        %v1736 = vld [vmem:[#allocation9 + $0x398] sm:$0xff]
        %v1737 = vld [vmem:[#allocation9 + $0x3a0] sm:$0xff]
        %v1738 = vld [vmem:[#allocation9 + $0x3a8] sm:$0xff]
        %v1739 = vld [vmem:[#allocation9 + $0x3b0] sm:$0xff]
        %v1740 = vld [vmem:[#allocation9 + $0x3b8] sm:$0xff]
        %v1741 = vld [vmem:[#allocation9 + $0x3c0] sm:$0xff]
        %v1742 = vld [vmem:[#allocation9 + $0x3c8] sm:$0xff]
        %v1743 = vld [vmem:[#allocation9 + $0x3d0] sm:$0xff]
        %v1744 = vld [vmem:[#allocation9 + $0x3d8] sm:$0xff]
        %v1745 = vld [vmem:[#allocation9 + $0x3e0] sm:$0xff]
        %v1746 = vld [vmem:[#allocation9 + $0x3e8] sm:$0xff]
        %v1747 = vld [vmem:[#allocation9 + $0x3f0] sm:$0xff]
        %v1748 = vld [vmem:[#allocation9 + $0x3f8] sm:$0xff]
        %v1749 = vld [vmem:[#allocation9 + $0x400] sm:$0xff]
        %v1750 = vld [vmem:[#allocation9 + $0x408] sm:$0xff]
        %v1751 = vld [vmem:[#allocation9 + $0x410] sm:$0xff]
        %v1752 = vld [vmem:[#allocation9 + $0x418] sm:$0xff]
        %v1753 = vld [vmem:[#allocation9 + $0x420] sm:$0xff]
        %v1754 = vld [vmem:[#allocation9 + $0x428] sm:$0xff]
        %v1755 = vld [vmem:[#allocation9 + $0x430] sm:$0xff]
        %v1756 = vld [vmem:[#allocation9 + $0x438] sm:$0xff]
        %v1757 = vld [vmem:[#allocation9 + $0x440] sm:$0xff]
        %v1758 = vld [vmem:[#allocation9 + $0x448] sm:$0xff]
        %v1759 = vld [vmem:[#allocation9 + $0x450] sm:$0xff]
        %v1760 = vld [vmem:[#allocation9 + $0x458] sm:$0xff]
        %v1761 = vld [vmem:[#allocation9 + $0x460] sm:$0xff]
        %v1762 = vld [vmem:[#allocation9 + $0x468] sm:$0xff]
        %v1763 = vld [vmem:[#allocation9 + $0x470] sm:$0xff]
        %v1764 = vld [vmem:[#allocation9 + $0x478] sm:$0xff]
        %1765 = vmatprep.subr.mxu0 %v1667
        %1766 = vmatpush1.msra.mxu0 %v1666
        %1767 = vmatprep.subr.mxu0 %v1664
        %1768 = vmatpush1.msra.mxu0 %v1663
        %1769 = vmatprep.subr.mxu0 %v1661
        %1770 = vmatpush1.msra.mxu0 %v1660
        %1771 = vmatprep.subr.mxu0 %v1658
        %1772 = vmatpush1.msra.mxu0 %v1657
        %1773 = vmatprep.subr.mxu0 %v1655
        %1774 = vmatpush1.msra.mxu0 %v1654
        %1775 = vmatprep.subr.mxu0 %v1652
        %1776 = vmatpush1.msra.mxu0 %v1651
        %1777 = vmatprep.subr.mxu0 %v1649
        %1778 = vmatpush1.msra.mxu0 %v1648
        %1779 = vmatprep.subr.mxu0 %v1646
        %1780 = vmatpush1.msra.mxu0 %v1645
        %1781 = vmatprep.subr.mxu0 %v1643
        %1782 = vmatpush1.msra.mxu0 %v1642
        %1783 = vmatprep.subr.mxu0 %v1640
        %1784 = vmatpush1.msra.mxu0 %v1639
        %1785 = vmatprep.subr.mxu0 %v1637
        %1786 = vmatpush1.msra.mxu0 %v1636
        %1787 = vmatprep.subr.mxu0 %v1634
        %1788 = vmatpush1.msra.mxu0 %v1633
        %1789 = vmatprep.subr.mxu0 %v1631
        %1790 = vmatpush1.msra.mxu0 %v1630
        %1791 = vmatprep.subr.mxu0 %v1628
        %1792 = vmatpush1.msra.mxu0 %v1627
        %1793 = vmatprep.subr.mxu0 %v1625
        %1794 = vmatpush1.msra.mxu0 %v1624
        %1795 = vmatprep.subr.mxu0 %v1622
        %1796 = vmatpush1.msra.mxu0 %v1621
        %1797 = vmatprep.subr.mxu0 %v1715
        %1798 = vmatpush2.msra.mxu0 %v1714
        %1799 = vmatprep.subr.mxu0 %v1712
        %1800 = vmatpush2.msra.mxu0 %v1711
        %1801 = vmatprep.subr.mxu0 %v1709
        %1802 = vmatpush2.msra.mxu0 %v1708
        %1803 = vmatprep.subr.mxu0 %v1706
        %1804 = vmatpush2.msra.mxu0 %v1705
        %1805 = vmatprep.subr.mxu0 %v1703
        %1806 = vmatpush2.msra.mxu0 %v1702
        %1807 = vmatprep.subr.mxu0 %v1700
        %1808 = vmatpush2.msra.mxu0 %v1699
        %1809 = vmatprep.subr.mxu0 %v1697
        %1810 = vmatpush2.msra.mxu0 %v1696
        %1811 = vmatprep.subr.mxu0 %v1694
        %1812 = vmatpush2.msra.mxu0 %v1693
        %1813 = vmatprep.subr.mxu0 %v1691
        %1814 = vmatpush2.msra.mxu0 %v1690
        %1815 = vmatprep.subr.mxu0 %v1688
        %1816 = vmatpush2.msra.mxu0 %v1687
        %1817 = vmatprep.subr.mxu0 %v1685
        %1818 = vmatpush2.msra.mxu0 %v1684
        %1819 = vmatprep.subr.mxu0 %v1682
        %1820 = vmatpush2.msra.mxu0 %v1681
        %1821 = vmatprep.subr.mxu0 %v1679
        %1822 = vmatpush2.msra.mxu0 %v1678
        %1823 = vmatprep.subr.mxu0 %v1676
        %1824 = vmatpush2.msra.mxu0 %v1675
        %1825 = vmatprep.subr.mxu0 %v1673
        %1826 = vmatpush2.msra.mxu0 %v1672
        %1827 = vmatprep.subr.mxu0 %v1670
        %1828 = vmatpush2.msra.mxu0 %v1669
        %1829 = vmatprep.mubr.f32.mxu0 %v767
        %1830 = vmatmul.mubr.f32.gmra.mxu0 %v766
        %v1831 = vpop.f32.mrf.mxu0
        %v1832 = vadd.f32 0.0, %v1831
        %v1833 = vpop.f32.mrf.mxu0
        %v1834 = vadd.f32 0.0, %v1833
        %1835 = vdwg.mxu0
        %1836 = vmatprep.subr.mxu0 %v1763
        %1837 = vmatpush1.msra.mxu0 %v1762
        %1838 = vmatprep.subr.mxu0 %v1760
        %1839 = vmatpush1.msra.mxu0 %v1759
        %1840 = vmatprep.subr.mxu0 %v1757
        %1841 = vmatpush1.msra.mxu0 %v1756
        %1842 = vmatprep.subr.mxu0 %v1754
        %1843 = vmatpush1.msra.mxu0 %v1753
        %1844 = vmatprep.subr.mxu0 %v1751
        %1845 = vmatpush1.msra.mxu0 %v1750
        %1846 = vmatprep.subr.mxu0 %v1748
        %1847 = vmatpush1.msra.mxu0 %v1747
        %1848 = vmatprep.subr.mxu0 %v1745
        %1849 = vmatpush1.msra.mxu0 %v1744
        %1850 = vmatprep.subr.mxu0 %v1742
        %1851 = vmatpush1.msra.mxu0 %v1741
        %1852 = vmatprep.subr.mxu0 %v1739
        %1853 = vmatpush1.msra.mxu0 %v1738
        %1854 = vmatprep.subr.mxu0 %v1736
        %1855 = vmatpush1.msra.mxu0 %v1735
        %1856 = vmatprep.subr.mxu0 %v1733
        %1857 = vmatpush1.msra.mxu0 %v1732
        %1858 = vmatprep.subr.mxu0 %v1730
        %1859 = vmatpush1.msra.mxu0 %v1729
        %1860 = vmatprep.subr.mxu0 %v1727
        %1861 = vmatpush1.msra.mxu0 %v1726
        %1862 = vmatprep.subr.mxu0 %v1724
        %1863 = vmatpush1.msra.mxu0 %v1723
        %1864 = vmatprep.subr.mxu0 %v1721
        %1865 = vmatpush1.msra.mxu0 %v1720
        %1866 = vmatprep.subr.mxu0 %v1718
        %1867 = vmatpush1.msra.mxu0 %v1717
        %1868 = vmatprep.subr.mxu0 0.0
        %1869 = vmatpush2.msra.mxu0 0.0
        %1870 = vmatprep.subr.mxu0 0.0
        %1871 = vmatpush2.msra.mxu0 0.0
        %1872 = vmatprep.subr.mxu0 0.0
        %1873 = vmatpush2.msra.mxu0 0.0
        %1874 = vmatprep.subr.mxu0 0.0
        %1875 = vmatpush2.msra.mxu0 0.0
        %1876 = vmatprep.subr.mxu0 0.0
        %1877 = vmatpush2.msra.mxu0 0.0
        %1878 = vmatprep.subr.mxu0 0.0
        %1879 = vmatpush2.msra.mxu0 0.0
        %1880 = vmatprep.subr.mxu0 0.0
        %1881 = vmatpush2.msra.mxu0 0.0
        %1882 = vmatprep.subr.mxu0 0.0
        %1883 = vmatpush2.msra.mxu0 0.0
        %1884 = vmatprep.subr.mxu0 0.0
        %1885 = vmatpush2.msra.mxu0 0.0
        %1886 = vmatprep.subr.mxu0 0.0
        %1887 = vmatpush2.msra.mxu0 0.0
        %1888 = vmatprep.subr.mxu0 0.0
        %1889 = vmatpush2.msra.mxu0 0.0
        %1890 = vmatprep.subr.mxu0 0.0
        %1891 = vmatpush2.msra.mxu0 0.0
        %1892 = vmatprep.subr.mxu0 0.0
        %1893 = vmatpush2.msra.mxu0 0.0
        %1894 = vmatprep.subr.mxu0 0.0
        %1895 = vmatpush2.msra.mxu0 0.0
        %1896 = vmatprep.subr.mxu0 0.0
        %1897 = vmatpush2.msra.mxu0 0.0
        %1898 = vmatprep.subr.mxu0 0.0
        %1899 = vmatpush2.msra.mxu0 0.0
        %1900 = vmatprep.mubr.f32.mxu0 0.0
        %1901 = vmatmul.mubr.f32.gmra.mxu0 %v768
        %v1902 = vpop.f32.mrf.mxu0
        %v1903 = vadd.f32 %v1832, %v1902
        %v1904 = vpop.f32.mrf.mxu0
        %v1905 = vadd.f32 %v1834, %v1904
        %1906 = vdwg.mxu0
        %1907 = vmatprep.subr.mxu0 0.0
        %1908 = vmatpush1.msra.mxu0 %v1668
        %1909 = vmatprep.subr.mxu0 0.0
        %1910 = vmatpush1.msra.mxu0 %v1665
        %1911 = vmatprep.subr.mxu0 0.0
        %1912 = vmatpush1.msra.mxu0 %v1662
        %1913 = vmatprep.subr.mxu0 0.0
        %1914 = vmatpush1.msra.mxu0 %v1659
        %1915 = vmatprep.subr.mxu0 0.0
        %1916 = vmatpush1.msra.mxu0 %v1656
        %1917 = vmatprep.subr.mxu0 0.0
        %1918 = vmatpush1.msra.mxu0 %v1653
        %1919 = vmatprep.subr.mxu0 0.0
        %1920 = vmatpush1.msra.mxu0 %v1650
        %1921 = vmatprep.subr.mxu0 0.0
        %1922 = vmatpush1.msra.mxu0 %v1647
        %1923 = vmatprep.subr.mxu0 0.0
        %1924 = vmatpush1.msra.mxu0 %v1644
        %1925 = vmatprep.subr.mxu0 0.0
        %1926 = vmatpush1.msra.mxu0 %v1641
        %1927 = vmatprep.subr.mxu0 0.0
        %1928 = vmatpush1.msra.mxu0 %v1638
        %1929 = vmatprep.subr.mxu0 0.0
        %1930 = vmatpush1.msra.mxu0 %v1635
        %1931 = vmatprep.subr.mxu0 0.0
        %1932 = vmatpush1.msra.mxu0 %v1632
        %1933 = vmatprep.subr.mxu0 0.0
        %1934 = vmatpush1.msra.mxu0 %v1629
        %1935 = vmatprep.subr.mxu0 0.0
        %1936 = vmatpush1.msra.mxu0 %v1626
        %1937 = vmatprep.subr.mxu0 0.0
        %1938 = vmatpush1.msra.mxu0 %v1623
        %1939 = vmatprep.subr.mxu0 0.0
        %1940 = vmatpush2.msra.mxu0 %v1716
        %1941 = vmatprep.subr.mxu0 0.0
        %1942 = vmatpush2.msra.mxu0 %v1713
        %1943 = vmatprep.subr.mxu0 0.0
        %1944 = vmatpush2.msra.mxu0 %v1710
        %1945 = vmatprep.subr.mxu0 0.0
        %1946 = vmatpush2.msra.mxu0 %v1707
        %1947 = vmatprep.subr.mxu0 0.0
        %1948 = vmatpush2.msra.mxu0 %v1704
        %1949 = vmatprep.subr.mxu0 0.0
        %1950 = vmatpush2.msra.mxu0 %v1701
        %1951 = vmatprep.subr.mxu0 0.0
        %1952 = vmatpush2.msra.mxu0 %v1698
        %1953 = vmatprep.subr.mxu0 0.0
        %1954 = vmatpush2.msra.mxu0 %v1695
        %1955 = vmatprep.subr.mxu0 0.0
        %1956 = vmatpush2.msra.mxu0 %v1692
        %1957 = vmatprep.subr.mxu0 0.0
        %1958 = vmatpush2.msra.mxu0 %v1689
        %1959 = vmatprep.subr.mxu0 0.0
        %1960 = vmatpush2.msra.mxu0 %v1686
        %1961 = vmatprep.subr.mxu0 0.0
        %1962 = vmatpush2.msra.mxu0 %v1683
        %1963 = vmatprep.subr.mxu0 0.0
        %1964 = vmatpush2.msra.mxu0 %v1680
        %1965 = vmatprep.subr.mxu0 0.0
        %1966 = vmatpush2.msra.mxu0 %v1677
        %1967 = vmatprep.subr.mxu0 0.0
        %1968 = vmatpush2.msra.mxu0 %v1674
        %1969 = vmatprep.subr.mxu0 0.0
        %1970 = vmatpush2.msra.mxu0 %v1671
        %1971 = vmatprep.mubr.f32.mxu0 %v767
        %1972 = vmatmul.mubr.f32.gmra.mxu0 %v766
        %v1973 = vpop.f32.mrf.mxu0
        %v1974 = vadd.f32 0.0, %v1973
        %v1975 = vpop.f32.mrf.mxu0
        %1976 = vdwg.mxu0
        %1977 = vmatprep.subr.mxu0 0.0
        %1978 = vmatpush1.msra.mxu0 %v1764
        %1979 = vmatprep.subr.mxu0 0.0
        %1980 = vmatpush1.msra.mxu0 %v1761
        %1981 = vmatprep.subr.mxu0 0.0
        %1982 = vmatpush1.msra.mxu0 %v1758
        %1983 = vmatprep.subr.mxu0 0.0
        %1984 = vmatpush1.msra.mxu0 %v1755
        %1985 = vmatprep.subr.mxu0 0.0
        %1986 = vmatpush1.msra.mxu0 %v1752
        %1987 = vmatprep.subr.mxu0 0.0
        %1988 = vmatpush1.msra.mxu0 %v1749
        %1989 = vmatprep.subr.mxu0 0.0
        %1990 = vmatpush1.msra.mxu0 %v1746
        %1991 = vmatprep.subr.mxu0 0.0
        %1992 = vmatpush1.msra.mxu0 %v1743
        %1993 = vmatprep.subr.mxu0 0.0
        %1994 = vmatpush1.msra.mxu0 %v1740
        %1995 = vmatprep.subr.mxu0 0.0
        %1996 = vmatpush1.msra.mxu0 %v1737
        %1997 = vmatprep.subr.mxu0 0.0
        %1998 = vmatpush1.msra.mxu0 %v1734
        %1999 = vmatprep.subr.mxu0 0.0
        %2000 = vmatpush1.msra.mxu0 %v1731
        %2001 = vmatprep.subr.mxu0 0.0
        %2002 = vmatpush1.msra.mxu0 %v1728
        %2003 = vmatprep.subr.mxu0 0.0
        %2004 = vmatpush1.msra.mxu0 %v1725
        %2005 = vmatprep.subr.mxu0 0.0
        %2006 = vmatpush1.msra.mxu0 %v1722
        %2007 = vmatprep.subr.mxu0 0.0
        %2008 = vmatpush1.msra.mxu0 %v1719
        %2009 = vmatprep.subr.mxu0 0.0
        %2010 = vmatpush2.msra.mxu0 0.0
        %2011 = vmatprep.subr.mxu0 0.0
        %2012 = vmatpush2.msra.mxu0 0.0
        %2013 = vmatprep.subr.mxu0 0.0
        %2014 = vmatpush2.msra.mxu0 0.0
        %2015 = vmatprep.subr.mxu0 0.0
        %2016 = vmatpush2.msra.mxu0 0.0
        %2017 = vmatprep.subr.mxu0 0.0
        %2018 = vmatpush2.msra.mxu0 0.0
        %2019 = vmatprep.subr.mxu0 0.0
        %2020 = vmatpush2.msra.mxu0 0.0
        %2021 = vmatprep.subr.mxu0 0.0
        %2022 = vmatpush2.msra.mxu0 0.0
        %2023 = vmatprep.subr.mxu0 0.0
        %2024 = vmatpush2.msra.mxu0 0.0
        %2025 = vmatprep.subr.mxu0 0.0
        %2026 = vmatpush2.msra.mxu0 0.0
        %2027 = vmatprep.subr.mxu0 0.0
        %2028 = vmatpush2.msra.mxu0 0.0
        %2029 = vmatprep.subr.mxu0 0.0
        %2030 = vmatpush2.msra.mxu0 0.0
        %2031 = vmatprep.subr.mxu0 0.0
        %2032 = vmatpush2.msra.mxu0 0.0
        %2033 = vmatprep.subr.mxu0 0.0
        %2034 = vmatpush2.msra.mxu0 0.0
        %2035 = vmatprep.subr.mxu0 0.0
        %2036 = vmatpush2.msra.mxu0 0.0
        %2037 = vmatprep.subr.mxu0 0.0
        %2038 = vmatpush2.msra.mxu0 0.0
        %2039 = vmatprep.subr.mxu0 0.0
        %2040 = vmatpush2.msra.mxu0 0.0
        %2041 = vmatprep.mubr.f32.mxu0 0.0
        %2042 = vmatmul.mubr.f32.gmra.mxu0 %v768
        %v2043 = vpop.f32.mrf.mxu0
        %v2044 = vadd.f32 %v1974, %v2043
        %v2045 = vpop.f32.mrf.mxu0
        %2046 = vdwg.mxu0
        %v2047 = vld [vmem:[%s14] sm:$0xff]
        %v2048 = vld [vmem:[%s14 + $0x8] sm:$0xff]
        %v2049 = vld [vmem:[%s14 + $0x10] sm:$0xff]
        %v2050 = vld [vmem:[%s14 + $0x18] sm:$0xff]
        %v2051 = vld [vmem:[%s14 + $0x20] sm:$0xff]
        %v2052 = vld [vmem:[%s15] sm:$0xff]
        %v2053 = vld [vmem:[%s15 + $0x8] sm:$0xff]
        %v2054 = vld [vmem:[%s15 + $0x10] sm:$0xff]
        %v2055 = vld [vmem:[%s15 + $0x18] sm:$0xff]
        %v2056 = vld [vmem:[%s15 + $0x20] sm:$0xff]
        %v2057 = vld [vmem:[%s15 + $0x28] sm:$0xff]
        %v2058 = vld [vmem:[%s15 + $0x30] sm:$0xff]
        %v2059 = vld [vmem:[%s15 + $0x38] sm:$0xff]
        %v2060 = vld [vmem:[%s15 + $0x40] sm:$0xff]
        %v2061 = vld [vmem:[%s15 + $0x48] sm:$0xff]
        %v2062 = vld [vmem:[%s15 + $0x50] sm:$0xff]
        %v2063 = vld [vmem:[%s15 + $0x58] sm:$0xff]
        %v2064 = vld [vmem:[%s15 + $0x60] sm:$0xff]
        %v2065 = vld [vmem:[%s15 + $0x68] sm:$0xff]
        %v2066 = vld [vmem:[%s15 + $0x70] sm:$0xff]
        %vm2067 = vcmask 39936
        %v2069 = vsel %vm2067, %v2047, 0
        %v2072 = vsel %vm2067, %v2048, 0
        %v2075 = vsel %vm2067, %v2049, 0
        %v2078 = vsel %vm2067, %v2050, 0
        %v2081 = vsel %vm2067, %v2051, 0
        %v2084 = vsel %vm702, %v1051, 0
        %v2087 = vsel %vm702, %v1053, 0
        %v2090 = vsel %vm702, %v1192, 0
        %2092 = vmatprep.subr.mxu0 0.0
        %2093 = vmatpush1.msra.mxu0 0.0
        %2094 = vmatprep.subr.mxu0 0.0
        %2095 = vmatpush1.msra.mxu0 0.0
        %2096 = vmatprep.subr.mxu0 0.0
        %2097 = vmatpush1.msra.mxu0 0.0
        %2098 = vmatprep.subr.mxu0 0.0
        %2099 = vmatpush1.msra.mxu0 0.0
        %2100 = vmatprep.subr.mxu0 0.0
        %2101 = vmatpush1.msra.mxu0 0.0
        %2102 = vmatprep.subr.mxu0 0.0
        %2103 = vmatpush1.msra.mxu0 0.0
        %2104 = vmatprep.subr.mxu0 0.0
        %2105 = vmatpush1.msra.mxu0 0.0
        %2106 = vmatprep.subr.mxu0 0.0
        %2107 = vmatpush1.msra.mxu0 0.0
        %2108 = vmatprep.subr.mxu0 0.0
        %2109 = vmatpush1.msra.mxu0 0.0
        %2110 = vmatprep.subr.mxu0 0.0
        %2111 = vmatpush1.msra.mxu0 0.0
        %2112 = vmatprep.subr.mxu0 0.0
        %2113 = vmatpush1.msra.mxu0 0.0
        %2114 = vmatprep.subr.mxu0 0.0
        %2115 = vmatpush1.msra.mxu0 0.0
        %2116 = vmatprep.subr.mxu0 0.0
        %2117 = vmatpush1.msra.mxu0 0.0
        %2118 = vmatprep.subr.mxu0 0.0
        %2119 = vmatpush1.msra.mxu0 0.0
        %2120 = vmatprep.subr.mxu0 0.0
        %2121 = vmatpush1.msra.mxu0 0.0
        %2122 = vmatprep.subr.mxu0 %v2087
        %2123 = vmatpush1.msra.mxu0 %v2084
        %2124 = vmatprep.subr.mxu0 0.0
        %2125 = vmatpush2.msra.mxu0 0.0
        %2126 = vmatprep.subr.mxu0 0.0
        %2127 = vmatpush2.msra.mxu0 0.0
        %2128 = vmatprep.subr.mxu0 0.0
        %2129 = vmatpush2.msra.mxu0 0.0
        %2130 = vmatprep.subr.mxu0 0.0
        %2131 = vmatpush2.msra.mxu0 0.0
        %2132 = vmatprep.subr.mxu0 0.0
        %2133 = vmatpush2.msra.mxu0 0.0
        %2134 = vmatprep.subr.mxu0 0.0
        %2135 = vmatpush2.msra.mxu0 0.0
        %2136 = vmatprep.subr.mxu0 0.0
        %2137 = vmatpush2.msra.mxu0 0.0
        %2138 = vmatprep.subr.mxu0 0.0
        %2139 = vmatpush2.msra.mxu0 0.0
        %2140 = vmatprep.subr.mxu0 0.0
        %2141 = vmatpush2.msra.mxu0 0.0
        %2142 = vmatprep.subr.mxu0 0.0
        %2143 = vmatpush2.msra.mxu0 0.0
        %2144 = vmatprep.subr.mxu0 0.0
        %2145 = vmatpush2.msra.mxu0 0.0
        %2146 = vmatprep.subr.mxu0 0.0
        %2147 = vmatpush2.msra.mxu0 0.0
        %2148 = vmatprep.subr.mxu0 0.0
        %2149 = vmatpush2.msra.mxu0 0.0
        %2150 = vmatprep.subr.mxu0 0.0
        %2151 = vmatpush2.msra.mxu0 0.0
        %2152 = vmatprep.subr.mxu0 0.0
        %2153 = vmatpush2.msra.mxu0 0.0
        %2154 = vmatprep.subr.mxu0 0.0
        %2155 = vmatpush2.msra.mxu0 0.0
        %2156 = vmatprep.mubr.f32.mxu0 0.0
        %2157 = vmatmul.mubr.f32.gmra.mxu0 %v2069
        %v2158 = vpop.f32.mrf.mxu0
        %v2159 = vadd.f32 0.0, %v2158
        %v2160 = vpop.f32.mrf.mxu0
        %v2161 = vadd.f32 0.0, %v2160
        %2162 = vmatprep.mubr.f32.mxu0 0.0
        %2163 = vmatmul.mubr.f32.gmra.mxu0 %v2072
        %v2164 = vpop.f32.mrf.mxu0
        %v2165 = vadd.f32 0.0, %v2164
        %v2166 = vpop.f32.mrf.mxu0
        %v2167 = vadd.f32 0.0, %v2166
        %2168 = vmatprep.mubr.f32.mxu0 0.0
        %2169 = vmatmul.mubr.f32.gmra.mxu0 %v2075
        %v2170 = vpop.f32.mrf.mxu0
        %v2171 = vadd.f32 0.0, %v2170
        %v2172 = vpop.f32.mrf.mxu0
        %v2173 = vadd.f32 0.0, %v2172
        %2174 = vmatprep.mubr.f32.mxu0 0.0
        %2175 = vmatmul.mubr.f32.gmra.mxu0 %v2078
        %v2176 = vpop.f32.mrf.mxu0
        %v2177 = vadd.f32 0.0, %v2176
        %v2178 = vpop.f32.mrf.mxu0
        %v2179 = vadd.f32 0.0, %v2178
        %2180 = vmatprep.mubr.f32.mxu0 0.0
        %2181 = vmatmul.mubr.f32.gmra.mxu0 %v2081
        %v2182 = vpop.f32.mrf.mxu0
        %v2183 = vadd.f32 0.0, %v2182
        %v2184 = vpop.f32.mrf.mxu0
        %v2185 = vadd.f32 0.0, %v2184
        %2186 = vdwg.mxu0
        %2187 = vmatprep.subr.mxu0 0.0
        %2188 = vmatpush1.msra.mxu0 0.0
        %2189 = vmatprep.subr.mxu0 0.0
        %2190 = vmatpush1.msra.mxu0 0.0
        %2191 = vmatprep.subr.mxu0 0.0
        %2192 = vmatpush1.msra.mxu0 0.0
        %2193 = vmatprep.subr.mxu0 0.0
        %2194 = vmatpush1.msra.mxu0 0.0
        %2195 = vmatprep.subr.mxu0 0.0
        %2196 = vmatpush1.msra.mxu0 0.0
        %2197 = vmatprep.subr.mxu0 0.0
        %2198 = vmatpush1.msra.mxu0 0.0
        %2199 = vmatprep.subr.mxu0 0.0
        %2200 = vmatpush1.msra.mxu0 0.0
        %2201 = vmatprep.subr.mxu0 0.0
        %2202 = vmatpush1.msra.mxu0 0.0
        %2203 = vmatprep.subr.mxu0 0.0
        %2204 = vmatpush1.msra.mxu0 0.0
        %2205 = vmatprep.subr.mxu0 0.0
        %2206 = vmatpush1.msra.mxu0 0.0
        %2207 = vmatprep.subr.mxu0 0.0
        %2208 = vmatpush1.msra.mxu0 0.0
        %2209 = vmatprep.subr.mxu0 0.0
        %2210 = vmatpush1.msra.mxu0 0.0
        %2211 = vmatprep.subr.mxu0 0.0
        %2212 = vmatpush1.msra.mxu0 0.0
        %2213 = vmatprep.subr.mxu0 0.0
        %2214 = vmatpush1.msra.mxu0 0.0
        %2215 = vmatprep.subr.mxu0 0.0
        %2216 = vmatpush1.msra.mxu0 0.0
        %2217 = vmatprep.subr.mxu0 0.0
        %2218 = vmatpush1.msra.mxu0 %v2090
        %2219 = vmatprep.subr.mxu0 0.0
        %2220 = vmatpush2.msra.mxu0 0.0
        %2221 = vmatprep.subr.mxu0 0.0
        %2222 = vmatpush2.msra.mxu0 0.0
        %2223 = vmatprep.subr.mxu0 0.0
        %2224 = vmatpush2.msra.mxu0 0.0
        %2225 = vmatprep.subr.mxu0 0.0
        %2226 = vmatpush2.msra.mxu0 0.0
        %2227 = vmatprep.subr.mxu0 0.0
        %2228 = vmatpush2.msra.mxu0 0.0
        %2229 = vmatprep.subr.mxu0 0.0
        %2230 = vmatpush2.msra.mxu0 0.0
        %2231 = vmatprep.subr.mxu0 0.0
        %2232 = vmatpush2.msra.mxu0 0.0
        %2233 = vmatprep.subr.mxu0 0.0
        %2234 = vmatpush2.msra.mxu0 0.0
        %2235 = vmatprep.subr.mxu0 0.0
        %2236 = vmatpush2.msra.mxu0 0.0
        %2237 = vmatprep.subr.mxu0 0.0
        %2238 = vmatpush2.msra.mxu0 0.0
        %2239 = vmatprep.subr.mxu0 0.0
        %2240 = vmatpush2.msra.mxu0 0.0
        %2241 = vmatprep.subr.mxu0 0.0
        %2242 = vmatpush2.msra.mxu0 0.0
        %2243 = vmatprep.subr.mxu0 0.0
        %2244 = vmatpush2.msra.mxu0 0.0
        %2245 = vmatprep.subr.mxu0 0.0
        %2246 = vmatpush2.msra.mxu0 0.0
        %2247 = vmatprep.subr.mxu0 0.0
        %2248 = vmatpush2.msra.mxu0 0.0
        %2249 = vmatprep.subr.mxu0 0.0
        %2250 = vmatpush2.msra.mxu0 0.0
        %2251 = vmatprep.mubr.f32.mxu0 0.0
        %2252 = vmatmul.mubr.f32.gmra.mxu0 %v2069
        %v2253 = vpop.f32.mrf.mxu0
        %v2254 = vadd.f32 0.0, %v2253
        %v2255 = vpop.f32.mrf.mxu0
        %2256 = vmatprep.mubr.f32.mxu0 0.0
        %2257 = vmatmul.mubr.f32.gmra.mxu0 %v2072
        %v2258 = vpop.f32.mrf.mxu0
        %v2259 = vadd.f32 0.0, %v2258
        %v2260 = vpop.f32.mrf.mxu0
        %2261 = vmatprep.mubr.f32.mxu0 0.0
        %2262 = vmatmul.mubr.f32.gmra.mxu0 %v2075
        %v2263 = vpop.f32.mrf.mxu0
        %v2264 = vadd.f32 0.0, %v2263
        %v2265 = vpop.f32.mrf.mxu0
        %2266 = vmatprep.mubr.f32.mxu0 0.0
        %2267 = vmatmul.mubr.f32.gmra.mxu0 %v2078
        %v2268 = vpop.f32.mrf.mxu0
        %v2269 = vadd.f32 0.0, %v2268
        %v2270 = vpop.f32.mrf.mxu0
        %2271 = vmatprep.mubr.f32.mxu0 0.0
        %2272 = vmatmul.mubr.f32.gmra.mxu0 %v2081
        %v2273 = vpop.f32.mrf.mxu0
        %v2274 = vadd.f32 0.0, %v2273
        %v2275 = vpop.f32.mrf.mxu0
        %2276 = vdwg.mxu0
        %v2277 = vmul.f32 %v2159, %v2052
        %v2278 = vmul.f32 %v2161, %v2053
        %v2279 = vmul.f32 %v2254, %v2054
        %v2280 = vmul.f32 %v2165, %v2055
        %v2281 = vmul.f32 %v2167, %v2056
        %v2282 = vmul.f32 %v2259, %v2057
        %v2283 = vmul.f32 %v2171, %v2058
        %v2284 = vmul.f32 %v2173, %v2059
        %v2285 = vmul.f32 %v2264, %v2060
        %v2286 = vmul.f32 %v2177, %v2061
        %v2287 = vmul.f32 %v2179, %v2062
        %v2288 = vmul.f32 %v2269, %v2063
        %v2289 = vmul.f32 %v2183, %v2064
        %v2290 = vmul.f32 %v2185, %v2065
        %v2291 = vmul.f32 %v2274, %v2066
        %2292 = vmatprep.subr.mxu0 0.0
        %2293 = vmatpush1.xpose.msra.mxu0 0.0
        %2294 = vmatprep.subr.mxu0 0.0
        %2295 = vmatpush1.xpose.msra.mxu0 0.0
        %2296 = vmatprep.subr.mxu0 0.0
        %2297 = vmatpush1.xpose.msra.mxu0 0.0
        %2298 = vmatprep.subr.mxu0 0.0
        %2299 = vmatpush1.xpose.msra.mxu0 0.0
        %2300 = vmatprep.subr.mxu0 0.0
        %2301 = vmatpush1.xpose.msra.mxu0 0.0
        %2302 = vmatprep.subr.mxu0 0.0
        %2303 = vmatpush1.xpose.msra.mxu0 0.0
        %2304 = vmatprep.subr.mxu0 0.0
        %2305 = vmatpush1.xpose.msra.mxu0 0.0
        %2306 = vmatprep.subr.mxu0 0.0
        %2307 = vmatpush1.xpose.msra.mxu0 0.0
        %2308 = vmatprep.subr.mxu0 0.0
        %2309 = vmatpush1.xpose.msra.mxu0 0.0
        %2310 = vmatprep.subr.mxu0 0.0
        %2311 = vmatpush1.xpose.msra.mxu0 0.0
        %2312 = vmatprep.subr.mxu0 0.0
        %2313 = vmatpush1.xpose.msra.mxu0 0.0
        %2314 = vmatprep.subr.mxu0 0.0
        %2315 = vmatpush1.xpose.msra.mxu0 0.0
        %2316 = vmatprep.subr.mxu0 0.0
        %2317 = vmatpush1.xpose.msra.mxu0 0.0
        %2318 = vmatprep.subr.mxu0 0.0
        %2319 = vmatpush1.xpose.msra.mxu0 0.0
        %2320 = vmatprep.subr.mxu0 0.0
        %2321 = vmatpush1.xpose.msra.mxu0 0.0
        %2322 = vmatprep.subr.mxu0 %v1479
        %2323 = vmatpush1.xpose.msra.mxu0 %v1477
        %2324 = vmatprep.subr.mxu0 0.0
        %2325 = vmatpush2.xpose.msra.mxu0 0.0
        %2326 = vmatprep.subr.mxu0 0.0
        %2327 = vmatpush2.xpose.msra.mxu0 0.0
        %2328 = vmatprep.subr.mxu0 0.0
        %2329 = vmatpush2.xpose.msra.mxu0 0.0
        %2330 = vmatprep.subr.mxu0 0.0
        %2331 = vmatpush2.xpose.msra.mxu0 0.0
        %2332 = vmatprep.subr.mxu0 0.0
        %2333 = vmatpush2.xpose.msra.mxu0 0.0
        %2334 = vmatprep.subr.mxu0 0.0
        %2335 = vmatpush2.xpose.msra.mxu0 0.0
        %2336 = vmatprep.subr.mxu0 0.0
        %2337 = vmatpush2.xpose.msra.mxu0 0.0
        %2338 = vmatprep.subr.mxu0 0.0
        %2339 = vmatpush2.xpose.msra.mxu0 0.0
        %2340 = vmatprep.subr.mxu0 0.0
        %2341 = vmatpush2.xpose.msra.mxu0 0.0
        %2342 = vmatprep.subr.mxu0 0.0
        %2343 = vmatpush2.xpose.msra.mxu0 0.0
        %2344 = vmatprep.subr.mxu0 0.0
        %2345 = vmatpush2.xpose.msra.mxu0 0.0
        %2346 = vmatprep.subr.mxu0 0.0
        %2347 = vmatpush2.xpose.msra.mxu0 0.0
        %2348 = vmatprep.subr.mxu0 0.0
        %2349 = vmatpush2.xpose.msra.mxu0 0.0
        %2350 = vmatprep.subr.mxu0 0.0
        %2351 = vmatpush2.xpose.msra.mxu0 0.0
        %2352 = vmatprep.subr.mxu0 0.0
        %2353 = vmatpush2.xpose.msra.mxu0 0.0
        %2354 = vmatprep.subr.mxu0 0.0
        %2355 = vmatpush2.xpose.msra.mxu0 0.0
        %2356 = vmatprep.mubr.f32.mxu0 %v2278
        %2357 = vmatmul.mubr.f32.gmra.mxu0 %v2277
        %v2358 = vpop.f32.mrf.mxu0
        %v2359 = vadd.f32 0.0, %v2358
        %v2360 = vpop.f32.mrf.mxu0
        %2361 = vmatprep.mubr.f32.mxu0 %v2281
        %2362 = vmatmul.mubr.f32.gmra.mxu0 %v2280
        %v2363 = vpop.f32.mrf.mxu0
        %v2364 = vadd.f32 0.0, %v2363
        %v2365 = vpop.f32.mrf.mxu0
        %2366 = vmatprep.mubr.f32.mxu0 %v2284
        %2367 = vmatmul.mubr.f32.gmra.mxu0 %v2283
        %v2368 = vpop.f32.mrf.mxu0
        %v2369 = vadd.f32 0.0, %v2368
        %v2370 = vpop.f32.mrf.mxu0
        %2371 = vmatprep.mubr.f32.mxu0 %v2287
        %2372 = vmatmul.mubr.f32.gmra.mxu0 %v2286
        %v2373 = vpop.f32.mrf.mxu0
        %v2374 = vadd.f32 0.0, %v2373
        %v2375 = vpop.f32.mrf.mxu0
        %2376 = vmatprep.mubr.f32.mxu0 %v2290
        %2377 = vmatmul.mubr.f32.gmra.mxu0 %v2289
        %v2378 = vpop.f32.mrf.mxu0
        %v2379 = vadd.f32 0.0, %v2378
        %v2380 = vpop.f32.mrf.mxu0
        %2381 = vdwg.mxu0
        %2382 = vmatprep.subr.mxu0 0.0
        %2383 = vmatpush1.xpose.msra.mxu0 0.0
        %2384 = vmatprep.subr.mxu0 0.0
        %2385 = vmatpush1.xpose.msra.mxu0 0.0
        %2386 = vmatprep.subr.mxu0 0.0
        %2387 = vmatpush1.xpose.msra.mxu0 0.0
        %2388 = vmatprep.subr.mxu0 0.0
        %2389 = vmatpush1.xpose.msra.mxu0 0.0
        %2390 = vmatprep.subr.mxu0 0.0
        %2391 = vmatpush1.xpose.msra.mxu0 0.0
        %2392 = vmatprep.subr.mxu0 0.0
        %2393 = vmatpush1.xpose.msra.mxu0 0.0
        %2394 = vmatprep.subr.mxu0 0.0
        %2395 = vmatpush1.xpose.msra.mxu0 0.0
        %2396 = vmatprep.subr.mxu0 0.0
        %2397 = vmatpush1.xpose.msra.mxu0 0.0
        %2398 = vmatprep.subr.mxu0 0.0
        %2399 = vmatpush1.xpose.msra.mxu0 0.0
        %2400 = vmatprep.subr.mxu0 0.0
        %2401 = vmatpush1.xpose.msra.mxu0 0.0
        %2402 = vmatprep.subr.mxu0 0.0
        %2403 = vmatpush1.xpose.msra.mxu0 0.0
        %2404 = vmatprep.subr.mxu0 0.0
        %2405 = vmatpush1.xpose.msra.mxu0 0.0
        %2406 = vmatprep.subr.mxu0 0.0
        %2407 = vmatpush1.xpose.msra.mxu0 0.0
        %2408 = vmatprep.subr.mxu0 0.0
        %2409 = vmatpush1.xpose.msra.mxu0 0.0
        %2410 = vmatprep.subr.mxu0 0.0
        %2411 = vmatpush1.xpose.msra.mxu0 0.0
        %2412 = vmatprep.subr.mxu0 0.0
        %2413 = vmatpush1.xpose.msra.mxu0 %v1618
        %2414 = vmatprep.subr.mxu0 0.0
        %2415 = vmatpush2.xpose.msra.mxu0 0.0
        %2416 = vmatprep.subr.mxu0 0.0
        %2417 = vmatpush2.xpose.msra.mxu0 0.0
        %2418 = vmatprep.subr.mxu0 0.0
        %2419 = vmatpush2.xpose.msra.mxu0 0.0
        %2420 = vmatprep.subr.mxu0 0.0
        %2421 = vmatpush2.xpose.msra.mxu0 0.0
        %2422 = vmatprep.subr.mxu0 0.0
        %2423 = vmatpush2.xpose.msra.mxu0 0.0
        %2424 = vmatprep.subr.mxu0 0.0
        %2425 = vmatpush2.xpose.msra.mxu0 0.0
        %2426 = vmatprep.subr.mxu0 0.0
        %2427 = vmatpush2.xpose.msra.mxu0 0.0
        %2428 = vmatprep.subr.mxu0 0.0
        %2429 = vmatpush2.xpose.msra.mxu0 0.0
        %2430 = vmatprep.subr.mxu0 0.0
        %2431 = vmatpush2.xpose.msra.mxu0 0.0
        %2432 = vmatprep.subr.mxu0 0.0
        %2433 = vmatpush2.xpose.msra.mxu0 0.0
        %2434 = vmatprep.subr.mxu0 0.0
        %2435 = vmatpush2.xpose.msra.mxu0 0.0
        %2436 = vmatprep.subr.mxu0 0.0
        %2437 = vmatpush2.xpose.msra.mxu0 0.0
        %2438 = vmatprep.subr.mxu0 0.0
        %2439 = vmatpush2.xpose.msra.mxu0 0.0
        %2440 = vmatprep.subr.mxu0 0.0
        %2441 = vmatpush2.xpose.msra.mxu0 0.0
        %2442 = vmatprep.subr.mxu0 0.0
        %2443 = vmatpush2.xpose.msra.mxu0 0.0
        %2444 = vmatprep.subr.mxu0 0.0
        %2445 = vmatpush2.xpose.msra.mxu0 0.0
        %2446 = vmatprep.mubr.f32.mxu0 0.0
        %2447 = vmatmul.mubr.f32.gmra.mxu0 %v2279
        %v2448 = vpop.f32.mrf.mxu0
        %v2449 = vadd.f32 %v2359, %v2448
        %v2450 = vpop.f32.mrf.mxu0
        %2451 = vmatprep.mubr.f32.mxu0 0.0
        %2452 = vmatmul.mubr.f32.gmra.mxu0 %v2282
        %v2453 = vpop.f32.mrf.mxu0
        %v2454 = vadd.f32 %v2364, %v2453
        %v2455 = vpop.f32.mrf.mxu0
        %2456 = vmatprep.mubr.f32.mxu0 0.0
        %2457 = vmatmul.mubr.f32.gmra.mxu0 %v2285
        %v2458 = vpop.f32.mrf.mxu0
        %v2459 = vadd.f32 %v2369, %v2458
        %v2460 = vpop.f32.mrf.mxu0
        %2461 = vmatprep.mubr.f32.mxu0 0.0
        %2462 = vmatmul.mubr.f32.gmra.mxu0 %v2288
        %v2463 = vpop.f32.mrf.mxu0
        %v2464 = vadd.f32 %v2374, %v2463
        %v2465 = vpop.f32.mrf.mxu0
        %2466 = vmatprep.mubr.f32.mxu0 0.0
        %2467 = vmatmul.mubr.f32.gmra.mxu0 %v2291
        %v2468 = vpop.f32.mrf.mxu0
        %v2469 = vadd.f32 %v2379, %v2468
        %v2470 = vpop.f32.mrf.mxu0
        %2471 = vdwg.mxu0
        %v2472 = vmul.f32 %v2449, 0.14433756
        %v2473 = vmul.f32 %v2454, 0.14433756
        %v2474 = vmul.f32 %v2459, 0.14433756
        %v2475 = vmul.f32 %v2464, 0.14433756
        %v2476 = vmul.f32 %v2469, 0.14433756
        %v2477 = vsel %vm2067, %v2472, -inf
        %2478 = vmax.xlane.f32.xlu0 %v2477
        %v2479 = vpop.xlane.xlu0 %2478
        %v2480 = vsel %vm2067, %v2473, -inf
        %2481 = vmax.xlane.f32.xlu0 %v2480
        %v2482 = vpop.xlane.xlu0 %2481
        %v2483 = vsel %vm2067, %v2474, -inf
        %2484 = vmax.xlane.f32.xlu0 %v2483
        %v2485 = vpop.xlane.xlu0 %2484
        %v2486 = vsel %vm2067, %v2475, -inf
        %2487 = vmax.xlane.f32.xlu0 %v2486
        %v2488 = vpop.xlane.xlu0 %2487
        %v2489 = vsel %vm2067, %v2476, -inf
        %2490 = vmax.xlane.f32.xlu0 %v2489
        %v2491 = vpop.xlane.xlu0 %2490
        %v2492 = vsub.f32 %v2472, %v2479
        %v2493 = vsub.f32 %v2473, %v2482
        %v2494 = vsub.f32 %v2474, %v2485
        %v2495 = vsub.f32 %v2475, %v2488
        %v2496 = vsub.f32 %v2476, %v2491
        %v2497 = vmul.f32 %v2492, 1.442695
        %v2498 = vpow.pop %v2497
        %v2499 = vmul.f32 %v2493, 1.442695
        %v2500 = vpow.pop %v2499
        %v2501 = vmul.f32 %v2494, 1.442695
        %v2502 = vpow.pop %v2501
        %v2503 = vmul.f32 %v2495, 1.442695
        %v2504 = vpow.pop %v2503
        %v2505 = vmul.f32 %v2496, 1.442695
        %v2506 = vpow.pop %v2505
        %v2507 = vsel %vm2067, %v2498, 0.0
        %2508 = vadd.xlane.f32.xlu0 %v2507
        %v2509 = vpop.xlane.xlu0 %2508
        %v2510 = vsel %vm2067, %v2500, 0.0
        %2511 = vadd.xlane.f32.xlu0 %v2510
        %v2512 = vpop.xlane.xlu0 %2511
        %v2513 = vsel %vm2067, %v2502, 0.0
        %2514 = vadd.xlane.f32.xlu0 %v2513
        %v2515 = vpop.xlane.xlu0 %2514
        %v2516 = vsel %vm2067, %v2504, 0.0
        %2517 = vadd.xlane.f32.xlu0 %v2516
        %v2518 = vpop.xlane.xlu0 %2517
        %v2519 = vsel %vm2067, %v2506, 0.0
        %2520 = vadd.xlane.f32.xlu0 %v2519
        %v2521 = vpop.xlane.xlu0 %2520
        %v2522 = vrcp.pop %v2509
        %v2523 = vmul.f32 %v2498, %v2522
        %v2524 = vrcp.pop %v2512
        %v2525 = vmul.f32 %v2500, %v2524
        %v2526 = vrcp.pop %v2515
        %v2527 = vmul.f32 %v2502, %v2526
        %v2528 = vrcp.pop %v2518
        %v2529 = vmul.f32 %v2504, %v2528
        %v2530 = vrcp.pop %v2521
        %v2531 = vmul.f32 %v2506, %v2530
        %v2533 = vsel %vm2067, %v2523, 0
        %v2536 = vsel %vm2067, %v2525, 0
        %v2539 = vsel %vm2067, %v2527, 0
        %v2542 = vsel %vm2067, %v2529, 0
        %v2545 = vsel %vm2067, %v2531, 0
        %v2548 = vsel %vm702, %v1903, 0
        %v2551 = vsel %vm702, %v1905, 0
        %v2554 = vsel %vm702, %v2044, 0
        %2556 = vmatprep.subr.mxu0 0.0
        %2557 = vmatpush1.msra.mxu0 0.0
        %2558 = vmatprep.subr.mxu0 0.0
        %2559 = vmatpush1.msra.mxu0 0.0
        %2560 = vmatprep.subr.mxu0 0.0
        %2561 = vmatpush1.msra.mxu0 0.0
        %2562 = vmatprep.subr.mxu0 0.0
        %2563 = vmatpush1.msra.mxu0 0.0
        %2564 = vmatprep.subr.mxu0 0.0
        %2565 = vmatpush1.msra.mxu0 0.0
        %2566 = vmatprep.subr.mxu0 0.0
        %2567 = vmatpush1.msra.mxu0 0.0
        %2568 = vmatprep.subr.mxu0 0.0
        %2569 = vmatpush1.msra.mxu0 0.0
        %2570 = vmatprep.subr.mxu0 0.0
        %2571 = vmatpush1.msra.mxu0 0.0
        %2572 = vmatprep.subr.mxu0 0.0
        %2573 = vmatpush1.msra.mxu0 0.0
        %2574 = vmatprep.subr.mxu0 0.0
        %2575 = vmatpush1.msra.mxu0 0.0
        %2576 = vmatprep.subr.mxu0 0.0
        %2577 = vmatpush1.msra.mxu0 0.0
        %2578 = vmatprep.subr.mxu0 0.0
        %2579 = vmatpush1.msra.mxu0 0.0
        %2580 = vmatprep.subr.mxu0 0.0
        %2581 = vmatpush1.msra.mxu0 0.0
        %2582 = vmatprep.subr.mxu0 0.0
        %2583 = vmatpush1.msra.mxu0 0.0
        %2584 = vmatprep.subr.mxu0 0.0
        %2585 = vmatpush1.msra.mxu0 0.0
        %2586 = vmatprep.subr.mxu0 %v2551
        %2587 = vmatpush1.msra.mxu0 %v2548
        %2588 = vmatprep.subr.mxu0 0.0
        %2589 = vmatpush2.msra.mxu0 0.0
        %2590 = vmatprep.subr.mxu0 0.0
        %2591 = vmatpush2.msra.mxu0 0.0
        %2592 = vmatprep.subr.mxu0 0.0
        %2593 = vmatpush2.msra.mxu0 0.0
        %2594 = vmatprep.subr.mxu0 0.0
        %2595 = vmatpush2.msra.mxu0 0.0
        %2596 = vmatprep.subr.mxu0 0.0
        %2597 = vmatpush2.msra.mxu0 0.0
        %2598 = vmatprep.subr.mxu0 0.0
        %2599 = vmatpush2.msra.mxu0 0.0
        %2600 = vmatprep.subr.mxu0 0.0
        %2601 = vmatpush2.msra.mxu0 0.0
        %2602 = vmatprep.subr.mxu0 0.0
        %2603 = vmatpush2.msra.mxu0 0.0
        %2604 = vmatprep.subr.mxu0 0.0
        %2605 = vmatpush2.msra.mxu0 0.0
        %2606 = vmatprep.subr.mxu0 0.0
        %2607 = vmatpush2.msra.mxu0 0.0
        %2608 = vmatprep.subr.mxu0 0.0
        %2609 = vmatpush2.msra.mxu0 0.0
        %2610 = vmatprep.subr.mxu0 0.0
        %2611 = vmatpush2.msra.mxu0 0.0
        %2612 = vmatprep.subr.mxu0 0.0
        %2613 = vmatpush2.msra.mxu0 0.0
        %2614 = vmatprep.subr.mxu0 0.0
        %2615 = vmatpush2.msra.mxu0 0.0
        %2616 = vmatprep.subr.mxu0 0.0
        %2617 = vmatpush2.msra.mxu0 0.0
        %2618 = vmatprep.subr.mxu0 0.0
        %2619 = vmatpush2.msra.mxu0 0.0
        %2620 = vmatprep.mubr.f32.mxu0 0.0
        %2621 = vmatmul.mubr.f32.gmra.mxu0 %v2533
        %v2622 = vpop.f32.mrf.mxu0
        %v2623 = vadd.f32 0.0, %v2622
        %v2624 = vpop.f32.mrf.mxu0
        %v2625 = vadd.f32 0.0, %v2624
        %2626 = vmatprep.mubr.f32.mxu0 0.0
        %2627 = vmatmul.mubr.f32.gmra.mxu0 %v2536
        %v2628 = vpop.f32.mrf.mxu0
        %v2629 = vadd.f32 0.0, %v2628
        %v2630 = vpop.f32.mrf.mxu0
        %v2631 = vadd.f32 0.0, %v2630
        %2632 = vmatprep.mubr.f32.mxu0 0.0
        %2633 = vmatmul.mubr.f32.gmra.mxu0 %v2539
        %v2634 = vpop.f32.mrf.mxu0
        %v2635 = vadd.f32 0.0, %v2634
        %v2636 = vpop.f32.mrf.mxu0
        %v2637 = vadd.f32 0.0, %v2636
        %2638 = vmatprep.mubr.f32.mxu0 0.0
        %2639 = vmatmul.mubr.f32.gmra.mxu0 %v2542
        %v2640 = vpop.f32.mrf.mxu0
        %v2641 = vadd.f32 0.0, %v2640
        %v2642 = vpop.f32.mrf.mxu0
        %v2643 = vadd.f32 0.0, %v2642
        %2644 = vmatprep.mubr.f32.mxu0 0.0
        %2645 = vmatmul.mubr.f32.gmra.mxu0 %v2545
        %v2646 = vpop.f32.mrf.mxu0
        %v2647 = vadd.f32 0.0, %v2646
        %v2648 = vpop.f32.mrf.mxu0
        %v2649 = vadd.f32 0.0, %v2648
        %2650 = vdwg.mxu0
        %2651 = vmatprep.subr.mxu0 0.0
        %2652 = vmatpush1.msra.mxu0 0.0
        %2653 = vmatprep.subr.mxu0 0.0
        %2654 = vmatpush1.msra.mxu0 0.0
        %2655 = vmatprep.subr.mxu0 0.0
        %2656 = vmatpush1.msra.mxu0 0.0
        %2657 = vmatprep.subr.mxu0 0.0
        %2658 = vmatpush1.msra.mxu0 0.0
        %2659 = vmatprep.subr.mxu0 0.0
        %2660 = vmatpush1.msra.mxu0 0.0
        %2661 = vmatprep.subr.mxu0 0.0
        %2662 = vmatpush1.msra.mxu0 0.0
        %2663 = vmatprep.subr.mxu0 0.0
        %2664 = vmatpush1.msra.mxu0 0.0
        %2665 = vmatprep.subr.mxu0 0.0
        %2666 = vmatpush1.msra.mxu0 0.0
        %2667 = vmatprep.subr.mxu0 0.0
        %2668 = vmatpush1.msra.mxu0 0.0
        %2669 = vmatprep.subr.mxu0 0.0
        %2670 = vmatpush1.msra.mxu0 0.0
        %2671 = vmatprep.subr.mxu0 0.0
        %2672 = vmatpush1.msra.mxu0 0.0
        %2673 = vmatprep.subr.mxu0 0.0
        %2674 = vmatpush1.msra.mxu0 0.0
        %2675 = vmatprep.subr.mxu0 0.0
        %2676 = vmatpush1.msra.mxu0 0.0
        %2677 = vmatprep.subr.mxu0 0.0
        %2678 = vmatpush1.msra.mxu0 0.0
        %2679 = vmatprep.subr.mxu0 0.0
        %2680 = vmatpush1.msra.mxu0 0.0
        %2681 = vmatprep.subr.mxu0 0.0
        %2682 = vmatpush1.msra.mxu0 %v2554
        %2683 = vmatprep.subr.mxu0 0.0
        %2684 = vmatpush2.msra.mxu0 0.0
        %2685 = vmatprep.subr.mxu0 0.0
        %2686 = vmatpush2.msra.mxu0 0.0
        %2687 = vmatprep.subr.mxu0 0.0
        %2688 = vmatpush2.msra.mxu0 0.0
        %2689 = vmatprep.subr.mxu0 0.0
        %2690 = vmatpush2.msra.mxu0 0.0
        %2691 = vmatprep.subr.mxu0 0.0
        %2692 = vmatpush2.msra.mxu0 0.0
        %2693 = vmatprep.subr.mxu0 0.0
        %2694 = vmatpush2.msra.mxu0 0.0
        %2695 = vmatprep.subr.mxu0 0.0
        %2696 = vmatpush2.msra.mxu0 0.0
        %2697 = vmatprep.subr.mxu0 0.0
        %2698 = vmatpush2.msra.mxu0 0.0
        %2699 = vmatprep.subr.mxu0 0.0
        %2700 = vmatpush2.msra.mxu0 0.0
        %2701 = vmatprep.subr.mxu0 0.0
        %2702 = vmatpush2.msra.mxu0 0.0
        %2703 = vmatprep.subr.mxu0 0.0
        %2704 = vmatpush2.msra.mxu0 0.0
        %2705 = vmatprep.subr.mxu0 0.0
        %2706 = vmatpush2.msra.mxu0 0.0
        %2707 = vmatprep.subr.mxu0 0.0
        %2708 = vmatpush2.msra.mxu0 0.0
        %2709 = vmatprep.subr.mxu0 0.0
        %2710 = vmatpush2.msra.mxu0 0.0
        %2711 = vmatprep.subr.mxu0 0.0
        %2712 = vmatpush2.msra.mxu0 0.0
        %2713 = vmatprep.subr.mxu0 0.0
        %2714 = vmatpush2.msra.mxu0 0.0
        %2715 = vmatprep.mubr.f32.mxu0 0.0
        %2716 = vmatmul.mubr.f32.gmra.mxu0 %v2533
        %v2717 = vpop.f32.mrf.mxu0
        %v2718 = vadd.f32 0.0, %v2717
        %v2719 = vpop.f32.mrf.mxu0
        %2720 = vmatprep.mubr.f32.mxu0 0.0
        %2721 = vmatmul.mubr.f32.gmra.mxu0 %v2536
        %v2722 = vpop.f32.mrf.mxu0
        %v2723 = vadd.f32 0.0, %v2722
        %v2724 = vpop.f32.mrf.mxu0
        %2725 = vmatprep.mubr.f32.mxu0 0.0
        %2726 = vmatmul.mubr.f32.gmra.mxu0 %v2539
        %v2727 = vpop.f32.mrf.mxu0
        %v2728 = vadd.f32 0.0, %v2727
        %v2729 = vpop.f32.mrf.mxu0
        %2730 = vmatprep.mubr.f32.mxu0 0.0
        %2731 = vmatmul.mubr.f32.gmra.mxu0 %v2542
        %v2732 = vpop.f32.mrf.mxu0
        %v2733 = vadd.f32 0.0, %v2732
        %v2734 = vpop.f32.mrf.mxu0
        %2735 = vmatprep.mubr.f32.mxu0 0.0
        %2736 = vmatmul.mubr.f32.gmra.mxu0 %v2545
        %v2737 = vpop.f32.mrf.mxu0
        %v2738 = vadd.f32 0.0, %v2737
        %v2739 = vpop.f32.mrf.mxu0
        %2740 = vdwg.mxu0
        %v2741 = vmul.f32 %v2623, %v2052
        %v2742 = vmul.f32 %v2625, %v2053
        %v2743 = vmul.f32 %v2718, %v2054
        %v2744 = vmul.f32 %v2629, %v2055
        %v2745 = vmul.f32 %v2631, %v2056
        %v2746 = vmul.f32 %v2723, %v2057
        %v2747 = vmul.f32 %v2635, %v2058
        %v2748 = vmul.f32 %v2637, %v2059
        %v2749 = vmul.f32 %v2728, %v2060
        %v2750 = vmul.f32 %v2641, %v2061
        %v2751 = vmul.f32 %v2643, %v2062
        %v2752 = vmul.f32 %v2733, %v2063
        %v2753 = vmul.f32 %v2647, %v2064
        %v2754 = vmul.f32 %v2649, %v2065
        %v2755 = vmul.f32 %v2738, %v2066
        %2756 = vxpose.xlu0.b32.start [1/16] %v2047, 128
        %2757 = vxpose.xlu0.b32.cont [2/16] %v2048, 128
        %2758 = vxpose.xlu0.b32.cont [3/16] %v2049, 128
        %2759 = vxpose.xlu0.b32.cont [4/16] %v2050, 128
        %2760 = vxpose.xlu0.b32.cont [5/16] %v2051, 128
        %2761 = vxpose.xlu0.b32.cont [6/16] 0.0, 128
        %2762 = vxpose.xlu0.b32.cont [7/16] 0.0, 128
        %2763 = vxpose.xlu0.b32.cont [8/16] 0.0, 128
        %2764 = vxpose.xlu0.b32.cont [9/16] 0.0, 128
        %2765 = vxpose.xlu0.b32.cont [10/16] 0.0, 128
        %2766 = vxpose.xlu0.b32.cont [11/16] 0.0, 128
        %2767 = vxpose.xlu0.b32.cont [12/16] 0.0, 128
        %2768 = vxpose.xlu0.b32.cont [13/16] 0.0, 128
        %2769 = vxpose.xlu0.b32.cont [14/16] 0.0, 128
        %2770 = vxpose.xlu0.b32.cont [15/16] 0.0, 128
        %2771 = vxpose.xlu0.b32.end [16/16] 0.0, 128
        %v2772 = vpop.trf.xlu0
        %v2773 = vpop.trf.xlu0
        %v2774 = vpop.trf.xlu0
        %v2775 = vpop.trf.xlu0
        %v2776 = vpop.trf.xlu0
        %v2777 = vpop.trf.xlu0
        %v2778 = vpop.trf.xlu0
        %v2779 = vpop.trf.xlu0
        %v2780 = vpop.trf.xlu0
        %v2781 = vpop.trf.xlu0
        %v2782 = vpop.trf.xlu0
        %v2783 = vpop.trf.xlu0
        %v2784 = vpop.trf.xlu0
        %v2785 = vpop.trf.xlu0
        %v2786 = vpop.trf.xlu0
        %v2787 = vpop.trf.xlu0
        %vm2788 = vcmask 326656
        %v2790 = vsel %vm2788, %v2772, 0
        %2792 = vmatprep.subr.mxu0 0.0
        %2793 = vmatpush1.msra.mxu0 0.0
        %2794 = vmatprep.subr.mxu0 0.0
        %2795 = vmatpush1.msra.mxu0 0.0
        %2796 = vmatprep.subr.mxu0 0.0
        %2797 = vmatpush1.msra.mxu0 0.0
        %2798 = vmatprep.subr.mxu0 0.0
        %2799 = vmatpush1.msra.mxu0 0.0
        %2800 = vmatprep.subr.mxu0 0.0
        %2801 = vmatpush1.msra.mxu0 0.0
        %2802 = vmatprep.subr.mxu0 0.0
        %2803 = vmatpush1.msra.mxu0 0.0
        %2804 = vmatprep.subr.mxu0 0.0
        %2805 = vmatpush1.msra.mxu0 0.0
        %2806 = vmatprep.subr.mxu0 0.0
        %2807 = vmatpush1.msra.mxu0 0.0
        %2808 = vmatprep.subr.mxu0 0.0
        %2809 = vmatpush1.msra.mxu0 0.0
        %2810 = vmatprep.subr.mxu0 0.0
        %2811 = vmatpush1.msra.mxu0 0.0
        %2812 = vmatprep.subr.mxu0 0.0
        %2813 = vmatpush1.msra.mxu0 0.0
        %2814 = vmatprep.subr.mxu0 %v2754
        %2815 = vmatpush1.msra.mxu0 %v2753
        %2816 = vmatprep.subr.mxu0 %v2751
        %2817 = vmatpush1.msra.mxu0 %v2750
        %2818 = vmatprep.subr.mxu0 %v2748
        %2819 = vmatpush1.msra.mxu0 %v2747
        %2820 = vmatprep.subr.mxu0 %v2745
        %2821 = vmatpush1.msra.mxu0 %v2744
        %2822 = vmatprep.subr.mxu0 %v2742
        %2823 = vmatpush1.msra.mxu0 %v2741
        %2824 = vmatprep.subr.mxu0 0.0
        %2825 = vmatpush2.msra.mxu0 0.0
        %2826 = vmatprep.subr.mxu0 0.0
        %2827 = vmatpush2.msra.mxu0 0.0
        %2828 = vmatprep.subr.mxu0 0.0
        %2829 = vmatpush2.msra.mxu0 0.0
        %2830 = vmatprep.subr.mxu0 0.0
        %2831 = vmatpush2.msra.mxu0 0.0
        %2832 = vmatprep.subr.mxu0 0.0
        %2833 = vmatpush2.msra.mxu0 0.0
        %2834 = vmatprep.subr.mxu0 0.0
        %2835 = vmatpush2.msra.mxu0 0.0
        %2836 = vmatprep.subr.mxu0 0.0
        %2837 = vmatpush2.msra.mxu0 0.0
        %2838 = vmatprep.subr.mxu0 0.0
        %2839 = vmatpush2.msra.mxu0 0.0
        %2840 = vmatprep.subr.mxu0 0.0
        %2841 = vmatpush2.msra.mxu0 0.0
        %2842 = vmatprep.subr.mxu0 0.0
        %2843 = vmatpush2.msra.mxu0 0.0
        %2844 = vmatprep.subr.mxu0 0.0
        %2845 = vmatpush2.msra.mxu0 0.0
        %2846 = vmatprep.subr.mxu0 0.0
        %2847 = vmatpush2.msra.mxu0 0.0
        %2848 = vmatprep.subr.mxu0 0.0
        %2849 = vmatpush2.msra.mxu0 0.0
        %2850 = vmatprep.subr.mxu0 0.0
        %2851 = vmatpush2.msra.mxu0 0.0
        %2852 = vmatprep.subr.mxu0 0.0
        %2853 = vmatpush2.msra.mxu0 0.0
        %2854 = vmatprep.subr.mxu0 0.0
        %2855 = vmatpush2.msra.mxu0 0.0
        %2856 = vmatprep.mubr.f32.mxu0 0.0
        %2857 = vmatmul.mubr.f32.gmra.mxu0 %v2790
        %v2858 = vpop.f32.mrf.mxu0
        %v2859 = vadd.f32 0.0, %v2858
        %v2860 = vpop.f32.mrf.mxu0
        %v2861 = vadd.f32 0.0, %v2860
        %2862 = vdwg.mxu0
        %2863 = vmatprep.subr.mxu0 0.0
        %2864 = vmatpush1.msra.mxu0 0.0
        %2865 = vmatprep.subr.mxu0 0.0
        %2866 = vmatpush1.msra.mxu0 0.0
        %2867 = vmatprep.subr.mxu0 0.0
        %2868 = vmatpush1.msra.mxu0 0.0
        %2869 = vmatprep.subr.mxu0 0.0
        %2870 = vmatpush1.msra.mxu0 0.0
        %2871 = vmatprep.subr.mxu0 0.0
        %2872 = vmatpush1.msra.mxu0 0.0
        %2873 = vmatprep.subr.mxu0 0.0
        %2874 = vmatpush1.msra.mxu0 0.0
        %2875 = vmatprep.subr.mxu0 0.0
        %2876 = vmatpush1.msra.mxu0 0.0
        %2877 = vmatprep.subr.mxu0 0.0
        %2878 = vmatpush1.msra.mxu0 0.0
        %2879 = vmatprep.subr.mxu0 0.0
        %2880 = vmatpush1.msra.mxu0 0.0
        %2881 = vmatprep.subr.mxu0 0.0
        %2882 = vmatpush1.msra.mxu0 0.0
        %2883 = vmatprep.subr.mxu0 0.0
        %2884 = vmatpush1.msra.mxu0 0.0
        %2885 = vmatprep.subr.mxu0 0.0
        %2886 = vmatpush1.msra.mxu0 %v2755
        %2887 = vmatprep.subr.mxu0 0.0
        %2888 = vmatpush1.msra.mxu0 %v2752
        %2889 = vmatprep.subr.mxu0 0.0
        %2890 = vmatpush1.msra.mxu0 %v2749
        %2891 = vmatprep.subr.mxu0 0.0
        %2892 = vmatpush1.msra.mxu0 %v2746
        %2893 = vmatprep.subr.mxu0 0.0
        %2894 = vmatpush1.msra.mxu0 %v2743
        %2895 = vmatprep.subr.mxu0 0.0
        %2896 = vmatpush2.msra.mxu0 0.0
        %2897 = vmatprep.subr.mxu0 0.0
        %2898 = vmatpush2.msra.mxu0 0.0
        %2899 = vmatprep.subr.mxu0 0.0
        %2900 = vmatpush2.msra.mxu0 0.0
        %2901 = vmatprep.subr.mxu0 0.0
        %2902 = vmatpush2.msra.mxu0 0.0
        %2903 = vmatprep.subr.mxu0 0.0
        %2904 = vmatpush2.msra.mxu0 0.0
        %2905 = vmatprep.subr.mxu0 0.0
        %2906 = vmatpush2.msra.mxu0 0.0
        %2907 = vmatprep.subr.mxu0 0.0
        %2908 = vmatpush2.msra.mxu0 0.0
        %2909 = vmatprep.subr.mxu0 0.0
        %2910 = vmatpush2.msra.mxu0 0.0
        %2911 = vmatprep.subr.mxu0 0.0
        %2912 = vmatpush2.msra.mxu0 0.0
        %2913 = vmatprep.subr.mxu0 0.0
        %2914 = vmatpush2.msra.mxu0 0.0
        %2915 = vmatprep.subr.mxu0 0.0
        %2916 = vmatpush2.msra.mxu0 0.0
        %2917 = vmatprep.subr.mxu0 0.0
        %2918 = vmatpush2.msra.mxu0 0.0
        %2919 = vmatprep.subr.mxu0 0.0
        %2920 = vmatpush2.msra.mxu0 0.0
        %2921 = vmatprep.subr.mxu0 0.0
        %2922 = vmatpush2.msra.mxu0 0.0
        %2923 = vmatprep.subr.mxu0 0.0
        %2924 = vmatpush2.msra.mxu0 0.0
        %2925 = vmatprep.subr.mxu0 0.0
        %2926 = vmatpush2.msra.mxu0 0.0
        %2927 = vmatprep.mubr.f32.mxu0 0.0
        %2928 = vmatmul.mubr.f32.gmra.mxu0 %v2790
        %v2929 = vpop.f32.mrf.mxu0
        %v2930 = vadd.f32 0.0, %v2929
        %v2931 = vpop.f32.mrf.mxu0
        %2932 = vdwg.mxu0
        %v2933 = vld [vmem:[#allocation10] sm:$0xff]
        %v2934 = vld [vmem:[#allocation10 + $0x8] sm:$0xff]
        %v2935 = vld [vmem:[#allocation10 + $0x10] sm:$0xff]
        %v2936 = vld [vmem:[#allocation10 + $0x18] sm:$0xff]
        %v2937 = vld [vmem:[#allocation10 + $0x20] sm:$0xff]
        %v2938 = vld [vmem:[#allocation10 + $0x28] sm:$0xff]
        %v2939 = vld [vmem:[#allocation10 + $0x30] sm:$0xff]
        %v2940 = vld [vmem:[#allocation10 + $0x38] sm:$0xff]
        %v2941 = vld [vmem:[#allocation10 + $0x40] sm:$0xff]
        %v2942 = vld [vmem:[#allocation10 + $0x48] sm:$0xff]
        %v2943 = vld [vmem:[#allocation10 + $0x50] sm:$0xff]
        %v2944 = vld [vmem:[#allocation10 + $0x58] sm:$0xff]
        %v2945 = vld [vmem:[#allocation10 + $0x60] sm:$0xff]
        %v2946 = vld [vmem:[#allocation10 + $0x68] sm:$0xff]
        %v2947 = vld [vmem:[#allocation10 + $0x70] sm:$0xff]
        %v2948 = vld [vmem:[#allocation10 + $0x78] sm:$0xff]
        %v2949 = vld [vmem:[#allocation10 + $0x80] sm:$0xff]
        %v2950 = vld [vmem:[#allocation10 + $0x88] sm:$0xff]
        %v2951 = vld [vmem:[#allocation10 + $0x90] sm:$0xff]
        %v2952 = vld [vmem:[#allocation10 + $0x98] sm:$0xff]
        %v2953 = vld [vmem:[#allocation10 + $0xa0] sm:$0xff]
        %v2954 = vld [vmem:[#allocation10 + $0xa8] sm:$0xff]
        %v2955 = vld [vmem:[#allocation10 + $0xb0] sm:$0xff]
        %v2956 = vld [vmem:[#allocation10 + $0xb8] sm:$0xff]
        %v2957 = vld [vmem:[#allocation10 + $0xc0] sm:$0xff]
        %v2958 = vld [vmem:[#allocation10 + $0xc8] sm:$0xff]
        %v2959 = vld [vmem:[#allocation10 + $0xd0] sm:$0xff]
        %v2960 = vld [vmem:[#allocation10 + $0xd8] sm:$0xff]
        %v2961 = vld [vmem:[#allocation10 + $0xe0] sm:$0xff]
        %v2962 = vld [vmem:[#allocation10 + $0xe8] sm:$0xff]
        %v2963 = vld [vmem:[#allocation10 + $0xf0] sm:$0xff]
        %v2964 = vld [vmem:[#allocation10 + $0xf8] sm:$0xff]
        %v2965 = vld [vmem:[#allocation10 + $0x100] sm:$0xff]
        %v2966 = vld [vmem:[#allocation10 + $0x108] sm:$0xff]
        %v2967 = vld [vmem:[#allocation10 + $0x110] sm:$0xff]
        %v2968 = vld [vmem:[#allocation10 + $0x118] sm:$0xff]
        %v2969 = vld [vmem:[#allocation10 + $0x120] sm:$0xff]
        %v2970 = vld [vmem:[#allocation10 + $0x128] sm:$0xff]
        %v2971 = vld [vmem:[#allocation10 + $0x130] sm:$0xff]
        %v2972 = vld [vmem:[#allocation10 + $0x138] sm:$0xff]
        %v2973 = vld [vmem:[#allocation10 + $0x140] sm:$0xff]
        %v2974 = vld [vmem:[#allocation10 + $0x148] sm:$0xff]
        %v2975 = vld [vmem:[#allocation10 + $0x150] sm:$0xff]
        %v2976 = vld [vmem:[#allocation10 + $0x158] sm:$0xff]
        %v2977 = vld [vmem:[#allocation10 + $0x160] sm:$0xff]
        %v2978 = vld [vmem:[#allocation10 + $0x168] sm:$0xff]
        %v2979 = vld [vmem:[#allocation10 + $0x170] sm:$0xff]
        %v2980 = vld [vmem:[#allocation10 + $0x178] sm:$0xff]
        %v2981 = vld [vmem:[#allocation10 + $0x180] sm:$0xff]
        %v2982 = vld [vmem:[#allocation10 + $0x188] sm:$0xff]
        %v2983 = vld [vmem:[#allocation10 + $0x190] sm:$0xff]
        %v2984 = vld [vmem:[#allocation10 + $0x198] sm:$0xff]
        %v2985 = vld [vmem:[#allocation10 + $0x1a0] sm:$0xff]
        %v2986 = vld [vmem:[#allocation10 + $0x1a8] sm:$0xff]
        %v2987 = vld [vmem:[#allocation10 + $0x1b0] sm:$0xff]
        %v2988 = vld [vmem:[#allocation10 + $0x1b8] sm:$0xff]
        %v2989 = vld [vmem:[#allocation10 + $0x1c0] sm:$0xff]
        %v2990 = vld [vmem:[#allocation10 + $0x1c8] sm:$0xff]
        %v2991 = vld [vmem:[#allocation10 + $0x1d0] sm:$0xff]
        %v2992 = vld [vmem:[#allocation10 + $0x1d8] sm:$0xff]
        %v2993 = vld [vmem:[#allocation10 + $0x1e0] sm:$0xff]
        %v2994 = vld [vmem:[#allocation10 + $0x1e8] sm:$0xff]
        %v2995 = vld [vmem:[#allocation10 + $0x1f0] sm:$0xff]
        %v2996 = vld [vmem:[#allocation10 + $0x1f8] sm:$0xff]
        %v2997 = vld [vmem:[#allocation10 + $0x200] sm:$0xff]
        %v2998 = vld [vmem:[#allocation10 + $0x208] sm:$0xff]
        %v2999 = vld [vmem:[#allocation10 + $0x210] sm:$0xff]
        %v3000 = vld [vmem:[#allocation10 + $0x218] sm:$0xff]
        %v3001 = vld [vmem:[#allocation10 + $0x220] sm:$0xff]
        %v3002 = vld [vmem:[#allocation10 + $0x228] sm:$0xff]
        %v3003 = vld [vmem:[#allocation10 + $0x230] sm:$0xff]
        %v3004 = vld [vmem:[#allocation10 + $0x238] sm:$0xff]
        %v3005 = vld [vmem:[#allocation10 + $0x240] sm:$0xff]
        %v3006 = vld [vmem:[#allocation10 + $0x248] sm:$0xff]
        %v3007 = vld [vmem:[#allocation10 + $0x250] sm:$0xff]
        %v3008 = vld [vmem:[#allocation10 + $0x258] sm:$0xff]
        %v3009 = vld [vmem:[#allocation10 + $0x260] sm:$0xff]
        %v3010 = vld [vmem:[#allocation10 + $0x268] sm:$0xff]
        %v3011 = vld [vmem:[#allocation10 + $0x270] sm:$0xff]
        %v3012 = vld [vmem:[#allocation10 + $0x278] sm:$0xff]
        %v3013 = vld [vmem:[#allocation10 + $0x280] sm:$0xff]
        %v3014 = vld [vmem:[#allocation10 + $0x288] sm:$0xff]
        %v3015 = vld [vmem:[#allocation10 + $0x290] sm:$0xff]
        %v3016 = vld [vmem:[#allocation10 + $0x298] sm:$0xff]
        %v3017 = vld [vmem:[#allocation10 + $0x2a0] sm:$0xff]
        %v3018 = vld [vmem:[#allocation10 + $0x2a8] sm:$0xff]
        %v3019 = vld [vmem:[#allocation10 + $0x2b0] sm:$0xff]
        %v3020 = vld [vmem:[#allocation10 + $0x2b8] sm:$0xff]
        %v3021 = vld [vmem:[#allocation10 + $0x2c0] sm:$0xff]
        %v3022 = vld [vmem:[#allocation10 + $0x2c8] sm:$0xff]
        %v3023 = vld [vmem:[#allocation10 + $0x2d0] sm:$0xff]
        %v3024 = vld [vmem:[#allocation10 + $0x2d8] sm:$0xff]
        %v3025 = vld [vmem:[#allocation10 + $0x2e0] sm:$0xff]
        %v3026 = vld [vmem:[#allocation10 + $0x2e8] sm:$0xff]
        %v3027 = vld [vmem:[#allocation10 + $0x2f0] sm:$0xff]
        %v3028 = vld [vmem:[#allocation10 + $0x2f8] sm:$0xff]
        %v3029 = vld [vmem:[#allocation10 + $0x300] sm:$0xff]
        %v3030 = vld [vmem:[#allocation10 + $0x308] sm:$0xff]
        %v3031 = vld [vmem:[#allocation10 + $0x310] sm:$0xff]
        %v3032 = vld [vmem:[#allocation10 + $0x318] sm:$0xff]
        %v3033 = vld [vmem:[#allocation10 + $0x320] sm:$0xff]
        %v3034 = vld [vmem:[#allocation10 + $0x328] sm:$0xff]
        %v3035 = vld [vmem:[#allocation10 + $0x330] sm:$0xff]
        %v3036 = vld [vmem:[#allocation10 + $0x338] sm:$0xff]
        %v3037 = vld [vmem:[#allocation10 + $0x340] sm:$0xff]
        %v3038 = vld [vmem:[#allocation10 + $0x348] sm:$0xff]
        %v3039 = vld [vmem:[#allocation10 + $0x350] sm:$0xff]
        %v3040 = vld [vmem:[#allocation10 + $0x358] sm:$0xff]
        %v3041 = vld [vmem:[#allocation10 + $0x360] sm:$0xff]
        %v3042 = vld [vmem:[#allocation10 + $0x368] sm:$0xff]
        %v3043 = vld [vmem:[#allocation10 + $0x370] sm:$0xff]
        %v3044 = vld [vmem:[#allocation10 + $0x378] sm:$0xff]
        %v3045 = vld [vmem:[#allocation10 + $0x380] sm:$0xff]
        %v3046 = vld [vmem:[#allocation10 + $0x388] sm:$0xff]
        %v3047 = vld [vmem:[#allocation10 + $0x390] sm:$0xff]
        %v3048 = vld [vmem:[#allocation10 + $0x398] sm:$0xff]
        %v3049 = vld [vmem:[#allocation10 + $0x3a0] sm:$0xff]
        %v3050 = vld [vmem:[#allocation10 + $0x3a8] sm:$0xff]
        %v3051 = vld [vmem:[#allocation10 + $0x3b0] sm:$0xff]
        %v3052 = vld [vmem:[#allocation10 + $0x3b8] sm:$0xff]
        %v3053 = vld [vmem:[#allocation10 + $0x3c0] sm:$0xff]
        %v3054 = vld [vmem:[#allocation10 + $0x3c8] sm:$0xff]
        %v3055 = vld [vmem:[#allocation10 + $0x3d0] sm:$0xff]
        %v3056 = vld [vmem:[#allocation10 + $0x3d8] sm:$0xff]
        %v3057 = vld [vmem:[#allocation10 + $0x3e0] sm:$0xff]
        %v3058 = vld [vmem:[#allocation10 + $0x3e8] sm:$0xff]
        %v3059 = vld [vmem:[#allocation10 + $0x3f0] sm:$0xff]
        %v3060 = vld [vmem:[#allocation10 + $0x3f8] sm:$0xff]
        %v3061 = vld [vmem:[#allocation10 + $0x400] sm:$0xff]
        %v3062 = vld [vmem:[#allocation10 + $0x408] sm:$0xff]
        %v3063 = vld [vmem:[#allocation10 + $0x410] sm:$0xff]
        %v3064 = vld [vmem:[#allocation10 + $0x418] sm:$0xff]
        %v3065 = vld [vmem:[#allocation10 + $0x420] sm:$0xff]
        %v3066 = vld [vmem:[#allocation10 + $0x428] sm:$0xff]
        %v3067 = vld [vmem:[#allocation10 + $0x430] sm:$0xff]
        %v3068 = vld [vmem:[#allocation10 + $0x438] sm:$0xff]
        %v3069 = vld [vmem:[#allocation10 + $0x440] sm:$0xff]
        %v3070 = vld [vmem:[#allocation10 + $0x448] sm:$0xff]
        %v3071 = vld [vmem:[#allocation10 + $0x450] sm:$0xff]
        %v3072 = vld [vmem:[#allocation10 + $0x458] sm:$0xff]
        %v3073 = vld [vmem:[#allocation10 + $0x460] sm:$0xff]
        %v3074 = vld [vmem:[#allocation10 + $0x468] sm:$0xff]
        %v3075 = vld [vmem:[#allocation10 + $0x470] sm:$0xff]
        %v3076 = vld [vmem:[#allocation10 + $0x478] sm:$0xff]
        %v3077 = vld [vmem:[#allocation12] sm:$0x7]
        %v3079 = vlaneseq
        %v3080 = vshrl.u32 %v3079, 7
        %v3081 = vsub.s32 0, %v3080
        %v3082 = vrot.slane %v3077, %v3081
        %v3083 = vlaneseq
        %v3084 = vshrl.u32 %v3083, 7
        %v3085 = vsub.s32 1, %v3084
        %v3086 = vrot.slane %v3077, %v3085
        %v3087 = vlaneseq
        %v3088 = vshrl.u32 %v3087, 7
        %v3089 = vsub.s32 2, %v3088
        %v3090 = vrot.slane %v3077, %v3089
        %3094 = vmatprep.subr.mxu0 %v2979
        %3095 = vmatpush1.msra.mxu0 %v2978
        %3096 = vmatprep.subr.mxu0 %v2976
        %3097 = vmatpush1.msra.mxu0 %v2975
        %3098 = vmatprep.subr.mxu0 %v2973
        %3099 = vmatpush1.msra.mxu0 %v2972
        %3100 = vmatprep.subr.mxu0 %v2970
        %3101 = vmatpush1.msra.mxu0 %v2969
        %3102 = vmatprep.subr.mxu0 %v2967
        %3103 = vmatpush1.msra.mxu0 %v2966
        %3104 = vmatprep.subr.mxu0 %v2964
        %3105 = vmatpush1.msra.mxu0 %v2963
        %3106 = vmatprep.subr.mxu0 %v2961
        %3107 = vmatpush1.msra.mxu0 %v2960
        %3108 = vmatprep.subr.mxu0 %v2958
        %3109 = vmatpush1.msra.mxu0 %v2957
        %3110 = vmatprep.subr.mxu0 %v2955
        %3111 = vmatpush1.msra.mxu0 %v2954
        %3112 = vmatprep.subr.mxu0 %v2952
        %3113 = vmatpush1.msra.mxu0 %v2951
        %3114 = vmatprep.subr.mxu0 %v2949
        %3115 = vmatpush1.msra.mxu0 %v2948
        %3116 = vmatprep.subr.mxu0 %v2946
        %3117 = vmatpush1.msra.mxu0 %v2945
        %3118 = vmatprep.subr.mxu0 %v2943
        %3119 = vmatpush1.msra.mxu0 %v2942
        %3120 = vmatprep.subr.mxu0 %v2940
        %3121 = vmatpush1.msra.mxu0 %v2939
        %3122 = vmatprep.subr.mxu0 %v2937
        %3123 = vmatpush1.msra.mxu0 %v2936
        %3124 = vmatprep.subr.mxu0 %v2934
        %3125 = vmatpush1.msra.mxu0 %v2933
        %3126 = vmatprep.subr.mxu0 %v3027
        %3127 = vmatpush2.msra.mxu0 %v3026
        %3128 = vmatprep.subr.mxu0 %v3024
        %3129 = vmatpush2.msra.mxu0 %v3023
        %3130 = vmatprep.subr.mxu0 %v3021
        %3131 = vmatpush2.msra.mxu0 %v3020
        %3132 = vmatprep.subr.mxu0 %v3018
        %3133 = vmatpush2.msra.mxu0 %v3017
        %3134 = vmatprep.subr.mxu0 %v3015
        %3135 = vmatpush2.msra.mxu0 %v3014
        %3136 = vmatprep.subr.mxu0 %v3012
        %3137 = vmatpush2.msra.mxu0 %v3011
        %3138 = vmatprep.subr.mxu0 %v3009
        %3139 = vmatpush2.msra.mxu0 %v3008
        %3140 = vmatprep.subr.mxu0 %v3006
        %3141 = vmatpush2.msra.mxu0 %v3005
        %3142 = vmatprep.subr.mxu0 %v3003
        %3143 = vmatpush2.msra.mxu0 %v3002
        %3144 = vmatprep.subr.mxu0 %v3000
        %3145 = vmatpush2.msra.mxu0 %v2999
        %3146 = vmatprep.subr.mxu0 %v2997
        %3147 = vmatpush2.msra.mxu0 %v2996
        %3148 = vmatprep.subr.mxu0 %v2994
        %3149 = vmatpush2.msra.mxu0 %v2993
        %3150 = vmatprep.subr.mxu0 %v2991
        %3151 = vmatpush2.msra.mxu0 %v2990
        %3152 = vmatprep.subr.mxu0 %v2988
        %3153 = vmatpush2.msra.mxu0 %v2987
        %3154 = vmatprep.subr.mxu0 %v2985
        %3155 = vmatpush2.msra.mxu0 %v2984
        %3156 = vmatprep.subr.mxu0 %v2982
        %3157 = vmatpush2.msra.mxu0 %v2981
        %3158 = vmatprep.mubr.f32.mxu0 %v2861
        %3159 = vmatmul.mubr.f32.gmra.mxu0 %v2859
        %v3160 = vpop.f32.mrf.mxu0
        %v3161 = vadd.f32 %v3082, %v3160
        %v3162 = vpop.f32.mrf.mxu0
        %v3163 = vadd.f32 %v3086, %v3162
        %3164 = vdwg.mxu0
        %3165 = vmatprep.subr.mxu0 %v3075
        %3166 = vmatpush1.msra.mxu0 %v3074
        %3167 = vmatprep.subr.mxu0 %v3072
        %3168 = vmatpush1.msra.mxu0 %v3071
        %3169 = vmatprep.subr.mxu0 %v3069
        %3170 = vmatpush1.msra.mxu0 %v3068
        %3171 = vmatprep.subr.mxu0 %v3066
        %3172 = vmatpush1.msra.mxu0 %v3065
        %3173 = vmatprep.subr.mxu0 %v3063
        %3174 = vmatpush1.msra.mxu0 %v3062
        %3175 = vmatprep.subr.mxu0 %v3060
        %3176 = vmatpush1.msra.mxu0 %v3059
        %3177 = vmatprep.subr.mxu0 %v3057
        %3178 = vmatpush1.msra.mxu0 %v3056
        %3179 = vmatprep.subr.mxu0 %v3054
        %3180 = vmatpush1.msra.mxu0 %v3053
        %3181 = vmatprep.subr.mxu0 %v3051
        %3182 = vmatpush1.msra.mxu0 %v3050
        %3183 = vmatprep.subr.mxu0 %v3048
        %3184 = vmatpush1.msra.mxu0 %v3047
        %3185 = vmatprep.subr.mxu0 %v3045
        %3186 = vmatpush1.msra.mxu0 %v3044
        %3187 = vmatprep.subr.mxu0 %v3042
        %3188 = vmatpush1.msra.mxu0 %v3041
        %3189 = vmatprep.subr.mxu0 %v3039
        %3190 = vmatpush1.msra.mxu0 %v3038
        %3191 = vmatprep.subr.mxu0 %v3036
        %3192 = vmatpush1.msra.mxu0 %v3035
        %3193 = vmatprep.subr.mxu0 %v3033
        %3194 = vmatpush1.msra.mxu0 %v3032
        %3195 = vmatprep.subr.mxu0 %v3030
        %3196 = vmatpush1.msra.mxu0 %v3029
        %3197 = vmatprep.subr.mxu0 0.0
        %3198 = vmatpush2.msra.mxu0 0.0
        %3199 = vmatprep.subr.mxu0 0.0
        %3200 = vmatpush2.msra.mxu0 0.0
        %3201 = vmatprep.subr.mxu0 0.0
        %3202 = vmatpush2.msra.mxu0 0.0
        %3203 = vmatprep.subr.mxu0 0.0
        %3204 = vmatpush2.msra.mxu0 0.0
        %3205 = vmatprep.subr.mxu0 0.0
        %3206 = vmatpush2.msra.mxu0 0.0
        %3207 = vmatprep.subr.mxu0 0.0
        %3208 = vmatpush2.msra.mxu0 0.0
        %3209 = vmatprep.subr.mxu0 0.0
        %3210 = vmatpush2.msra.mxu0 0.0
        %3211 = vmatprep.subr.mxu0 0.0
        %3212 = vmatpush2.msra.mxu0 0.0
        %3213 = vmatprep.subr.mxu0 0.0
        %3214 = vmatpush2.msra.mxu0 0.0
        %3215 = vmatprep.subr.mxu0 0.0
        %3216 = vmatpush2.msra.mxu0 0.0
        %3217 = vmatprep.subr.mxu0 0.0
        %3218 = vmatpush2.msra.mxu0 0.0
        %3219 = vmatprep.subr.mxu0 0.0
        %3220 = vmatpush2.msra.mxu0 0.0
        %3221 = vmatprep.subr.mxu0 0.0
        %3222 = vmatpush2.msra.mxu0 0.0
        %3223 = vmatprep.subr.mxu0 0.0
        %3224 = vmatpush2.msra.mxu0 0.0
        %3225 = vmatprep.subr.mxu0 0.0
        %3226 = vmatpush2.msra.mxu0 0.0
        %3227 = vmatprep.subr.mxu0 0.0
        %3228 = vmatpush2.msra.mxu0 0.0
        %3229 = vmatprep.mubr.f32.mxu0 0.0
        %3230 = vmatmul.mubr.f32.gmra.mxu0 %v2930
        %v3231 = vpop.f32.mrf.mxu0
        %v3232 = vadd.f32 %v3161, %v3231
        %v3233 = vpop.f32.mrf.mxu0
        %v3234 = vadd.f32 %v3163, %v3233
        %3235 = vdwg.mxu0
        %3236 = vmatprep.subr.mxu0 0.0
        %3237 = vmatpush1.msra.mxu0 %v2980
        %3238 = vmatprep.subr.mxu0 0.0
        %3239 = vmatpush1.msra.mxu0 %v2977
        %3240 = vmatprep.subr.mxu0 0.0
        %3241 = vmatpush1.msra.mxu0 %v2974
        %3242 = vmatprep.subr.mxu0 0.0
        %3243 = vmatpush1.msra.mxu0 %v2971
        %3244 = vmatprep.subr.mxu0 0.0
        %3245 = vmatpush1.msra.mxu0 %v2968
        %3246 = vmatprep.subr.mxu0 0.0
        %3247 = vmatpush1.msra.mxu0 %v2965
        %3248 = vmatprep.subr.mxu0 0.0
        %3249 = vmatpush1.msra.mxu0 %v2962
        %3250 = vmatprep.subr.mxu0 0.0
        %3251 = vmatpush1.msra.mxu0 %v2959
        %3252 = vmatprep.subr.mxu0 0.0
        %3253 = vmatpush1.msra.mxu0 %v2956
        %3254 = vmatprep.subr.mxu0 0.0
        %3255 = vmatpush1.msra.mxu0 %v2953
        %3256 = vmatprep.subr.mxu0 0.0
        %3257 = vmatpush1.msra.mxu0 %v2950
        %3258 = vmatprep.subr.mxu0 0.0
        %3259 = vmatpush1.msra.mxu0 %v2947
        %3260 = vmatprep.subr.mxu0 0.0
        %3261 = vmatpush1.msra.mxu0 %v2944
        %3262 = vmatprep.subr.mxu0 0.0
        %3263 = vmatpush1.msra.mxu0 %v2941
        %3264 = vmatprep.subr.mxu0 0.0
        %3265 = vmatpush1.msra.mxu0 %v2938
        %3266 = vmatprep.subr.mxu0 0.0
        %3267 = vmatpush1.msra.mxu0 %v2935
        %3268 = vmatprep.subr.mxu0 0.0
        %3269 = vmatpush2.msra.mxu0 %v3028
        %3270 = vmatprep.subr.mxu0 0.0
        %3271 = vmatpush2.msra.mxu0 %v3025
        %3272 = vmatprep.subr.mxu0 0.0
        %3273 = vmatpush2.msra.mxu0 %v3022
        %3274 = vmatprep.subr.mxu0 0.0
        %3275 = vmatpush2.msra.mxu0 %v3019
        %3276 = vmatprep.subr.mxu0 0.0
        %3277 = vmatpush2.msra.mxu0 %v3016
        %3278 = vmatprep.subr.mxu0 0.0
        %3279 = vmatpush2.msra.mxu0 %v3013
        %3280 = vmatprep.subr.mxu0 0.0
        %3281 = vmatpush2.msra.mxu0 %v3010
        %3282 = vmatprep.subr.mxu0 0.0
        %3283 = vmatpush2.msra.mxu0 %v3007
        %3284 = vmatprep.subr.mxu0 0.0
        %3285 = vmatpush2.msra.mxu0 %v3004
        %3286 = vmatprep.subr.mxu0 0.0
        %3287 = vmatpush2.msra.mxu0 %v3001
        %3288 = vmatprep.subr.mxu0 0.0
        %3289 = vmatpush2.msra.mxu0 %v2998
        %3290 = vmatprep.subr.mxu0 0.0
        %3291 = vmatpush2.msra.mxu0 %v2995
        %3292 = vmatprep.subr.mxu0 0.0
        %3293 = vmatpush2.msra.mxu0 %v2992
        %3294 = vmatprep.subr.mxu0 0.0
        %3295 = vmatpush2.msra.mxu0 %v2989
        %3296 = vmatprep.subr.mxu0 0.0
        %3297 = vmatpush2.msra.mxu0 %v2986
        %3298 = vmatprep.subr.mxu0 0.0
        %3299 = vmatpush2.msra.mxu0 %v2983
        %3300 = vmatprep.mubr.f32.mxu0 %v2861
        %3301 = vmatmul.mubr.f32.gmra.mxu0 %v2859
        %v3302 = vpop.f32.mrf.mxu0
        %v3303 = vadd.f32 %v3090, %v3302
        %v3304 = vpop.f32.mrf.mxu0
        %3305 = vdwg.mxu0
        %3306 = vmatprep.subr.mxu0 0.0
        %3307 = vmatpush1.msra.mxu0 %v3076
        %3308 = vmatprep.subr.mxu0 0.0
        %3309 = vmatpush1.msra.mxu0 %v3073
        %3310 = vmatprep.subr.mxu0 0.0
        %3311 = vmatpush1.msra.mxu0 %v3070
        %3312 = vmatprep.subr.mxu0 0.0
        %3313 = vmatpush1.msra.mxu0 %v3067
        %3314 = vmatprep.subr.mxu0 0.0
        %3315 = vmatpush1.msra.mxu0 %v3064
        %3316 = vmatprep.subr.mxu0 0.0
        %3317 = vmatpush1.msra.mxu0 %v3061
        %3318 = vmatprep.subr.mxu0 0.0
        %3319 = vmatpush1.msra.mxu0 %v3058
        %3320 = vmatprep.subr.mxu0 0.0
        %3321 = vmatpush1.msra.mxu0 %v3055
        %3322 = vmatprep.subr.mxu0 0.0
        %3323 = vmatpush1.msra.mxu0 %v3052
        %3324 = vmatprep.subr.mxu0 0.0
        %3325 = vmatpush1.msra.mxu0 %v3049
        %3326 = vmatprep.subr.mxu0 0.0
        %3327 = vmatpush1.msra.mxu0 %v3046
        %3328 = vmatprep.subr.mxu0 0.0
        %3329 = vmatpush1.msra.mxu0 %v3043
        %3330 = vmatprep.subr.mxu0 0.0
        %3331 = vmatpush1.msra.mxu0 %v3040
        %3332 = vmatprep.subr.mxu0 0.0
        %3333 = vmatpush1.msra.mxu0 %v3037
        %3334 = vmatprep.subr.mxu0 0.0
        %3335 = vmatpush1.msra.mxu0 %v3034
        %3336 = vmatprep.subr.mxu0 0.0
        %3337 = vmatpush1.msra.mxu0 %v3031
        %3338 = vmatprep.subr.mxu0 0.0
        %3339 = vmatpush2.msra.mxu0 0.0
        %3340 = vmatprep.subr.mxu0 0.0
        %3341 = vmatpush2.msra.mxu0 0.0
        %3342 = vmatprep.subr.mxu0 0.0
        %3343 = vmatpush2.msra.mxu0 0.0
        %3344 = vmatprep.subr.mxu0 0.0
        %3345 = vmatpush2.msra.mxu0 0.0
        %3346 = vmatprep.subr.mxu0 0.0
        %3347 = vmatpush2.msra.mxu0 0.0
        %3348 = vmatprep.subr.mxu0 0.0
        %3349 = vmatpush2.msra.mxu0 0.0
        %3350 = vmatprep.subr.mxu0 0.0
        %3351 = vmatpush2.msra.mxu0 0.0
        %3352 = vmatprep.subr.mxu0 0.0
        %3353 = vmatpush2.msra.mxu0 0.0
        %3354 = vmatprep.subr.mxu0 0.0
        %3355 = vmatpush2.msra.mxu0 0.0
        %3356 = vmatprep.subr.mxu0 0.0
        %3357 = vmatpush2.msra.mxu0 0.0
        %3358 = vmatprep.subr.mxu0 0.0
        %3359 = vmatpush2.msra.mxu0 0.0
        %3360 = vmatprep.subr.mxu0 0.0
        %3361 = vmatpush2.msra.mxu0 0.0
        %3362 = vmatprep.subr.mxu0 0.0
        %3363 = vmatpush2.msra.mxu0 0.0
        %3364 = vmatprep.subr.mxu0 0.0
        %3365 = vmatpush2.msra.mxu0 0.0
        %3366 = vmatprep.subr.mxu0 0.0
        %3367 = vmatpush2.msra.mxu0 0.0
        %3368 = vmatprep.subr.mxu0 0.0
        %3369 = vmatpush2.msra.mxu0 0.0
        %3370 = vmatprep.mubr.f32.mxu0 0.0
        %3371 = vmatmul.mubr.f32.gmra.mxu0 %v2930
        %v3372 = vpop.f32.mrf.mxu0
        %v3373 = vadd.f32 %v3303, %v3372
        %v3374 = vpop.f32.mrf.mxu0
        %3375 = vdwg.mxu0
        %v3376 = vadd.f32 %v3232, %v697
        %v3377 = vadd.f32 %v3234, %v698
        %v3378 = vadd.f32 %v3373, %v699
        %v3379 = vld [vmem:[#allocation13] sm:$0x7]
        %v3380 = vld [vmem:[#allocation15] sm:$0x7]
        %v3381 = vsel %vm702, %v3376, 0.0
        %v3382 = vsel %vm702, %v3377, 0.0
        %v3383 = vadd.f32 %v3381, %v3382
        %v3384 = vsel %vm702, %v3378, 0.0
        %v3385 = vadd.f32 %v3383, %v3384
        %3386 = vadd.xlane.f32.xlu0 %v3385
        %v3387 = vpop.xlane.xlu0 %3386
        %v3388 = vmul.f32 %v3387, %v710
        %v3389 = vsub.f32 %v3376, %v3388
        %v3390 = vsub.f32 %v3377, %v3388
        %v3391 = vsub.f32 %v3378, %v3388
        %v3392 = vmul.f32 %v3389, %v3389
        %v3393 = vmul.f32 %v3390, %v3390
        %v3394 = vmul.f32 %v3391, %v3391
        %v3395 = vsel %vm702, %v3392, 0.0
        %v3396 = vsel %vm702, %v3393, 0.0
        %v3397 = vadd.f32 %v3395, %v3396
        %v3398 = vsel %vm702, %v3394, 0.0
        %v3399 = vadd.f32 %v3397, %v3398
        %3400 = vadd.xlane.f32.xlu0 %v3399
        %v3401 = vpop.xlane.xlu0 %3400
        %v3402 = vmul.f32 %v3401, %v710
        %v3403 = vadd.f32 %v3402, 1e-05
        %v3404 = vrsqrt.pop %v3403
        %v3405 = vmul.f32 %v3389, %v3404
        %v3406 = vmul.f32 %v3390, %v3404
        %v3407 = vmul.f32 %v3391, %v3404
        %v3409 = vlaneseq
        %v3410 = vshrl.u32 %v3409, 7
        %v3411 = vsub.s32 0, %v3410
        %v3412 = vrot.slane %v3379, %v3411
        %v3413 = vlaneseq
        %v3414 = vshrl.u32 %v3413, 7
        %v3415 = vsub.s32 1, %v3414
        %v3416 = vrot.slane %v3379, %v3415
        %v3417 = vlaneseq
        %v3418 = vshrl.u32 %v3417, 7
        %v3419 = vsub.s32 2, %v3418
        %v3420 = vrot.slane %v3379, %v3419
        %v3424 = vmul.f32 %v3405, %v3412
        %v3425 = vmul.f32 %v3406, %v3416
        %v3426 = vmul.f32 %v3407, %v3420
        %v3428 = vlaneseq
        %v3429 = vshrl.u32 %v3428, 7
        %v3430 = vsub.s32 0, %v3429
        %v3431 = vrot.slane %v3380, %v3430
        %v3432 = vlaneseq
        %v3433 = vshrl.u32 %v3432, 7
        %v3434 = vsub.s32 1, %v3433
        %v3435 = vrot.slane %v3380, %v3434
        %v3436 = vlaneseq
        %v3437 = vshrl.u32 %v3436, 7
        %v3438 = vsub.s32 2, %v3437
        %v3439 = vrot.slane %v3380, %v3438
        %v3443 = vadd.f32 %v3424, %v3431
        %v3444 = vadd.f32 %v3425, %v3435
        %v3445 = vadd.f32 %v3426, %v3439
        %v3446 = vld [vmem:[#allocation16] sm:$0xff]
        %v3447 = vld [vmem:[#allocation16 + $0x8] sm:$0xff]
        %v3448 = vld [vmem:[#allocation16 + $0x10] sm:$0xff]
        %v3449 = vld [vmem:[#allocation16 + $0x18] sm:$0xff]
        %v3450 = vld [vmem:[#allocation16 + $0x20] sm:$0xff]
        %v3451 = vld [vmem:[#allocation16 + $0x28] sm:$0xff]
        %v3452 = vld [vmem:[#allocation16 + $0x30] sm:$0xff]
        %v3453 = vld [vmem:[#allocation16 + $0x38] sm:$0xff]
        %v3454 = vld [vmem:[#allocation16 + $0x40] sm:$0xff]
        %v3455 = vld [vmem:[#allocation16 + $0x48] sm:$0xff]
        %v3456 = vld [vmem:[#allocation16 + $0x50] sm:$0xff]
        %v3457 = vld [vmem:[#allocation16 + $0x58] sm:$0xff]
        %v3458 = vld [vmem:[#allocation16 + $0x60] sm:$0xff]
        %v3459 = vld [vmem:[#allocation16 + $0x68] sm:$0xff]
        %v3460 = vld [vmem:[#allocation16 + $0x70] sm:$0xff]
        %v3461 = vld [vmem:[#allocation16 + $0x78] sm:$0xff]
        %v3462 = vld [vmem:[#allocation16 + $0x80] sm:$0xff]
        %v3463 = vld [vmem:[#allocation16 + $0x88] sm:$0xff]
        %v3464 = vld [vmem:[#allocation16 + $0x90] sm:$0xff]
        %v3465 = vld [vmem:[#allocation16 + $0x98] sm:$0xff]
        %v3466 = vld [vmem:[#allocation16 + $0xa0] sm:$0xff]
        %v3467 = vld [vmem:[#allocation16 + $0xa8] sm:$0xff]
        %v3468 = vld [vmem:[#allocation16 + $0xb0] sm:$0xff]
        %v3469 = vld [vmem:[#allocation16 + $0xb8] sm:$0xff]
        %v3470 = vld [vmem:[#allocation16 + $0xc0] sm:$0xff]
        %v3471 = vld [vmem:[#allocation16 + $0xc8] sm:$0xff]
        %v3472 = vld [vmem:[#allocation16 + $0xd0] sm:$0xff]
        %v3473 = vld [vmem:[#allocation16 + $0xd8] sm:$0xff]
        %v3474 = vld [vmem:[#allocation16 + $0xe0] sm:$0xff]
        %v3475 = vld [vmem:[#allocation16 + $0xe8] sm:$0xff]
        %v3476 = vld [vmem:[#allocation16 + $0xf0] sm:$0xff]
        %v3477 = vld [vmem:[#allocation16 + $0xf8] sm:$0xff]
        %v3478 = vld [vmem:[#allocation16 + $0x100] sm:$0xff]
        %v3479 = vld [vmem:[#allocation16 + $0x108] sm:$0xff]
        %v3480 = vld [vmem:[#allocation16 + $0x110] sm:$0xff]
        %v3481 = vld [vmem:[#allocation16 + $0x118] sm:$0xff]
        %v3482 = vld [vmem:[#allocation16 + $0x120] sm:$0xff]
        %v3483 = vld [vmem:[#allocation16 + $0x128] sm:$0xff]
        %v3484 = vld [vmem:[#allocation16 + $0x130] sm:$0xff]
        %v3485 = vld [vmem:[#allocation16 + $0x138] sm:$0xff]
        %v3486 = vld [vmem:[#allocation16 + $0x140] sm:$0xff]
        %v3487 = vld [vmem:[#allocation16 + $0x148] sm:$0xff]
        %v3488 = vld [vmem:[#allocation16 + $0x150] sm:$0xff]
        %v3489 = vld [vmem:[#allocation16 + $0x158] sm:$0xff]
        %v3490 = vld [vmem:[#allocation16 + $0x160] sm:$0xff]
        %v3491 = vld [vmem:[#allocation16 + $0x168] sm:$0xff]
        %v3492 = vld [vmem:[#allocation16 + $0x170] sm:$0xff]
        %v3493 = vld [vmem:[#allocation16 + $0x178] sm:$0xff]
        %v3494 = vld [vmem:[#allocation16 + $0x180] sm:$0xff]
        %v3495 = vld [vmem:[#allocation16 + $0x188] sm:$0xff]
        %v3496 = vld [vmem:[#allocation16 + $0x190] sm:$0xff]
        %v3497 = vld [vmem:[#allocation16 + $0x198] sm:$0xff]
        %v3498 = vld [vmem:[#allocation16 + $0x1a0] sm:$0xff]
        %v3499 = vld [vmem:[#allocation16 + $0x1a8] sm:$0xff]
        %v3500 = vld [vmem:[#allocation16 + $0x1b0] sm:$0xff]
        %v3501 = vld [vmem:[#allocation16 + $0x1b8] sm:$0xff]
        %v3502 = vld [vmem:[#allocation16 + $0x1c0] sm:$0xff]
        %v3503 = vld [vmem:[#allocation16 + $0x1c8] sm:$0xff]
        %v3504 = vld [vmem:[#allocation16 + $0x1d0] sm:$0xff]
        %v3505 = vld [vmem:[#allocation16 + $0x1d8] sm:$0xff]
        %v3506 = vld [vmem:[#allocation16 + $0x1e0] sm:$0xff]
        %v3507 = vld [vmem:[#allocation16 + $0x1e8] sm:$0xff]
        %v3508 = vld [vmem:[#allocation16 + $0x1f0] sm:$0xff]
        %v3509 = vld [vmem:[#allocation16 + $0x1f8] sm:$0xff]
        %v3510 = vld [vmem:[#allocation16 + $0x200] sm:$0xff]
        %v3511 = vld [vmem:[#allocation16 + $0x208] sm:$0xff]
        %v3512 = vld [vmem:[#allocation16 + $0x210] sm:$0xff]
        %v3513 = vld [vmem:[#allocation16 + $0x218] sm:$0xff]
        %v3514 = vld [vmem:[#allocation16 + $0x220] sm:$0xff]
        %v3515 = vld [vmem:[#allocation16 + $0x228] sm:$0xff]
        %v3516 = vld [vmem:[#allocation16 + $0x230] sm:$0xff]
        %v3517 = vld [vmem:[#allocation16 + $0x238] sm:$0xff]
        %v3518 = vld [vmem:[#allocation16 + $0x240] sm:$0xff]
        %v3519 = vld [vmem:[#allocation16 + $0x248] sm:$0xff]
        %v3520 = vld [vmem:[#allocation16 + $0x250] sm:$0xff]
        %v3521 = vld [vmem:[#allocation16 + $0x258] sm:$0xff]
        %v3522 = vld [vmem:[#allocation16 + $0x260] sm:$0xff]
        %v3523 = vld [vmem:[#allocation16 + $0x268] sm:$0xff]
        %v3524 = vld [vmem:[#allocation16 + $0x270] sm:$0xff]
        %v3525 = vld [vmem:[#allocation16 + $0x278] sm:$0xff]
        %v3526 = vld [vmem:[#allocation16 + $0x280] sm:$0xff]
        %v3527 = vld [vmem:[#allocation16 + $0x288] sm:$0xff]
        %v3528 = vld [vmem:[#allocation16 + $0x290] sm:$0xff]
        %v3529 = vld [vmem:[#allocation16 + $0x298] sm:$0xff]
        %v3530 = vld [vmem:[#allocation16 + $0x2a0] sm:$0xff]
        %v3531 = vld [vmem:[#allocation16 + $0x2a8] sm:$0xff]
        %v3532 = vld [vmem:[#allocation16 + $0x2b0] sm:$0xff]
        %v3533 = vld [vmem:[#allocation16 + $0x2b8] sm:$0xff]
        %v3534 = vld [vmem:[#allocation16 + $0x2c0] sm:$0xff]
        %v3535 = vld [vmem:[#allocation16 + $0x2c8] sm:$0xff]
        %v3536 = vld [vmem:[#allocation16 + $0x2d0] sm:$0xff]
        %v3537 = vld [vmem:[#allocation16 + $0x2d8] sm:$0xff]
        %v3538 = vld [vmem:[#allocation16 + $0x2e0] sm:$0xff]
        %v3539 = vld [vmem:[#allocation16 + $0x2e8] sm:$0xff]
        %v3540 = vld [vmem:[#allocation16 + $0x2f0] sm:$0xff]
        %v3541 = vld [vmem:[#allocation16 + $0x2f8] sm:$0xff]
        %v3542 = vld [vmem:[#allocation16 + $0x300] sm:$0xff]
        %v3543 = vld [vmem:[#allocation16 + $0x308] sm:$0xff]
        %v3544 = vld [vmem:[#allocation16 + $0x310] sm:$0xff]
        %v3545 = vld [vmem:[#allocation16 + $0x318] sm:$0xff]
        %v3546 = vld [vmem:[#allocation16 + $0x320] sm:$0xff]
        %v3547 = vld [vmem:[#allocation16 + $0x328] sm:$0xff]
        %v3548 = vld [vmem:[#allocation16 + $0x330] sm:$0xff]
        %v3549 = vld [vmem:[#allocation16 + $0x338] sm:$0xff]
        %v3550 = vld [vmem:[#allocation16 + $0x340] sm:$0xff]
        %v3551 = vld [vmem:[#allocation16 + $0x348] sm:$0xff]
        %v3552 = vld [vmem:[#allocation16 + $0x350] sm:$0xff]
        %v3553 = vld [vmem:[#allocation16 + $0x358] sm:$0xff]
        %v3554 = vld [vmem:[#allocation16 + $0x360] sm:$0xff]
        %v3555 = vld [vmem:[#allocation16 + $0x368] sm:$0xff]
        %v3556 = vld [vmem:[#allocation16 + $0x370] sm:$0xff]
        %v3557 = vld [vmem:[#allocation16 + $0x378] sm:$0xff]
        %v3558 = vld [vmem:[#allocation16 + $0x380] sm:$0xff]
        %v3559 = vld [vmem:[#allocation16 + $0x388] sm:$0xff]
        %v3560 = vld [vmem:[#allocation16 + $0x390] sm:$0xff]
        %v3561 = vld [vmem:[#allocation16 + $0x398] sm:$0xff]
        %v3562 = vld [vmem:[#allocation16 + $0x3a0] sm:$0xff]
        %v3563 = vld [vmem:[#allocation16 + $0x3a8] sm:$0xff]
        %v3564 = vld [vmem:[#allocation16 + $0x3b0] sm:$0xff]
        %v3565 = vld [vmem:[#allocation16 + $0x3b8] sm:$0xff]
        %v3566 = vld [vmem:[#allocation16 + $0x3c0] sm:$0xff]
        %v3567 = vld [vmem:[#allocation16 + $0x3c8] sm:$0xff]
        %v3568 = vld [vmem:[#allocation16 + $0x3d0] sm:$0xff]
        %v3569 = vld [vmem:[#allocation16 + $0x3d8] sm:$0xff]
        %v3570 = vld [vmem:[#allocation16 + $0x3e0] sm:$0xff]
        %v3571 = vld [vmem:[#allocation16 + $0x3e8] sm:$0xff]
        %v3572 = vld [vmem:[#allocation16 + $0x3f0] sm:$0xff]
        %v3573 = vld [vmem:[#allocation16 + $0x3f8] sm:$0xff]
        %v3574 = vld [vmem:[#allocation16 + $0x400] sm:$0xff]
        %v3575 = vld [vmem:[#allocation16 + $0x408] sm:$0xff]
        %v3576 = vld [vmem:[#allocation16 + $0x410] sm:$0xff]
        %v3577 = vld [vmem:[#allocation16 + $0x418] sm:$0xff]
        %v3578 = vld [vmem:[#allocation16 + $0x420] sm:$0xff]
        %v3579 = vld [vmem:[#allocation16 + $0x428] sm:$0xff]
        %v3580 = vld [vmem:[#allocation16 + $0x430] sm:$0xff]
        %v3581 = vld [vmem:[#allocation16 + $0x438] sm:$0xff]
        %v3582 = vld [vmem:[#allocation16 + $0x440] sm:$0xff]
        %v3583 = vld [vmem:[#allocation16 + $0x448] sm:$0xff]
        %v3584 = vld [vmem:[#allocation16 + $0x450] sm:$0xff]
        %v3585 = vld [vmem:[#allocation16 + $0x458] sm:$0xff]
        %v3586 = vld [vmem:[#allocation16 + $0x460] sm:$0xff]
        %v3587 = vld [vmem:[#allocation16 + $0x468] sm:$0xff]
        %v3588 = vld [vmem:[#allocation16 + $0x470] sm:$0xff]
        %v3589 = vld [vmem:[#allocation16 + $0x478] sm:$0xff]
        %v3590 = vld [vmem:[#allocation16 + $0x480] sm:$0xff]
        %v3591 = vld [vmem:[#allocation16 + $0x488] sm:$0xff]
        %v3592 = vld [vmem:[#allocation16 + $0x490] sm:$0xff]
        %v3593 = vld [vmem:[#allocation16 + $0x498] sm:$0xff]
        %v3594 = vld [vmem:[#allocation16 + $0x4a0] sm:$0xff]
        %v3595 = vld [vmem:[#allocation16 + $0x4a8] sm:$0xff]
        %v3596 = vld [vmem:[#allocation16 + $0x4b0] sm:$0xff]
        %v3597 = vld [vmem:[#allocation16 + $0x4b8] sm:$0xff]
        %v3598 = vld [vmem:[#allocation16 + $0x4c0] sm:$0xff]
        %v3599 = vld [vmem:[#allocation16 + $0x4c8] sm:$0xff]
        %v3600 = vld [vmem:[#allocation16 + $0x4d0] sm:$0xff]
        %v3601 = vld [vmem:[#allocation16 + $0x4d8] sm:$0xff]
        %v3602 = vld [vmem:[#allocation16 + $0x4e0] sm:$0xff]
        %v3603 = vld [vmem:[#allocation16 + $0x4e8] sm:$0xff]
        %v3604 = vld [vmem:[#allocation16 + $0x4f0] sm:$0xff]
        %v3605 = vld [vmem:[#allocation16 + $0x4f8] sm:$0xff]
        %v3606 = vld [vmem:[#allocation16 + $0x500] sm:$0xff]
        %v3607 = vld [vmem:[#allocation16 + $0x508] sm:$0xff]
        %v3608 = vld [vmem:[#allocation16 + $0x510] sm:$0xff]
        %v3609 = vld [vmem:[#allocation16 + $0x518] sm:$0xff]
        %v3610 = vld [vmem:[#allocation16 + $0x520] sm:$0xff]
        %v3611 = vld [vmem:[#allocation16 + $0x528] sm:$0xff]
        %v3612 = vld [vmem:[#allocation16 + $0x530] sm:$0xff]
        %v3613 = vld [vmem:[#allocation16 + $0x538] sm:$0xff]
        %v3614 = vld [vmem:[#allocation16 + $0x540] sm:$0xff]
        %v3615 = vld [vmem:[#allocation16 + $0x548] sm:$0xff]
        %v3616 = vld [vmem:[#allocation16 + $0x550] sm:$0xff]
        %v3617 = vld [vmem:[#allocation16 + $0x558] sm:$0xff]
        %v3618 = vld [vmem:[#allocation16 + $0x560] sm:$0xff]
        %v3619 = vld [vmem:[#allocation16 + $0x568] sm:$0xff]
        %v3620 = vld [vmem:[#allocation16 + $0x570] sm:$0xff]
        %v3621 = vld [vmem:[#allocation16 + $0x578] sm:$0xff]
        %v3622 = vld [vmem:[#allocation16 + $0x580] sm:$0xff]
        %v3623 = vld [vmem:[#allocation16 + $0x588] sm:$0xff]
        %v3624 = vld [vmem:[#allocation16 + $0x590] sm:$0xff]
        %v3625 = vld [vmem:[#allocation16 + $0x598] sm:$0xff]
        %v3626 = vld [vmem:[#allocation16 + $0x5a0] sm:$0xff]
        %v3627 = vld [vmem:[#allocation16 + $0x5a8] sm:$0xff]
        %v3628 = vld [vmem:[#allocation16 + $0x5b0] sm:$0xff]
        %v3629 = vld [vmem:[#allocation16 + $0x5b8] sm:$0xff]
        %v3630 = vld [vmem:[#allocation16 + $0x5c0] sm:$0xff]
        %v3631 = vld [vmem:[#allocation16 + $0x5c8] sm:$0xff]
        %v3632 = vld [vmem:[#allocation16 + $0x5d0] sm:$0xff]
        %v3633 = vld [vmem:[#allocation16 + $0x5d8] sm:$0xff]
        %v3634 = vld [vmem:[#allocation16 + $0x5e0] sm:$0xff]
        %v3635 = vld [vmem:[#allocation16 + $0x5e8] sm:$0xff]
        %v3636 = vld [vmem:[#allocation16 + $0x5f0] sm:$0xff]
        %v3637 = vld [vmem:[#allocation16 + $0x5f8] sm:$0xff]
        %v3638 = vld [vmem:[#allocation16 + $0x600] sm:$0xff]
        %v3639 = vld [vmem:[#allocation16 + $0x608] sm:$0xff]
        %v3640 = vld [vmem:[#allocation16 + $0x610] sm:$0xff]
        %v3641 = vld [vmem:[#allocation16 + $0x618] sm:$0xff]
        %v3642 = vld [vmem:[#allocation16 + $0x620] sm:$0xff]
        %v3643 = vld [vmem:[#allocation16 + $0x628] sm:$0xff]
        %v3644 = vld [vmem:[#allocation16 + $0x630] sm:$0xff]
        %v3645 = vld [vmem:[#allocation16 + $0x638] sm:$0xff]
        %v3646 = vld [vmem:[#allocation16 + $0x640] sm:$0xff]
        %v3647 = vld [vmem:[#allocation16 + $0x648] sm:$0xff]
        %v3648 = vld [vmem:[#allocation16 + $0x650] sm:$0xff]
        %v3649 = vld [vmem:[#allocation16 + $0x658] sm:$0xff]
        %v3650 = vld [vmem:[#allocation16 + $0x660] sm:$0xff]
        %v3651 = vld [vmem:[#allocation16 + $0x668] sm:$0xff]
        %v3652 = vld [vmem:[#allocation16 + $0x670] sm:$0xff]
        %v3653 = vld [vmem:[#allocation16 + $0x678] sm:$0xff]
        %v3654 = vld [vmem:[#allocation16 + $0x680] sm:$0xff]
        %v3655 = vld [vmem:[#allocation16 + $0x688] sm:$0xff]
        %v3656 = vld [vmem:[#allocation16 + $0x690] sm:$0xff]
        %v3657 = vld [vmem:[#allocation16 + $0x698] sm:$0xff]
        %v3658 = vld [vmem:[#allocation16 + $0x6a0] sm:$0xff]
        %v3659 = vld [vmem:[#allocation16 + $0x6a8] sm:$0xff]
        %v3660 = vld [vmem:[#allocation16 + $0x6b0] sm:$0xff]
        %v3661 = vld [vmem:[#allocation16 + $0x6b8] sm:$0xff]
        %v3662 = vld [vmem:[#allocation16 + $0x6c0] sm:$0xff]
        %v3663 = vld [vmem:[#allocation16 + $0x6c8] sm:$0xff]
        %v3664 = vld [vmem:[#allocation16 + $0x6d0] sm:$0xff]
        %v3665 = vld [vmem:[#allocation16 + $0x6d8] sm:$0xff]
        %v3666 = vld [vmem:[#allocation16 + $0x6e0] sm:$0xff]
        %v3667 = vld [vmem:[#allocation16 + $0x6e8] sm:$0xff]
        %v3668 = vld [vmem:[#allocation16 + $0x6f0] sm:$0xff]
        %v3669 = vld [vmem:[#allocation16 + $0x6f8] sm:$0xff]
        %v3670 = vld [vmem:[#allocation16 + $0x700] sm:$0xff]
        %v3671 = vld [vmem:[#allocation16 + $0x708] sm:$0xff]
        %v3672 = vld [vmem:[#allocation16 + $0x710] sm:$0xff]
        %v3673 = vld [vmem:[#allocation16 + $0x718] sm:$0xff]
        %v3674 = vld [vmem:[#allocation16 + $0x720] sm:$0xff]
        %v3675 = vld [vmem:[#allocation16 + $0x728] sm:$0xff]
        %v3676 = vld [vmem:[#allocation16 + $0x730] sm:$0xff]
        %v3677 = vld [vmem:[#allocation16 + $0x738] sm:$0xff]
        %v3678 = vld [vmem:[#allocation16 + $0x740] sm:$0xff]
        %v3679 = vld [vmem:[#allocation16 + $0x748] sm:$0xff]
        %v3680 = vld [vmem:[#allocation16 + $0x750] sm:$0xff]
        %v3681 = vld [vmem:[#allocation16 + $0x758] sm:$0xff]
        %v3682 = vld [vmem:[#allocation16 + $0x760] sm:$0xff]
        %v3683 = vld [vmem:[#allocation16 + $0x768] sm:$0xff]
        %v3684 = vld [vmem:[#allocation16 + $0x770] sm:$0xff]
        %v3685 = vld [vmem:[#allocation16 + $0x778] sm:$0xff]
        %v3686 = vld [vmem:[#allocation16 + $0x780] sm:$0xff]
        %v3687 = vld [vmem:[#allocation16 + $0x788] sm:$0xff]
        %v3688 = vld [vmem:[#allocation16 + $0x790] sm:$0xff]
        %v3689 = vld [vmem:[#allocation16 + $0x798] sm:$0xff]
        %v3690 = vld [vmem:[#allocation16 + $0x7a0] sm:$0xff]
        %v3691 = vld [vmem:[#allocation16 + $0x7a8] sm:$0xff]
        %v3692 = vld [vmem:[#allocation16 + $0x7b0] sm:$0xff]
        %v3693 = vld [vmem:[#allocation16 + $0x7b8] sm:$0xff]
        %v3694 = vld [vmem:[#allocation16 + $0x7c0] sm:$0xff]
        %v3695 = vld [vmem:[#allocation16 + $0x7c8] sm:$0xff]
        %v3696 = vld [vmem:[#allocation16 + $0x7d0] sm:$0xff]
        %v3697 = vld [vmem:[#allocation16 + $0x7d8] sm:$0xff]
        %v3698 = vld [vmem:[#allocation16 + $0x7e0] sm:$0xff]
        %v3699 = vld [vmem:[#allocation16 + $0x7e8] sm:$0xff]
        %v3700 = vld [vmem:[#allocation16 + $0x7f0] sm:$0xff]
        %v3701 = vld [vmem:[#allocation16 + $0x7f8] sm:$0xff]
        %v3702 = vld [vmem:[#allocation16 + $0x800] sm:$0xff]
        %v3703 = vld [vmem:[#allocation16 + $0x808] sm:$0xff]
        %v3704 = vld [vmem:[#allocation16 + $0x810] sm:$0xff]
        %v3705 = vld [vmem:[#allocation16 + $0x818] sm:$0xff]
        %v3706 = vld [vmem:[#allocation16 + $0x820] sm:$0xff]
        %v3707 = vld [vmem:[#allocation16 + $0x828] sm:$0xff]
        %v3708 = vld [vmem:[#allocation16 + $0x830] sm:$0xff]
        %v3709 = vld [vmem:[#allocation16 + $0x838] sm:$0xff]
        %v3710 = vld [vmem:[#allocation16 + $0x840] sm:$0xff]
        %v3711 = vld [vmem:[#allocation16 + $0x848] sm:$0xff]
        %v3712 = vld [vmem:[#allocation16 + $0x850] sm:$0xff]
        %v3713 = vld [vmem:[#allocation16 + $0x858] sm:$0xff]
        %v3714 = vld [vmem:[#allocation16 + $0x860] sm:$0xff]
        %v3715 = vld [vmem:[#allocation16 + $0x868] sm:$0xff]
        %v3716 = vld [vmem:[#allocation16 + $0x870] sm:$0xff]
        %v3717 = vld [vmem:[#allocation16 + $0x878] sm:$0xff]
        %v3718 = vld [vmem:[#allocation16 + $0x880] sm:$0xff]
        %v3719 = vld [vmem:[#allocation16 + $0x888] sm:$0xff]
        %v3720 = vld [vmem:[#allocation16 + $0x890] sm:$0xff]
        %v3721 = vld [vmem:[#allocation16 + $0x898] sm:$0xff]
        %v3722 = vld [vmem:[#allocation16 + $0x8a0] sm:$0xff]
        %v3723 = vld [vmem:[#allocation16 + $0x8a8] sm:$0xff]
        %v3724 = vld [vmem:[#allocation16 + $0x8b0] sm:$0xff]
        %v3725 = vld [vmem:[#allocation16 + $0x8b8] sm:$0xff]
        %v3726 = vld [vmem:[#allocation16 + $0x8c0] sm:$0xff]
        %v3727 = vld [vmem:[#allocation16 + $0x8c8] sm:$0xff]
        %v3728 = vld [vmem:[#allocation16 + $0x8d0] sm:$0xff]
        %v3729 = vld [vmem:[#allocation16 + $0x8d8] sm:$0xff]
        %v3730 = vld [vmem:[#allocation16 + $0x8e0] sm:$0xff]
        %v3731 = vld [vmem:[#allocation16 + $0x8e8] sm:$0xff]
        %v3732 = vld [vmem:[#allocation16 + $0x8f0] sm:$0xff]
        %v3733 = vld [vmem:[#allocation16 + $0x8f8] sm:$0xff]
        %v3734 = vld [vmem:[#allocation16 + $0x900] sm:$0xff]
        %v3735 = vld [vmem:[#allocation16 + $0x908] sm:$0xff]
        %v3736 = vld [vmem:[#allocation16 + $0x910] sm:$0xff]
        %v3737 = vld [vmem:[#allocation16 + $0x918] sm:$0xff]
        %v3738 = vld [vmem:[#allocation16 + $0x920] sm:$0xff]
        %v3739 = vld [vmem:[#allocation16 + $0x928] sm:$0xff]
        %v3740 = vld [vmem:[#allocation16 + $0x930] sm:$0xff]
        %v3741 = vld [vmem:[#allocation16 + $0x938] sm:$0xff]
        %v3742 = vld [vmem:[#allocation16 + $0x940] sm:$0xff]
        %v3743 = vld [vmem:[#allocation16 + $0x948] sm:$0xff]
        %v3744 = vld [vmem:[#allocation16 + $0x950] sm:$0xff]
        %v3745 = vld [vmem:[#allocation16 + $0x958] sm:$0xff]
        %v3746 = vld [vmem:[#allocation16 + $0x960] sm:$0xff]
        %v3747 = vld [vmem:[#allocation16 + $0x968] sm:$0xff]
        %v3748 = vld [vmem:[#allocation16 + $0x970] sm:$0xff]
        %v3749 = vld [vmem:[#allocation16 + $0x978] sm:$0xff]
        %v3750 = vld [vmem:[#allocation16 + $0x980] sm:$0xff]
        %v3751 = vld [vmem:[#allocation16 + $0x988] sm:$0xff]
        %v3752 = vld [vmem:[#allocation16 + $0x990] sm:$0xff]
        %v3753 = vld [vmem:[#allocation16 + $0x998] sm:$0xff]
        %v3754 = vld [vmem:[#allocation16 + $0x9a0] sm:$0xff]
        %v3755 = vld [vmem:[#allocation16 + $0x9a8] sm:$0xff]
        %v3756 = vld [vmem:[#allocation16 + $0x9b0] sm:$0xff]
        %v3757 = vld [vmem:[#allocation16 + $0x9b8] sm:$0xff]
        %v3758 = vld [vmem:[#allocation16 + $0x9c0] sm:$0xff]
        %v3759 = vld [vmem:[#allocation16 + $0x9c8] sm:$0xff]
        %v3760 = vld [vmem:[#allocation16 + $0x9d0] sm:$0xff]
        %v3761 = vld [vmem:[#allocation16 + $0x9d8] sm:$0xff]
        %v3762 = vld [vmem:[#allocation16 + $0x9e0] sm:$0xff]
        %v3763 = vld [vmem:[#allocation16 + $0x9e8] sm:$0xff]
        %v3764 = vld [vmem:[#allocation16 + $0x9f0] sm:$0xff]
        %v3765 = vld [vmem:[#allocation16 + $0x9f8] sm:$0xff]
        %v3766 = vld [vmem:[#allocation16 + $0xa00] sm:$0xff]
        %v3767 = vld [vmem:[#allocation16 + $0xa08] sm:$0xff]
        %v3768 = vld [vmem:[#allocation16 + $0xa10] sm:$0xff]
        %v3769 = vld [vmem:[#allocation16 + $0xa18] sm:$0xff]
        %v3770 = vld [vmem:[#allocation16 + $0xa20] sm:$0xff]
        %v3771 = vld [vmem:[#allocation16 + $0xa28] sm:$0xff]
        %v3772 = vld [vmem:[#allocation16 + $0xa30] sm:$0xff]
        %v3773 = vld [vmem:[#allocation16 + $0xa38] sm:$0xff]
        %v3774 = vld [vmem:[#allocation16 + $0xa40] sm:$0xff]
        %v3775 = vld [vmem:[#allocation16 + $0xa48] sm:$0xff]
        %v3776 = vld [vmem:[#allocation16 + $0xa50] sm:$0xff]
        %v3777 = vld [vmem:[#allocation16 + $0xa58] sm:$0xff]
        %v3778 = vld [vmem:[#allocation16 + $0xa60] sm:$0xff]
        %v3779 = vld [vmem:[#allocation16 + $0xa68] sm:$0xff]
        %v3780 = vld [vmem:[#allocation16 + $0xa70] sm:$0xff]
        %v3781 = vld [vmem:[#allocation16 + $0xa78] sm:$0xff]
        %v3782 = vld [vmem:[#allocation16 + $0xa80] sm:$0xff]
        %v3783 = vld [vmem:[#allocation16 + $0xa88] sm:$0xff]
        %v3784 = vld [vmem:[#allocation16 + $0xa90] sm:$0xff]
        %v3785 = vld [vmem:[#allocation16 + $0xa98] sm:$0xff]
        %v3786 = vld [vmem:[#allocation16 + $0xaa0] sm:$0xff]
        %v3787 = vld [vmem:[#allocation16 + $0xaa8] sm:$0xff]
        %v3788 = vld [vmem:[#allocation16 + $0xab0] sm:$0xff]
        %v3789 = vld [vmem:[#allocation16 + $0xab8] sm:$0xff]
        %v3790 = vld [vmem:[#allocation16 + $0xac0] sm:$0xff]
        %v3791 = vld [vmem:[#allocation16 + $0xac8] sm:$0xff]
        %v3792 = vld [vmem:[#allocation16 + $0xad0] sm:$0xff]
        %v3793 = vld [vmem:[#allocation16 + $0xad8] sm:$0xff]
        %v3794 = vld [vmem:[#allocation16 + $0xae0] sm:$0xff]
        %v3795 = vld [vmem:[#allocation16 + $0xae8] sm:$0xff]
        %v3796 = vld [vmem:[#allocation16 + $0xaf0] sm:$0xff]
        %v3797 = vld [vmem:[#allocation16 + $0xaf8] sm:$0xff]
        %v3798 = vld [vmem:[#allocation16 + $0xb00] sm:$0xff]
        %v3799 = vld [vmem:[#allocation16 + $0xb08] sm:$0xff]
        %v3800 = vld [vmem:[#allocation16 + $0xb10] sm:$0xff]
        %v3801 = vld [vmem:[#allocation16 + $0xb18] sm:$0xff]
        %v3802 = vld [vmem:[#allocation16 + $0xb20] sm:$0xff]
        %v3803 = vld [vmem:[#allocation16 + $0xb28] sm:$0xff]
        %v3804 = vld [vmem:[#allocation16 + $0xb30] sm:$0xff]
        %v3805 = vld [vmem:[#allocation16 + $0xb38] sm:$0xff]
        %v3806 = vld [vmem:[#allocation16 + $0xb40] sm:$0xff]
        %v3807 = vld [vmem:[#allocation16 + $0xb48] sm:$0xff]
        %v3808 = vld [vmem:[#allocation16 + $0xb50] sm:$0xff]
        %v3809 = vld [vmem:[#allocation16 + $0xb58] sm:$0xff]
        %v3810 = vld [vmem:[#allocation16 + $0xb60] sm:$0xff]
        %v3811 = vld [vmem:[#allocation16 + $0xb68] sm:$0xff]
        %v3812 = vld [vmem:[#allocation16 + $0xb70] sm:$0xff]
        %v3813 = vld [vmem:[#allocation16 + $0xb78] sm:$0xff]
        %v3814 = vld [vmem:[#allocation16 + $0xb80] sm:$0xff]
        %v3815 = vld [vmem:[#allocation16 + $0xb88] sm:$0xff]
        %v3816 = vld [vmem:[#allocation16 + $0xb90] sm:$0xff]
        %v3817 = vld [vmem:[#allocation16 + $0xb98] sm:$0xff]
        %v3818 = vld [vmem:[#allocation16 + $0xba0] sm:$0xff]
        %v3819 = vld [vmem:[#allocation16 + $0xba8] sm:$0xff]
        %v3820 = vld [vmem:[#allocation16 + $0xbb0] sm:$0xff]
        %v3821 = vld [vmem:[#allocation16 + $0xbb8] sm:$0xff]
        %v3822 = vld [vmem:[#allocation16 + $0xbc0] sm:$0xff]
        %v3823 = vld [vmem:[#allocation16 + $0xbc8] sm:$0xff]
        %v3824 = vld [vmem:[#allocation16 + $0xbd0] sm:$0xff]
        %v3825 = vld [vmem:[#allocation16 + $0xbd8] sm:$0xff]
        %v3826 = vld [vmem:[#allocation16 + $0xbe0] sm:$0xff]
        %v3827 = vld [vmem:[#allocation16 + $0xbe8] sm:$0xff]
        %v3828 = vld [vmem:[#allocation16 + $0xbf0] sm:$0xff]
        %v3829 = vld [vmem:[#allocation16 + $0xbf8] sm:$0xff]
        %v3830 = vld [vmem:[#allocation16 + $0xc00] sm:$0xff]
        %v3831 = vld [vmem:[#allocation16 + $0xc08] sm:$0xff]
        %v3832 = vld [vmem:[#allocation16 + $0xc10] sm:$0xff]
        %v3833 = vld [vmem:[#allocation16 + $0xc18] sm:$0xff]
        %v3834 = vld [vmem:[#allocation16 + $0xc20] sm:$0xff]
        %v3835 = vld [vmem:[#allocation16 + $0xc28] sm:$0xff]
        %v3836 = vld [vmem:[#allocation16 + $0xc30] sm:$0xff]
        %v3837 = vld [vmem:[#allocation16 + $0xc38] sm:$0xff]
        %v3838 = vld [vmem:[#allocation16 + $0xc40] sm:$0xff]
        %v3839 = vld [vmem:[#allocation16 + $0xc48] sm:$0xff]
        %v3840 = vld [vmem:[#allocation16 + $0xc50] sm:$0xff]
        %v3841 = vld [vmem:[#allocation16 + $0xc58] sm:$0xff]
        %v3842 = vld [vmem:[#allocation16 + $0xc60] sm:$0xff]
        %v3843 = vld [vmem:[#allocation16 + $0xc68] sm:$0xff]
        %v3844 = vld [vmem:[#allocation16 + $0xc70] sm:$0xff]
        %v3845 = vld [vmem:[#allocation16 + $0xc78] sm:$0xff]
        %v3846 = vld [vmem:[#allocation16 + $0xc80] sm:$0xff]
        %v3847 = vld [vmem:[#allocation16 + $0xc88] sm:$0xff]
        %v3848 = vld [vmem:[#allocation16 + $0xc90] sm:$0xff]
        %v3849 = vld [vmem:[#allocation16 + $0xc98] sm:$0xff]
        %v3850 = vld [vmem:[#allocation16 + $0xca0] sm:$0xff]
        %v3851 = vld [vmem:[#allocation16 + $0xca8] sm:$0xff]
        %v3852 = vld [vmem:[#allocation16 + $0xcb0] sm:$0xff]
        %v3853 = vld [vmem:[#allocation16 + $0xcb8] sm:$0xff]
        %v3854 = vld [vmem:[#allocation16 + $0xcc0] sm:$0xff]
        %v3855 = vld [vmem:[#allocation16 + $0xcc8] sm:$0xff]
        %v3856 = vld [vmem:[#allocation16 + $0xcd0] sm:$0xff]
        %v3857 = vld [vmem:[#allocation16 + $0xcd8] sm:$0xff]
        %v3858 = vld [vmem:[#allocation16 + $0xce0] sm:$0xff]
        %v3859 = vld [vmem:[#allocation16 + $0xce8] sm:$0xff]
        %v3860 = vld [vmem:[#allocation16 + $0xcf0] sm:$0xff]
        %v3861 = vld [vmem:[#allocation16 + $0xcf8] sm:$0xff]
        %v3862 = vld [vmem:[#allocation16 + $0xd00] sm:$0xff]
        %v3863 = vld [vmem:[#allocation16 + $0xd08] sm:$0xff]
        %v3864 = vld [vmem:[#allocation16 + $0xd10] sm:$0xff]
        %v3865 = vld [vmem:[#allocation16 + $0xd18] sm:$0xff]
        %v3866 = vld [vmem:[#allocation16 + $0xd20] sm:$0xff]
        %v3867 = vld [vmem:[#allocation16 + $0xd28] sm:$0xff]
        %v3868 = vld [vmem:[#allocation16 + $0xd30] sm:$0xff]
        %v3869 = vld [vmem:[#allocation16 + $0xd38] sm:$0xff]
        %v3870 = vld [vmem:[#allocation16 + $0xd40] sm:$0xff]
        %v3871 = vld [vmem:[#allocation16 + $0xd48] sm:$0xff]
        %v3872 = vld [vmem:[#allocation16 + $0xd50] sm:$0xff]
        %v3873 = vld [vmem:[#allocation16 + $0xd58] sm:$0xff]
        %v3874 = vld [vmem:[#allocation16 + $0xd60] sm:$0xff]
        %v3875 = vld [vmem:[#allocation16 + $0xd68] sm:$0xff]
        %v3876 = vld [vmem:[#allocation16 + $0xd70] sm:$0xff]
        %v3877 = vld [vmem:[#allocation16 + $0xd78] sm:$0xff]
        %v3878 = vld [vmem:[#allocation16 + $0xd80] sm:$0xff]
        %v3879 = vld [vmem:[#allocation16 + $0xd88] sm:$0xff]
        %v3880 = vld [vmem:[#allocation16 + $0xd90] sm:$0xff]
        %v3881 = vld [vmem:[#allocation16 + $0xd98] sm:$0xff]
        %v3882 = vld [vmem:[#allocation16 + $0xda0] sm:$0xff]
        %v3883 = vld [vmem:[#allocation16 + $0xda8] sm:$0xff]
        %v3884 = vld [vmem:[#allocation16 + $0xdb0] sm:$0xff]
        %v3885 = vld [vmem:[#allocation16 + $0xdb8] sm:$0xff]
        %v3886 = vld [vmem:[#allocation16 + $0xdc0] sm:$0xff]
        %v3887 = vld [vmem:[#allocation16 + $0xdc8] sm:$0xff]
        %v3888 = vld [vmem:[#allocation16 + $0xdd0] sm:$0xff]
        %v3889 = vld [vmem:[#allocation16 + $0xdd8] sm:$0xff]
        %v3890 = vld [vmem:[#allocation16 + $0xde0] sm:$0xff]
        %v3891 = vld [vmem:[#allocation16 + $0xde8] sm:$0xff]
        %v3892 = vld [vmem:[#allocation16 + $0xdf0] sm:$0xff]
        %v3893 = vld [vmem:[#allocation16 + $0xdf8] sm:$0xff]
        %v3894 = vld [vmem:[#allocation16 + $0xe00] sm:$0xff]
        %v3895 = vld [vmem:[#allocation16 + $0xe08] sm:$0xff]
        %v3896 = vld [vmem:[#allocation16 + $0xe10] sm:$0xff]
        %v3897 = vld [vmem:[#allocation16 + $0xe18] sm:$0xff]
        %v3898 = vld [vmem:[#allocation16 + $0xe20] sm:$0xff]
        %v3899 = vld [vmem:[#allocation16 + $0xe28] sm:$0xff]
        %v3900 = vld [vmem:[#allocation16 + $0xe30] sm:$0xff]
        %v3901 = vld [vmem:[#allocation16 + $0xe38] sm:$0xff]
        %v3902 = vld [vmem:[#allocation16 + $0xe40] sm:$0xff]
        %v3903 = vld [vmem:[#allocation16 + $0xe48] sm:$0xff]
        %v3904 = vld [vmem:[#allocation16 + $0xe50] sm:$0xff]
        %v3905 = vld [vmem:[#allocation16 + $0xe58] sm:$0xff]
        %v3906 = vld [vmem:[#allocation16 + $0xe60] sm:$0xff]
        %v3907 = vld [vmem:[#allocation16 + $0xe68] sm:$0xff]
        %v3908 = vld [vmem:[#allocation16 + $0xe70] sm:$0xff]
        %v3909 = vld [vmem:[#allocation16 + $0xe78] sm:$0xff]
        %v3910 = vld [vmem:[#allocation16 + $0xe80] sm:$0xff]
        %v3911 = vld [vmem:[#allocation16 + $0xe88] sm:$0xff]
        %v3912 = vld [vmem:[#allocation16 + $0xe90] sm:$0xff]
        %v3913 = vld [vmem:[#allocation16 + $0xe98] sm:$0xff]
        %v3914 = vld [vmem:[#allocation16 + $0xea0] sm:$0xff]
        %v3915 = vld [vmem:[#allocation16 + $0xea8] sm:$0xff]
        %v3916 = vld [vmem:[#allocation16 + $0xeb0] sm:$0xff]
        %v3917 = vld [vmem:[#allocation16 + $0xeb8] sm:$0xff]
        %v3918 = vld [vmem:[#allocation16 + $0xec0] sm:$0xff]
        %v3919 = vld [vmem:[#allocation16 + $0xec8] sm:$0xff]
        %v3920 = vld [vmem:[#allocation16 + $0xed0] sm:$0xff]
        %v3921 = vld [vmem:[#allocation16 + $0xed8] sm:$0xff]
        %v3922 = vld [vmem:[#allocation16 + $0xee0] sm:$0xff]
        %v3923 = vld [vmem:[#allocation16 + $0xee8] sm:$0xff]
        %v3924 = vld [vmem:[#allocation16 + $0xef0] sm:$0xff]
        %v3925 = vld [vmem:[#allocation16 + $0xef8] sm:$0xff]
        %v3926 = vld [vmem:[#allocation16 + $0xf00] sm:$0xff]
        %v3927 = vld [vmem:[#allocation16 + $0xf08] sm:$0xff]
        %v3928 = vld [vmem:[#allocation16 + $0xf10] sm:$0xff]
        %v3929 = vld [vmem:[#allocation16 + $0xf18] sm:$0xff]
        %v3930 = vld [vmem:[#allocation16 + $0xf20] sm:$0xff]
        %v3931 = vld [vmem:[#allocation16 + $0xf28] sm:$0xff]
        %v3932 = vld [vmem:[#allocation16 + $0xf30] sm:$0xff]
        %v3933 = vld [vmem:[#allocation16 + $0xf38] sm:$0xff]
        %v3934 = vld [vmem:[#allocation16 + $0xf40] sm:$0xff]
        %v3935 = vld [vmem:[#allocation16 + $0xf48] sm:$0xff]
        %v3936 = vld [vmem:[#allocation16 + $0xf50] sm:$0xff]
        %v3937 = vld [vmem:[#allocation16 + $0xf58] sm:$0xff]
        %v3938 = vld [vmem:[#allocation16 + $0xf60] sm:$0xff]
        %v3939 = vld [vmem:[#allocation16 + $0xf68] sm:$0xff]
        %v3940 = vld [vmem:[#allocation16 + $0xf70] sm:$0xff]
        %v3941 = vld [vmem:[#allocation16 + $0xf78] sm:$0xff]
        %v3942 = vld [vmem:[#allocation16 + $0xf80] sm:$0xff]
        %v3943 = vld [vmem:[#allocation16 + $0xf88] sm:$0xff]
        %v3944 = vld [vmem:[#allocation16 + $0xf90] sm:$0xff]
        %v3945 = vld [vmem:[#allocation16 + $0xf98] sm:$0xff]
        %v3946 = vld [vmem:[#allocation16 + $0xfa0] sm:$0xff]
        %v3947 = vld [vmem:[#allocation16 + $0xfa8] sm:$0xff]
        %v3948 = vld [vmem:[#allocation16 + $0xfb0] sm:$0xff]
        %v3949 = vld [vmem:[#allocation16 + $0xfb8] sm:$0xff]
        %v3950 = vld [vmem:[#allocation16 + $0xfc0] sm:$0xff]
        %v3951 = vld [vmem:[#allocation16 + $0xfc8] sm:$0xff]
        %v3952 = vld [vmem:[#allocation16 + $0xfd0] sm:$0xff]
        %v3953 = vld [vmem:[#allocation16 + $0xfd8] sm:$0xff]
        %v3954 = vld [vmem:[#allocation16 + $0xfe0] sm:$0xff]
        %v3955 = vld [vmem:[#allocation16 + $0xfe8] sm:$0xff]
        %v3956 = vld [vmem:[#allocation16 + $0xff0] sm:$0xff]
        %v3957 = vld [vmem:[#allocation16 + $0xff8] sm:$0xff]
        %v3958 = vld [vmem:[#allocation16 + $0x1000] sm:$0xff]
        %v3959 = vld [vmem:[#allocation16 + $0x1008] sm:$0xff]
        %v3960 = vld [vmem:[#allocation16 + $0x1010] sm:$0xff]
        %v3961 = vld [vmem:[#allocation16 + $0x1018] sm:$0xff]
        %v3962 = vld [vmem:[#allocation16 + $0x1020] sm:$0xff]
        %v3963 = vld [vmem:[#allocation16 + $0x1028] sm:$0xff]
        %v3964 = vld [vmem:[#allocation16 + $0x1030] sm:$0xff]
        %v3965 = vld [vmem:[#allocation16 + $0x1038] sm:$0xff]
        %v3966 = vld [vmem:[#allocation16 + $0x1040] sm:$0xff]
        %v3967 = vld [vmem:[#allocation16 + $0x1048] sm:$0xff]
        %v3968 = vld [vmem:[#allocation16 + $0x1050] sm:$0xff]
        %v3969 = vld [vmem:[#allocation16 + $0x1058] sm:$0xff]
        %v3970 = vld [vmem:[#allocation16 + $0x1060] sm:$0xff]
        %v3971 = vld [vmem:[#allocation16 + $0x1068] sm:$0xff]
        %v3972 = vld [vmem:[#allocation16 + $0x1070] sm:$0xff]
        %v3973 = vld [vmem:[#allocation16 + $0x1078] sm:$0xff]
        %v3974 = vld [vmem:[#allocation16 + $0x1080] sm:$0xff]
        %v3975 = vld [vmem:[#allocation16 + $0x1088] sm:$0xff]
        %v3976 = vld [vmem:[#allocation16 + $0x1090] sm:$0xff]
        %v3977 = vld [vmem:[#allocation16 + $0x1098] sm:$0xff]
        %v3978 = vld [vmem:[#allocation16 + $0x10a0] sm:$0xff]
        %v3979 = vld [vmem:[#allocation16 + $0x10a8] sm:$0xff]
        %v3980 = vld [vmem:[#allocation16 + $0x10b0] sm:$0xff]
        %v3981 = vld [vmem:[#allocation16 + $0x10b8] sm:$0xff]
        %v3982 = vld [vmem:[#allocation16 + $0x10c0] sm:$0xff]
        %v3983 = vld [vmem:[#allocation16 + $0x10c8] sm:$0xff]
        %v3984 = vld [vmem:[#allocation16 + $0x10d0] sm:$0xff]
        %v3985 = vld [vmem:[#allocation16 + $0x10d8] sm:$0xff]
        %v3986 = vld [vmem:[#allocation16 + $0x10e0] sm:$0xff]
        %v3987 = vld [vmem:[#allocation16 + $0x10e8] sm:$0xff]
        %v3988 = vld [vmem:[#allocation16 + $0x10f0] sm:$0xff]
        %v3989 = vld [vmem:[#allocation16 + $0x10f8] sm:$0xff]
        %v3990 = vld [vmem:[#allocation16 + $0x1100] sm:$0xff]
        %v3991 = vld [vmem:[#allocation16 + $0x1108] sm:$0xff]
        %v3992 = vld [vmem:[#allocation16 + $0x1110] sm:$0xff]
        %v3993 = vld [vmem:[#allocation16 + $0x1118] sm:$0xff]
        %v3994 = vld [vmem:[#allocation16 + $0x1120] sm:$0xff]
        %v3995 = vld [vmem:[#allocation16 + $0x1128] sm:$0xff]
        %v3996 = vld [vmem:[#allocation16 + $0x1130] sm:$0xff]
        %v3997 = vld [vmem:[#allocation16 + $0x1138] sm:$0xff]
        %v3998 = vld [vmem:[#allocation16 + $0x1140] sm:$0xff]
        %v3999 = vld [vmem:[#allocation16 + $0x1148] sm:$0xff]
        %v4000 = vld [vmem:[#allocation16 + $0x1150] sm:$0xff]
        %v4001 = vld [vmem:[#allocation16 + $0x1158] sm:$0xff]
        %v4002 = vld [vmem:[#allocation16 + $0x1160] sm:$0xff]
        %v4003 = vld [vmem:[#allocation16 + $0x1168] sm:$0xff]
        %v4004 = vld [vmem:[#allocation16 + $0x1170] sm:$0xff]
        %v4005 = vld [vmem:[#allocation16 + $0x1178] sm:$0xff]
        %v4006 = vld [vmem:[#allocation16 + $0x1180] sm:$0xff]
        %v4007 = vld [vmem:[#allocation16 + $0x1188] sm:$0xff]
        %v4008 = vld [vmem:[#allocation16 + $0x1190] sm:$0xff]
        %v4009 = vld [vmem:[#allocation16 + $0x1198] sm:$0xff]
        %v4010 = vld [vmem:[#allocation16 + $0x11a0] sm:$0xff]
        %v4011 = vld [vmem:[#allocation16 + $0x11a8] sm:$0xff]
        %v4012 = vld [vmem:[#allocation16 + $0x11b0] sm:$0xff]
        %v4013 = vld [vmem:[#allocation16 + $0x11b8] sm:$0xff]
        %v4014 = vld [vmem:[#allocation16 + $0x11c0] sm:$0xff]
        %v4015 = vld [vmem:[#allocation16 + $0x11c8] sm:$0xff]
        %v4016 = vld [vmem:[#allocation16 + $0x11d0] sm:$0xff]
        %v4017 = vld [vmem:[#allocation16 + $0x11d8] sm:$0xff]
        %v4018 = vld [vmem:[#allocation16 + $0x11e0] sm:$0xff]
        %v4019 = vld [vmem:[#allocation16 + $0x11e8] sm:$0xff]
        %v4020 = vld [vmem:[#allocation16 + $0x11f0] sm:$0xff]
        %v4021 = vld [vmem:[#allocation16 + $0x11f8] sm:$0xff]
        %v4022 = vld [vmem:[#allocation18] sm:$0xff]
        %v4023 = vld [vmem:[#allocation18 + $0x8] sm:$0xf]
        %v4026 = vlaneseq
        %v4027 = vshrl.u32 %v4026, 7
        %v4028 = vsub.s32 0, %v4027
        %v4029 = vrot.slane %v4022, %v4028
        %v4030 = vlaneseq
        %v4031 = vshrl.u32 %v4030, 7
        %v4032 = vsub.s32 1, %v4031
        %v4033 = vrot.slane %v4022, %v4032
        %v4034 = vlaneseq
        %v4035 = vshrl.u32 %v4034, 7
        %v4036 = vsub.s32 2, %v4035
        %v4037 = vrot.slane %v4022, %v4036
        %v4038 = vlaneseq
        %v4039 = vshrl.u32 %v4038, 7
        %v4040 = vsub.s32 3, %v4039
        %v4041 = vrot.slane %v4022, %v4040
        %v4042 = vlaneseq
        %v4043 = vshrl.u32 %v4042, 7
        %v4044 = vsub.s32 4, %v4043
        %v4045 = vrot.slane %v4022, %v4044
        %v4046 = vlaneseq
        %v4047 = vshrl.u32 %v4046, 7
        %v4048 = vsub.s32 5, %v4047
        %v4049 = vrot.slane %v4022, %v4048
        %v4050 = vlaneseq
        %v4051 = vshrl.u32 %v4050, 7
        %v4052 = vsub.s32 6, %v4051
        %v4053 = vrot.slane %v4022, %v4052
        %v4054 = vlaneseq
        %v4055 = vshrl.u32 %v4054, 7
        %v4056 = vsub.s32 7, %v4055
        %v4057 = vrot.slane %v4022, %v4056
        %v4058 = vlaneseq
        %v4059 = vshrl.u32 %v4058, 7
        %v4060 = vsub.s32 0, %v4059
        %v4061 = vrot.slane %v4023, %v4060
        %v4062 = vlaneseq
        %v4063 = vshrl.u32 %v4062, 7
        %v4064 = vsub.s32 1, %v4063
        %v4065 = vrot.slane %v4023, %v4064
        %v4066 = vlaneseq
        %v4067 = vshrl.u32 %v4066, 7
        %v4068 = vsub.s32 2, %v4067
        %v4069 = vrot.slane %v4023, %v4068
        %v4070 = vlaneseq
        %v4071 = vshrl.u32 %v4070, 7
        %v4072 = vsub.s32 3, %v4071
        %v4073 = vrot.slane %v4023, %v4072
        %4086 = vmatprep.subr.mxu0 %v3627
        %4087 = vmatpush1.msra.mxu0 %v3626
        %4088 = vmatprep.subr.mxu0 %v3615
        %4089 = vmatpush1.msra.mxu0 %v3614
        %4090 = vmatprep.subr.mxu0 %v3603
        %4091 = vmatpush1.msra.mxu0 %v3602
        %4092 = vmatprep.subr.mxu0 %v3591
        %4093 = vmatpush1.msra.mxu0 %v3590
        %4094 = vmatprep.subr.mxu0 %v3579
        %4095 = vmatpush1.msra.mxu0 %v3578
        %4096 = vmatprep.subr.mxu0 %v3567
        %4097 = vmatpush1.msra.mxu0 %v3566
        %4098 = vmatprep.subr.mxu0 %v3555
        %4099 = vmatpush1.msra.mxu0 %v3554
        %4100 = vmatprep.subr.mxu0 %v3543
        %4101 = vmatpush1.msra.mxu0 %v3542
        %4102 = vmatprep.subr.mxu0 %v3531
        %4103 = vmatpush1.msra.mxu0 %v3530
        %4104 = vmatprep.subr.mxu0 %v3519
        %4105 = vmatpush1.msra.mxu0 %v3518
        %4106 = vmatprep.subr.mxu0 %v3507
        %4107 = vmatpush1.msra.mxu0 %v3506
        %4108 = vmatprep.subr.mxu0 %v3495
        %4109 = vmatpush1.msra.mxu0 %v3494
        %4110 = vmatprep.subr.mxu0 %v3483
        %4111 = vmatpush1.msra.mxu0 %v3482
        %4112 = vmatprep.subr.mxu0 %v3471
        %4113 = vmatpush1.msra.mxu0 %v3470
        %4114 = vmatprep.subr.mxu0 %v3459
        %4115 = vmatpush1.msra.mxu0 %v3458
        %4116 = vmatprep.subr.mxu0 %v3447
        %4117 = vmatpush1.msra.mxu0 %v3446
        %4118 = vmatprep.subr.mxu0 %v3819
        %4119 = vmatpush2.msra.mxu0 %v3818
        %4120 = vmatprep.subr.mxu0 %v3807
        %4121 = vmatpush2.msra.mxu0 %v3806
        %4122 = vmatprep.subr.mxu0 %v3795
        %4123 = vmatpush2.msra.mxu0 %v3794
        %4124 = vmatprep.subr.mxu0 %v3783
        %4125 = vmatpush2.msra.mxu0 %v3782
        %4126 = vmatprep.subr.mxu0 %v3771
        %4127 = vmatpush2.msra.mxu0 %v3770
        %4128 = vmatprep.subr.mxu0 %v3759
        %4129 = vmatpush2.msra.mxu0 %v3758
        %4130 = vmatprep.subr.mxu0 %v3747
        %4131 = vmatpush2.msra.mxu0 %v3746
        %4132 = vmatprep.subr.mxu0 %v3735
        %4133 = vmatpush2.msra.mxu0 %v3734
        %4134 = vmatprep.subr.mxu0 %v3723
        %4135 = vmatpush2.msra.mxu0 %v3722
        %4136 = vmatprep.subr.mxu0 %v3711
        %4137 = vmatpush2.msra.mxu0 %v3710
        %4138 = vmatprep.subr.mxu0 %v3699
        %4139 = vmatpush2.msra.mxu0 %v3698
        %4140 = vmatprep.subr.mxu0 %v3687
        %4141 = vmatpush2.msra.mxu0 %v3686
        %4142 = vmatprep.subr.mxu0 %v3675
        %4143 = vmatpush2.msra.mxu0 %v3674
        %4144 = vmatprep.subr.mxu0 %v3663
        %4145 = vmatpush2.msra.mxu0 %v3662
        %4146 = vmatprep.subr.mxu0 %v3651
        %4147 = vmatpush2.msra.mxu0 %v3650
        %4148 = vmatprep.subr.mxu0 %v3639
        %4149 = vmatpush2.msra.mxu0 %v3638
        %4150 = vmatprep.mubr.f32.mxu0 %v3444
        %4151 = vmatmul.mubr.f32.gmra.mxu0 %v3443
        %v4152 = vpop.f32.mrf.mxu0
        %v4153 = vadd.f32 %v4029, %v4152
        %v4154 = vpop.f32.mrf.mxu0
        %v4155 = vadd.f32 %v4033, %v4154
        %4156 = vdwg.mxu0
        %4157 = vmatprep.subr.mxu0 %v4011
        %4158 = vmatpush1.msra.mxu0 %v4010
        %4159 = vmatprep.subr.mxu0 %v3999
        %4160 = vmatpush1.msra.mxu0 %v3998
        %4161 = vmatprep.subr.mxu0 %v3987
        %4162 = vmatpush1.msra.mxu0 %v3986
        %4163 = vmatprep.subr.mxu0 %v3975
        %4164 = vmatpush1.msra.mxu0 %v3974
        %4165 = vmatprep.subr.mxu0 %v3963
        %4166 = vmatpush1.msra.mxu0 %v3962
        %4167 = vmatprep.subr.mxu0 %v3951
        %4168 = vmatpush1.msra.mxu0 %v3950
        %4169 = vmatprep.subr.mxu0 %v3939
        %4170 = vmatpush1.msra.mxu0 %v3938
        %4171 = vmatprep.subr.mxu0 %v3927
        %4172 = vmatpush1.msra.mxu0 %v3926
        %4173 = vmatprep.subr.mxu0 %v3915
        %4174 = vmatpush1.msra.mxu0 %v3914
        %4175 = vmatprep.subr.mxu0 %v3903
        %4176 = vmatpush1.msra.mxu0 %v3902
        %4177 = vmatprep.subr.mxu0 %v3891
        %4178 = vmatpush1.msra.mxu0 %v3890
        %4179 = vmatprep.subr.mxu0 %v3879
        %4180 = vmatpush1.msra.mxu0 %v3878
        %4181 = vmatprep.subr.mxu0 %v3867
        %4182 = vmatpush1.msra.mxu0 %v3866
        %4183 = vmatprep.subr.mxu0 %v3855
        %4184 = vmatpush1.msra.mxu0 %v3854
        %4185 = vmatprep.subr.mxu0 %v3843
        %4186 = vmatpush1.msra.mxu0 %v3842
        %4187 = vmatprep.subr.mxu0 %v3831
        %4188 = vmatpush1.msra.mxu0 %v3830
        %4189 = vmatprep.subr.mxu0 0.0
        %4190 = vmatpush2.msra.mxu0 0.0
        %4191 = vmatprep.subr.mxu0 0.0
        %4192 = vmatpush2.msra.mxu0 0.0
        %4193 = vmatprep.subr.mxu0 0.0
        %4194 = vmatpush2.msra.mxu0 0.0
        %4195 = vmatprep.subr.mxu0 0.0
        %4196 = vmatpush2.msra.mxu0 0.0
        %4197 = vmatprep.subr.mxu0 0.0
        %4198 = vmatpush2.msra.mxu0 0.0
        %4199 = vmatprep.subr.mxu0 0.0
        %4200 = vmatpush2.msra.mxu0 0.0
        %4201 = vmatprep.subr.mxu0 0.0
        %4202 = vmatpush2.msra.mxu0 0.0
        %4203 = vmatprep.subr.mxu0 0.0
        %4204 = vmatpush2.msra.mxu0 0.0
        %4205 = vmatprep.subr.mxu0 0.0
        %4206 = vmatpush2.msra.mxu0 0.0
        %4207 = vmatprep.subr.mxu0 0.0
        %4208 = vmatpush2.msra.mxu0 0.0
        %4209 = vmatprep.subr.mxu0 0.0
        %4210 = vmatpush2.msra.mxu0 0.0
        %4211 = vmatprep.subr.mxu0 0.0
        %4212 = vmatpush2.msra.mxu0 0.0
        %4213 = vmatprep.subr.mxu0 0.0
        %4214 = vmatpush2.msra.mxu0 0.0
        %4215 = vmatprep.subr.mxu0 0.0
        %4216 = vmatpush2.msra.mxu0 0.0
        %4217 = vmatprep.subr.mxu0 0.0
        %4218 = vmatpush2.msra.mxu0 0.0
        %4219 = vmatprep.subr.mxu0 0.0
        %4220 = vmatpush2.msra.mxu0 0.0
        %4221 = vmatprep.mubr.f32.mxu0 0.0
        %4222 = vmatmul.mubr.f32.gmra.mxu0 %v3445
        %v4223 = vpop.f32.mrf.mxu0
        %v4224 = vadd.f32 %v4153, %v4223
        %v4225 = vpop.f32.mrf.mxu0
        %v4226 = vadd.f32 %v4155, %v4225
        %4227 = vdwg.mxu0
        %4228 = vmatprep.subr.mxu0 %v3629
        %4229 = vmatpush1.msra.mxu0 %v3628
        %4230 = vmatprep.subr.mxu0 %v3617
        %4231 = vmatpush1.msra.mxu0 %v3616
        %4232 = vmatprep.subr.mxu0 %v3605
        %4233 = vmatpush1.msra.mxu0 %v3604
        %4234 = vmatprep.subr.mxu0 %v3593
        %4235 = vmatpush1.msra.mxu0 %v3592
        %4236 = vmatprep.subr.mxu0 %v3581
        %4237 = vmatpush1.msra.mxu0 %v3580
        %4238 = vmatprep.subr.mxu0 %v3569
        %4239 = vmatpush1.msra.mxu0 %v3568
        %4240 = vmatprep.subr.mxu0 %v3557
        %4241 = vmatpush1.msra.mxu0 %v3556
        %4242 = vmatprep.subr.mxu0 %v3545
        %4243 = vmatpush1.msra.mxu0 %v3544
        %4244 = vmatprep.subr.mxu0 %v3533
        %4245 = vmatpush1.msra.mxu0 %v3532
        %4246 = vmatprep.subr.mxu0 %v3521
        %4247 = vmatpush1.msra.mxu0 %v3520
        %4248 = vmatprep.subr.mxu0 %v3509
        %4249 = vmatpush1.msra.mxu0 %v3508
        %4250 = vmatprep.subr.mxu0 %v3497
        %4251 = vmatpush1.msra.mxu0 %v3496
        %4252 = vmatprep.subr.mxu0 %v3485
        %4253 = vmatpush1.msra.mxu0 %v3484
        %4254 = vmatprep.subr.mxu0 %v3473
        %4255 = vmatpush1.msra.mxu0 %v3472
        %4256 = vmatprep.subr.mxu0 %v3461
        %4257 = vmatpush1.msra.mxu0 %v3460
        %4258 = vmatprep.subr.mxu0 %v3449
        %4259 = vmatpush1.msra.mxu0 %v3448
        %4260 = vmatprep.subr.mxu0 %v3821
        %4261 = vmatpush2.msra.mxu0 %v3820
        %4262 = vmatprep.subr.mxu0 %v3809
        %4263 = vmatpush2.msra.mxu0 %v3808
        %4264 = vmatprep.subr.mxu0 %v3797
        %4265 = vmatpush2.msra.mxu0 %v3796
        %4266 = vmatprep.subr.mxu0 %v3785
        %4267 = vmatpush2.msra.mxu0 %v3784
        %4268 = vmatprep.subr.mxu0 %v3773
        %4269 = vmatpush2.msra.mxu0 %v3772
        %4270 = vmatprep.subr.mxu0 %v3761
        %4271 = vmatpush2.msra.mxu0 %v3760
        %4272 = vmatprep.subr.mxu0 %v3749
        %4273 = vmatpush2.msra.mxu0 %v3748
        %4274 = vmatprep.subr.mxu0 %v3737
        %4275 = vmatpush2.msra.mxu0 %v3736
        %4276 = vmatprep.subr.mxu0 %v3725
        %4277 = vmatpush2.msra.mxu0 %v3724
        %4278 = vmatprep.subr.mxu0 %v3713
        %4279 = vmatpush2.msra.mxu0 %v3712
        %4280 = vmatprep.subr.mxu0 %v3701
        %4281 = vmatpush2.msra.mxu0 %v3700
        %4282 = vmatprep.subr.mxu0 %v3689
        %4283 = vmatpush2.msra.mxu0 %v3688
        %4284 = vmatprep.subr.mxu0 %v3677
        %4285 = vmatpush2.msra.mxu0 %v3676
        %4286 = vmatprep.subr.mxu0 %v3665
        %4287 = vmatpush2.msra.mxu0 %v3664
        %4288 = vmatprep.subr.mxu0 %v3653
        %4289 = vmatpush2.msra.mxu0 %v3652
        %4290 = vmatprep.subr.mxu0 %v3641
        %4291 = vmatpush2.msra.mxu0 %v3640
        %4292 = vmatprep.mubr.f32.mxu0 %v3444
        %4293 = vmatmul.mubr.f32.gmra.mxu0 %v3443
        %v4294 = vpop.f32.mrf.mxu0
        %v4295 = vadd.f32 %v4037, %v4294
        %v4296 = vpop.f32.mrf.mxu0
        %v4297 = vadd.f32 %v4041, %v4296
        %4298 = vdwg.mxu0
        %4299 = vmatprep.subr.mxu0 %v4013
        %4300 = vmatpush1.msra.mxu0 %v4012
        %4301 = vmatprep.subr.mxu0 %v4001
        %4302 = vmatpush1.msra.mxu0 %v4000
        %4303 = vmatprep.subr.mxu0 %v3989
        %4304 = vmatpush1.msra.mxu0 %v3988
        %4305 = vmatprep.subr.mxu0 %v3977
        %4306 = vmatpush1.msra.mxu0 %v3976
        %4307 = vmatprep.subr.mxu0 %v3965
        %4308 = vmatpush1.msra.mxu0 %v3964
        %4309 = vmatprep.subr.mxu0 %v3953
        %4310 = vmatpush1.msra.mxu0 %v3952
        %4311 = vmatprep.subr.mxu0 %v3941
        %4312 = vmatpush1.msra.mxu0 %v3940
        %4313 = vmatprep.subr.mxu0 %v3929
        %4314 = vmatpush1.msra.mxu0 %v3928
        %4315 = vmatprep.subr.mxu0 %v3917
        %4316 = vmatpush1.msra.mxu0 %v3916
        %4317 = vmatprep.subr.mxu0 %v3905
        %4318 = vmatpush1.msra.mxu0 %v3904
        %4319 = vmatprep.subr.mxu0 %v3893
        %4320 = vmatpush1.msra.mxu0 %v3892
        %4321 = vmatprep.subr.mxu0 %v3881
        %4322 = vmatpush1.msra.mxu0 %v3880
        %4323 = vmatprep.subr.mxu0 %v3869
        %4324 = vmatpush1.msra.mxu0 %v3868
        %4325 = vmatprep.subr.mxu0 %v3857
        %4326 = vmatpush1.msra.mxu0 %v3856
        %4327 = vmatprep.subr.mxu0 %v3845
        %4328 = vmatpush1.msra.mxu0 %v3844
        %4329 = vmatprep.subr.mxu0 %v3833
        %4330 = vmatpush1.msra.mxu0 %v3832
        %4331 = vmatprep.subr.mxu0 0.0
        %4332 = vmatpush2.msra.mxu0 0.0
        %4333 = vmatprep.subr.mxu0 0.0
        %4334 = vmatpush2.msra.mxu0 0.0
        %4335 = vmatprep.subr.mxu0 0.0
        %4336 = vmatpush2.msra.mxu0 0.0
        %4337 = vmatprep.subr.mxu0 0.0
        %4338 = vmatpush2.msra.mxu0 0.0
        %4339 = vmatprep.subr.mxu0 0.0
        %4340 = vmatpush2.msra.mxu0 0.0
        %4341 = vmatprep.subr.mxu0 0.0
        %4342 = vmatpush2.msra.mxu0 0.0
        %4343 = vmatprep.subr.mxu0 0.0
        %4344 = vmatpush2.msra.mxu0 0.0
        %4345 = vmatprep.subr.mxu0 0.0
        %4346 = vmatpush2.msra.mxu0 0.0
        %4347 = vmatprep.subr.mxu0 0.0
        %4348 = vmatpush2.msra.mxu0 0.0
        %4349 = vmatprep.subr.mxu0 0.0
        %4350 = vmatpush2.msra.mxu0 0.0
        %4351 = vmatprep.subr.mxu0 0.0
        %4352 = vmatpush2.msra.mxu0 0.0
        %4353 = vmatprep.subr.mxu0 0.0
        %4354 = vmatpush2.msra.mxu0 0.0
        %4355 = vmatprep.subr.mxu0 0.0
        %4356 = vmatpush2.msra.mxu0 0.0
        %4357 = vmatprep.subr.mxu0 0.0
        %4358 = vmatpush2.msra.mxu0 0.0
        %4359 = vmatprep.subr.mxu0 0.0
        %4360 = vmatpush2.msra.mxu0 0.0
        %4361 = vmatprep.subr.mxu0 0.0
        %4362 = vmatpush2.msra.mxu0 0.0
        %4363 = vmatprep.mubr.f32.mxu0 0.0
        %4364 = vmatmul.mubr.f32.gmra.mxu0 %v3445
        %v4365 = vpop.f32.mrf.mxu0
        %v4366 = vadd.f32 %v4295, %v4365
        %v4367 = vpop.f32.mrf.mxu0
        %v4368 = vadd.f32 %v4297, %v4367
        %4369 = vdwg.mxu0
        %4370 = vmatprep.subr.mxu0 %v3631
        %4371 = vmatpush1.msra.mxu0 %v3630
        %4372 = vmatprep.subr.mxu0 %v3619
        %4373 = vmatpush1.msra.mxu0 %v3618
        %4374 = vmatprep.subr.mxu0 %v3607
        %4375 = vmatpush1.msra.mxu0 %v3606
        %4376 = vmatprep.subr.mxu0 %v3595
        %4377 = vmatpush1.msra.mxu0 %v3594
        %4378 = vmatprep.subr.mxu0 %v3583
        %4379 = vmatpush1.msra.mxu0 %v3582
        %4380 = vmatprep.subr.mxu0 %v3571
        %4381 = vmatpush1.msra.mxu0 %v3570
        %4382 = vmatprep.subr.mxu0 %v3559
        %4383 = vmatpush1.msra.mxu0 %v3558
        %4384 = vmatprep.subr.mxu0 %v3547
        %4385 = vmatpush1.msra.mxu0 %v3546
        %4386 = vmatprep.subr.mxu0 %v3535
        %4387 = vmatpush1.msra.mxu0 %v3534
        %4388 = vmatprep.subr.mxu0 %v3523
        %4389 = vmatpush1.msra.mxu0 %v3522
        %4390 = vmatprep.subr.mxu0 %v3511
        %4391 = vmatpush1.msra.mxu0 %v3510
        %4392 = vmatprep.subr.mxu0 %v3499
        %4393 = vmatpush1.msra.mxu0 %v3498
        %4394 = vmatprep.subr.mxu0 %v3487
        %4395 = vmatpush1.msra.mxu0 %v3486
        %4396 = vmatprep.subr.mxu0 %v3475
        %4397 = vmatpush1.msra.mxu0 %v3474
        %4398 = vmatprep.subr.mxu0 %v3463
        %4399 = vmatpush1.msra.mxu0 %v3462
        %4400 = vmatprep.subr.mxu0 %v3451
        %4401 = vmatpush1.msra.mxu0 %v3450
        %4402 = vmatprep.subr.mxu0 %v3823
        %4403 = vmatpush2.msra.mxu0 %v3822
        %4404 = vmatprep.subr.mxu0 %v3811
        %4405 = vmatpush2.msra.mxu0 %v3810
        %4406 = vmatprep.subr.mxu0 %v3799
        %4407 = vmatpush2.msra.mxu0 %v3798
        %4408 = vmatprep.subr.mxu0 %v3787
        %4409 = vmatpush2.msra.mxu0 %v3786
        %4410 = vmatprep.subr.mxu0 %v3775
        %4411 = vmatpush2.msra.mxu0 %v3774
        %4412 = vmatprep.subr.mxu0 %v3763
        %4413 = vmatpush2.msra.mxu0 %v3762
        %4414 = vmatprep.subr.mxu0 %v3751
        %4415 = vmatpush2.msra.mxu0 %v3750
        %4416 = vmatprep.subr.mxu0 %v3739
        %4417 = vmatpush2.msra.mxu0 %v3738
        %4418 = vmatprep.subr.mxu0 %v3727
        %4419 = vmatpush2.msra.mxu0 %v3726
        %4420 = vmatprep.subr.mxu0 %v3715
        %4421 = vmatpush2.msra.mxu0 %v3714
        %4422 = vmatprep.subr.mxu0 %v3703
        %4423 = vmatpush2.msra.mxu0 %v3702
        %4424 = vmatprep.subr.mxu0 %v3691
        %4425 = vmatpush2.msra.mxu0 %v3690
        %4426 = vmatprep.subr.mxu0 %v3679
        %4427 = vmatpush2.msra.mxu0 %v3678
        %4428 = vmatprep.subr.mxu0 %v3667
        %4429 = vmatpush2.msra.mxu0 %v3666
        %4430 = vmatprep.subr.mxu0 %v3655
        %4431 = vmatpush2.msra.mxu0 %v3654
        %4432 = vmatprep.subr.mxu0 %v3643
        %4433 = vmatpush2.msra.mxu0 %v3642
        %4434 = vmatprep.mubr.f32.mxu0 %v3444
        %4435 = vmatmul.mubr.f32.gmra.mxu0 %v3443
        %v4436 = vpop.f32.mrf.mxu0
        %v4437 = vadd.f32 %v4045, %v4436
        %v4438 = vpop.f32.mrf.mxu0
        %v4439 = vadd.f32 %v4049, %v4438
        %4440 = vdwg.mxu0
        %4441 = vmatprep.subr.mxu0 %v4015
        %4442 = vmatpush1.msra.mxu0 %v4014
        %4443 = vmatprep.subr.mxu0 %v4003
        %4444 = vmatpush1.msra.mxu0 %v4002
        %4445 = vmatprep.subr.mxu0 %v3991
        %4446 = vmatpush1.msra.mxu0 %v3990
        %4447 = vmatprep.subr.mxu0 %v3979
        %4448 = vmatpush1.msra.mxu0 %v3978
        %4449 = vmatprep.subr.mxu0 %v3967
        %4450 = vmatpush1.msra.mxu0 %v3966
        %4451 = vmatprep.subr.mxu0 %v3955
        %4452 = vmatpush1.msra.mxu0 %v3954
        %4453 = vmatprep.subr.mxu0 %v3943
        %4454 = vmatpush1.msra.mxu0 %v3942
        %4455 = vmatprep.subr.mxu0 %v3931
        %4456 = vmatpush1.msra.mxu0 %v3930
        %4457 = vmatprep.subr.mxu0 %v3919
        %4458 = vmatpush1.msra.mxu0 %v3918
        %4459 = vmatprep.subr.mxu0 %v3907
        %4460 = vmatpush1.msra.mxu0 %v3906
        %4461 = vmatprep.subr.mxu0 %v3895
        %4462 = vmatpush1.msra.mxu0 %v3894
        %4463 = vmatprep.subr.mxu0 %v3883
        %4464 = vmatpush1.msra.mxu0 %v3882
        %4465 = vmatprep.subr.mxu0 %v3871
        %4466 = vmatpush1.msra.mxu0 %v3870
        %4467 = vmatprep.subr.mxu0 %v3859
        %4468 = vmatpush1.msra.mxu0 %v3858
        %4469 = vmatprep.subr.mxu0 %v3847
        %4470 = vmatpush1.msra.mxu0 %v3846
        %4471 = vmatprep.subr.mxu0 %v3835
        %4472 = vmatpush1.msra.mxu0 %v3834
        %4473 = vmatprep.subr.mxu0 0.0
        %4474 = vmatpush2.msra.mxu0 0.0
        %4475 = vmatprep.subr.mxu0 0.0
        %4476 = vmatpush2.msra.mxu0 0.0
        %4477 = vmatprep.subr.mxu0 0.0
        %4478 = vmatpush2.msra.mxu0 0.0
        %4479 = vmatprep.subr.mxu0 0.0
        %4480 = vmatpush2.msra.mxu0 0.0
        %4481 = vmatprep.subr.mxu0 0.0
        %4482 = vmatpush2.msra.mxu0 0.0
        %4483 = vmatprep.subr.mxu0 0.0
        %4484 = vmatpush2.msra.mxu0 0.0
        %4485 = vmatprep.subr.mxu0 0.0
        %4486 = vmatpush2.msra.mxu0 0.0
        %4487 = vmatprep.subr.mxu0 0.0
        %4488 = vmatpush2.msra.mxu0 0.0
        %4489 = vmatprep.subr.mxu0 0.0
        %4490 = vmatpush2.msra.mxu0 0.0
        %4491 = vmatprep.subr.mxu0 0.0
        %4492 = vmatpush2.msra.mxu0 0.0
        %4493 = vmatprep.subr.mxu0 0.0
        %4494 = vmatpush2.msra.mxu0 0.0
        %4495 = vmatprep.subr.mxu0 0.0
        %4496 = vmatpush2.msra.mxu0 0.0
        %4497 = vmatprep.subr.mxu0 0.0
        %4498 = vmatpush2.msra.mxu0 0.0
        %4499 = vmatprep.subr.mxu0 0.0
        %4500 = vmatpush2.msra.mxu0 0.0
        %4501 = vmatprep.subr.mxu0 0.0
        %4502 = vmatpush2.msra.mxu0 0.0
        %4503 = vmatprep.subr.mxu0 0.0
        %4504 = vmatpush2.msra.mxu0 0.0
        %4505 = vmatprep.mubr.f32.mxu0 0.0
        %4506 = vmatmul.mubr.f32.gmra.mxu0 %v3445
        %v4507 = vpop.f32.mrf.mxu0
        %v4508 = vadd.f32 %v4437, %v4507
        %v4509 = vpop.f32.mrf.mxu0
        %v4510 = vadd.f32 %v4439, %v4509
        %4511 = vdwg.mxu0
        %4512 = vmatprep.subr.mxu0 %v3633
        %4513 = vmatpush1.msra.mxu0 %v3632
        %4514 = vmatprep.subr.mxu0 %v3621
        %4515 = vmatpush1.msra.mxu0 %v3620
        %4516 = vmatprep.subr.mxu0 %v3609
        %4517 = vmatpush1.msra.mxu0 %v3608
        %4518 = vmatprep.subr.mxu0 %v3597
        %4519 = vmatpush1.msra.mxu0 %v3596
        %4520 = vmatprep.subr.mxu0 %v3585
        %4521 = vmatpush1.msra.mxu0 %v3584
        %4522 = vmatprep.subr.mxu0 %v3573
        %4523 = vmatpush1.msra.mxu0 %v3572
        %4524 = vmatprep.subr.mxu0 %v3561
        %4525 = vmatpush1.msra.mxu0 %v3560
        %4526 = vmatprep.subr.mxu0 %v3549
        %4527 = vmatpush1.msra.mxu0 %v3548
        %4528 = vmatprep.subr.mxu0 %v3537
        %4529 = vmatpush1.msra.mxu0 %v3536
        %4530 = vmatprep.subr.mxu0 %v3525
        %4531 = vmatpush1.msra.mxu0 %v3524
        %4532 = vmatprep.subr.mxu0 %v3513
        %4533 = vmatpush1.msra.mxu0 %v3512
        %4534 = vmatprep.subr.mxu0 %v3501
        %4535 = vmatpush1.msra.mxu0 %v3500
        %4536 = vmatprep.subr.mxu0 %v3489
        %4537 = vmatpush1.msra.mxu0 %v3488
        %4538 = vmatprep.subr.mxu0 %v3477
        %4539 = vmatpush1.msra.mxu0 %v3476
        %4540 = vmatprep.subr.mxu0 %v3465
        %4541 = vmatpush1.msra.mxu0 %v3464
        %4542 = vmatprep.subr.mxu0 %v3453
        %4543 = vmatpush1.msra.mxu0 %v3452
        %4544 = vmatprep.subr.mxu0 %v3825
        %4545 = vmatpush2.msra.mxu0 %v3824
        %4546 = vmatprep.subr.mxu0 %v3813
        %4547 = vmatpush2.msra.mxu0 %v3812
        %4548 = vmatprep.subr.mxu0 %v3801
        %4549 = vmatpush2.msra.mxu0 %v3800
        %4550 = vmatprep.subr.mxu0 %v3789
        %4551 = vmatpush2.msra.mxu0 %v3788
        %4552 = vmatprep.subr.mxu0 %v3777
        %4553 = vmatpush2.msra.mxu0 %v3776
        %4554 = vmatprep.subr.mxu0 %v3765
        %4555 = vmatpush2.msra.mxu0 %v3764
        %4556 = vmatprep.subr.mxu0 %v3753
        %4557 = vmatpush2.msra.mxu0 %v3752
        %4558 = vmatprep.subr.mxu0 %v3741
        %4559 = vmatpush2.msra.mxu0 %v3740
        %4560 = vmatprep.subr.mxu0 %v3729
        %4561 = vmatpush2.msra.mxu0 %v3728
        %4562 = vmatprep.subr.mxu0 %v3717
        %4563 = vmatpush2.msra.mxu0 %v3716
        %4564 = vmatprep.subr.mxu0 %v3705
        %4565 = vmatpush2.msra.mxu0 %v3704
        %4566 = vmatprep.subr.mxu0 %v3693
        %4567 = vmatpush2.msra.mxu0 %v3692
        %4568 = vmatprep.subr.mxu0 %v3681
        %4569 = vmatpush2.msra.mxu0 %v3680
        %4570 = vmatprep.subr.mxu0 %v3669
        %4571 = vmatpush2.msra.mxu0 %v3668
        %4572 = vmatprep.subr.mxu0 %v3657
        %4573 = vmatpush2.msra.mxu0 %v3656
        %4574 = vmatprep.subr.mxu0 %v3645
        %4575 = vmatpush2.msra.mxu0 %v3644
        %4576 = vmatprep.mubr.f32.mxu0 %v3444
        %4577 = vmatmul.mubr.f32.gmra.mxu0 %v3443
        %v4578 = vpop.f32.mrf.mxu0
        %v4579 = vadd.f32 %v4053, %v4578
        %v4580 = vpop.f32.mrf.mxu0
        %v4581 = vadd.f32 %v4057, %v4580
        %4582 = vdwg.mxu0
        %4583 = vmatprep.subr.mxu0 %v4017
        %4584 = vmatpush1.msra.mxu0 %v4016
        %4585 = vmatprep.subr.mxu0 %v4005
        %4586 = vmatpush1.msra.mxu0 %v4004
        %4587 = vmatprep.subr.mxu0 %v3993
        %4588 = vmatpush1.msra.mxu0 %v3992
        %4589 = vmatprep.subr.mxu0 %v3981
        %4590 = vmatpush1.msra.mxu0 %v3980
        %4591 = vmatprep.subr.mxu0 %v3969
        %4592 = vmatpush1.msra.mxu0 %v3968
        %4593 = vmatprep.subr.mxu0 %v3957
        %4594 = vmatpush1.msra.mxu0 %v3956
        %4595 = vmatprep.subr.mxu0 %v3945
        %4596 = vmatpush1.msra.mxu0 %v3944
        %4597 = vmatprep.subr.mxu0 %v3933
        %4598 = vmatpush1.msra.mxu0 %v3932
        %4599 = vmatprep.subr.mxu0 %v3921
        %4600 = vmatpush1.msra.mxu0 %v3920
        %4601 = vmatprep.subr.mxu0 %v3909
        %4602 = vmatpush1.msra.mxu0 %v3908
        %4603 = vmatprep.subr.mxu0 %v3897
        %4604 = vmatpush1.msra.mxu0 %v3896
        %4605 = vmatprep.subr.mxu0 %v3885
        %4606 = vmatpush1.msra.mxu0 %v3884
        %4607 = vmatprep.subr.mxu0 %v3873
        %4608 = vmatpush1.msra.mxu0 %v3872
        %4609 = vmatprep.subr.mxu0 %v3861
        %4610 = vmatpush1.msra.mxu0 %v3860
        %4611 = vmatprep.subr.mxu0 %v3849
        %4612 = vmatpush1.msra.mxu0 %v3848
        %4613 = vmatprep.subr.mxu0 %v3837
        %4614 = vmatpush1.msra.mxu0 %v3836
        %4615 = vmatprep.subr.mxu0 0.0
        %4616 = vmatpush2.msra.mxu0 0.0
        %4617 = vmatprep.subr.mxu0 0.0
        %4618 = vmatpush2.msra.mxu0 0.0
        %4619 = vmatprep.subr.mxu0 0.0
        %4620 = vmatpush2.msra.mxu0 0.0
        %4621 = vmatprep.subr.mxu0 0.0
        %4622 = vmatpush2.msra.mxu0 0.0
        %4623 = vmatprep.subr.mxu0 0.0
        %4624 = vmatpush2.msra.mxu0 0.0
        %4625 = vmatprep.subr.mxu0 0.0
        %4626 = vmatpush2.msra.mxu0 0.0
        %4627 = vmatprep.subr.mxu0 0.0
        %4628 = vmatpush2.msra.mxu0 0.0
        %4629 = vmatprep.subr.mxu0 0.0
        %4630 = vmatpush2.msra.mxu0 0.0
        %4631 = vmatprep.subr.mxu0 0.0
        %4632 = vmatpush2.msra.mxu0 0.0
        %4633 = vmatprep.subr.mxu0 0.0
        %4634 = vmatpush2.msra.mxu0 0.0
        %4635 = vmatprep.subr.mxu0 0.0
        %4636 = vmatpush2.msra.mxu0 0.0
        %4637 = vmatprep.subr.mxu0 0.0
        %4638 = vmatpush2.msra.mxu0 0.0
        %4639 = vmatprep.subr.mxu0 0.0
        %4640 = vmatpush2.msra.mxu0 0.0
        %4641 = vmatprep.subr.mxu0 0.0
        %4642 = vmatpush2.msra.mxu0 0.0
        %4643 = vmatprep.subr.mxu0 0.0
        %4644 = vmatpush2.msra.mxu0 0.0
        %4645 = vmatprep.subr.mxu0 0.0
        %4646 = vmatpush2.msra.mxu0 0.0
        %4647 = vmatprep.mubr.f32.mxu0 0.0
        %4648 = vmatmul.mubr.f32.gmra.mxu0 %v3445
        %v4649 = vpop.f32.mrf.mxu0
        %v4650 = vadd.f32 %v4579, %v4649
        %v4651 = vpop.f32.mrf.mxu0
        %v4652 = vadd.f32 %v4581, %v4651
        %4653 = vdwg.mxu0
        %4654 = vmatprep.subr.mxu0 %v3635
        %4655 = vmatpush1.msra.mxu0 %v3634
        %4656 = vmatprep.subr.mxu0 %v3623
        %4657 = vmatpush1.msra.mxu0 %v3622
        %4658 = vmatprep.subr.mxu0 %v3611
        %4659 = vmatpush1.msra.mxu0 %v3610
        %4660 = vmatprep.subr.mxu0 %v3599
        %4661 = vmatpush1.msra.mxu0 %v3598
        %4662 = vmatprep.subr.mxu0 %v3587
        %4663 = vmatpush1.msra.mxu0 %v3586
        %4664 = vmatprep.subr.mxu0 %v3575
        %4665 = vmatpush1.msra.mxu0 %v3574
        %4666 = vmatprep.subr.mxu0 %v3563
        %4667 = vmatpush1.msra.mxu0 %v3562
        %4668 = vmatprep.subr.mxu0 %v3551
        %4669 = vmatpush1.msra.mxu0 %v3550
        %4670 = vmatprep.subr.mxu0 %v3539
        %4671 = vmatpush1.msra.mxu0 %v3538
        %4672 = vmatprep.subr.mxu0 %v3527
        %4673 = vmatpush1.msra.mxu0 %v3526
        %4674 = vmatprep.subr.mxu0 %v3515
        %4675 = vmatpush1.msra.mxu0 %v3514
        %4676 = vmatprep.subr.mxu0 %v3503
        %4677 = vmatpush1.msra.mxu0 %v3502
        %4678 = vmatprep.subr.mxu0 %v3491
        %4679 = vmatpush1.msra.mxu0 %v3490
        %4680 = vmatprep.subr.mxu0 %v3479
        %4681 = vmatpush1.msra.mxu0 %v3478
        %4682 = vmatprep.subr.mxu0 %v3467
        %4683 = vmatpush1.msra.mxu0 %v3466
        %4684 = vmatprep.subr.mxu0 %v3455
        %4685 = vmatpush1.msra.mxu0 %v3454
        %4686 = vmatprep.subr.mxu0 %v3827
        %4687 = vmatpush2.msra.mxu0 %v3826
        %4688 = vmatprep.subr.mxu0 %v3815
        %4689 = vmatpush2.msra.mxu0 %v3814
        %4690 = vmatprep.subr.mxu0 %v3803
        %4691 = vmatpush2.msra.mxu0 %v3802
        %4692 = vmatprep.subr.mxu0 %v3791
        %4693 = vmatpush2.msra.mxu0 %v3790
        %4694 = vmatprep.subr.mxu0 %v3779
        %4695 = vmatpush2.msra.mxu0 %v3778
        %4696 = vmatprep.subr.mxu0 %v3767
        %4697 = vmatpush2.msra.mxu0 %v3766
        %4698 = vmatprep.subr.mxu0 %v3755
        %4699 = vmatpush2.msra.mxu0 %v3754
        %4700 = vmatprep.subr.mxu0 %v3743
        %4701 = vmatpush2.msra.mxu0 %v3742
        %4702 = vmatprep.subr.mxu0 %v3731
        %4703 = vmatpush2.msra.mxu0 %v3730
        %4704 = vmatprep.subr.mxu0 %v3719
        %4705 = vmatpush2.msra.mxu0 %v3718
        %4706 = vmatprep.subr.mxu0 %v3707
        %4707 = vmatpush2.msra.mxu0 %v3706
        %4708 = vmatprep.subr.mxu0 %v3695
        %4709 = vmatpush2.msra.mxu0 %v3694
        %4710 = vmatprep.subr.mxu0 %v3683
        %4711 = vmatpush2.msra.mxu0 %v3682
        %4712 = vmatprep.subr.mxu0 %v3671
        %4713 = vmatpush2.msra.mxu0 %v3670
        %4714 = vmatprep.subr.mxu0 %v3659
        %4715 = vmatpush2.msra.mxu0 %v3658
        %4716 = vmatprep.subr.mxu0 %v3647
        %4717 = vmatpush2.msra.mxu0 %v3646
        %4718 = vmatprep.mubr.f32.mxu0 %v3444
        %4719 = vmatmul.mubr.f32.gmra.mxu0 %v3443
        %v4720 = vpop.f32.mrf.mxu0
        %v4721 = vadd.f32 %v4061, %v4720
        %v4722 = vpop.f32.mrf.mxu0
        %v4723 = vadd.f32 %v4065, %v4722
        %4724 = vdwg.mxu0
        %4725 = vmatprep.subr.mxu0 %v4019
        %4726 = vmatpush1.msra.mxu0 %v4018
        %4727 = vmatprep.subr.mxu0 %v4007
        %4728 = vmatpush1.msra.mxu0 %v4006
        %4729 = vmatprep.subr.mxu0 %v3995
        %4730 = vmatpush1.msra.mxu0 %v3994
        %4731 = vmatprep.subr.mxu0 %v3983
        %4732 = vmatpush1.msra.mxu0 %v3982
        %4733 = vmatprep.subr.mxu0 %v3971
        %4734 = vmatpush1.msra.mxu0 %v3970
        %4735 = vmatprep.subr.mxu0 %v3959
        %4736 = vmatpush1.msra.mxu0 %v3958
        %4737 = vmatprep.subr.mxu0 %v3947
        %4738 = vmatpush1.msra.mxu0 %v3946
        %4739 = vmatprep.subr.mxu0 %v3935
        %4740 = vmatpush1.msra.mxu0 %v3934
        %4741 = vmatprep.subr.mxu0 %v3923
        %4742 = vmatpush1.msra.mxu0 %v3922
        %4743 = vmatprep.subr.mxu0 %v3911
        %4744 = vmatpush1.msra.mxu0 %v3910
        %4745 = vmatprep.subr.mxu0 %v3899
        %4746 = vmatpush1.msra.mxu0 %v3898
        %4747 = vmatprep.subr.mxu0 %v3887
        %4748 = vmatpush1.msra.mxu0 %v3886
        %4749 = vmatprep.subr.mxu0 %v3875
        %4750 = vmatpush1.msra.mxu0 %v3874
        %4751 = vmatprep.subr.mxu0 %v3863
        %4752 = vmatpush1.msra.mxu0 %v3862
        %4753 = vmatprep.subr.mxu0 %v3851
        %4754 = vmatpush1.msra.mxu0 %v3850
        %4755 = vmatprep.subr.mxu0 %v3839
        %4756 = vmatpush1.msra.mxu0 %v3838
        %4757 = vmatprep.subr.mxu0 0.0
        %4758 = vmatpush2.msra.mxu0 0.0
        %4759 = vmatprep.subr.mxu0 0.0
        %4760 = vmatpush2.msra.mxu0 0.0
        %4761 = vmatprep.subr.mxu0 0.0
        %4762 = vmatpush2.msra.mxu0 0.0
        %4763 = vmatprep.subr.mxu0 0.0
        %4764 = vmatpush2.msra.mxu0 0.0
        %4765 = vmatprep.subr.mxu0 0.0
        %4766 = vmatpush2.msra.mxu0 0.0
        %4767 = vmatprep.subr.mxu0 0.0
        %4768 = vmatpush2.msra.mxu0 0.0
        %4769 = vmatprep.subr.mxu0 0.0
        %4770 = vmatpush2.msra.mxu0 0.0
        %4771 = vmatprep.subr.mxu0 0.0
        %4772 = vmatpush2.msra.mxu0 0.0
        %4773 = vmatprep.subr.mxu0 0.0
        %4774 = vmatpush2.msra.mxu0 0.0
        %4775 = vmatprep.subr.mxu0 0.0
        %4776 = vmatpush2.msra.mxu0 0.0
        %4777 = vmatprep.subr.mxu0 0.0
        %4778 = vmatpush2.msra.mxu0 0.0
        %4779 = vmatprep.subr.mxu0 0.0
        %4780 = vmatpush2.msra.mxu0 0.0
        %4781 = vmatprep.subr.mxu0 0.0
        %4782 = vmatpush2.msra.mxu0 0.0
        %4783 = vmatprep.subr.mxu0 0.0
        %4784 = vmatpush2.msra.mxu0 0.0
        %4785 = vmatprep.subr.mxu0 0.0
        %4786 = vmatpush2.msra.mxu0 0.0
        %4787 = vmatprep.subr.mxu0 0.0
        %4788 = vmatpush2.msra.mxu0 0.0
        %4789 = vmatprep.mubr.f32.mxu0 0.0
        %4790 = vmatmul.mubr.f32.gmra.mxu0 %v3445
        %v4791 = vpop.f32.mrf.mxu0
        %v4792 = vadd.f32 %v4721, %v4791
        %v4793 = vpop.f32.mrf.mxu0
        %v4794 = vadd.f32 %v4723, %v4793
        %4795 = vdwg.mxu0
        %4796 = vmatprep.subr.mxu0 %v3637
        %4797 = vmatpush1.msra.mxu0 %v3636
        %4798 = vmatprep.subr.mxu0 %v3625
        %4799 = vmatpush1.msra.mxu0 %v3624
        %4800 = vmatprep.subr.mxu0 %v3613
        %4801 = vmatpush1.msra.mxu0 %v3612
        %4802 = vmatprep.subr.mxu0 %v3601
        %4803 = vmatpush1.msra.mxu0 %v3600
        %4804 = vmatprep.subr.mxu0 %v3589
        %4805 = vmatpush1.msra.mxu0 %v3588
        %4806 = vmatprep.subr.mxu0 %v3577
        %4807 = vmatpush1.msra.mxu0 %v3576
        %4808 = vmatprep.subr.mxu0 %v3565
        %4809 = vmatpush1.msra.mxu0 %v3564
        %4810 = vmatprep.subr.mxu0 %v3553
        %4811 = vmatpush1.msra.mxu0 %v3552
        %4812 = vmatprep.subr.mxu0 %v3541
        %4813 = vmatpush1.msra.mxu0 %v3540
        %4814 = vmatprep.subr.mxu0 %v3529
        %4815 = vmatpush1.msra.mxu0 %v3528
        %4816 = vmatprep.subr.mxu0 %v3517
        %4817 = vmatpush1.msra.mxu0 %v3516
        %4818 = vmatprep.subr.mxu0 %v3505
        %4819 = vmatpush1.msra.mxu0 %v3504
        %4820 = vmatprep.subr.mxu0 %v3493
        %4821 = vmatpush1.msra.mxu0 %v3492
        %4822 = vmatprep.subr.mxu0 %v3481
        %4823 = vmatpush1.msra.mxu0 %v3480
        %4824 = vmatprep.subr.mxu0 %v3469
        %4825 = vmatpush1.msra.mxu0 %v3468
        %4826 = vmatprep.subr.mxu0 %v3457
        %4827 = vmatpush1.msra.mxu0 %v3456
        %4828 = vmatprep.subr.mxu0 %v3829
        %4829 = vmatpush2.msra.mxu0 %v3828
        %4830 = vmatprep.subr.mxu0 %v3817
        %4831 = vmatpush2.msra.mxu0 %v3816
        %4832 = vmatprep.subr.mxu0 %v3805
        %4833 = vmatpush2.msra.mxu0 %v3804
        %4834 = vmatprep.subr.mxu0 %v3793
        %4835 = vmatpush2.msra.mxu0 %v3792
        %4836 = vmatprep.subr.mxu0 %v3781
        %4837 = vmatpush2.msra.mxu0 %v3780
        %4838 = vmatprep.subr.mxu0 %v3769
        %4839 = vmatpush2.msra.mxu0 %v3768
        %4840 = vmatprep.subr.mxu0 %v3757
        %4841 = vmatpush2.msra.mxu0 %v3756
        %4842 = vmatprep.subr.mxu0 %v3745
        %4843 = vmatpush2.msra.mxu0 %v3744
        %4844 = vmatprep.subr.mxu0 %v3733
        %4845 = vmatpush2.msra.mxu0 %v3732
        %4846 = vmatprep.subr.mxu0 %v3721
        %4847 = vmatpush2.msra.mxu0 %v3720
        %4848 = vmatprep.subr.mxu0 %v3709
        %4849 = vmatpush2.msra.mxu0 %v3708
        %4850 = vmatprep.subr.mxu0 %v3697
        %4851 = vmatpush2.msra.mxu0 %v3696
        %4852 = vmatprep.subr.mxu0 %v3685
        %4853 = vmatpush2.msra.mxu0 %v3684
        %4854 = vmatprep.subr.mxu0 %v3673
        %4855 = vmatpush2.msra.mxu0 %v3672
        %4856 = vmatprep.subr.mxu0 %v3661
        %4857 = vmatpush2.msra.mxu0 %v3660
        %4858 = vmatprep.subr.mxu0 %v3649
        %4859 = vmatpush2.msra.mxu0 %v3648
        %4860 = vmatprep.mubr.f32.mxu0 %v3444
        %4861 = vmatmul.mubr.f32.gmra.mxu0 %v3443
        %v4862 = vpop.f32.mrf.mxu0
        %v4863 = vadd.f32 %v4069, %v4862
        %v4864 = vpop.f32.mrf.mxu0
        %v4865 = vadd.f32 %v4073, %v4864
        %4866 = vdwg.mxu0
        %4867 = vmatprep.subr.mxu0 %v4021
        %4868 = vmatpush1.msra.mxu0 %v4020
        %4869 = vmatprep.subr.mxu0 %v4009
        %4870 = vmatpush1.msra.mxu0 %v4008
        %4871 = vmatprep.subr.mxu0 %v3997
        %4872 = vmatpush1.msra.mxu0 %v3996
        %4873 = vmatprep.subr.mxu0 %v3985
        %4874 = vmatpush1.msra.mxu0 %v3984
        %4875 = vmatprep.subr.mxu0 %v3973
        %4876 = vmatpush1.msra.mxu0 %v3972
        %4877 = vmatprep.subr.mxu0 %v3961
        %4878 = vmatpush1.msra.mxu0 %v3960
        %4879 = vmatprep.subr.mxu0 %v3949
        %4880 = vmatpush1.msra.mxu0 %v3948
        %4881 = vmatprep.subr.mxu0 %v3937
        %4882 = vmatpush1.msra.mxu0 %v3936
        %4883 = vmatprep.subr.mxu0 %v3925
        %4884 = vmatpush1.msra.mxu0 %v3924
        %4885 = vmatprep.subr.mxu0 %v3913
        %4886 = vmatpush1.msra.mxu0 %v3912
        %4887 = vmatprep.subr.mxu0 %v3901
        %4888 = vmatpush1.msra.mxu0 %v3900
        %4889 = vmatprep.subr.mxu0 %v3889
        %4890 = vmatpush1.msra.mxu0 %v3888
        %4891 = vmatprep.subr.mxu0 %v3877
        %4892 = vmatpush1.msra.mxu0 %v3876
        %4893 = vmatprep.subr.mxu0 %v3865
        %4894 = vmatpush1.msra.mxu0 %v3864
        %4895 = vmatprep.subr.mxu0 %v3853
        %4896 = vmatpush1.msra.mxu0 %v3852
        %4897 = vmatprep.subr.mxu0 %v3841
        %4898 = vmatpush1.msra.mxu0 %v3840
        %4899 = vmatprep.subr.mxu0 0.0
        %4900 = vmatpush2.msra.mxu0 0.0
        %4901 = vmatprep.subr.mxu0 0.0
        %4902 = vmatpush2.msra.mxu0 0.0
        %4903 = vmatprep.subr.mxu0 0.0
        %4904 = vmatpush2.msra.mxu0 0.0
        %4905 = vmatprep.subr.mxu0 0.0
        %4906 = vmatpush2.msra.mxu0 0.0
        %4907 = vmatprep.subr.mxu0 0.0
        %4908 = vmatpush2.msra.mxu0 0.0
        %4909 = vmatprep.subr.mxu0 0.0
        %4910 = vmatpush2.msra.mxu0 0.0
        %4911 = vmatprep.subr.mxu0 0.0
        %4912 = vmatpush2.msra.mxu0 0.0
        %4913 = vmatprep.subr.mxu0 0.0
        %4914 = vmatpush2.msra.mxu0 0.0
        %4915 = vmatprep.subr.mxu0 0.0
        %4916 = vmatpush2.msra.mxu0 0.0
        %4917 = vmatprep.subr.mxu0 0.0
        %4918 = vmatpush2.msra.mxu0 0.0
        %4919 = vmatprep.subr.mxu0 0.0
        %4920 = vmatpush2.msra.mxu0 0.0
        %4921 = vmatprep.subr.mxu0 0.0
        %4922 = vmatpush2.msra.mxu0 0.0
        %4923 = vmatprep.subr.mxu0 0.0
        %4924 = vmatpush2.msra.mxu0 0.0
        %4925 = vmatprep.subr.mxu0 0.0
        %4926 = vmatpush2.msra.mxu0 0.0
        %4927 = vmatprep.subr.mxu0 0.0
        %4928 = vmatpush2.msra.mxu0 0.0
        %4929 = vmatprep.subr.mxu0 0.0
        %4930 = vmatpush2.msra.mxu0 0.0
        %4931 = vmatprep.mubr.f32.mxu0 0.0
        %4932 = vmatmul.mubr.f32.gmra.mxu0 %v3445
        %v4933 = vpop.f32.mrf.mxu0
        %v4934 = vadd.f32 %v4863, %v4933
        %v4935 = vpop.f32.mrf.mxu0
        %v4936 = vadd.f32 %v4865, %v4935
        %4937 = vdwg.mxu0
        %v4938 = vmul.f32 %v4224, 0.5
        %v4939 = vmul.f32 %v4226, 0.5
        %v4940 = vmul.f32 %v4366, 0.5
        %v4941 = vmul.f32 %v4368, 0.5
        %v4942 = vmul.f32 %v4508, 0.5
        %v4943 = vmul.f32 %v4510, 0.5
        %v4944 = vmul.f32 %v4650, 0.5
        %v4945 = vmul.f32 %v4652, 0.5
        %v4946 = vmul.f32 %v4792, 0.5
        %v4947 = vmul.f32 %v4794, 0.5
        %v4948 = vmul.f32 %v4934, 0.5
        %v4949 = vmul.f32 %v4936, 0.5
        %v4950 = vmul.f32 %v4224, 0.70710677
        %v4951 = vmul.f32 %v4226, 0.70710677
        %v4952 = vmul.f32 %v4366, 0.70710677
        %v4953 = vmul.f32 %v4368, 0.70710677
        %v4954 = vmul.f32 %v4508, 0.70710677
        %v4955 = vmul.f32 %v4510, 0.70710677
        %v4956 = vmul.f32 %v4650, 0.70710677
        %v4957 = vmul.f32 %v4652, 0.70710677
        %v4958 = vmul.f32 %v4792, 0.70710677
        %v4959 = vmul.f32 %v4794, 0.70710677
        %v4960 = vmul.f32 %v4934, 0.70710677
        %v4961 = vmul.f32 %v4936, 0.70710677
        %vm4962 = vcmp.lt.f32.partialorder %v4950, 0.0
        %vm4963 = vcmp.lt.f32.partialorder %v4951, 0.0
        %vm4964 = vcmp.lt.f32.partialorder %v4952, 0.0
        %vm4965 = vcmp.lt.f32.partialorder %v4953, 0.0
        %vm4966 = vcmp.lt.f32.partialorder %v4954, 0.0
        %vm4967 = vcmp.lt.f32.partialorder %v4955, 0.0
        %vm4968 = vcmp.lt.f32.partialorder %v4956, 0.0
        %vm4969 = vcmp.lt.f32.partialorder %v4957, 0.0
        %vm4970 = vcmp.lt.f32.partialorder %v4958, 0.0
        %vm4971 = vcmp.lt.f32.partialorder %v4959, 0.0
        %vm4972 = vcmp.lt.f32.partialorder %v4960, 0.0
        %vm4973 = vcmp.lt.f32.partialorder %v4961, 0.0
        %v4974 = vsel %vm4962, -1.0, 1.0
        %v4975 = vsel %vm4963, -1.0, 1.0
        %v4976 = vsel %vm4964, -1.0, 1.0
        %v4977 = vsel %vm4965, -1.0, 1.0
        %v4978 = vsel %vm4966, -1.0, 1.0
        %v4979 = vsel %vm4967, -1.0, 1.0
        %v4980 = vsel %vm4968, -1.0, 1.0
        %v4981 = vsel %vm4969, -1.0, 1.0
        %v4982 = vsel %vm4970, -1.0, 1.0
        %v4983 = vsel %vm4971, -1.0, 1.0
        %v4984 = vsel %vm4972, -1.0, 1.0
        %v4985 = vsel %vm4973, -1.0, 1.0
        %v4986 = vand.u32 2147483647, %v4950
        %v4987 = vand.u32 2147483647, %v4951
        %v4988 = vand.u32 2147483647, %v4952
        %v4989 = vand.u32 2147483647, %v4953
        %v4990 = vand.u32 2147483647, %v4954
        %v4991 = vand.u32 2147483647, %v4955
        %v4992 = vand.u32 2147483647, %v4956
        %v4993 = vand.u32 2147483647, %v4957
        %v4994 = vand.u32 2147483647, %v4958
        %v4995 = vand.u32 2147483647, %v4959
        %v4996 = vand.u32 2147483647, %v4960
        %v4997 = vand.u32 2147483647, %v4961
        %v4998 = vmul.f32 %v4986, 0.3275911
        %v4999 = vmul.f32 %v4987, 0.3275911
        %v5000 = vmul.f32 %v4988, 0.3275911
        %v5001 = vmul.f32 %v4989, 0.3275911
        %v5002 = vmul.f32 %v4990, 0.3275911
        %v5003 = vmul.f32 %v4991, 0.3275911
        %v5004 = vmul.f32 %v4992, 0.3275911
        %v5005 = vmul.f32 %v4993, 0.3275911
        %v5006 = vmul.f32 %v4994, 0.3275911
        %v5007 = vmul.f32 %v4995, 0.3275911
        %v5008 = vmul.f32 %v4996, 0.3275911
        %v5009 = vmul.f32 %v4997, 0.3275911
        %v5010 = vadd.f32 %v4998, 1.0
        %v5011 = vadd.f32 %v4999, 1.0
        %v5012 = vadd.f32 %v5000, 1.0
        %v5013 = vadd.f32 %v5001, 1.0
        %v5014 = vadd.f32 %v5002, 1.0
        %v5015 = vadd.f32 %v5003, 1.0
        %v5016 = vadd.f32 %v5004, 1.0
        %v5017 = vadd.f32 %v5005, 1.0
        %v5018 = vadd.f32 %v5006, 1.0
        %v5019 = vadd.f32 %v5007, 1.0
        %v5020 = vadd.f32 %v5008, 1.0
        %v5021 = vadd.f32 %v5009, 1.0
        %v5022 = vrcp.pop %v5010
        %v5023 = vmul.f32 1.0, %v5022
        %v5024 = vrcp.pop %v5011
        %v5025 = vmul.f32 1.0, %v5024
        %v5026 = vrcp.pop %v5012
        %v5027 = vmul.f32 1.0, %v5026
        %v5028 = vrcp.pop %v5013
        %v5029 = vmul.f32 1.0, %v5028
        %v5030 = vrcp.pop %v5014
        %v5031 = vmul.f32 1.0, %v5030
        %v5032 = vrcp.pop %v5015
        %v5033 = vmul.f32 1.0, %v5032
        %v5034 = vrcp.pop %v5016
        %v5035 = vmul.f32 1.0, %v5034
        %v5036 = vrcp.pop %v5017
        %v5037 = vmul.f32 1.0, %v5036
        %v5038 = vrcp.pop %v5018
        %v5039 = vmul.f32 1.0, %v5038
        %v5040 = vrcp.pop %v5019
        %v5041 = vmul.f32 1.0, %v5040
        %v5042 = vrcp.pop %v5020
        %v5043 = vmul.f32 1.0, %v5042
        %v5044 = vrcp.pop %v5021
        %v5045 = vmul.f32 1.0, %v5044
        %v5046 = vmul.f32 %v5023, 1.0614054
        %v5047 = vmul.f32 %v5025, 1.0614054
        %v5048 = vmul.f32 %v5027, 1.0614054
        %v5049 = vmul.f32 %v5029, 1.0614054
        %v5050 = vmul.f32 %v5031, 1.0614054
        %v5051 = vmul.f32 %v5033, 1.0614054
        %v5052 = vmul.f32 %v5035, 1.0614054
        %v5053 = vmul.f32 %v5037, 1.0614054
        %v5054 = vmul.f32 %v5039, 1.0614054
        %v5055 = vmul.f32 %v5041, 1.0614054
        %v5056 = vmul.f32 %v5043, 1.0614054
        %v5057 = vmul.f32 %v5045, 1.0614054
        %v5058 = vadd.f32 %v5046, -1.4531521
        %v5059 = vadd.f32 %v5047, -1.4531521
        %v5060 = vadd.f32 %v5048, -1.4531521
        %v5061 = vadd.f32 %v5049, -1.4531521
        %v5062 = vadd.f32 %v5050, -1.4531521
        %v5063 = vadd.f32 %v5051, -1.4531521
        %v5064 = vadd.f32 %v5052, -1.4531521
        %v5065 = vadd.f32 %v5053, -1.4531521
        %v5066 = vadd.f32 %v5054, -1.4531521
        %v5067 = vadd.f32 %v5055, -1.4531521
        %v5068 = vadd.f32 %v5056, -1.4531521
        %v5069 = vadd.f32 %v5057, -1.4531521
        %v5070 = vmul.f32 %v5058, %v5023
        %v5071 = vmul.f32 %v5059, %v5025
        %v5072 = vmul.f32 %v5060, %v5027
        %v5073 = vmul.f32 %v5061, %v5029
        %v5074 = vmul.f32 %v5062, %v5031
        %v5075 = vmul.f32 %v5063, %v5033
        %v5076 = vmul.f32 %v5064, %v5035
        %v5077 = vmul.f32 %v5065, %v5037
        %v5078 = vmul.f32 %v5066, %v5039
        %v5079 = vmul.f32 %v5067, %v5041
        %v5080 = vmul.f32 %v5068, %v5043
        %v5081 = vmul.f32 %v5069, %v5045
        %v5082 = vadd.f32 %v5070, 1.4214138
        %v5083 = vadd.f32 %v5071, 1.4214138
        %v5084 = vadd.f32 %v5072, 1.4214138
        %v5085 = vadd.f32 %v5073, 1.4214138
        %v5086 = vadd.f32 %v5074, 1.4214138
        %v5087 = vadd.f32 %v5075, 1.4214138
        %v5088 = vadd.f32 %v5076, 1.4214138
        %v5089 = vadd.f32 %v5077, 1.4214138
        %v5090 = vadd.f32 %v5078, 1.4214138
        %v5091 = vadd.f32 %v5079, 1.4214138
        %v5092 = vadd.f32 %v5080, 1.4214138
        %v5093 = vadd.f32 %v5081, 1.4214138
        %v5094 = vmul.f32 %v5082, %v5023
        %v5095 = vmul.f32 %v5083, %v5025
        %v5096 = vmul.f32 %v5084, %v5027
        %v5097 = vmul.f32 %v5085, %v5029
        %v5098 = vmul.f32 %v5086, %v5031
        %v5099 = vmul.f32 %v5087, %v5033
        %v5100 = vmul.f32 %v5088, %v5035
        %v5101 = vmul.f32 %v5089, %v5037
        %v5102 = vmul.f32 %v5090, %v5039
        %v5103 = vmul.f32 %v5091, %v5041
        %v5104 = vmul.f32 %v5092, %v5043
        %v5105 = vmul.f32 %v5093, %v5045
        %v5106 = vadd.f32 %v5094, -0.28449672
        %v5107 = vadd.f32 %v5095, -0.28449672
        %v5108 = vadd.f32 %v5096, -0.28449672
        %v5109 = vadd.f32 %v5097, -0.28449672
        %v5110 = vadd.f32 %v5098, -0.28449672
        %v5111 = vadd.f32 %v5099, -0.28449672
        %v5112 = vadd.f32 %v5100, -0.28449672
        %v5113 = vadd.f32 %v5101, -0.28449672
        %v5114 = vadd.f32 %v5102, -0.28449672
        %v5115 = vadd.f32 %v5103, -0.28449672
        %v5116 = vadd.f32 %v5104, -0.28449672
        %v5117 = vadd.f32 %v5105, -0.28449672
        %v5118 = vmul.f32 %v5106, %v5023
        %v5119 = vmul.f32 %v5107, %v5025
        %v5120 = vmul.f32 %v5108, %v5027
        %v5121 = vmul.f32 %v5109, %v5029
        %v5122 = vmul.f32 %v5110, %v5031
        %v5123 = vmul.f32 %v5111, %v5033
        %v5124 = vmul.f32 %v5112, %v5035
        %v5125 = vmul.f32 %v5113, %v5037
        %v5126 = vmul.f32 %v5114, %v5039
        %v5127 = vmul.f32 %v5115, %v5041
        %v5128 = vmul.f32 %v5116, %v5043
        %v5129 = vmul.f32 %v5117, %v5045
        %v5130 = vadd.f32 %v5118, 0.2548296
        %v5131 = vadd.f32 %v5119, 0.2548296
        %v5132 = vadd.f32 %v5120, 0.2548296
        %v5133 = vadd.f32 %v5121, 0.2548296
        %v5134 = vadd.f32 %v5122, 0.2548296
        %v5135 = vadd.f32 %v5123, 0.2548296
        %v5136 = vadd.f32 %v5124, 0.2548296
        %v5137 = vadd.f32 %v5125, 0.2548296
        %v5138 = vadd.f32 %v5126, 0.2548296
        %v5139 = vadd.f32 %v5127, 0.2548296
        %v5140 = vadd.f32 %v5128, 0.2548296
        %v5141 = vadd.f32 %v5129, 0.2548296
        %v5142 = vmul.f32 %v5130, %v5023
        %v5143 = vmul.f32 %v5131, %v5025
        %v5144 = vmul.f32 %v5132, %v5027
        %v5145 = vmul.f32 %v5133, %v5029
        %v5146 = vmul.f32 %v5134, %v5031
        %v5147 = vmul.f32 %v5135, %v5033
        %v5148 = vmul.f32 %v5136, %v5035
        %v5149 = vmul.f32 %v5137, %v5037
        %v5150 = vmul.f32 %v5138, %v5039
        %v5151 = vmul.f32 %v5139, %v5041
        %v5152 = vmul.f32 %v5140, %v5043
        %v5153 = vmul.f32 %v5141, %v5045
        %v5154 = vsub.f32 0.0, %v4986
        %v5155 = vsub.f32 0.0, %v4987
        %v5156 = vsub.f32 0.0, %v4988
        %v5157 = vsub.f32 0.0, %v4989
        %v5158 = vsub.f32 0.0, %v4990
        %v5159 = vsub.f32 0.0, %v4991
        %v5160 = vsub.f32 0.0, %v4992
        %v5161 = vsub.f32 0.0, %v4993
        %v5162 = vsub.f32 0.0, %v4994
        %v5163 = vsub.f32 0.0, %v4995
        %v5164 = vsub.f32 0.0, %v4996
        %v5165 = vsub.f32 0.0, %v4997
        %v5166 = vmul.f32 %v5154, %v4986
        %v5167 = vmul.f32 %v5155, %v4987
        %v5168 = vmul.f32 %v5156, %v4988
        %v5169 = vmul.f32 %v5157, %v4989
        %v5170 = vmul.f32 %v5158, %v4990
        %v5171 = vmul.f32 %v5159, %v4991
        %v5172 = vmul.f32 %v5160, %v4992
        %v5173 = vmul.f32 %v5161, %v4993
        %v5174 = vmul.f32 %v5162, %v4994
        %v5175 = vmul.f32 %v5163, %v4995
        %v5176 = vmul.f32 %v5164, %v4996
        %v5177 = vmul.f32 %v5165, %v4997
        %v5178 = vmul.f32 %v5166, 1.442695
        %v5179 = vpow.pop %v5178
        %v5180 = vmul.f32 %v5167, 1.442695
        %v5181 = vpow.pop %v5180
        %v5182 = vmul.f32 %v5168, 1.442695
        %v5183 = vpow.pop %v5182
        %v5184 = vmul.f32 %v5169, 1.442695
        %v5185 = vpow.pop %v5184
        %v5186 = vmul.f32 %v5170, 1.442695
        %v5187 = vpow.pop %v5186
        %v5188 = vmul.f32 %v5171, 1.442695
        %v5189 = vpow.pop %v5188
        %v5190 = vmul.f32 %v5172, 1.442695
        %v5191 = vpow.pop %v5190
        %v5192 = vmul.f32 %v5173, 1.442695
        %v5193 = vpow.pop %v5192
        %v5194 = vmul.f32 %v5174, 1.442695
        %v5195 = vpow.pop %v5194
        %v5196 = vmul.f32 %v5175, 1.442695
        %v5197 = vpow.pop %v5196
        %v5198 = vmul.f32 %v5176, 1.442695
        %v5199 = vpow.pop %v5198
        %v5200 = vmul.f32 %v5177, 1.442695
        %v5201 = vpow.pop %v5200
        %v5202 = vmul.f32 %v5142, %v5179
        %v5203 = vmul.f32 %v5143, %v5181
        %v5204 = vmul.f32 %v5144, %v5183
        %v5205 = vmul.f32 %v5145, %v5185
        %v5206 = vmul.f32 %v5146, %v5187
        %v5207 = vmul.f32 %v5147, %v5189
        %v5208 = vmul.f32 %v5148, %v5191
        %v5209 = vmul.f32 %v5149, %v5193
        %v5210 = vmul.f32 %v5150, %v5195
        %v5211 = vmul.f32 %v5151, %v5197
        %v5212 = vmul.f32 %v5152, %v5199
        %v5213 = vmul.f32 %v5153, %v5201
        %v5214 = vsub.f32 1.0, %v5202
        %v5215 = vsub.f32 1.0, %v5203
        %v5216 = vsub.f32 1.0, %v5204
        %v5217 = vsub.f32 1.0, %v5205
        %v5218 = vsub.f32 1.0, %v5206
        %v5219 = vsub.f32 1.0, %v5207
        %v5220 = vsub.f32 1.0, %v5208
        %v5221 = vsub.f32 1.0, %v5209
        %v5222 = vsub.f32 1.0, %v5210
        %v5223 = vsub.f32 1.0, %v5211
        %v5224 = vsub.f32 1.0, %v5212
        %v5225 = vsub.f32 1.0, %v5213
        %v5226 = vmul.f32 %v4974, %v5214
        %v5227 = vmul.f32 %v4975, %v5215
        %v5228 = vmul.f32 %v4976, %v5216
        %v5229 = vmul.f32 %v4977, %v5217
        %v5230 = vmul.f32 %v4978, %v5218
        %v5231 = vmul.f32 %v4979, %v5219
        %v5232 = vmul.f32 %v4980, %v5220
        %v5233 = vmul.f32 %v4981, %v5221
        %v5234 = vmul.f32 %v4982, %v5222
        %v5235 = vmul.f32 %v4983, %v5223
        %v5236 = vmul.f32 %v4984, %v5224
        %v5237 = vmul.f32 %v4985, %v5225
        %v5238 = vadd.f32 %v5226, 1.0
        %v5239 = vadd.f32 %v5227, 1.0
        %v5240 = vadd.f32 %v5228, 1.0
        %v5241 = vadd.f32 %v5229, 1.0
        %v5242 = vadd.f32 %v5230, 1.0
        %v5243 = vadd.f32 %v5231, 1.0
        %v5244 = vadd.f32 %v5232, 1.0
        %v5245 = vadd.f32 %v5233, 1.0
        %v5246 = vadd.f32 %v5234, 1.0
        %v5247 = vadd.f32 %v5235, 1.0
        %v5248 = vadd.f32 %v5236, 1.0
        %v5249 = vadd.f32 %v5237, 1.0
        %v5250 = vmul.f32 %v4938, %v5238
        %v5251 = vmul.f32 %v4939, %v5239
        %v5252 = vmul.f32 %v4940, %v5240
        %v5253 = vmul.f32 %v4941, %v5241
        %v5254 = vmul.f32 %v4942, %v5242
        %v5255 = vmul.f32 %v4943, %v5243
        %v5256 = vmul.f32 %v4944, %v5244
        %v5257 = vmul.f32 %v4945, %v5245
        %v5258 = vmul.f32 %v4946, %v5246
        %v5259 = vmul.f32 %v4947, %v5247
        %v5260 = vmul.f32 %v4948, %v5248
        %v5261 = vmul.f32 %v4949, %v5249
        %v5262 = vld [vmem:[#allocation19] sm:$0xff]
        %v5263 = vld [vmem:[#allocation19 + $0x8] sm:$0xff]
        %v5264 = vld [vmem:[#allocation19 + $0x10] sm:$0xff]
        %v5265 = vld [vmem:[#allocation19 + $0x18] sm:$0xff]
        %v5266 = vld [vmem:[#allocation19 + $0x20] sm:$0xff]
        %v5267 = vld [vmem:[#allocation19 + $0x28] sm:$0xff]
        %v5268 = vld [vmem:[#allocation19 + $0x30] sm:$0xff]
        %v5269 = vld [vmem:[#allocation19 + $0x38] sm:$0xff]
        %v5270 = vld [vmem:[#allocation19 + $0x40] sm:$0xff]
        %v5271 = vld [vmem:[#allocation19 + $0x48] sm:$0xff]
        %v5272 = vld [vmem:[#allocation19 + $0x50] sm:$0xff]
        %v5273 = vld [vmem:[#allocation19 + $0x58] sm:$0xff]
        %v5274 = vld [vmem:[#allocation19 + $0x60] sm:$0xff]
        %v5275 = vld [vmem:[#allocation19 + $0x68] sm:$0xff]
        %v5276 = vld [vmem:[#allocation19 + $0x70] sm:$0xff]
        %v5277 = vld [vmem:[#allocation19 + $0x78] sm:$0xff]
        %v5278 = vld [vmem:[#allocation19 + $0x80] sm:$0xff]
        %v5279 = vld [vmem:[#allocation19 + $0x88] sm:$0xff]
        %v5280 = vld [vmem:[#allocation19 + $0x90] sm:$0xff]
        %v5281 = vld [vmem:[#allocation19 + $0x98] sm:$0xff]
        %v5282 = vld [vmem:[#allocation19 + $0xa0] sm:$0xff]
        %v5283 = vld [vmem:[#allocation19 + $0xa8] sm:$0xff]
        %v5284 = vld [vmem:[#allocation19 + $0xb0] sm:$0xff]
        %v5285 = vld [vmem:[#allocation19 + $0xb8] sm:$0xff]
        %v5286 = vld [vmem:[#allocation19 + $0xc0] sm:$0xff]
        %v5287 = vld [vmem:[#allocation19 + $0xc8] sm:$0xff]
        %v5288 = vld [vmem:[#allocation19 + $0xd0] sm:$0xff]
        %v5289 = vld [vmem:[#allocation19 + $0xd8] sm:$0xff]
        %v5290 = vld [vmem:[#allocation19 + $0xe0] sm:$0xff]
        %v5291 = vld [vmem:[#allocation19 + $0xe8] sm:$0xff]
        %v5292 = vld [vmem:[#allocation19 + $0xf0] sm:$0xff]
        %v5293 = vld [vmem:[#allocation19 + $0xf8] sm:$0xff]
        %v5294 = vld [vmem:[#allocation19 + $0x100] sm:$0xff]
        %v5295 = vld [vmem:[#allocation19 + $0x108] sm:$0xff]
        %v5296 = vld [vmem:[#allocation19 + $0x110] sm:$0xff]
        %v5297 = vld [vmem:[#allocation19 + $0x118] sm:$0xff]
        %v5298 = vld [vmem:[#allocation19 + $0x120] sm:$0xff]
        %v5299 = vld [vmem:[#allocation19 + $0x128] sm:$0xff]
        %v5300 = vld [vmem:[#allocation19 + $0x130] sm:$0xff]
        %v5301 = vld [vmem:[#allocation19 + $0x138] sm:$0xff]
        %v5302 = vld [vmem:[#allocation19 + $0x140] sm:$0xff]
        %v5303 = vld [vmem:[#allocation19 + $0x148] sm:$0xff]
        %v5304 = vld [vmem:[#allocation19 + $0x150] sm:$0xff]
        %v5305 = vld [vmem:[#allocation19 + $0x158] sm:$0xff]
        %v5306 = vld [vmem:[#allocation19 + $0x160] sm:$0xff]
        %v5307 = vld [vmem:[#allocation19 + $0x168] sm:$0xff]
        %v5308 = vld [vmem:[#allocation19 + $0x170] sm:$0xff]
        %v5309 = vld [vmem:[#allocation19 + $0x178] sm:$0xff]
        %v5310 = vld [vmem:[#allocation19 + $0x180] sm:$0xff]
        %v5311 = vld [vmem:[#allocation19 + $0x188] sm:$0xff]
        %v5312 = vld [vmem:[#allocation19 + $0x190] sm:$0xff]
        %v5313 = vld [vmem:[#allocation19 + $0x198] sm:$0xff]
        %v5314 = vld [vmem:[#allocation19 + $0x1a0] sm:$0xff]
        %v5315 = vld [vmem:[#allocation19 + $0x1a8] sm:$0xff]
        %v5316 = vld [vmem:[#allocation19 + $0x1b0] sm:$0xff]
        %v5317 = vld [vmem:[#allocation19 + $0x1b8] sm:$0xff]
        %v5318 = vld [vmem:[#allocation19 + $0x1c0] sm:$0xff]
        %v5319 = vld [vmem:[#allocation19 + $0x1c8] sm:$0xff]
        %v5320 = vld [vmem:[#allocation19 + $0x1d0] sm:$0xff]
        %v5321 = vld [vmem:[#allocation19 + $0x1d8] sm:$0xff]
        %v5322 = vld [vmem:[#allocation19 + $0x1e0] sm:$0xff]
        %v5323 = vld [vmem:[#allocation19 + $0x1e8] sm:$0xff]
        %v5324 = vld [vmem:[#allocation19 + $0x1f0] sm:$0xff]
        %v5325 = vld [vmem:[#allocation19 + $0x1f8] sm:$0xff]
        %v5326 = vld [vmem:[#allocation19 + $0x200] sm:$0xff]
        %v5327 = vld [vmem:[#allocation19 + $0x208] sm:$0xff]
        %v5328 = vld [vmem:[#allocation19 + $0x210] sm:$0xff]
        %v5329 = vld [vmem:[#allocation19 + $0x218] sm:$0xff]
        %v5330 = vld [vmem:[#allocation19 + $0x220] sm:$0xff]
        %v5331 = vld [vmem:[#allocation19 + $0x228] sm:$0xff]
        %v5332 = vld [vmem:[#allocation19 + $0x230] sm:$0xff]
        %v5333 = vld [vmem:[#allocation19 + $0x238] sm:$0xff]
        %v5334 = vld [vmem:[#allocation19 + $0x240] sm:$0xff]
        %v5335 = vld [vmem:[#allocation19 + $0x248] sm:$0xff]
        %v5336 = vld [vmem:[#allocation19 + $0x250] sm:$0xff]
        %v5337 = vld [vmem:[#allocation19 + $0x258] sm:$0xff]
        %v5338 = vld [vmem:[#allocation19 + $0x260] sm:$0xff]
        %v5339 = vld [vmem:[#allocation19 + $0x268] sm:$0xff]
        %v5340 = vld [vmem:[#allocation19 + $0x270] sm:$0xff]
        %v5341 = vld [vmem:[#allocation19 + $0x278] sm:$0xff]
        %v5342 = vld [vmem:[#allocation19 + $0x280] sm:$0xff]
        %v5343 = vld [vmem:[#allocation19 + $0x288] sm:$0xff]
        %v5344 = vld [vmem:[#allocation19 + $0x290] sm:$0xff]
        %v5345 = vld [vmem:[#allocation19 + $0x298] sm:$0xff]
        %v5346 = vld [vmem:[#allocation19 + $0x2a0] sm:$0xff]
        %v5347 = vld [vmem:[#allocation19 + $0x2a8] sm:$0xff]
        %v5348 = vld [vmem:[#allocation19 + $0x2b0] sm:$0xff]
        %v5349 = vld [vmem:[#allocation19 + $0x2b8] sm:$0xff]
        %v5350 = vld [vmem:[#allocation19 + $0x2c0] sm:$0xff]
        %v5351 = vld [vmem:[#allocation19 + $0x2c8] sm:$0xff]
        %v5352 = vld [vmem:[#allocation19 + $0x2d0] sm:$0xff]
        %v5353 = vld [vmem:[#allocation19 + $0x2d8] sm:$0xff]
        %v5354 = vld [vmem:[#allocation19 + $0x2e0] sm:$0xff]
        %v5355 = vld [vmem:[#allocation19 + $0x2e8] sm:$0xff]
        %v5356 = vld [vmem:[#allocation19 + $0x2f0] sm:$0xff]
        %v5357 = vld [vmem:[#allocation19 + $0x2f8] sm:$0xff]
        %v5358 = vld [vmem:[#allocation19 + $0x300] sm:$0xff]
        %v5359 = vld [vmem:[#allocation19 + $0x308] sm:$0xff]
        %v5360 = vld [vmem:[#allocation19 + $0x310] sm:$0xff]
        %v5361 = vld [vmem:[#allocation19 + $0x318] sm:$0xff]
        %v5362 = vld [vmem:[#allocation19 + $0x320] sm:$0xff]
        %v5363 = vld [vmem:[#allocation19 + $0x328] sm:$0xff]
        %v5364 = vld [vmem:[#allocation19 + $0x330] sm:$0xff]
        %v5365 = vld [vmem:[#allocation19 + $0x338] sm:$0xff]
        %v5366 = vld [vmem:[#allocation19 + $0x340] sm:$0xff]
        %v5367 = vld [vmem:[#allocation19 + $0x348] sm:$0xff]
        %v5368 = vld [vmem:[#allocation19 + $0x350] sm:$0xff]
        %v5369 = vld [vmem:[#allocation19 + $0x358] sm:$0xff]
        %v5370 = vld [vmem:[#allocation19 + $0x360] sm:$0xff]
        %v5371 = vld [vmem:[#allocation19 + $0x368] sm:$0xff]
        %v5372 = vld [vmem:[#allocation19 + $0x370] sm:$0xff]
        %v5373 = vld [vmem:[#allocation19 + $0x378] sm:$0xff]
        %v5374 = vld [vmem:[#allocation19 + $0x380] sm:$0xff]
        %v5375 = vld [vmem:[#allocation19 + $0x388] sm:$0xff]
        %v5376 = vld [vmem:[#allocation19 + $0x390] sm:$0xff]
        %v5377 = vld [vmem:[#allocation19 + $0x398] sm:$0xff]
        %v5378 = vld [vmem:[#allocation19 + $0x3a0] sm:$0xff]
        %v5379 = vld [vmem:[#allocation19 + $0x3a8] sm:$0xff]
        %v5380 = vld [vmem:[#allocation19 + $0x3b0] sm:$0xff]
        %v5381 = vld [vmem:[#allocation19 + $0x3b8] sm:$0xff]
        %v5382 = vld [vmem:[#allocation19 + $0x3c0] sm:$0xff]
        %v5383 = vld [vmem:[#allocation19 + $0x3c8] sm:$0xff]
        %v5384 = vld [vmem:[#allocation19 + $0x3d0] sm:$0xff]
        %v5385 = vld [vmem:[#allocation19 + $0x3d8] sm:$0xff]
        %v5386 = vld [vmem:[#allocation19 + $0x3e0] sm:$0xff]
        %v5387 = vld [vmem:[#allocation19 + $0x3e8] sm:$0xff]
        %v5388 = vld [vmem:[#allocation19 + $0x3f0] sm:$0xff]
        %v5389 = vld [vmem:[#allocation19 + $0x3f8] sm:$0xff]
        %v5390 = vld [vmem:[#allocation19 + $0x400] sm:$0xff]
        %v5391 = vld [vmem:[#allocation19 + $0x408] sm:$0xff]
        %v5392 = vld [vmem:[#allocation19 + $0x410] sm:$0xff]
        %v5393 = vld [vmem:[#allocation19 + $0x418] sm:$0xff]
        %v5394 = vld [vmem:[#allocation19 + $0x420] sm:$0xff]
        %v5395 = vld [vmem:[#allocation19 + $0x428] sm:$0xff]
        %v5396 = vld [vmem:[#allocation19 + $0x430] sm:$0xff]
        %v5397 = vld [vmem:[#allocation19 + $0x438] sm:$0xff]
        %v5398 = vld [vmem:[#allocation19 + $0x440] sm:$0xff]
        %v5399 = vld [vmem:[#allocation19 + $0x448] sm:$0xff]
        %v5400 = vld [vmem:[#allocation19 + $0x450] sm:$0xff]
        %v5401 = vld [vmem:[#allocation19 + $0x458] sm:$0xff]
        %v5402 = vld [vmem:[#allocation19 + $0x460] sm:$0xff]
        %v5403 = vld [vmem:[#allocation19 + $0x468] sm:$0xff]
        %v5404 = vld [vmem:[#allocation19 + $0x470] sm:$0xff]
        %v5405 = vld [vmem:[#allocation19 + $0x478] sm:$0xff]
        %v5406 = vld [vmem:[#allocation19 + $0x480] sm:$0xff]
        %v5407 = vld [vmem:[#allocation19 + $0x488] sm:$0xff]
        %v5408 = vld [vmem:[#allocation19 + $0x490] sm:$0xff]
        %v5409 = vld [vmem:[#allocation19 + $0x498] sm:$0xff]
        %v5410 = vld [vmem:[#allocation19 + $0x4a0] sm:$0xff]
        %v5411 = vld [vmem:[#allocation19 + $0x4a8] sm:$0xff]
        %v5412 = vld [vmem:[#allocation19 + $0x4b0] sm:$0xff]
        %v5413 = vld [vmem:[#allocation19 + $0x4b8] sm:$0xff]
        %v5414 = vld [vmem:[#allocation19 + $0x4c0] sm:$0xff]
        %v5415 = vld [vmem:[#allocation19 + $0x4c8] sm:$0xff]
        %v5416 = vld [vmem:[#allocation19 + $0x4d0] sm:$0xff]
        %v5417 = vld [vmem:[#allocation19 + $0x4d8] sm:$0xff]
        %v5418 = vld [vmem:[#allocation19 + $0x4e0] sm:$0xff]
        %v5419 = vld [vmem:[#allocation19 + $0x4e8] sm:$0xff]
        %v5420 = vld [vmem:[#allocation19 + $0x4f0] sm:$0xff]
        %v5421 = vld [vmem:[#allocation19 + $0x4f8] sm:$0xff]
        %v5422 = vld [vmem:[#allocation19 + $0x500] sm:$0xff]
        %v5423 = vld [vmem:[#allocation19 + $0x508] sm:$0xff]
        %v5424 = vld [vmem:[#allocation19 + $0x510] sm:$0xff]
        %v5425 = vld [vmem:[#allocation19 + $0x518] sm:$0xff]
        %v5426 = vld [vmem:[#allocation19 + $0x520] sm:$0xff]
        %v5427 = vld [vmem:[#allocation19 + $0x528] sm:$0xff]
        %v5428 = vld [vmem:[#allocation19 + $0x530] sm:$0xff]
        %v5429 = vld [vmem:[#allocation19 + $0x538] sm:$0xff]
        %v5430 = vld [vmem:[#allocation19 + $0x540] sm:$0xff]
        %v5431 = vld [vmem:[#allocation19 + $0x548] sm:$0xff]
        %v5432 = vld [vmem:[#allocation19 + $0x550] sm:$0xff]
        %v5433 = vld [vmem:[#allocation19 + $0x558] sm:$0xff]
        %v5434 = vld [vmem:[#allocation19 + $0x560] sm:$0xff]
        %v5435 = vld [vmem:[#allocation19 + $0x568] sm:$0xff]
        %v5436 = vld [vmem:[#allocation19 + $0x570] sm:$0xff]
        %v5437 = vld [vmem:[#allocation19 + $0x578] sm:$0xff]
        %v5438 = vld [vmem:[#allocation19 + $0x580] sm:$0xff]
        %v5439 = vld [vmem:[#allocation19 + $0x588] sm:$0xff]
        %v5440 = vld [vmem:[#allocation19 + $0x590] sm:$0xff]
        %v5441 = vld [vmem:[#allocation19 + $0x598] sm:$0xff]
        %v5442 = vld [vmem:[#allocation19 + $0x5a0] sm:$0xff]
        %v5443 = vld [vmem:[#allocation19 + $0x5a8] sm:$0xff]
        %v5444 = vld [vmem:[#allocation19 + $0x5b0] sm:$0xff]
        %v5445 = vld [vmem:[#allocation19 + $0x5b8] sm:$0xff]
        %v5446 = vld [vmem:[#allocation19 + $0x5c0] sm:$0xff]
        %v5447 = vld [vmem:[#allocation19 + $0x5c8] sm:$0xff]
        %v5448 = vld [vmem:[#allocation19 + $0x5d0] sm:$0xff]
        %v5449 = vld [vmem:[#allocation19 + $0x5d8] sm:$0xff]
        %v5450 = vld [vmem:[#allocation19 + $0x5e0] sm:$0xff]
        %v5451 = vld [vmem:[#allocation19 + $0x5e8] sm:$0xff]
        %v5452 = vld [vmem:[#allocation19 + $0x5f0] sm:$0xff]
        %v5453 = vld [vmem:[#allocation19 + $0x5f8] sm:$0xff]
        %v5454 = vld [vmem:[#allocation19 + $0x600] sm:$0xff]
        %v5455 = vld [vmem:[#allocation19 + $0x608] sm:$0xff]
        %v5456 = vld [vmem:[#allocation19 + $0x610] sm:$0xff]
        %v5457 = vld [vmem:[#allocation19 + $0x618] sm:$0xff]
        %v5458 = vld [vmem:[#allocation19 + $0x620] sm:$0xff]
        %v5459 = vld [vmem:[#allocation19 + $0x628] sm:$0xff]
        %v5460 = vld [vmem:[#allocation19 + $0x630] sm:$0xff]
        %v5461 = vld [vmem:[#allocation19 + $0x638] sm:$0xff]
        %v5462 = vld [vmem:[#allocation19 + $0x640] sm:$0xff]
        %v5463 = vld [vmem:[#allocation19 + $0x648] sm:$0xff]
        %v5464 = vld [vmem:[#allocation19 + $0x650] sm:$0xff]
        %v5465 = vld [vmem:[#allocation19 + $0x658] sm:$0xff]
        %v5466 = vld [vmem:[#allocation19 + $0x660] sm:$0xff]
        %v5467 = vld [vmem:[#allocation19 + $0x668] sm:$0xff]
        %v5468 = vld [vmem:[#allocation19 + $0x670] sm:$0xff]
        %v5469 = vld [vmem:[#allocation19 + $0x678] sm:$0xff]
        %v5470 = vld [vmem:[#allocation19 + $0x680] sm:$0xff]
        %v5471 = vld [vmem:[#allocation19 + $0x688] sm:$0xff]
        %v5472 = vld [vmem:[#allocation19 + $0x690] sm:$0xff]
        %v5473 = vld [vmem:[#allocation19 + $0x698] sm:$0xff]
        %v5474 = vld [vmem:[#allocation19 + $0x6a0] sm:$0xff]
        %v5475 = vld [vmem:[#allocation19 + $0x6a8] sm:$0xff]
        %v5476 = vld [vmem:[#allocation19 + $0x6b0] sm:$0xff]
        %v5477 = vld [vmem:[#allocation19 + $0x6b8] sm:$0xff]
        %v5478 = vld [vmem:[#allocation19 + $0x6c0] sm:$0xff]
        %v5479 = vld [vmem:[#allocation19 + $0x6c8] sm:$0xff]
        %v5480 = vld [vmem:[#allocation19 + $0x6d0] sm:$0xff]
        %v5481 = vld [vmem:[#allocation19 + $0x6d8] sm:$0xff]
        %v5482 = vld [vmem:[#allocation19 + $0x6e0] sm:$0xff]
        %v5483 = vld [vmem:[#allocation19 + $0x6e8] sm:$0xff]
        %v5484 = vld [vmem:[#allocation19 + $0x6f0] sm:$0xff]
        %v5485 = vld [vmem:[#allocation19 + $0x6f8] sm:$0xff]
        %v5486 = vld [vmem:[#allocation19 + $0x700] sm:$0xff]
        %v5487 = vld [vmem:[#allocation19 + $0x708] sm:$0xff]
        %v5488 = vld [vmem:[#allocation19 + $0x710] sm:$0xff]
        %v5489 = vld [vmem:[#allocation19 + $0x718] sm:$0xff]
        %v5490 = vld [vmem:[#allocation19 + $0x720] sm:$0xff]
        %v5491 = vld [vmem:[#allocation19 + $0x728] sm:$0xff]
        %v5492 = vld [vmem:[#allocation19 + $0x730] sm:$0xff]
        %v5493 = vld [vmem:[#allocation19 + $0x738] sm:$0xff]
        %v5494 = vld [vmem:[#allocation19 + $0x740] sm:$0xff]
        %v5495 = vld [vmem:[#allocation19 + $0x748] sm:$0xff]
        %v5496 = vld [vmem:[#allocation19 + $0x750] sm:$0xff]
        %v5497 = vld [vmem:[#allocation19 + $0x758] sm:$0xff]
        %v5498 = vld [vmem:[#allocation19 + $0x760] sm:$0xff]
        %v5499 = vld [vmem:[#allocation19 + $0x768] sm:$0xff]
        %v5500 = vld [vmem:[#allocation19 + $0x770] sm:$0xff]
        %v5501 = vld [vmem:[#allocation19 + $0x778] sm:$0xff]
        %v5502 = vld [vmem:[#allocation19 + $0x780] sm:$0xff]
        %v5503 = vld [vmem:[#allocation19 + $0x788] sm:$0xff]
        %v5504 = vld [vmem:[#allocation19 + $0x790] sm:$0xff]
        %v5505 = vld [vmem:[#allocation19 + $0x798] sm:$0xff]
        %v5506 = vld [vmem:[#allocation19 + $0x7a0] sm:$0xff]
        %v5507 = vld [vmem:[#allocation19 + $0x7a8] sm:$0xff]
        %v5508 = vld [vmem:[#allocation19 + $0x7b0] sm:$0xff]
        %v5509 = vld [vmem:[#allocation19 + $0x7b8] sm:$0xff]
        %v5510 = vld [vmem:[#allocation19 + $0x7c0] sm:$0xff]
        %v5511 = vld [vmem:[#allocation19 + $0x7c8] sm:$0xff]
        %v5512 = vld [vmem:[#allocation19 + $0x7d0] sm:$0xff]
        %v5513 = vld [vmem:[#allocation19 + $0x7d8] sm:$0xff]
        %v5514 = vld [vmem:[#allocation19 + $0x7e0] sm:$0xff]
        %v5515 = vld [vmem:[#allocation19 + $0x7e8] sm:$0xff]
        %v5516 = vld [vmem:[#allocation19 + $0x7f0] sm:$0xff]
        %v5517 = vld [vmem:[#allocation19 + $0x7f8] sm:$0xff]
        %v5518 = vld [vmem:[#allocation19 + $0x800] sm:$0xff]
        %v5519 = vld [vmem:[#allocation19 + $0x808] sm:$0xff]
        %v5520 = vld [vmem:[#allocation19 + $0x810] sm:$0xff]
        %v5521 = vld [vmem:[#allocation19 + $0x818] sm:$0xff]
        %v5522 = vld [vmem:[#allocation19 + $0x820] sm:$0xff]
        %v5523 = vld [vmem:[#allocation19 + $0x828] sm:$0xff]
        %v5524 = vld [vmem:[#allocation19 + $0x830] sm:$0xff]
        %v5525 = vld [vmem:[#allocation19 + $0x838] sm:$0xff]
        %v5526 = vld [vmem:[#allocation19 + $0x840] sm:$0xff]
        %v5527 = vld [vmem:[#allocation19 + $0x848] sm:$0xff]
        %v5528 = vld [vmem:[#allocation19 + $0x850] sm:$0xff]
        %v5529 = vld [vmem:[#allocation19 + $0x858] sm:$0xff]
        %v5530 = vld [vmem:[#allocation19 + $0x860] sm:$0xff]
        %v5531 = vld [vmem:[#allocation19 + $0x868] sm:$0xff]
        %v5532 = vld [vmem:[#allocation19 + $0x870] sm:$0xff]
        %v5533 = vld [vmem:[#allocation19 + $0x878] sm:$0xff]
        %v5534 = vld [vmem:[#allocation19 + $0x880] sm:$0xff]
        %v5535 = vld [vmem:[#allocation19 + $0x888] sm:$0xff]
        %v5536 = vld [vmem:[#allocation19 + $0x890] sm:$0xff]
        %v5537 = vld [vmem:[#allocation19 + $0x898] sm:$0xff]
        %v5538 = vld [vmem:[#allocation19 + $0x8a0] sm:$0xff]
        %v5539 = vld [vmem:[#allocation19 + $0x8a8] sm:$0xff]
        %v5540 = vld [vmem:[#allocation19 + $0x8b0] sm:$0xff]
        %v5541 = vld [vmem:[#allocation19 + $0x8b8] sm:$0xff]
        %v5542 = vld [vmem:[#allocation19 + $0x8c0] sm:$0xff]
        %v5543 = vld [vmem:[#allocation19 + $0x8c8] sm:$0xff]
        %v5544 = vld [vmem:[#allocation19 + $0x8d0] sm:$0xff]
        %v5545 = vld [vmem:[#allocation19 + $0x8d8] sm:$0xff]
        %v5546 = vld [vmem:[#allocation19 + $0x8e0] sm:$0xff]
        %v5547 = vld [vmem:[#allocation19 + $0x8e8] sm:$0xff]
        %v5548 = vld [vmem:[#allocation19 + $0x8f0] sm:$0xff]
        %v5549 = vld [vmem:[#allocation19 + $0x8f8] sm:$0xff]
        %v5550 = vld [vmem:[#allocation19 + $0x900] sm:$0xff]
        %v5551 = vld [vmem:[#allocation19 + $0x908] sm:$0xff]
        %v5552 = vld [vmem:[#allocation19 + $0x910] sm:$0xff]
        %v5553 = vld [vmem:[#allocation19 + $0x918] sm:$0xff]
        %v5554 = vld [vmem:[#allocation19 + $0x920] sm:$0xff]
        %v5555 = vld [vmem:[#allocation19 + $0x928] sm:$0xff]
        %v5556 = vld [vmem:[#allocation19 + $0x930] sm:$0xff]
        %v5557 = vld [vmem:[#allocation19 + $0x938] sm:$0xff]
        %v5558 = vld [vmem:[#allocation19 + $0x940] sm:$0xff]
        %v5559 = vld [vmem:[#allocation19 + $0x948] sm:$0xff]
        %v5560 = vld [vmem:[#allocation19 + $0x950] sm:$0xff]
        %v5561 = vld [vmem:[#allocation19 + $0x958] sm:$0xff]
        %v5562 = vld [vmem:[#allocation19 + $0x960] sm:$0xff]
        %v5563 = vld [vmem:[#allocation19 + $0x968] sm:$0xff]
        %v5564 = vld [vmem:[#allocation19 + $0x970] sm:$0xff]
        %v5565 = vld [vmem:[#allocation19 + $0x978] sm:$0xff]
        %v5566 = vld [vmem:[#allocation19 + $0x980] sm:$0xff]
        %v5567 = vld [vmem:[#allocation19 + $0x988] sm:$0xff]
        %v5568 = vld [vmem:[#allocation19 + $0x990] sm:$0xff]
        %v5569 = vld [vmem:[#allocation19 + $0x998] sm:$0xff]
        %v5570 = vld [vmem:[#allocation19 + $0x9a0] sm:$0xff]
        %v5571 = vld [vmem:[#allocation19 + $0x9a8] sm:$0xff]
        %v5572 = vld [vmem:[#allocation19 + $0x9b0] sm:$0xff]
        %v5573 = vld [vmem:[#allocation19 + $0x9b8] sm:$0xff]
        %v5574 = vld [vmem:[#allocation19 + $0x9c0] sm:$0xff]
        %v5575 = vld [vmem:[#allocation19 + $0x9c8] sm:$0xff]
        %v5576 = vld [vmem:[#allocation19 + $0x9d0] sm:$0xff]
        %v5577 = vld [vmem:[#allocation19 + $0x9d8] sm:$0xff]
        %v5578 = vld [vmem:[#allocation19 + $0x9e0] sm:$0xff]
        %v5579 = vld [vmem:[#allocation19 + $0x9e8] sm:$0xff]
        %v5580 = vld [vmem:[#allocation19 + $0x9f0] sm:$0xff]
        %v5581 = vld [vmem:[#allocation19 + $0x9f8] sm:$0xff]
        %v5582 = vld [vmem:[#allocation19 + $0xa00] sm:$0xff]
        %v5583 = vld [vmem:[#allocation19 + $0xa08] sm:$0xff]
        %v5584 = vld [vmem:[#allocation19 + $0xa10] sm:$0xff]
        %v5585 = vld [vmem:[#allocation19 + $0xa18] sm:$0xff]
        %v5586 = vld [vmem:[#allocation19 + $0xa20] sm:$0xff]
        %v5587 = vld [vmem:[#allocation19 + $0xa28] sm:$0xff]
        %v5588 = vld [vmem:[#allocation19 + $0xa30] sm:$0xff]
        %v5589 = vld [vmem:[#allocation19 + $0xa38] sm:$0xff]
        %v5590 = vld [vmem:[#allocation19 + $0xa40] sm:$0xff]
        %v5591 = vld [vmem:[#allocation19 + $0xa48] sm:$0xff]
        %v5592 = vld [vmem:[#allocation19 + $0xa50] sm:$0xff]
        %v5593 = vld [vmem:[#allocation19 + $0xa58] sm:$0xff]
        %v5594 = vld [vmem:[#allocation19 + $0xa60] sm:$0xff]
        %v5595 = vld [vmem:[#allocation19 + $0xa68] sm:$0xff]
        %v5596 = vld [vmem:[#allocation19 + $0xa70] sm:$0xff]
        %v5597 = vld [vmem:[#allocation19 + $0xa78] sm:$0xff]
        %v5598 = vld [vmem:[#allocation19 + $0xa80] sm:$0xff]
        %v5599 = vld [vmem:[#allocation19 + $0xa88] sm:$0xff]
        %v5600 = vld [vmem:[#allocation19 + $0xa90] sm:$0xff]
        %v5601 = vld [vmem:[#allocation19 + $0xa98] sm:$0xff]
        %v5602 = vld [vmem:[#allocation19 + $0xaa0] sm:$0xff]
        %v5603 = vld [vmem:[#allocation19 + $0xaa8] sm:$0xff]
        %v5604 = vld [vmem:[#allocation19 + $0xab0] sm:$0xff]
        %v5605 = vld [vmem:[#allocation19 + $0xab8] sm:$0xff]
        %v5606 = vld [vmem:[#allocation19 + $0xac0] sm:$0xff]
        %v5607 = vld [vmem:[#allocation19 + $0xac8] sm:$0xff]
        %v5608 = vld [vmem:[#allocation19 + $0xad0] sm:$0xff]
        %v5609 = vld [vmem:[#allocation19 + $0xad8] sm:$0xff]
        %v5610 = vld [vmem:[#allocation19 + $0xae0] sm:$0xff]
        %v5611 = vld [vmem:[#allocation19 + $0xae8] sm:$0xff]
        %v5612 = vld [vmem:[#allocation19 + $0xaf0] sm:$0xff]
        %v5613 = vld [vmem:[#allocation19 + $0xaf8] sm:$0xff]
        %v5614 = vld [vmem:[#allocation19 + $0xb00] sm:$0xff]
        %v5615 = vld [vmem:[#allocation19 + $0xb08] sm:$0xff]
        %v5616 = vld [vmem:[#allocation19 + $0xb10] sm:$0xff]
        %v5617 = vld [vmem:[#allocation19 + $0xb18] sm:$0xff]
        %v5618 = vld [vmem:[#allocation19 + $0xb20] sm:$0xff]
        %v5619 = vld [vmem:[#allocation19 + $0xb28] sm:$0xff]
        %v5620 = vld [vmem:[#allocation19 + $0xb30] sm:$0xff]
        %v5621 = vld [vmem:[#allocation19 + $0xb38] sm:$0xff]
        %v5622 = vld [vmem:[#allocation19 + $0xb40] sm:$0xff]
        %v5623 = vld [vmem:[#allocation19 + $0xb48] sm:$0xff]
        %v5624 = vld [vmem:[#allocation19 + $0xb50] sm:$0xff]
        %v5625 = vld [vmem:[#allocation19 + $0xb58] sm:$0xff]
        %v5626 = vld [vmem:[#allocation19 + $0xb60] sm:$0xff]
        %v5627 = vld [vmem:[#allocation19 + $0xb68] sm:$0xff]
        %v5628 = vld [vmem:[#allocation19 + $0xb70] sm:$0xff]
        %v5629 = vld [vmem:[#allocation19 + $0xb78] sm:$0xff]
        %v5630 = vld [vmem:[#allocation19 + $0xb80] sm:$0xff]
        %v5631 = vld [vmem:[#allocation19 + $0xb88] sm:$0xff]
        %v5632 = vld [vmem:[#allocation19 + $0xb90] sm:$0xff]
        %v5633 = vld [vmem:[#allocation19 + $0xb98] sm:$0xff]
        %v5634 = vld [vmem:[#allocation19 + $0xba0] sm:$0xff]
        %v5635 = vld [vmem:[#allocation19 + $0xba8] sm:$0xff]
        %v5636 = vld [vmem:[#allocation19 + $0xbb0] sm:$0xff]
        %v5637 = vld [vmem:[#allocation19 + $0xbb8] sm:$0xff]
        %v5638 = vld [vmem:[#allocation19 + $0xbc0] sm:$0xff]
        %v5639 = vld [vmem:[#allocation19 + $0xbc8] sm:$0xff]
        %v5640 = vld [vmem:[#allocation19 + $0xbd0] sm:$0xff]
        %v5641 = vld [vmem:[#allocation19 + $0xbd8] sm:$0xff]
        %v5642 = vld [vmem:[#allocation19 + $0xbe0] sm:$0xff]
        %v5643 = vld [vmem:[#allocation19 + $0xbe8] sm:$0xff]
        %v5644 = vld [vmem:[#allocation19 + $0xbf0] sm:$0xff]
        %v5645 = vld [vmem:[#allocation19 + $0xbf8] sm:$0xff]
        %v5646 = vld [vmem:[#allocation19 + $0xc00] sm:$0xff]
        %v5647 = vld [vmem:[#allocation19 + $0xc08] sm:$0xff]
        %v5648 = vld [vmem:[#allocation19 + $0xc10] sm:$0xff]
        %v5649 = vld [vmem:[#allocation19 + $0xc18] sm:$0xff]
        %v5650 = vld [vmem:[#allocation19 + $0xc20] sm:$0xff]
        %v5651 = vld [vmem:[#allocation19 + $0xc28] sm:$0xff]
        %v5652 = vld [vmem:[#allocation19 + $0xc30] sm:$0xff]
        %v5653 = vld [vmem:[#allocation19 + $0xc38] sm:$0xff]
        %v5654 = vld [vmem:[#allocation19 + $0xc40] sm:$0xff]
        %v5655 = vld [vmem:[#allocation19 + $0xc48] sm:$0xff]
        %v5656 = vld [vmem:[#allocation19 + $0xc50] sm:$0xff]
        %v5657 = vld [vmem:[#allocation19 + $0xc58] sm:$0xff]
        %v5658 = vld [vmem:[#allocation19 + $0xc60] sm:$0xff]
        %v5659 = vld [vmem:[#allocation19 + $0xc68] sm:$0xff]
        %v5660 = vld [vmem:[#allocation19 + $0xc70] sm:$0xff]
        %v5661 = vld [vmem:[#allocation19 + $0xc78] sm:$0xff]
        %v5662 = vld [vmem:[#allocation19 + $0xc80] sm:$0xff]
        %v5663 = vld [vmem:[#allocation19 + $0xc88] sm:$0xff]
        %v5664 = vld [vmem:[#allocation19 + $0xc90] sm:$0xff]
        %v5665 = vld [vmem:[#allocation19 + $0xc98] sm:$0xff]
        %v5666 = vld [vmem:[#allocation19 + $0xca0] sm:$0xff]
        %v5667 = vld [vmem:[#allocation19 + $0xca8] sm:$0xff]
        %v5668 = vld [vmem:[#allocation19 + $0xcb0] sm:$0xff]
        %v5669 = vld [vmem:[#allocation19 + $0xcb8] sm:$0xff]
        %v5670 = vld [vmem:[#allocation19 + $0xcc0] sm:$0xff]
        %v5671 = vld [vmem:[#allocation19 + $0xcc8] sm:$0xff]
        %v5672 = vld [vmem:[#allocation19 + $0xcd0] sm:$0xff]
        %v5673 = vld [vmem:[#allocation19 + $0xcd8] sm:$0xff]
        %v5674 = vld [vmem:[#allocation19 + $0xce0] sm:$0xff]
        %v5675 = vld [vmem:[#allocation19 + $0xce8] sm:$0xff]
        %v5676 = vld [vmem:[#allocation19 + $0xcf0] sm:$0xff]
        %v5677 = vld [vmem:[#allocation19 + $0xcf8] sm:$0xff]
        %v5678 = vld [vmem:[#allocation19 + $0xd00] sm:$0xff]
        %v5679 = vld [vmem:[#allocation19 + $0xd08] sm:$0xff]
        %v5680 = vld [vmem:[#allocation19 + $0xd10] sm:$0xff]
        %v5681 = vld [vmem:[#allocation19 + $0xd18] sm:$0xff]
        %v5682 = vld [vmem:[#allocation19 + $0xd20] sm:$0xff]
        %v5683 = vld [vmem:[#allocation19 + $0xd28] sm:$0xff]
        %v5684 = vld [vmem:[#allocation19 + $0xd30] sm:$0xff]
        %v5685 = vld [vmem:[#allocation19 + $0xd38] sm:$0xff]
        %v5686 = vld [vmem:[#allocation19 + $0xd40] sm:$0xff]
        %v5687 = vld [vmem:[#allocation19 + $0xd48] sm:$0xff]
        %v5688 = vld [vmem:[#allocation19 + $0xd50] sm:$0xff]
        %v5689 = vld [vmem:[#allocation19 + $0xd58] sm:$0xff]
        %v5690 = vld [vmem:[#allocation19 + $0xd60] sm:$0xff]
        %v5691 = vld [vmem:[#allocation19 + $0xd68] sm:$0xff]
        %v5692 = vld [vmem:[#allocation19 + $0xd70] sm:$0xff]
        %v5693 = vld [vmem:[#allocation19 + $0xd78] sm:$0xff]
        %v5694 = vld [vmem:[#allocation19 + $0xd80] sm:$0xff]
        %v5695 = vld [vmem:[#allocation19 + $0xd88] sm:$0xff]
        %v5696 = vld [vmem:[#allocation19 + $0xd90] sm:$0xff]
        %v5697 = vld [vmem:[#allocation19 + $0xd98] sm:$0xff]
        %v5698 = vld [vmem:[#allocation19 + $0xda0] sm:$0xff]
        %v5699 = vld [vmem:[#allocation19 + $0xda8] sm:$0xff]
        %v5700 = vld [vmem:[#allocation19 + $0xdb0] sm:$0xff]
        %v5701 = vld [vmem:[#allocation19 + $0xdb8] sm:$0xff]
        %v5702 = vld [vmem:[#allocation19 + $0xdc0] sm:$0xff]
        %v5703 = vld [vmem:[#allocation19 + $0xdc8] sm:$0xff]
        %v5704 = vld [vmem:[#allocation19 + $0xdd0] sm:$0xff]
        %v5705 = vld [vmem:[#allocation19 + $0xdd8] sm:$0xff]
        %v5706 = vld [vmem:[#allocation19 + $0xde0] sm:$0xff]
        %v5707 = vld [vmem:[#allocation19 + $0xde8] sm:$0xff]
        %v5708 = vld [vmem:[#allocation19 + $0xdf0] sm:$0xff]
        %v5709 = vld [vmem:[#allocation19 + $0xdf8] sm:$0xff]
        %v5710 = vld [vmem:[#allocation19 + $0xe00] sm:$0xff]
        %v5711 = vld [vmem:[#allocation19 + $0xe08] sm:$0xff]
        %v5712 = vld [vmem:[#allocation19 + $0xe10] sm:$0xff]
        %v5713 = vld [vmem:[#allocation19 + $0xe18] sm:$0xff]
        %v5714 = vld [vmem:[#allocation19 + $0xe20] sm:$0xff]
        %v5715 = vld [vmem:[#allocation19 + $0xe28] sm:$0xff]
        %v5716 = vld [vmem:[#allocation19 + $0xe30] sm:$0xff]
        %v5717 = vld [vmem:[#allocation19 + $0xe38] sm:$0xff]
        %v5718 = vld [vmem:[#allocation19 + $0xe40] sm:$0xff]
        %v5719 = vld [vmem:[#allocation19 + $0xe48] sm:$0xff]
        %v5720 = vld [vmem:[#allocation19 + $0xe50] sm:$0xff]
        %v5721 = vld [vmem:[#allocation19 + $0xe58] sm:$0xff]
        %v5722 = vld [vmem:[#allocation19 + $0xe60] sm:$0xff]
        %v5723 = vld [vmem:[#allocation19 + $0xe68] sm:$0xff]
        %v5724 = vld [vmem:[#allocation19 + $0xe70] sm:$0xff]
        %v5725 = vld [vmem:[#allocation19 + $0xe78] sm:$0xff]
        %v5726 = vld [vmem:[#allocation19 + $0xe80] sm:$0xff]
        %v5727 = vld [vmem:[#allocation19 + $0xe88] sm:$0xff]
        %v5728 = vld [vmem:[#allocation19 + $0xe90] sm:$0xff]
        %v5729 = vld [vmem:[#allocation19 + $0xe98] sm:$0xff]
        %v5730 = vld [vmem:[#allocation19 + $0xea0] sm:$0xff]
        %v5731 = vld [vmem:[#allocation19 + $0xea8] sm:$0xff]
        %v5732 = vld [vmem:[#allocation19 + $0xeb0] sm:$0xff]
        %v5733 = vld [vmem:[#allocation19 + $0xeb8] sm:$0xff]
        %v5734 = vld [vmem:[#allocation19 + $0xec0] sm:$0xff]
        %v5735 = vld [vmem:[#allocation19 + $0xec8] sm:$0xff]
        %v5736 = vld [vmem:[#allocation19 + $0xed0] sm:$0xff]
        %v5737 = vld [vmem:[#allocation19 + $0xed8] sm:$0xff]
        %v5738 = vld [vmem:[#allocation19 + $0xee0] sm:$0xff]
        %v5739 = vld [vmem:[#allocation19 + $0xee8] sm:$0xff]
        %v5740 = vld [vmem:[#allocation19 + $0xef0] sm:$0xff]
        %v5741 = vld [vmem:[#allocation19 + $0xef8] sm:$0xff]
        %v5742 = vld [vmem:[#allocation19 + $0xf00] sm:$0xff]
        %v5743 = vld [vmem:[#allocation19 + $0xf08] sm:$0xff]
        %v5744 = vld [vmem:[#allocation19 + $0xf10] sm:$0xff]
        %v5745 = vld [vmem:[#allocation19 + $0xf18] sm:$0xff]
        %v5746 = vld [vmem:[#allocation19 + $0xf20] sm:$0xff]
        %v5747 = vld [vmem:[#allocation19 + $0xf28] sm:$0xff]
        %v5748 = vld [vmem:[#allocation19 + $0xf30] sm:$0xff]
        %v5749 = vld [vmem:[#allocation19 + $0xf38] sm:$0xff]
        %v5750 = vld [vmem:[#allocation19 + $0xf40] sm:$0xff]
        %v5751 = vld [vmem:[#allocation19 + $0xf48] sm:$0xff]
        %v5752 = vld [vmem:[#allocation19 + $0xf50] sm:$0xff]
        %v5753 = vld [vmem:[#allocation19 + $0xf58] sm:$0xff]
        %v5754 = vld [vmem:[#allocation19 + $0xf60] sm:$0xff]
        %v5755 = vld [vmem:[#allocation19 + $0xf68] sm:$0xff]
        %v5756 = vld [vmem:[#allocation19 + $0xf70] sm:$0xff]
        %v5757 = vld [vmem:[#allocation19 + $0xf78] sm:$0xff]
        %v5758 = vld [vmem:[#allocation19 + $0xf80] sm:$0xff]
        %v5759 = vld [vmem:[#allocation19 + $0xf88] sm:$0xff]
        %v5760 = vld [vmem:[#allocation19 + $0xf90] sm:$0xff]
        %v5761 = vld [vmem:[#allocation19 + $0xf98] sm:$0xff]
        %v5762 = vld [vmem:[#allocation19 + $0xfa0] sm:$0xff]
        %v5763 = vld [vmem:[#allocation19 + $0xfa8] sm:$0xff]
        %v5764 = vld [vmem:[#allocation19 + $0xfb0] sm:$0xff]
        %v5765 = vld [vmem:[#allocation19 + $0xfb8] sm:$0xff]
        %v5766 = vld [vmem:[#allocation19 + $0xfc0] sm:$0xff]
        %v5767 = vld [vmem:[#allocation19 + $0xfc8] sm:$0xff]
        %v5768 = vld [vmem:[#allocation19 + $0xfd0] sm:$0xff]
        %v5769 = vld [vmem:[#allocation19 + $0xfd8] sm:$0xff]
        %v5770 = vld [vmem:[#allocation19 + $0xfe0] sm:$0xff]
        %v5771 = vld [vmem:[#allocation19 + $0xfe8] sm:$0xff]
        %v5772 = vld [vmem:[#allocation19 + $0xff0] sm:$0xff]
        %v5773 = vld [vmem:[#allocation19 + $0xff8] sm:$0xff]
        %v5774 = vld [vmem:[#allocation19 + $0x1000] sm:$0xff]
        %v5775 = vld [vmem:[#allocation19 + $0x1008] sm:$0xff]
        %v5776 = vld [vmem:[#allocation19 + $0x1010] sm:$0xff]
        %v5777 = vld [vmem:[#allocation19 + $0x1018] sm:$0xff]
        %v5778 = vld [vmem:[#allocation19 + $0x1020] sm:$0xff]
        %v5779 = vld [vmem:[#allocation19 + $0x1028] sm:$0xff]
        %v5780 = vld [vmem:[#allocation19 + $0x1030] sm:$0xff]
        %v5781 = vld [vmem:[#allocation19 + $0x1038] sm:$0xff]
        %v5782 = vld [vmem:[#allocation19 + $0x1040] sm:$0xff]
        %v5783 = vld [vmem:[#allocation19 + $0x1048] sm:$0xff]
        %v5784 = vld [vmem:[#allocation19 + $0x1050] sm:$0xff]
        %v5785 = vld [vmem:[#allocation19 + $0x1058] sm:$0xff]
        %v5786 = vld [vmem:[#allocation19 + $0x1060] sm:$0xff]
        %v5787 = vld [vmem:[#allocation19 + $0x1068] sm:$0xff]
        %v5788 = vld [vmem:[#allocation19 + $0x1070] sm:$0xff]
        %v5789 = vld [vmem:[#allocation19 + $0x1078] sm:$0xff]
        %v5790 = vld [vmem:[#allocation19 + $0x1080] sm:$0xff]
        %v5791 = vld [vmem:[#allocation19 + $0x1088] sm:$0xff]
        %v5792 = vld [vmem:[#allocation19 + $0x1090] sm:$0xff]
        %v5793 = vld [vmem:[#allocation19 + $0x1098] sm:$0xff]
        %v5794 = vld [vmem:[#allocation19 + $0x10a0] sm:$0xff]
        %v5795 = vld [vmem:[#allocation19 + $0x10a8] sm:$0xff]
        %v5796 = vld [vmem:[#allocation19 + $0x10b0] sm:$0xff]
        %v5797 = vld [vmem:[#allocation19 + $0x10b8] sm:$0xff]
        %v5798 = vld [vmem:[#allocation19 + $0x10c0] sm:$0xff]
        %v5799 = vld [vmem:[#allocation19 + $0x10c8] sm:$0xff]
        %v5800 = vld [vmem:[#allocation19 + $0x10d0] sm:$0xff]
        %v5801 = vld [vmem:[#allocation19 + $0x10d8] sm:$0xff]
        %v5802 = vld [vmem:[#allocation19 + $0x10e0] sm:$0xff]
        %v5803 = vld [vmem:[#allocation19 + $0x10e8] sm:$0xff]
        %v5804 = vld [vmem:[#allocation19 + $0x10f0] sm:$0xff]
        %v5805 = vld [vmem:[#allocation19 + $0x10f8] sm:$0xff]
        %v5806 = vld [vmem:[#allocation19 + $0x1100] sm:$0xff]
        %v5807 = vld [vmem:[#allocation19 + $0x1108] sm:$0xff]
        %v5808 = vld [vmem:[#allocation19 + $0x1110] sm:$0xff]
        %v5809 = vld [vmem:[#allocation19 + $0x1118] sm:$0xff]
        %v5810 = vld [vmem:[#allocation19 + $0x1120] sm:$0xff]
        %v5811 = vld [vmem:[#allocation19 + $0x1128] sm:$0xff]
        %v5812 = vld [vmem:[#allocation19 + $0x1130] sm:$0xff]
        %v5813 = vld [vmem:[#allocation19 + $0x1138] sm:$0xff]
        %v5814 = vld [vmem:[#allocation19 + $0x1140] sm:$0xff]
        %v5815 = vld [vmem:[#allocation19 + $0x1148] sm:$0xff]
        %v5816 = vld [vmem:[#allocation19 + $0x1150] sm:$0xff]
        %v5817 = vld [vmem:[#allocation19 + $0x1158] sm:$0xff]
        %v5818 = vld [vmem:[#allocation19 + $0x1160] sm:$0xff]
        %v5819 = vld [vmem:[#allocation19 + $0x1168] sm:$0xff]
        %v5820 = vld [vmem:[#allocation19 + $0x1170] sm:$0xff]
        %v5821 = vld [vmem:[#allocation19 + $0x1178] sm:$0xff]
        %v5822 = vld [vmem:[#allocation19 + $0x1180] sm:$0xff]
        %v5823 = vld [vmem:[#allocation19 + $0x1188] sm:$0xff]
        %v5824 = vld [vmem:[#allocation19 + $0x1190] sm:$0xff]
        %v5825 = vld [vmem:[#allocation19 + $0x1198] sm:$0xff]
        %v5826 = vld [vmem:[#allocation19 + $0x11a0] sm:$0xff]
        %v5827 = vld [vmem:[#allocation19 + $0x11a8] sm:$0xff]
        %v5828 = vld [vmem:[#allocation19 + $0x11b0] sm:$0xff]
        %v5829 = vld [vmem:[#allocation19 + $0x11b8] sm:$0xff]
        %v5830 = vld [vmem:[#allocation19 + $0x11c0] sm:$0xff]
        %v5831 = vld [vmem:[#allocation19 + $0x11c8] sm:$0xff]
        %v5832 = vld [vmem:[#allocation19 + $0x11d0] sm:$0xff]
        %v5833 = vld [vmem:[#allocation19 + $0x11d8] sm:$0xff]
        %v5834 = vld [vmem:[#allocation19 + $0x11e0] sm:$0xff]
        %v5835 = vld [vmem:[#allocation19 + $0x11e8] sm:$0xff]
        %v5836 = vld [vmem:[#allocation19 + $0x11f0] sm:$0xff]
        %v5837 = vld [vmem:[#allocation19 + $0x11f8] sm:$0xff]
        %v5838 = vld [vmem:[#allocation21] sm:$0x7]
        %v5840 = vlaneseq
        %v5841 = vshrl.u32 %v5840, 7
        %v5842 = vsub.s32 0, %v5841
        %v5843 = vrot.slane %v5838, %v5842
        %v5844 = vlaneseq
        %v5845 = vshrl.u32 %v5844, 7
        %v5846 = vsub.s32 1, %v5845
        %v5847 = vrot.slane %v5838, %v5846
        %v5848 = vlaneseq
        %v5849 = vshrl.u32 %v5848, 7
        %v5850 = vsub.s32 2, %v5849
        %v5851 = vrot.slane %v5838, %v5850
        %5855 = vmatprep.subr.mxu0 %v5308
        %5856 = vmatpush1.msra.mxu0 %v5307
        %5857 = vmatprep.subr.mxu0 %v5305
        %5858 = vmatpush1.msra.mxu0 %v5304
        %5859 = vmatprep.subr.mxu0 %v5302
        %5860 = vmatpush1.msra.mxu0 %v5301
        %5861 = vmatprep.subr.mxu0 %v5299
        %5862 = vmatpush1.msra.mxu0 %v5298
        %5863 = vmatprep.subr.mxu0 %v5296
        %5864 = vmatpush1.msra.mxu0 %v5295
        %5865 = vmatprep.subr.mxu0 %v5293
        %5866 = vmatpush1.msra.mxu0 %v5292
        %5867 = vmatprep.subr.mxu0 %v5290
        %5868 = vmatpush1.msra.mxu0 %v5289
        %5869 = vmatprep.subr.mxu0 %v5287
        %5870 = vmatpush1.msra.mxu0 %v5286
        %5871 = vmatprep.subr.mxu0 %v5284
        %5872 = vmatpush1.msra.mxu0 %v5283
        %5873 = vmatprep.subr.mxu0 %v5281
        %5874 = vmatpush1.msra.mxu0 %v5280
        %5875 = vmatprep.subr.mxu0 %v5278
        %5876 = vmatpush1.msra.mxu0 %v5277
        %5877 = vmatprep.subr.mxu0 %v5275
        %5878 = vmatpush1.msra.mxu0 %v5274
        %5879 = vmatprep.subr.mxu0 %v5272
        %5880 = vmatpush1.msra.mxu0 %v5271
        %5881 = vmatprep.subr.mxu0 %v5269
        %5882 = vmatpush1.msra.mxu0 %v5268
        %5883 = vmatprep.subr.mxu0 %v5266
        %5884 = vmatpush1.msra.mxu0 %v5265
        %5885 = vmatprep.subr.mxu0 %v5263
        %5886 = vmatpush1.msra.mxu0 %v5262
        %5887 = vmatprep.subr.mxu0 %v5356
        %5888 = vmatpush2.msra.mxu0 %v5355
        %5889 = vmatprep.subr.mxu0 %v5353
        %5890 = vmatpush2.msra.mxu0 %v5352
        %5891 = vmatprep.subr.mxu0 %v5350
        %5892 = vmatpush2.msra.mxu0 %v5349
        %5893 = vmatprep.subr.mxu0 %v5347
        %5894 = vmatpush2.msra.mxu0 %v5346
        %5895 = vmatprep.subr.mxu0 %v5344
        %5896 = vmatpush2.msra.mxu0 %v5343
        %5897 = vmatprep.subr.mxu0 %v5341
        %5898 = vmatpush2.msra.mxu0 %v5340
        %5899 = vmatprep.subr.mxu0 %v5338
        %5900 = vmatpush2.msra.mxu0 %v5337
        %5901 = vmatprep.subr.mxu0 %v5335
        %5902 = vmatpush2.msra.mxu0 %v5334
        %5903 = vmatprep.subr.mxu0 %v5332
        %5904 = vmatpush2.msra.mxu0 %v5331
        %5905 = vmatprep.subr.mxu0 %v5329
        %5906 = vmatpush2.msra.mxu0 %v5328
        %5907 = vmatprep.subr.mxu0 %v5326
        %5908 = vmatpush2.msra.mxu0 %v5325
        %5909 = vmatprep.subr.mxu0 %v5323
        %5910 = vmatpush2.msra.mxu0 %v5322
        %5911 = vmatprep.subr.mxu0 %v5320
        %5912 = vmatpush2.msra.mxu0 %v5319
        %5913 = vmatprep.subr.mxu0 %v5317
        %5914 = vmatpush2.msra.mxu0 %v5316
        %5915 = vmatprep.subr.mxu0 %v5314
        %5916 = vmatpush2.msra.mxu0 %v5313
        %5917 = vmatprep.subr.mxu0 %v5311
        %5918 = vmatpush2.msra.mxu0 %v5310
        %5919 = vmatprep.mubr.f32.mxu0 %v5251
        %5920 = vmatmul.mubr.f32.gmra.mxu0 %v5250
        %v5921 = vpop.f32.mrf.mxu0
        %v5922 = vadd.f32 %v5843, %v5921
        %v5923 = vpop.f32.mrf.mxu0
        %v5924 = vadd.f32 %v5847, %v5923
        %5925 = vdwg.mxu0
        %5926 = vmatprep.subr.mxu0 %v5404
        %5927 = vmatpush1.msra.mxu0 %v5403
        %5928 = vmatprep.subr.mxu0 %v5401
        %5929 = vmatpush1.msra.mxu0 %v5400
        %5930 = vmatprep.subr.mxu0 %v5398
        %5931 = vmatpush1.msra.mxu0 %v5397
        %5932 = vmatprep.subr.mxu0 %v5395
        %5933 = vmatpush1.msra.mxu0 %v5394
        %5934 = vmatprep.subr.mxu0 %v5392
        %5935 = vmatpush1.msra.mxu0 %v5391
        %5936 = vmatprep.subr.mxu0 %v5389
        %5937 = vmatpush1.msra.mxu0 %v5388
        %5938 = vmatprep.subr.mxu0 %v5386
        %5939 = vmatpush1.msra.mxu0 %v5385
        %5940 = vmatprep.subr.mxu0 %v5383
        %5941 = vmatpush1.msra.mxu0 %v5382
        %5942 = vmatprep.subr.mxu0 %v5380
        %5943 = vmatpush1.msra.mxu0 %v5379
        %5944 = vmatprep.subr.mxu0 %v5377
        %5945 = vmatpush1.msra.mxu0 %v5376
        %5946 = vmatprep.subr.mxu0 %v5374
        %5947 = vmatpush1.msra.mxu0 %v5373
        %5948 = vmatprep.subr.mxu0 %v5371
        %5949 = vmatpush1.msra.mxu0 %v5370
        %5950 = vmatprep.subr.mxu0 %v5368
        %5951 = vmatpush1.msra.mxu0 %v5367
        %5952 = vmatprep.subr.mxu0 %v5365
        %5953 = vmatpush1.msra.mxu0 %v5364
        %5954 = vmatprep.subr.mxu0 %v5362
        %5955 = vmatpush1.msra.mxu0 %v5361
        %5956 = vmatprep.subr.mxu0 %v5359
        %5957 = vmatpush1.msra.mxu0 %v5358
        %5958 = vmatprep.subr.mxu0 %v5452
        %5959 = vmatpush2.msra.mxu0 %v5451
        %5960 = vmatprep.subr.mxu0 %v5449
        %5961 = vmatpush2.msra.mxu0 %v5448
        %5962 = vmatprep.subr.mxu0 %v5446
        %5963 = vmatpush2.msra.mxu0 %v5445
        %5964 = vmatprep.subr.mxu0 %v5443
        %5965 = vmatpush2.msra.mxu0 %v5442
        %5966 = vmatprep.subr.mxu0 %v5440
        %5967 = vmatpush2.msra.mxu0 %v5439
        %5968 = vmatprep.subr.mxu0 %v5437
        %5969 = vmatpush2.msra.mxu0 %v5436
        %5970 = vmatprep.subr.mxu0 %v5434
        %5971 = vmatpush2.msra.mxu0 %v5433
        %5972 = vmatprep.subr.mxu0 %v5431
        %5973 = vmatpush2.msra.mxu0 %v5430
        %5974 = vmatprep.subr.mxu0 %v5428
        %5975 = vmatpush2.msra.mxu0 %v5427
        %5976 = vmatprep.subr.mxu0 %v5425
        %5977 = vmatpush2.msra.mxu0 %v5424
        %5978 = vmatprep.subr.mxu0 %v5422
        %5979 = vmatpush2.msra.mxu0 %v5421
        %5980 = vmatprep.subr.mxu0 %v5419
        %5981 = vmatpush2.msra.mxu0 %v5418
        %5982 = vmatprep.subr.mxu0 %v5416
        %5983 = vmatpush2.msra.mxu0 %v5415
        %5984 = vmatprep.subr.mxu0 %v5413
        %5985 = vmatpush2.msra.mxu0 %v5412
        %5986 = vmatprep.subr.mxu0 %v5410
        %5987 = vmatpush2.msra.mxu0 %v5409
        %5988 = vmatprep.subr.mxu0 %v5407
        %5989 = vmatpush2.msra.mxu0 %v5406
        %5990 = vmatprep.mubr.f32.mxu0 %v5253
        %5991 = vmatmul.mubr.f32.gmra.mxu0 %v5252
        %v5992 = vpop.f32.mrf.mxu0
        %v5993 = vadd.f32 %v5922, %v5992
        %v5994 = vpop.f32.mrf.mxu0
        %v5995 = vadd.f32 %v5924, %v5994
        %5996 = vdwg.mxu0
        %5997 = vmatprep.subr.mxu0 %v5500
        %5998 = vmatpush1.msra.mxu0 %v5499
        %5999 = vmatprep.subr.mxu0 %v5497
        %6000 = vmatpush1.msra.mxu0 %v5496
        %6001 = vmatprep.subr.mxu0 %v5494
        %6002 = vmatpush1.msra.mxu0 %v5493
        %6003 = vmatprep.subr.mxu0 %v5491
        %6004 = vmatpush1.msra.mxu0 %v5490
        %6005 = vmatprep.subr.mxu0 %v5488
        %6006 = vmatpush1.msra.mxu0 %v5487
        %6007 = vmatprep.subr.mxu0 %v5485
        %6008 = vmatpush1.msra.mxu0 %v5484
        %6009 = vmatprep.subr.mxu0 %v5482
        %6010 = vmatpush1.msra.mxu0 %v5481
        %6011 = vmatprep.subr.mxu0 %v5479
        %6012 = vmatpush1.msra.mxu0 %v5478
        %6013 = vmatprep.subr.mxu0 %v5476
        %6014 = vmatpush1.msra.mxu0 %v5475
        %6015 = vmatprep.subr.mxu0 %v5473
        %6016 = vmatpush1.msra.mxu0 %v5472
        %6017 = vmatprep.subr.mxu0 %v5470
        %6018 = vmatpush1.msra.mxu0 %v5469
        %6019 = vmatprep.subr.mxu0 %v5467
        %6020 = vmatpush1.msra.mxu0 %v5466
        %6021 = vmatprep.subr.mxu0 %v5464
        %6022 = vmatpush1.msra.mxu0 %v5463
        %6023 = vmatprep.subr.mxu0 %v5461
        %6024 = vmatpush1.msra.mxu0 %v5460
        %6025 = vmatprep.subr.mxu0 %v5458
        %6026 = vmatpush1.msra.mxu0 %v5457
        %6027 = vmatprep.subr.mxu0 %v5455
        %6028 = vmatpush1.msra.mxu0 %v5454
        %6029 = vmatprep.subr.mxu0 %v5548
        %6030 = vmatpush2.msra.mxu0 %v5547
        %6031 = vmatprep.subr.mxu0 %v5545
        %6032 = vmatpush2.msra.mxu0 %v5544
        %6033 = vmatprep.subr.mxu0 %v5542
        %6034 = vmatpush2.msra.mxu0 %v5541
        %6035 = vmatprep.subr.mxu0 %v5539
        %6036 = vmatpush2.msra.mxu0 %v5538
        %6037 = vmatprep.subr.mxu0 %v5536
        %6038 = vmatpush2.msra.mxu0 %v5535
        %6039 = vmatprep.subr.mxu0 %v5533
        %6040 = vmatpush2.msra.mxu0 %v5532
        %6041 = vmatprep.subr.mxu0 %v5530
        %6042 = vmatpush2.msra.mxu0 %v5529
        %6043 = vmatprep.subr.mxu0 %v5527
        %6044 = vmatpush2.msra.mxu0 %v5526
        %6045 = vmatprep.subr.mxu0 %v5524
        %6046 = vmatpush2.msra.mxu0 %v5523
        %6047 = vmatprep.subr.mxu0 %v5521
        %6048 = vmatpush2.msra.mxu0 %v5520
        %6049 = vmatprep.subr.mxu0 %v5518
        %6050 = vmatpush2.msra.mxu0 %v5517
        %6051 = vmatprep.subr.mxu0 %v5515
        %6052 = vmatpush2.msra.mxu0 %v5514
        %6053 = vmatprep.subr.mxu0 %v5512
        %6054 = vmatpush2.msra.mxu0 %v5511
        %6055 = vmatprep.subr.mxu0 %v5509
        %6056 = vmatpush2.msra.mxu0 %v5508
        %6057 = vmatprep.subr.mxu0 %v5506
        %6058 = vmatpush2.msra.mxu0 %v5505
        %6059 = vmatprep.subr.mxu0 %v5503
        %6060 = vmatpush2.msra.mxu0 %v5502
        %6061 = vmatprep.mubr.f32.mxu0 %v5255
        %6062 = vmatmul.mubr.f32.gmra.mxu0 %v5254
        %v6063 = vpop.f32.mrf.mxu0
        %v6064 = vadd.f32 %v5993, %v6063
        %v6065 = vpop.f32.mrf.mxu0
        %v6066 = vadd.f32 %v5995, %v6065
        %6067 = vdwg.mxu0
        %6068 = vmatprep.subr.mxu0 %v5596
        %6069 = vmatpush1.msra.mxu0 %v5595
        %6070 = vmatprep.subr.mxu0 %v5593
        %6071 = vmatpush1.msra.mxu0 %v5592
        %6072 = vmatprep.subr.mxu0 %v5590
        %6073 = vmatpush1.msra.mxu0 %v5589
        %6074 = vmatprep.subr.mxu0 %v5587
        %6075 = vmatpush1.msra.mxu0 %v5586
        %6076 = vmatprep.subr.mxu0 %v5584
        %6077 = vmatpush1.msra.mxu0 %v5583
        %6078 = vmatprep.subr.mxu0 %v5581
        %6079 = vmatpush1.msra.mxu0 %v5580
        %6080 = vmatprep.subr.mxu0 %v5578
        %6081 = vmatpush1.msra.mxu0 %v5577
        %6082 = vmatprep.subr.mxu0 %v5575
        %6083 = vmatpush1.msra.mxu0 %v5574
        %6084 = vmatprep.subr.mxu0 %v5572
        %6085 = vmatpush1.msra.mxu0 %v5571
        %6086 = vmatprep.subr.mxu0 %v5569
        %6087 = vmatpush1.msra.mxu0 %v5568
        %6088 = vmatprep.subr.mxu0 %v5566
        %6089 = vmatpush1.msra.mxu0 %v5565
        %6090 = vmatprep.subr.mxu0 %v5563
        %6091 = vmatpush1.msra.mxu0 %v5562
        %6092 = vmatprep.subr.mxu0 %v5560
        %6093 = vmatpush1.msra.mxu0 %v5559
        %6094 = vmatprep.subr.mxu0 %v5557
        %6095 = vmatpush1.msra.mxu0 %v5556
        %6096 = vmatprep.subr.mxu0 %v5554
        %6097 = vmatpush1.msra.mxu0 %v5553
        %6098 = vmatprep.subr.mxu0 %v5551
        %6099 = vmatpush1.msra.mxu0 %v5550
        %6100 = vmatprep.subr.mxu0 %v5644
        %6101 = vmatpush2.msra.mxu0 %v5643
        %6102 = vmatprep.subr.mxu0 %v5641
        %6103 = vmatpush2.msra.mxu0 %v5640
        %6104 = vmatprep.subr.mxu0 %v5638
        %6105 = vmatpush2.msra.mxu0 %v5637
        %6106 = vmatprep.subr.mxu0 %v5635
        %6107 = vmatpush2.msra.mxu0 %v5634
        %6108 = vmatprep.subr.mxu0 %v5632
        %6109 = vmatpush2.msra.mxu0 %v5631
        %6110 = vmatprep.subr.mxu0 %v5629
        %6111 = vmatpush2.msra.mxu0 %v5628
        %6112 = vmatprep.subr.mxu0 %v5626
        %6113 = vmatpush2.msra.mxu0 %v5625
        %6114 = vmatprep.subr.mxu0 %v5623
        %6115 = vmatpush2.msra.mxu0 %v5622
        %6116 = vmatprep.subr.mxu0 %v5620
        %6117 = vmatpush2.msra.mxu0 %v5619
        %6118 = vmatprep.subr.mxu0 %v5617
        %6119 = vmatpush2.msra.mxu0 %v5616
        %6120 = vmatprep.subr.mxu0 %v5614
        %6121 = vmatpush2.msra.mxu0 %v5613
        %6122 = vmatprep.subr.mxu0 %v5611
        %6123 = vmatpush2.msra.mxu0 %v5610
        %6124 = vmatprep.subr.mxu0 %v5608
        %6125 = vmatpush2.msra.mxu0 %v5607
        %6126 = vmatprep.subr.mxu0 %v5605
        %6127 = vmatpush2.msra.mxu0 %v5604
        %6128 = vmatprep.subr.mxu0 %v5602
        %6129 = vmatpush2.msra.mxu0 %v5601
        %6130 = vmatprep.subr.mxu0 %v5599
        %6131 = vmatpush2.msra.mxu0 %v5598
        %6132 = vmatprep.mubr.f32.mxu0 %v5257
        %6133 = vmatmul.mubr.f32.gmra.mxu0 %v5256
        %v6134 = vpop.f32.mrf.mxu0
        %v6135 = vadd.f32 %v6064, %v6134
        %v6136 = vpop.f32.mrf.mxu0
        %v6137 = vadd.f32 %v6066, %v6136
        %6138 = vdwg.mxu0
        %6139 = vmatprep.subr.mxu0 %v5692
        %6140 = vmatpush1.msra.mxu0 %v5691
        %6141 = vmatprep.subr.mxu0 %v5689
        %6142 = vmatpush1.msra.mxu0 %v5688
        %6143 = vmatprep.subr.mxu0 %v5686
        %6144 = vmatpush1.msra.mxu0 %v5685
        %6145 = vmatprep.subr.mxu0 %v5683
        %6146 = vmatpush1.msra.mxu0 %v5682
        %6147 = vmatprep.subr.mxu0 %v5680
        %6148 = vmatpush1.msra.mxu0 %v5679
        %6149 = vmatprep.subr.mxu0 %v5677
        %6150 = vmatpush1.msra.mxu0 %v5676
        %6151 = vmatprep.subr.mxu0 %v5674
        %6152 = vmatpush1.msra.mxu0 %v5673
        %6153 = vmatprep.subr.mxu0 %v5671
        %6154 = vmatpush1.msra.mxu0 %v5670
        %6155 = vmatprep.subr.mxu0 %v5668
        %6156 = vmatpush1.msra.mxu0 %v5667
        %6157 = vmatprep.subr.mxu0 %v5665
        %6158 = vmatpush1.msra.mxu0 %v5664
        %6159 = vmatprep.subr.mxu0 %v5662
        %6160 = vmatpush1.msra.mxu0 %v5661
        %6161 = vmatprep.subr.mxu0 %v5659
        %6162 = vmatpush1.msra.mxu0 %v5658
        %6163 = vmatprep.subr.mxu0 %v5656
        %6164 = vmatpush1.msra.mxu0 %v5655
        %6165 = vmatprep.subr.mxu0 %v5653
        %6166 = vmatpush1.msra.mxu0 %v5652
        %6167 = vmatprep.subr.mxu0 %v5650
        %6168 = vmatpush1.msra.mxu0 %v5649
        %6169 = vmatprep.subr.mxu0 %v5647
        %6170 = vmatpush1.msra.mxu0 %v5646
        %6171 = vmatprep.subr.mxu0 %v5740
        %6172 = vmatpush2.msra.mxu0 %v5739
        %6173 = vmatprep.subr.mxu0 %v5737
        %6174 = vmatpush2.msra.mxu0 %v5736
        %6175 = vmatprep.subr.mxu0 %v5734
        %6176 = vmatpush2.msra.mxu0 %v5733
        %6177 = vmatprep.subr.mxu0 %v5731
        %6178 = vmatpush2.msra.mxu0 %v5730
        %6179 = vmatprep.subr.mxu0 %v5728
        %6180 = vmatpush2.msra.mxu0 %v5727
        %6181 = vmatprep.subr.mxu0 %v5725
        %6182 = vmatpush2.msra.mxu0 %v5724
        %6183 = vmatprep.subr.mxu0 %v5722
        %6184 = vmatpush2.msra.mxu0 %v5721
        %6185 = vmatprep.subr.mxu0 %v5719
        %6186 = vmatpush2.msra.mxu0 %v5718
        %6187 = vmatprep.subr.mxu0 %v5716
        %6188 = vmatpush2.msra.mxu0 %v5715
        %6189 = vmatprep.subr.mxu0 %v5713
        %6190 = vmatpush2.msra.mxu0 %v5712
        %6191 = vmatprep.subr.mxu0 %v5710
        %6192 = vmatpush2.msra.mxu0 %v5709
        %6193 = vmatprep.subr.mxu0 %v5707
        %6194 = vmatpush2.msra.mxu0 %v5706
        %6195 = vmatprep.subr.mxu0 %v5704
        %6196 = vmatpush2.msra.mxu0 %v5703
        %6197 = vmatprep.subr.mxu0 %v5701
        %6198 = vmatpush2.msra.mxu0 %v5700
        %6199 = vmatprep.subr.mxu0 %v5698
        %6200 = vmatpush2.msra.mxu0 %v5697
        %6201 = vmatprep.subr.mxu0 %v5695
        %6202 = vmatpush2.msra.mxu0 %v5694
        %6203 = vmatprep.mubr.f32.mxu0 %v5259
        %6204 = vmatmul.mubr.f32.gmra.mxu0 %v5258
        %v6205 = vpop.f32.mrf.mxu0
        %v6206 = vadd.f32 %v6135, %v6205
        %v6207 = vpop.f32.mrf.mxu0
        %v6208 = vadd.f32 %v6137, %v6207
        %6209 = vdwg.mxu0
        %6210 = vmatprep.subr.mxu0 %v5788
        %6211 = vmatpush1.msra.mxu0 %v5787
        %6212 = vmatprep.subr.mxu0 %v5785
        %6213 = vmatpush1.msra.mxu0 %v5784
        %6214 = vmatprep.subr.mxu0 %v5782
        %6215 = vmatpush1.msra.mxu0 %v5781
        %6216 = vmatprep.subr.mxu0 %v5779
        %6217 = vmatpush1.msra.mxu0 %v5778
        %6218 = vmatprep.subr.mxu0 %v5776
        %6219 = vmatpush1.msra.mxu0 %v5775
        %6220 = vmatprep.subr.mxu0 %v5773
        %6221 = vmatpush1.msra.mxu0 %v5772
        %6222 = vmatprep.subr.mxu0 %v5770
        %6223 = vmatpush1.msra.mxu0 %v5769
        %6224 = vmatprep.subr.mxu0 %v5767
        %6225 = vmatpush1.msra.mxu0 %v5766
        %6226 = vmatprep.subr.mxu0 %v5764
        %6227 = vmatpush1.msra.mxu0 %v5763
        %6228 = vmatprep.subr.mxu0 %v5761
        %6229 = vmatpush1.msra.mxu0 %v5760
        %6230 = vmatprep.subr.mxu0 %v5758
        %6231 = vmatpush1.msra.mxu0 %v5757
        %6232 = vmatprep.subr.mxu0 %v5755
        %6233 = vmatpush1.msra.mxu0 %v5754
        %6234 = vmatprep.subr.mxu0 %v5752
        %6235 = vmatpush1.msra.mxu0 %v5751
        %6236 = vmatprep.subr.mxu0 %v5749
        %6237 = vmatpush1.msra.mxu0 %v5748
        %6238 = vmatprep.subr.mxu0 %v5746
        %6239 = vmatpush1.msra.mxu0 %v5745
        %6240 = vmatprep.subr.mxu0 %v5743
        %6241 = vmatpush1.msra.mxu0 %v5742
        %6242 = vmatprep.subr.mxu0 %v5836
        %6243 = vmatpush2.msra.mxu0 %v5835
        %6244 = vmatprep.subr.mxu0 %v5833
        %6245 = vmatpush2.msra.mxu0 %v5832
        %6246 = vmatprep.subr.mxu0 %v5830
        %6247 = vmatpush2.msra.mxu0 %v5829
        %6248 = vmatprep.subr.mxu0 %v5827
        %6249 = vmatpush2.msra.mxu0 %v5826
        %6250 = vmatprep.subr.mxu0 %v5824
        %6251 = vmatpush2.msra.mxu0 %v5823
        %6252 = vmatprep.subr.mxu0 %v5821
        %6253 = vmatpush2.msra.mxu0 %v5820
        %6254 = vmatprep.subr.mxu0 %v5818
        %6255 = vmatpush2.msra.mxu0 %v5817
        %6256 = vmatprep.subr.mxu0 %v5815
        %6257 = vmatpush2.msra.mxu0 %v5814
        %6258 = vmatprep.subr.mxu0 %v5812
        %6259 = vmatpush2.msra.mxu0 %v5811
        %6260 = vmatprep.subr.mxu0 %v5809
        %6261 = vmatpush2.msra.mxu0 %v5808
        %6262 = vmatprep.subr.mxu0 %v5806
        %6263 = vmatpush2.msra.mxu0 %v5805
        %6264 = vmatprep.subr.mxu0 %v5803
        %6265 = vmatpush2.msra.mxu0 %v5802
        %6266 = vmatprep.subr.mxu0 %v5800
        %6267 = vmatpush2.msra.mxu0 %v5799
        %6268 = vmatprep.subr.mxu0 %v5797
        %6269 = vmatpush2.msra.mxu0 %v5796
        %6270 = vmatprep.subr.mxu0 %v5794
        %6271 = vmatpush2.msra.mxu0 %v5793
        %6272 = vmatprep.subr.mxu0 %v5791
        %6273 = vmatpush2.msra.mxu0 %v5790
        %6274 = vmatprep.mubr.f32.mxu0 %v5261
        %6275 = vmatmul.mubr.f32.gmra.mxu0 %v5260
        %v6276 = vpop.f32.mrf.mxu0
        %v6277 = vadd.f32 %v6206, %v6276
        %v6278 = vpop.f32.mrf.mxu0
        %v6279 = vadd.f32 %v6208, %v6278
        %6280 = vdwg.mxu0
        %6281 = vmatprep.subr.mxu0 0.0
        %6282 = vmatpush1.msra.mxu0 %v5309
        %6283 = vmatprep.subr.mxu0 0.0
        %6284 = vmatpush1.msra.mxu0 %v5306
        %6285 = vmatprep.subr.mxu0 0.0
        %6286 = vmatpush1.msra.mxu0 %v5303
        %6287 = vmatprep.subr.mxu0 0.0
        %6288 = vmatpush1.msra.mxu0 %v5300
        %6289 = vmatprep.subr.mxu0 0.0
        %6290 = vmatpush1.msra.mxu0 %v5297
        %6291 = vmatprep.subr.mxu0 0.0
        %6292 = vmatpush1.msra.mxu0 %v5294
        %6293 = vmatprep.subr.mxu0 0.0
        %6294 = vmatpush1.msra.mxu0 %v5291
        %6295 = vmatprep.subr.mxu0 0.0
        %6296 = vmatpush1.msra.mxu0 %v5288
        %6297 = vmatprep.subr.mxu0 0.0
        %6298 = vmatpush1.msra.mxu0 %v5285
        %6299 = vmatprep.subr.mxu0 0.0
        %6300 = vmatpush1.msra.mxu0 %v5282
        %6301 = vmatprep.subr.mxu0 0.0
        %6302 = vmatpush1.msra.mxu0 %v5279
        %6303 = vmatprep.subr.mxu0 0.0
        %6304 = vmatpush1.msra.mxu0 %v5276
        %6305 = vmatprep.subr.mxu0 0.0
        %6306 = vmatpush1.msra.mxu0 %v5273
        %6307 = vmatprep.subr.mxu0 0.0
        %6308 = vmatpush1.msra.mxu0 %v5270
        %6309 = vmatprep.subr.mxu0 0.0
        %6310 = vmatpush1.msra.mxu0 %v5267
        %6311 = vmatprep.subr.mxu0 0.0
        %6312 = vmatpush1.msra.mxu0 %v5264
        %6313 = vmatprep.subr.mxu0 0.0
        %6314 = vmatpush2.msra.mxu0 %v5357
        %6315 = vmatprep.subr.mxu0 0.0
        %6316 = vmatpush2.msra.mxu0 %v5354
        %6317 = vmatprep.subr.mxu0 0.0
        %6318 = vmatpush2.msra.mxu0 %v5351
        %6319 = vmatprep.subr.mxu0 0.0
        %6320 = vmatpush2.msra.mxu0 %v5348
        %6321 = vmatprep.subr.mxu0 0.0
        %6322 = vmatpush2.msra.mxu0 %v5345
        %6323 = vmatprep.subr.mxu0 0.0
        %6324 = vmatpush2.msra.mxu0 %v5342
        %6325 = vmatprep.subr.mxu0 0.0
        %6326 = vmatpush2.msra.mxu0 %v5339
        %6327 = vmatprep.subr.mxu0 0.0
        %6328 = vmatpush2.msra.mxu0 %v5336
        %6329 = vmatprep.subr.mxu0 0.0
        %6330 = vmatpush2.msra.mxu0 %v5333
        %6331 = vmatprep.subr.mxu0 0.0
        %6332 = vmatpush2.msra.mxu0 %v5330
        %6333 = vmatprep.subr.mxu0 0.0
        %6334 = vmatpush2.msra.mxu0 %v5327
        %6335 = vmatprep.subr.mxu0 0.0
        %6336 = vmatpush2.msra.mxu0 %v5324
        %6337 = vmatprep.subr.mxu0 0.0
        %6338 = vmatpush2.msra.mxu0 %v5321
        %6339 = vmatprep.subr.mxu0 0.0
        %6340 = vmatpush2.msra.mxu0 %v5318
        %6341 = vmatprep.subr.mxu0 0.0
        %6342 = vmatpush2.msra.mxu0 %v5315
        %6343 = vmatprep.subr.mxu0 0.0
        %6344 = vmatpush2.msra.mxu0 %v5312
        %6345 = vmatprep.mubr.f32.mxu0 %v5251
        %6346 = vmatmul.mubr.f32.gmra.mxu0 %v5250
        %v6347 = vpop.f32.mrf.mxu0
        %v6348 = vadd.f32 %v5851, %v6347
        %v6349 = vpop.f32.mrf.mxu0
        %6350 = vdwg.mxu0
        %6351 = vmatprep.subr.mxu0 0.0
        %6352 = vmatpush1.msra.mxu0 %v5405
        %6353 = vmatprep.subr.mxu0 0.0
        %6354 = vmatpush1.msra.mxu0 %v5402
        %6355 = vmatprep.subr.mxu0 0.0
        %6356 = vmatpush1.msra.mxu0 %v5399
        %6357 = vmatprep.subr.mxu0 0.0
        %6358 = vmatpush1.msra.mxu0 %v5396
        %6359 = vmatprep.subr.mxu0 0.0
        %6360 = vmatpush1.msra.mxu0 %v5393
        %6361 = vmatprep.subr.mxu0 0.0
        %6362 = vmatpush1.msra.mxu0 %v5390
        %6363 = vmatprep.subr.mxu0 0.0
        %6364 = vmatpush1.msra.mxu0 %v5387
        %6365 = vmatprep.subr.mxu0 0.0
        %6366 = vmatpush1.msra.mxu0 %v5384
        %6367 = vmatprep.subr.mxu0 0.0
        %6368 = vmatpush1.msra.mxu0 %v5381
        %6369 = vmatprep.subr.mxu0 0.0
        %6370 = vmatpush1.msra.mxu0 %v5378
        %6371 = vmatprep.subr.mxu0 0.0
        %6372 = vmatpush1.msra.mxu0 %v5375
        %6373 = vmatprep.subr.mxu0 0.0
        %6374 = vmatpush1.msra.mxu0 %v5372
        %6375 = vmatprep.subr.mxu0 0.0
        %6376 = vmatpush1.msra.mxu0 %v5369
        %6377 = vmatprep.subr.mxu0 0.0
        %6378 = vmatpush1.msra.mxu0 %v5366
        %6379 = vmatprep.subr.mxu0 0.0
        %6380 = vmatpush1.msra.mxu0 %v5363
        %6381 = vmatprep.subr.mxu0 0.0
        %6382 = vmatpush1.msra.mxu0 %v5360
        %6383 = vmatprep.subr.mxu0 0.0
        %6384 = vmatpush2.msra.mxu0 %v5453
        %6385 = vmatprep.subr.mxu0 0.0
        %6386 = vmatpush2.msra.mxu0 %v5450
        %6387 = vmatprep.subr.mxu0 0.0
        %6388 = vmatpush2.msra.mxu0 %v5447
        %6389 = vmatprep.subr.mxu0 0.0
        %6390 = vmatpush2.msra.mxu0 %v5444
        %6391 = vmatprep.subr.mxu0 0.0
        %6392 = vmatpush2.msra.mxu0 %v5441
        %6393 = vmatprep.subr.mxu0 0.0
        %6394 = vmatpush2.msra.mxu0 %v5438
        %6395 = vmatprep.subr.mxu0 0.0
        %6396 = vmatpush2.msra.mxu0 %v5435
        %6397 = vmatprep.subr.mxu0 0.0
        %6398 = vmatpush2.msra.mxu0 %v5432
        %6399 = vmatprep.subr.mxu0 0.0
        %6400 = vmatpush2.msra.mxu0 %v5429
        %6401 = vmatprep.subr.mxu0 0.0
        %6402 = vmatpush2.msra.mxu0 %v5426
        %6403 = vmatprep.subr.mxu0 0.0
        %6404 = vmatpush2.msra.mxu0 %v5423
        %6405 = vmatprep.subr.mxu0 0.0
        %6406 = vmatpush2.msra.mxu0 %v5420
        %6407 = vmatprep.subr.mxu0 0.0
        %6408 = vmatpush2.msra.mxu0 %v5417
        %6409 = vmatprep.subr.mxu0 0.0
        %6410 = vmatpush2.msra.mxu0 %v5414
        %6411 = vmatprep.subr.mxu0 0.0
        %6412 = vmatpush2.msra.mxu0 %v5411
        %6413 = vmatprep.subr.mxu0 0.0
        %6414 = vmatpush2.msra.mxu0 %v5408
        %6415 = vmatprep.mubr.f32.mxu0 %v5253
        %6416 = vmatmul.mubr.f32.gmra.mxu0 %v5252
        %v6417 = vpop.f32.mrf.mxu0
        %v6418 = vadd.f32 %v6348, %v6417
        %v6419 = vpop.f32.mrf.mxu0
        %6420 = vdwg.mxu0
        %6421 = vmatprep.subr.mxu0 0.0
        %6422 = vmatpush1.msra.mxu0 %v5501
        %6423 = vmatprep.subr.mxu0 0.0
        %6424 = vmatpush1.msra.mxu0 %v5498
        %6425 = vmatprep.subr.mxu0 0.0
        %6426 = vmatpush1.msra.mxu0 %v5495
        %6427 = vmatprep.subr.mxu0 0.0
        %6428 = vmatpush1.msra.mxu0 %v5492
        %6429 = vmatprep.subr.mxu0 0.0
        %6430 = vmatpush1.msra.mxu0 %v5489
        %6431 = vmatprep.subr.mxu0 0.0
        %6432 = vmatpush1.msra.mxu0 %v5486
        %6433 = vmatprep.subr.mxu0 0.0
        %6434 = vmatpush1.msra.mxu0 %v5483
        %6435 = vmatprep.subr.mxu0 0.0
        %6436 = vmatpush1.msra.mxu0 %v5480
        %6437 = vmatprep.subr.mxu0 0.0
        %6438 = vmatpush1.msra.mxu0 %v5477
        %6439 = vmatprep.subr.mxu0 0.0
        %6440 = vmatpush1.msra.mxu0 %v5474
        %6441 = vmatprep.subr.mxu0 0.0
        %6442 = vmatpush1.msra.mxu0 %v5471
        %6443 = vmatprep.subr.mxu0 0.0
        %6444 = vmatpush1.msra.mxu0 %v5468
        %6445 = vmatprep.subr.mxu0 0.0
        %6446 = vmatpush1.msra.mxu0 %v5465
        %6447 = vmatprep.subr.mxu0 0.0
        %6448 = vmatpush1.msra.mxu0 %v5462
        %6449 = vmatprep.subr.mxu0 0.0
        %6450 = vmatpush1.msra.mxu0 %v5459
        %6451 = vmatprep.subr.mxu0 0.0
        %6452 = vmatpush1.msra.mxu0 %v5456
        %6453 = vmatprep.subr.mxu0 0.0
        %6454 = vmatpush2.msra.mxu0 %v5549
        %6455 = vmatprep.subr.mxu0 0.0
        %6456 = vmatpush2.msra.mxu0 %v5546
        %6457 = vmatprep.subr.mxu0 0.0
        %6458 = vmatpush2.msra.mxu0 %v5543
        %6459 = vmatprep.subr.mxu0 0.0
        %6460 = vmatpush2.msra.mxu0 %v5540
        %6461 = vmatprep.subr.mxu0 0.0
        %6462 = vmatpush2.msra.mxu0 %v5537
        %6463 = vmatprep.subr.mxu0 0.0
        %6464 = vmatpush2.msra.mxu0 %v5534
        %6465 = vmatprep.subr.mxu0 0.0
        %6466 = vmatpush2.msra.mxu0 %v5531
        %6467 = vmatprep.subr.mxu0 0.0
        %6468 = vmatpush2.msra.mxu0 %v5528
        %6469 = vmatprep.subr.mxu0 0.0
        %6470 = vmatpush2.msra.mxu0 %v5525
        %6471 = vmatprep.subr.mxu0 0.0
        %6472 = vmatpush2.msra.mxu0 %v5522
        %6473 = vmatprep.subr.mxu0 0.0
        %6474 = vmatpush2.msra.mxu0 %v5519
        %6475 = vmatprep.subr.mxu0 0.0
        %6476 = vmatpush2.msra.mxu0 %v5516
        %6477 = vmatprep.subr.mxu0 0.0
        %6478 = vmatpush2.msra.mxu0 %v5513
        %6479 = vmatprep.subr.mxu0 0.0
        %6480 = vmatpush2.msra.mxu0 %v5510
        %6481 = vmatprep.subr.mxu0 0.0
        %6482 = vmatpush2.msra.mxu0 %v5507
        %6483 = vmatprep.subr.mxu0 0.0
        %6484 = vmatpush2.msra.mxu0 %v5504
        %6485 = vmatprep.mubr.f32.mxu0 %v5255
        %6486 = vmatmul.mubr.f32.gmra.mxu0 %v5254
        %v6487 = vpop.f32.mrf.mxu0
        %v6488 = vadd.f32 %v6418, %v6487
        %v6489 = vpop.f32.mrf.mxu0
        %6490 = vdwg.mxu0
        %6491 = vmatprep.subr.mxu0 0.0
        %6492 = vmatpush1.msra.mxu0 %v5597
        %6493 = vmatprep.subr.mxu0 0.0
        %6494 = vmatpush1.msra.mxu0 %v5594
        %6495 = vmatprep.subr.mxu0 0.0
        %6496 = vmatpush1.msra.mxu0 %v5591
        %6497 = vmatprep.subr.mxu0 0.0
        %6498 = vmatpush1.msra.mxu0 %v5588
        %6499 = vmatprep.subr.mxu0 0.0
        %6500 = vmatpush1.msra.mxu0 %v5585
        %6501 = vmatprep.subr.mxu0 0.0
        %6502 = vmatpush1.msra.mxu0 %v5582
        %6503 = vmatprep.subr.mxu0 0.0
        %6504 = vmatpush1.msra.mxu0 %v5579
        %6505 = vmatprep.subr.mxu0 0.0
        %6506 = vmatpush1.msra.mxu0 %v5576
        %6507 = vmatprep.subr.mxu0 0.0
        %6508 = vmatpush1.msra.mxu0 %v5573
        %6509 = vmatprep.subr.mxu0 0.0
        %6510 = vmatpush1.msra.mxu0 %v5570
        %6511 = vmatprep.subr.mxu0 0.0
        %6512 = vmatpush1.msra.mxu0 %v5567
        %6513 = vmatprep.subr.mxu0 0.0
        %6514 = vmatpush1.msra.mxu0 %v5564
        %6515 = vmatprep.subr.mxu0 0.0
        %6516 = vmatpush1.msra.mxu0 %v5561
        %6517 = vmatprep.subr.mxu0 0.0
        %6518 = vmatpush1.msra.mxu0 %v5558
        %6519 = vmatprep.subr.mxu0 0.0
        %6520 = vmatpush1.msra.mxu0 %v5555
        %6521 = vmatprep.subr.mxu0 0.0
        %6522 = vmatpush1.msra.mxu0 %v5552
        %6523 = vmatprep.subr.mxu0 0.0
        %6524 = vmatpush2.msra.mxu0 %v5645
        %6525 = vmatprep.subr.mxu0 0.0
        %6526 = vmatpush2.msra.mxu0 %v5642
        %6527 = vmatprep.subr.mxu0 0.0
        %6528 = vmatpush2.msra.mxu0 %v5639
        %6529 = vmatprep.subr.mxu0 0.0
        %6530 = vmatpush2.msra.mxu0 %v5636
        %6531 = vmatprep.subr.mxu0 0.0
        %6532 = vmatpush2.msra.mxu0 %v5633
        %6533 = vmatprep.subr.mxu0 0.0
        %6534 = vmatpush2.msra.mxu0 %v5630
        %6535 = vmatprep.subr.mxu0 0.0
        %6536 = vmatpush2.msra.mxu0 %v5627
        %6537 = vmatprep.subr.mxu0 0.0
        %6538 = vmatpush2.msra.mxu0 %v5624
        %6539 = vmatprep.subr.mxu0 0.0
        %6540 = vmatpush2.msra.mxu0 %v5621
        %6541 = vmatprep.subr.mxu0 0.0
        %6542 = vmatpush2.msra.mxu0 %v5618
        %6543 = vmatprep.subr.mxu0 0.0
        %6544 = vmatpush2.msra.mxu0 %v5615
        %6545 = vmatprep.subr.mxu0 0.0
        %6546 = vmatpush2.msra.mxu0 %v5612
        %6547 = vmatprep.subr.mxu0 0.0
        %6548 = vmatpush2.msra.mxu0 %v5609
        %6549 = vmatprep.subr.mxu0 0.0
        %6550 = vmatpush2.msra.mxu0 %v5606
        %6551 = vmatprep.subr.mxu0 0.0
        %6552 = vmatpush2.msra.mxu0 %v5603
        %6553 = vmatprep.subr.mxu0 0.0
        %6554 = vmatpush2.msra.mxu0 %v5600
        %6555 = vmatprep.mubr.f32.mxu0 %v5257
        %6556 = vmatmul.mubr.f32.gmra.mxu0 %v5256
        %v6557 = vpop.f32.mrf.mxu0
        %v6558 = vadd.f32 %v6488, %v6557
        %v6559 = vpop.f32.mrf.mxu0
        %6560 = vdwg.mxu0
        %6561 = vmatprep.subr.mxu0 0.0
        %6562 = vmatpush1.msra.mxu0 %v5693
        %6563 = vmatprep.subr.mxu0 0.0
        %6564 = vmatpush1.msra.mxu0 %v5690
        %6565 = vmatprep.subr.mxu0 0.0
        %6566 = vmatpush1.msra.mxu0 %v5687
        %6567 = vmatprep.subr.mxu0 0.0
        %6568 = vmatpush1.msra.mxu0 %v5684
        %6569 = vmatprep.subr.mxu0 0.0
        %6570 = vmatpush1.msra.mxu0 %v5681
        %6571 = vmatprep.subr.mxu0 0.0
        %6572 = vmatpush1.msra.mxu0 %v5678
        %6573 = vmatprep.subr.mxu0 0.0
        %6574 = vmatpush1.msra.mxu0 %v5675
        %6575 = vmatprep.subr.mxu0 0.0
        %6576 = vmatpush1.msra.mxu0 %v5672
        %6577 = vmatprep.subr.mxu0 0.0
        %6578 = vmatpush1.msra.mxu0 %v5669
        %6579 = vmatprep.subr.mxu0 0.0
        %6580 = vmatpush1.msra.mxu0 %v5666
        %6581 = vmatprep.subr.mxu0 0.0
        %6582 = vmatpush1.msra.mxu0 %v5663
        %6583 = vmatprep.subr.mxu0 0.0
        %6584 = vmatpush1.msra.mxu0 %v5660
        %6585 = vmatprep.subr.mxu0 0.0
        %6586 = vmatpush1.msra.mxu0 %v5657
        %6587 = vmatprep.subr.mxu0 0.0
        %6588 = vmatpush1.msra.mxu0 %v5654
        %6589 = vmatprep.subr.mxu0 0.0
        %6590 = vmatpush1.msra.mxu0 %v5651
        %6591 = vmatprep.subr.mxu0 0.0
        %6592 = vmatpush1.msra.mxu0 %v5648
        %6593 = vmatprep.subr.mxu0 0.0
        %6594 = vmatpush2.msra.mxu0 %v5741
        %6595 = vmatprep.subr.mxu0 0.0
        %6596 = vmatpush2.msra.mxu0 %v5738
        %6597 = vmatprep.subr.mxu0 0.0
        %6598 = vmatpush2.msra.mxu0 %v5735
        %6599 = vmatprep.subr.mxu0 0.0
        %6600 = vmatpush2.msra.mxu0 %v5732
        %6601 = vmatprep.subr.mxu0 0.0
        %6602 = vmatpush2.msra.mxu0 %v5729
        %6603 = vmatprep.subr.mxu0 0.0
        %6604 = vmatpush2.msra.mxu0 %v5726
        %6605 = vmatprep.subr.mxu0 0.0
        %6606 = vmatpush2.msra.mxu0 %v5723
        %6607 = vmatprep.subr.mxu0 0.0
        %6608 = vmatpush2.msra.mxu0 %v5720
        %6609 = vmatprep.subr.mxu0 0.0
        %6610 = vmatpush2.msra.mxu0 %v5717
        %6611 = vmatprep.subr.mxu0 0.0
        %6612 = vmatpush2.msra.mxu0 %v5714
        %6613 = vmatprep.subr.mxu0 0.0
        %6614 = vmatpush2.msra.mxu0 %v5711
        %6615 = vmatprep.subr.mxu0 0.0
        %6616 = vmatpush2.msra.mxu0 %v5708
        %6617 = vmatprep.subr.mxu0 0.0
        %6618 = vmatpush2.msra.mxu0 %v5705
        %6619 = vmatprep.subr.mxu0 0.0
        %6620 = vmatpush2.msra.mxu0 %v5702
        %6621 = vmatprep.subr.mxu0 0.0
        %6622 = vmatpush2.msra.mxu0 %v5699
        %6623 = vmatprep.subr.mxu0 0.0
        %6624 = vmatpush2.msra.mxu0 %v5696
        %6625 = vmatprep.mubr.f32.mxu0 %v5259
        %6626 = vmatmul.mubr.f32.gmra.mxu0 %v5258
        %v6627 = vpop.f32.mrf.mxu0
        %v6628 = vadd.f32 %v6558, %v6627
        %v6629 = vpop.f32.mrf.mxu0
        %6630 = vdwg.mxu0
        %6631 = vmatprep.subr.mxu0 0.0
        %6632 = vmatpush1.msra.mxu0 %v5789
        %6633 = vmatprep.subr.mxu0 0.0
        %6634 = vmatpush1.msra.mxu0 %v5786
        %6635 = vmatprep.subr.mxu0 0.0
        %6636 = vmatpush1.msra.mxu0 %v5783
        %6637 = vmatprep.subr.mxu0 0.0
        %6638 = vmatpush1.msra.mxu0 %v5780
        %6639 = vmatprep.subr.mxu0 0.0
        %6640 = vmatpush1.msra.mxu0 %v5777
        %6641 = vmatprep.subr.mxu0 0.0
        %6642 = vmatpush1.msra.mxu0 %v5774
        %6643 = vmatprep.subr.mxu0 0.0
        %6644 = vmatpush1.msra.mxu0 %v5771
        %6645 = vmatprep.subr.mxu0 0.0
        %6646 = vmatpush1.msra.mxu0 %v5768
        %6647 = vmatprep.subr.mxu0 0.0
        %6648 = vmatpush1.msra.mxu0 %v5765
        %6649 = vmatprep.subr.mxu0 0.0
        %6650 = vmatpush1.msra.mxu0 %v5762
        %6651 = vmatprep.subr.mxu0 0.0
        %6652 = vmatpush1.msra.mxu0 %v5759
        %6653 = vmatprep.subr.mxu0 0.0
        %6654 = vmatpush1.msra.mxu0 %v5756
        %6655 = vmatprep.subr.mxu0 0.0
        %6656 = vmatpush1.msra.mxu0 %v5753
        %6657 = vmatprep.subr.mxu0 0.0
        %6658 = vmatpush1.msra.mxu0 %v5750
        %6659 = vmatprep.subr.mxu0 0.0
        %6660 = vmatpush1.msra.mxu0 %v5747
        %6661 = vmatprep.subr.mxu0 0.0
        %6662 = vmatpush1.msra.mxu0 %v5744
        %6663 = vmatprep.subr.mxu0 0.0
        %6664 = vmatpush2.msra.mxu0 %v5837
        %6665 = vmatprep.subr.mxu0 0.0
        %6666 = vmatpush2.msra.mxu0 %v5834
        %6667 = vmatprep.subr.mxu0 0.0
        %6668 = vmatpush2.msra.mxu0 %v5831
        %6669 = vmatprep.subr.mxu0 0.0
        %6670 = vmatpush2.msra.mxu0 %v5828
        %6671 = vmatprep.subr.mxu0 0.0
        %6672 = vmatpush2.msra.mxu0 %v5825
        %6673 = vmatprep.subr.mxu0 0.0
        %6674 = vmatpush2.msra.mxu0 %v5822
        %6675 = vmatprep.subr.mxu0 0.0
        %6676 = vmatpush2.msra.mxu0 %v5819
        %6677 = vmatprep.subr.mxu0 0.0
        %6678 = vmatpush2.msra.mxu0 %v5816
        %6679 = vmatprep.subr.mxu0 0.0
        %6680 = vmatpush2.msra.mxu0 %v5813
        %6681 = vmatprep.subr.mxu0 0.0
        %6682 = vmatpush2.msra.mxu0 %v5810
        %6683 = vmatprep.subr.mxu0 0.0
        %6684 = vmatpush2.msra.mxu0 %v5807
        %6685 = vmatprep.subr.mxu0 0.0
        %6686 = vmatpush2.msra.mxu0 %v5804
        %6687 = vmatprep.subr.mxu0 0.0
        %6688 = vmatpush2.msra.mxu0 %v5801
        %6689 = vmatprep.subr.mxu0 0.0
        %6690 = vmatpush2.msra.mxu0 %v5798
        %6691 = vmatprep.subr.mxu0 0.0
        %6692 = vmatpush2.msra.mxu0 %v5795
        %6693 = vmatprep.subr.mxu0 0.0
        %6694 = vmatpush2.msra.mxu0 %v5792
        %6695 = vmatprep.mubr.f32.mxu0 %v5261
        %6696 = vmatmul.mubr.f32.gmra.mxu0 %v5260
        %v6697 = vpop.f32.mrf.mxu0
        %v6698 = vadd.f32 %v6628, %v6697
        %v6699 = vpop.f32.mrf.mxu0
        %6700 = vdwg.mxu0
        %v6701 = vadd.f32 %v6277, %v3376
        %v6702 = vadd.f32 %v6279, %v3377
        %v6703 = vadd.f32 %v6698, %v3378
        %6704 = vst [vmem:[%s696] sm:$0x1f] %v6701
        %6705 = vst [vmem:[%s696 + $0x8] sm:$0x1f] %v6702
        %6706 = vst [vmem:[%s696 + $0x10] sm:$0x1f] %v6703
        %p6707 = scmp.lt.s32.totalorder %s34, 1
        %s6708 = scalar_select %p6707, %s34, 1
        %s6709 = smul.addr %s6708, 3
        %s6710 = smul.addr %s6709, 8
        %s6711 = scalar_lea.vmem %s16, %s6710
        // Predicated region
        $region137: #{vit_encoder_block.1} parent=83 // pred_check
          %p6712 = pneg %p393
        $region138: #{vit_encoder_block.1} parent=83 // pred_check_branch
          %6714 = sbr.rel (%p6712) target = $region140
        $region139: #{vit_encoder_block.1} parent=83 // pred_region
          _
        $region140: #{vit_encoder_block.1} parent=83 // pred_fallthru
          _
      $region84: #{vit_encoder_block.1} parent=5 // pred_fallthru
        _
      %p6715 = scmp.le.s32.totalorder 2, %s29
      // Predicated region
      $region141: #{vit_encoder_block.1} parent=5 // pred_check
        %p6716 = pneg %p6715
      $region142: #{vit_encoder_block.1} parent=5 // pred_check_branch
        %6718 = sbr.rel (%p6716) target = $region144
      $region143: #{vit_encoder_block.1} parent=5 // pred_region
        %s6719 = ssub.s32 %s29, 2
        // Predicated region
        $region145: #{vit_encoder_block.1} parent=143 // pred_check
          %p6720 = pneg %p399
        $region146: #{vit_encoder_block.1} parent=143 // pred_check_branch
          %6722 = sbr.rel (%p6720) target = $region148
        $region147: #{vit_encoder_block.1} parent=143 // pred_region
          %p6723 = scmp.lt.s32.totalorder %s35, 1
          %s6724 = scalar_select %p6723, %s35, 1
          %s6725 = smul.addr %s6724, 3
          %s6726 = smul.addr %s6725, 8
          %s6727 = scalar_lea.vmem %s16, %s6726
        $region148: #{vit_encoder_block.1} parent=143 // pred_fallthru
          _
      $region144: #{vit_encoder_block.1} parent=5 // pred_fallthru
        _
    $region6: #{vit_encoder_block.1} parent=1 // loop_footer
      %s33 = sadd.s32 1, %s29
    $region7: #{vit_encoder_block.1} parent=1 // loop_footer_branch
      %28 = sbr.rel target = $region3
    $region8: #{vit_encoder_block.1} parent=1 // loop_exit
      _
    %6728 = vsyncpa [#allocation3], 1
    %s6729 = scalar_lea.sflag [#allocation3], 1
    %6730 = vsyncpa %s6729, 1
    %6731 = vsyncpa [#allocation5], 1
    %6732 = vsyncpa [#allocation8], 1
    %6733 = vsyncpa [#allocation11], 1
    %6734 = vsyncpa [#allocation14], 1
    %6735 = vsyncpa [#allocation17], 1
    %6736 = vsyncpa [#allocation20], 1

</llo_original>
